<compile_context>
chip_gen: v7x
topology: tpu7x:2x2x1
jax: 0.10.0
libtpu: 0.0.40
codegen_flags: <defaults>
</compile_context>

<pallas_src>
import functools

import jax
import jax.numpy as jnp
import numpy as np
from jax import lax
from jax.experimental import pallas as pl
from jax.experimental.pallas import tpu as pltpu  # noqa: F401  (TPU backend)

LATENT_DIM = 20
LATENT_PAD = 128            # mu / logvar each occupy one 128-lane slab
FLATTEN = 128 * 3 * 2       # 768


def _round_up(x, m):
    return (x + m - 1) // m * m


# ----------------------------------------------------------------------------
# pallas_call plumbing: grid-less single-shot calls, whole arrays in VMEM
# ----------------------------------------------------------------------------
def _call(kernel, inputs, out_shape, *, flops=0, transcendentals=0):
    outs = out_shape if isinstance(out_shape, (list, tuple)) else [out_shape]
    nbytes = sum(int(np.prod(a.shape)) * np.dtype(a.dtype).itemsize for a in inputs)
    nbytes += sum(int(np.prod(s.shape)) * np.dtype(s.dtype).itemsize for s in outs)
    return pl.pallas_call(
        kernel,
        out_shape=out_shape,
        cost_estimate=pl.CostEstimate(
            flops=int(flops),
            transcendentals=int(transcendentals),
            bytes_accessed=int(nbytes),
        ),
    )(*inputs)


# ----------------------------------------------------------------------------
# kernels
# ----------------------------------------------------------------------------
def _conv_relu_pool_kernel(p_ref, w_ref, b_ref, o_ref, *, mp):
    """conv(3x3) GEMM + bias + ReLU + 2x2 max-pool.

    p_ref holds the 4 pool-tap im2col matrices stacked along rows: (4*mp, K).
    One MXU dot produces all 4 tap accumulators; the pool is a max over four
    8-aligned row slices (ReLU commutes with max, bias is tap-invariant).
    """
    y = jnp.dot(p_ref[...], w_ref[...], preferred_element_type=jnp.float32)
    m = jnp.maximum(jnp.maximum(y[0 * mp:1 * mp], y[1 * mp:2 * mp]),
                    jnp.maximum(y[2 * mp:3 * mp], y[3 * mp:4 * mp]))
    o_ref[...] = jnp.maximum(m + b_ref[...], 0.0).astype(o_ref.dtype)


def _matmul_bias_act_kernel(x_ref, w_ref, b_ref, o_ref, *, act):
    acc = jnp.dot(x_ref[...], w_ref[...], preferred_element_type=jnp.float32)
    acc = acc + b_ref[...]
    if act == "relu":
        acc = jnp.maximum(acc, 0.0)
    o_ref[...] = acc.astype(o_ref.dtype)


def _latent_kernel(h_ref, wml_ref, bml_ref, eps_ref, wdec_ref, bdec_ref,
                   ml_ref, d_ref):
    """(fc_mu ++ fc_logvar) single GEMM + reparameterize + fc_decode.

    wml is (768, 256): mu weights in lanes [0,20), logvar weights in lanes
    [128,148), zeros elsewhere -> the two in-kernel slices are 128-aligned.
    eps is zero-padded to 128 lanes, fc_decode rows >= 20 are zero, so the
    padding lanes contribute exactly nothing.
    """
    h = h_ref[...]
    ml = jnp.dot(h, wml_ref[...], preferred_element_type=jnp.float32) + bml_ref[...]
    mu = ml[:, :LATENT_PAD]
    logvar = ml[:, LATENT_PAD:]
    z = mu + eps_ref[...] * jnp.exp(0.5 * logvar)            # f32, EUP exp
    d = jnp.dot(z.astype(wdec_ref.dtype), wdec_ref[...],
                preferred_element_type=jnp.float32) + bdec_ref[...]
    ml_ref[...] = ml
    d_ref[...] = d.astype(d_ref.dtype)


def _dec3_sigmoid_upsample_kernel(p_ref, wbd_ref, b_ref, bt_ref, a_ref, o_ref,
                                  *, batch, h_in, h_out, w_out):
    """deconv3 (block-diag GEMM -> (N*24,16)) + sigmoid + bf16 bilinear resize."""
    s = jnp.dot(p_ref[...], wbd_ref[...], preferred_element_type=jnp.float32)
    s = jax.nn.sigmoid(s + b_ref[...])                       # (N*24, 16), f32
    # width interpolation 16 -> 20 (bf16 operands, f32 accumulation)
    y1 = jnp.dot(s.astype(jnp.bfloat16), bt_ref[...],
                 preferred_element_type=jnp.float32)         # (N*24, 20)
    y1 = y1.astype(jnp.bfloat16).reshape(batch, h_in, w_out)
    # height interpolation 24 -> 28 as ONE batched dot (no per-image loop)
    amat = jnp.broadcast_to(a_ref[...], (batch, h_out, h_in))  # bf16 (N,28,24)
    out = jnp.einsum("nhk,nkw->nhw", amat, y1,
                     preferred_element_type=jnp.float32)
    o_ref[...] = out.astype(o_ref.dtype)


# ----------------------------------------------------------------------------
# wrapper-side layout glue (XLA): padding + im2col slicing, all bf16
# ----------------------------------------------------------------------------
def _im2col_nhwc(xp, kh, kw):
    """xp: padded (N,Hp,Wp,C) -> (N,Ho,Wo,kh*kw*C), column order (ky,kx,c)."""
    N, Hp, Wp, C = xp.shape
    Ho, Wo = Hp - kh + 1, Wp - kw + 1
    cols = [xp[:, i:i + Ho, j:j + Wo, :] for i in range(kh) for j in range(kw)]
    return jnp.concatenate(cols, axis=-1)


def conv_relu_pool(x_nhwc, w, b):
    """3x3 conv (pad 1, stride 1) + ReLU + 2x2 max-pool (floor mode), NHWC."""
    N, H, W, C = x_nhwc.shape
    O = w.shape[1]
    Hp, Wp = H // 2, W // 2
    xp = jnp.pad(x_nhwc, ((0, 0), (1, 1), (1, 1), (0, 0)))
    P = _im2col_nhwc(xp, 3, 3)                               # (N, H, W, 9C)
    M = N * Hp * Wp
    Mp = _round_up(M, 8)                                     # 8-sublane aligned
    taps = []
    for a in (0, 1):                                         # pool tap offsets
        for c in (0, 1):
            t = P[:, a:a + 2 * Hp:2, c:c + 2 * Wp:2, :].reshape(M, 9 * C)
            taps.append(jnp.pad(t, ((0, Mp - M), (0, 0))))
    p_all = jnp.concatenate(taps, axis=0)                    # (4*Mp, 9C)
    out = _call(
        functools.partial(_conv_relu_pool_kernel, mp=Mp),
        [p_all, w, b],
        jax.ShapeDtypeStruct((Mp, O), jnp.bfloat16),
        flops=2 * 4 * Mp * (9 * C) * O,
    )
    return out[:M].reshape(N, Hp, Wp, O)


def deconv_relu(x_nhwc, w, b, kh, kw, stride, pad, out_pad, O):
    """PyTorch ConvTranspose2d + ReLU via zero-insert + valid-conv GEMM."""
    lo = kh - 1 - pad
    xz = lax.pad(x_nhwc, jnp.zeros((), x_nhwc.dtype),
                 ((0, 0, 0),
                  (lo, lo + out_pad, stride - 1),
                  (kw - 1 - pad, kw - 1 - pad + out_pad, stride - 1),
                  (0, 0, 0)))
    P = _im2col_nhwc(xz, kh, kw)
    N, Ho, Wo, K = P.shape
    out = _call(
        functools.partial(_matmul_bias_act_kernel, act="relu"),
        [P.reshape(N * Ho * Wo, K), w, b],
        jax.ShapeDtypeStruct((N * Ho * Wo, O), jnp.bfloat16),
        flops=2 * N * Ho * Wo * K * O,
    )
    return out.reshape(N, Ho, Wo, O)


def latent_block(hflat, eps_pad, params):
    """fc_mu+fc_logvar (one GEMM) + reparameterize + fc_decode, one kernel."""
    N = hflat.shape[0]
    ml, d = _call(
        _latent_kernel,
        [hflat, params["fc_mulv_w"], params["fc_mulv_b"], eps_pad,
         params["fc_decode_w"], params["fc_decode_b"]],
        [jax.ShapeDtypeStruct((N, 2 * LATENT_PAD), jnp.float32),
         jax.ShapeDtypeStruct((N, FLATTEN), jnp.bfloat16)],
        flops=2 * N * FLATTEN * 2 * LATENT_PAD + 2 * N * LATENT_PAD * FLATTEN,
        transcendentals=N * LATENT_PAD,
    )
    return ml, d


def deconv3_sigmoid_upsample(x_nhwc, wbd, b, bt, amat):
    """ConvTranspose2d(32,1,4,2,1) + Sigmoid + bilinear resize to (28,20)."""
    N = x_nhwc.shape[0]
    xz = lax.pad(x_nhwc, jnp.zeros((), x_nhwc.dtype),
                 ((0, 0, 0), (2, 2, 1), (2, 2, 1), (0, 0, 0)))   # (N,27,19,32)
    P = _im2col_nhwc(xz, 4, 4)                                   # (N,24,16,512)
    P2 = P.reshape(N * 24, 16 * 512)                             # rows (n,y), cols (x,k)
    flops = (2 * N * 24 * (16 * 512) * 16        # block-diag deconv GEMM
             + 2 * N * 24 * 16 * 20              # width interpolation
             + 2 * N * 28 * 24 * 20)             # height interpolation
    out = _call(
        functools.partial(_dec3_sigmoid_upsample_kernel,
                          batch=N, h_in=24, h_out=28, w_out=20),
        [P2, wbd, b, bt, amat],
        jax.ShapeDtypeStruct((N, 28, 20), jnp.float32),
        flops=flops, transcendentals=N * 24 * 16,
    )
    return out.reshape(N, 1, 28, 20)


def _bilinear_matrix(out_size, in_size):
    """Interpolation matrix for align_corners=False bilinear resize."""
    scale = in_size / out_size
    i = np.arange(out_size, dtype=np.float64)
    src = np.maximum((i + 0.5) * scale - 0.5, 0.0)
    i0 = np.minimum(np.floor(src).astype(np.int64), in_size - 1)
    i1 = np.minimum(i0 + 1, in_size - 1)
    w1 = src - i0
    w0 = 1.0 - w1
    M = np.zeros((out_size, in_size), np.float32)
    M[np.arange(out_size), i0] += w0.astype(np.float32)
    M[np.arange(out_size), i1] += w1.astype(np.float32)
    return jnp.asarray(M)


# ----------------------------------------------------------------------------
# parameters (pre-transposed / pre-flipped / pre-padded / pre-block-diag, bf16)
# ----------------------------------------------------------------------------
def init_params(key, latent_dim=LATENT_DIM):
    assert latent_dim <= LATENT_PAD
    ks = jax.random.split(key, 9)

    def nrm(k, shape, fan_in):
        return jax.random.normal(k, shape, jnp.float32) / np.sqrt(fan_in)

    def conv_w(k, O, C, kh, kw):
        w = nrm(k, (O, C, kh, kw), C * kh * kw)              # PyTorch OIHW
        return w.transpose(2, 3, 1, 0).reshape(kh * kw * C, O).astype(jnp.bfloat16)

    def deconv_w_gemm(k, Cin, Cout, kh, kw):
        w = nrm(k, (Cin, Cout, kh, kw), Cin * kh * kw)       # PyTorch (Cin,Cout,kh,kw)
        wc = jnp.flip(w, (2, 3)).transpose(1, 0, 2, 3)       # equivalent conv OIHW
        return wc.transpose(2, 3, 1, 0).reshape(kh * kw * Cin, Cout)

    p = {
        "conv1_w": conv_w(ks[0], 32, 1, 3, 3),   "conv1_b": jnp.zeros((1, 32), jnp.float32),
        "conv2_w": conv_w(ks[1], 64, 32, 3, 3),  "conv2_b": jnp.zeros((1, 64), jnp.float32),
        "conv3_w": conv_w(ks[2], 128, 64, 3, 3), "conv3_b": jnp.zeros((1, 128), jnp.float32),
    }

    # fc_mu / fc_logvar merged into one lane-padded GEMM:
    #   lanes [0, latent)           -> mu
    #   lanes [128, 128 + latent)   -> logvar
    wmu = nrm(ks[3], (FLATTEN, latent_dim), FLATTEN)
    wlv = nrm(ks[4], (FLATTEN, latent_dim), FLATTEN)
    wml = jnp.zeros((FLATTEN, 2 * LATENT_PAD), jnp.float32)
    wml = wml.at[:, :latent_dim].set(wmu)
    wml = wml.at[:, LATENT_PAD:LATENT_PAD + latent_dim].set(wlv)
    p["fc_mulv_w"] = wml.astype(jnp.bfloat16)
    p["fc_mulv_b"] = jnp.zeros((1, 2 * LATENT_PAD), jnp.float32)

    # fc_decode padded to 128 input rows (rows >= latent_dim are zero).
    wdec = nrm(ks[5], (latent_dim, FLATTEN), latent_dim)
    wdec_pad = jnp.zeros((LATENT_PAD, FLATTEN), jnp.float32).at[:latent_dim].set(wdec)
    p["fc_decode_w"] = wdec_pad.astype(jnp.bfloat16)
    p["fc_decode_b"] = jnp.zeros((1, FLATTEN), jnp.float32)

    p["deconv1_w"] = deconv_w_gemm(ks[6], 128, 64, 3, 3).astype(jnp.bfloat16)
    p["deconv1_b"] = jnp.zeros((1, 64), jnp.float32)
    p["deconv2_w"] = deconv_w_gemm(ks[7], 64, 32, 3, 3).astype(jnp.bfloat16)
    p["deconv2_b"] = jnp.zeros((1, 32), jnp.float32)

    # deconv3 (32 -> 1 channel): block-diagonal GEMM so the kernel output is
    # (N*24, 16) instead of a (768, 1) lane-1 store.
    w3 = deconv_w_gemm(ks[8], 32, 1, 4, 4)                   # (512, 1) f32
    p["deconv3_wbd"] = jnp.kron(jnp.eye(16, dtype=jnp.float32), w3).astype(jnp.bfloat16)
    p["deconv3_b"] = jnp.zeros((1, 1), jnp.float32)

    # bilinear resize matrices (align_corners=False), bf16 for the MXU.
    p["bilinear_a"] = _bilinear_matrix(28, 24).astype(jnp.bfloat16)       # (28, 24)
    p["bilinear_bt"] = _bilinear_matrix(20, 16).T.astype(jnp.bfloat16)    # (16, 20)
    return p


# ----------------------------------------------------------------------------
# forward
# ----------------------------------------------------------------------------
def vae_forward(params, x, eps):
    N = x.shape[0]
    # NCHW -> NHWC, bf16 for the MXU path.
    h = jnp.transpose(x, (0, 2, 3, 1)).astype(jnp.bfloat16)            # (N,28,20,1)
    h = conv_relu_pool(h, params["conv1_w"], params["conv1_b"])        # (N,14,10,32)
    h = conv_relu_pool(h, params["conv2_w"], params["conv2_b"])        # (N,7,5,64)
    h = conv_relu_pool(h, params["conv3_w"], params["conv3_b"])        # (N,3,2,128)
    hflat = h.reshape(N, FLATTEN)                                      # (N,768)

    eps_pad = jnp.pad(eps.astype(jnp.float32),
                      ((0, 0), (0, LATENT_PAD - LATENT_DIM)))          # (N,128)
    ml, d = latent_block(hflat, eps_pad, params)
    mu = ml[:, :LATENT_DIM]
    logvar = ml[:, LATENT_PAD:LATENT_PAD + LATENT_DIM]

    d = d.reshape(N, 3, 2, 128)                                        # NHWC
    d = deconv_relu(d, params["deconv1_w"], params["deconv1_b"],
                    3, 3, 2, 1, 1, 64)                                 # (N,6,4,64)
    d = deconv_relu(d, params["deconv2_w"], params["deconv2_b"],
                    3, 3, 2, 1, 1, 32)                                 # (N,12,8,32)
    recon = deconv3_sigmoid_upsample(d, params["deconv3_wbd"], params["deconv3_b"],
                                     params["bilinear_bt"], params["bilinear_a"])
    return recon, mu, logvar                                           # (N,1,28,20)


if __name__ == "__main__":
    key = jax.random.PRNGKey(0)
    k_param, k_x, k_eps = jax.random.split(key, 3)

    params = init_params(k_param, LATENT_DIM)

    batch = 2
    x = jax.random.normal(k_x, (batch, 1, 28, 20), jnp.float32)
    eps = jax.random.normal(k_eps, (batch, LATENT_DIM), jnp.float32)

    recon, mu, logvar = jax.jit(vae_forward)(params, x, eps)
    jax.block_until_ready((recon, mu, logvar))

    assert recon.shape == (batch, 1, 28, 20)
    assert mu.shape == (batch, LATENT_DIM)
    assert logvar.shape == (batch, LATENT_DIM)
    assert bool(jnp.all(jnp.isfinite(recon)))
    assert bool(jnp.all(jnp.isfinite(mu))) and bool(jnp.all(jnp.isfinite(logvar)))
    # sigmoid + convex bilinear resample stays in [0,1] up to bf16 rounding of
    # the interpolation weights / interpolated activations (<~1% slack).
    assert bool(jnp.all((recon >= -1e-2) & (recon <= 1.0 + 1e-2)))

    print("KERNEL_OK")
</pallas_src>

<mosaic_0001>
module attributes {stable_mosaic.version = 11 : i64} {
  func.func @_conv_relu_pool_kernel(%arg0: memref<1120x9xbf16, #tpu.memory_space<vmem>>, %arg1: memref<9x32xbf16, #tpu.memory_space<vmem>>, %arg2: memref<1x32xf32, #tpu.memory_space<vmem>>, %arg3: memref<280x32xbf16, #tpu.memory_space<vmem>>) attributes {dimension_semantics = [], scalar_prefetch = 0 : i64, scratch_operands = 0 : i64, tpu.core_type = #tpu.core_type<tc>} {
    %c0 = arith.constant 0 : index
    %c0_0 = arith.constant 0 : index
    %0 = vector.load %arg0[%c0, %c0_0] : memref<1120x9xbf16, #tpu.memory_space<vmem>>, vector<1120x9xbf16>
    %c0_1 = arith.constant 0 : index
    %c0_2 = arith.constant 0 : index
    %1 = vector.load %arg1[%c0_1, %c0_2] : memref<9x32xbf16, #tpu.memory_space<vmem>>, vector<9x32xbf16>
    %cst = arith.constant dense<0.000000e+00> : vector<1120x32xf32>
    %2 = tpu.matmul %0, %1, %cst {dimension_numbers = #tpu.dot_dimension_numbers<[1], [0], [0], [1], [0, 0, 1, 1], [], []>} : vector<1120x9xbf16>, vector<9x32xbf16>, vector<1120x32xf32> -> vector<1120x32xf32>
    %3 = vector.extract_strided_slice %2 {offsets = [0, 0], sizes = [280, 32], strides = [1, 1]} : vector<1120x32xf32> to vector<280x32xf32>
    %4 = vector.extract_strided_slice %2 {offsets = [280, 0], sizes = [280, 32], strides = [1, 1]} : vector<1120x32xf32> to vector<280x32xf32>
    %5 = arith.maximumf %3, %4 : vector<280x32xf32>
    %6 = vector.extract_strided_slice %2 {offsets = [560, 0], sizes = [280, 32], strides = [1, 1]} : vector<1120x32xf32> to vector<280x32xf32>
    %7 = vector.extract_strided_slice %2 {offsets = [840, 0], sizes = [280, 32], strides = [1, 1]} : vector<1120x32xf32> to vector<280x32xf32>
    %8 = arith.maximumf %6, %7 : vector<280x32xf32>
    %9 = arith.maximumf %5, %8 : vector<280x32xf32>
    %c0_3 = arith.constant 0 : index
    %c0_4 = arith.constant 0 : index
    %10 = vector.load %arg2[%c0_3, %c0_4] : memref<1x32xf32, #tpu.memory_space<vmem>>, vector<1x32xf32>
    %11 = vector.broadcast %10 : vector<1x32xf32> to vector<280x32xf32>
    %12 = arith.addf %9, %11 : vector<280x32xf32>
    %cst_5 = arith.constant 0.000000e+00 : f32
    %13 = vector.broadcast %cst_5 : f32 to vector<280x32xf32>
    %14 = arith.maximumf %12, %13 : vector<280x32xf32>
    %15 = arith.truncf %14 : vector<280x32xf32> to vector<280x32xbf16>
    %c0_6 = arith.constant 0 : index
    %c0_7 = arith.constant 0 : index
    %16 = vector.load %arg3[%c0_6, %c0_7] : memref<280x32xbf16, #tpu.memory_space<vmem>>, vector<280x32xbf16>
    tpu.vector_store %arg3[%c0_6, %c0_7], %15 {strides = array<i32>} : memref<280x32xbf16, #tpu.memory_space<vmem>>, vector<280x32xbf16>,
    return
  }
}

module attributes {stable_mosaic.version = 11 : i64} {
  func.func @_conv_relu_pool_kernel(%arg0: memref<288x288xbf16, #tpu.memory_space<vmem>>, %arg1: memref<288x64xbf16, #tpu.memory_space<vmem>>, %arg2: memref<1x64xf32, #tpu.memory_space<vmem>>, %arg3: memref<72x64xbf16, #tpu.memory_space<vmem>>) attributes {dimension_semantics = [], scalar_prefetch = 0 : i64, scratch_operands = 0 : i64, tpu.core_type = #tpu.core_type<tc>} {
    %c0 = arith.constant 0 : index
    %c0_0 = arith.constant 0 : index
    %0 = vector.load %arg0[%c0, %c0_0] : memref<288x288xbf16, #tpu.memory_space<vmem>>, vector<288x288xbf16>
    %c0_1 = arith.constant 0 : index
    %c0_2 = arith.constant 0 : index
    %1 = vector.load %arg1[%c0_1, %c0_2] : memref<288x64xbf16, #tpu.memory_space<vmem>>, vector<288x64xbf16>
    %cst = arith.constant dense<0.000000e+00> : vector<288x64xf32>
    %2 = tpu.matmul %0, %1, %cst {dimension_numbers = #tpu.dot_dimension_numbers<[1], [0], [0], [1], [0, 0, 1, 1], [], []>} : vector<288x288xbf16>, vector<288x64xbf16>, vector<288x64xf32> -> vector<288x64xf32>
    %3 = vector.extract_strided_slice %2 {offsets = [0, 0], sizes = [72, 64], strides = [1, 1]} : vector<288x64xf32> to vector<72x64xf32>
    %4 = vector.extract_strided_slice %2 {offsets = [72, 0], sizes = [72, 64], strides = [1, 1]} : vector<288x64xf32> to vector<72x64xf32>
    %5 = arith.maximumf %3, %4 : vector<72x64xf32>
    %6 = vector.extract_strided_slice %2 {offsets = [144, 0], sizes = [72, 64], strides = [1, 1]} : vector<288x64xf32> to vector<72x64xf32>
    %7 = vector.extract_strided_slice %2 {offsets = [216, 0], sizes = [72, 64], strides = [1, 1]} : vector<288x64xf32> to vector<72x64xf32>
    %8 = arith.maximumf %6, %7 : vector<72x64xf32>
    %9 = arith.maximumf %5, %8 : vector<72x64xf32>
    %c0_3 = arith.constant 0 : index
    %c0_4 = arith.constant 0 : index
    %10 = vector.load %arg2[%c0_3, %c0_4] : memref<1x64xf32, #tpu.memory_space<vmem>>, vector<1x64xf32>
    %11 = vector.broadcast %10 : vector<1x64xf32> to vector<72x64xf32>
    %12 = arith.addf %9, %11 : vector<72x64xf32>
    %cst_5 = arith.constant 0.000000e+00 : f32
    %13 = vector.broadcast %cst_5 : f32 to vector<72x64xf32>
    %14 = arith.maximumf %12, %13 : vector<72x64xf32>
    %15 = arith.truncf %14 : vector<72x64xf32> to vector<72x64xbf16>
    %c0_6 = arith.constant 0 : index
    %c0_7 = arith.constant 0 : index
    %16 = vector.load %arg3[%c0_6, %c0_7] : memref<72x64xbf16, #tpu.memory_space<vmem>>, vector<72x64xbf16>
    tpu.vector_store %arg3[%c0_6, %c0_7], %15 {strides = array<i32>} : memref<72x64xbf16, #tpu.memory_space<vmem>>, vector<72x64xbf16>,
    return
  }
}

module attributes {stable_mosaic.version = 11 : i64} {
  func.func @_conv_relu_pool_kernel(%arg0: memref<64x576xbf16, #tpu.memory_space<vmem>>, %arg1: memref<576x128xbf16, #tpu.memory_space<vmem>>, %arg2: memref<1x128xf32, #tpu.memory_space<vmem>>, %arg3: memref<16x128xbf16, #tpu.memory_space<vmem>>) attributes {dimension_semantics = [], scalar_prefetch = 0 : i64, scratch_operands = 0 : i64, tpu.core_type = #tpu.core_type<tc>} {
    %c0 = arith.constant 0 : index
    %c0_0 = arith.constant 0 : index
    %0 = vector.load %arg0[%c0, %c0_0] : memref<64x576xbf16, #tpu.memory_space<vmem>>, vector<64x576xbf16>
    %c0_1 = arith.constant 0 : index
    %c0_2 = arith.constant 0 : index
    %1 = vector.load %arg1[%c0_1, %c0_2] : memref<576x128xbf16, #tpu.memory_space<vmem>>, vector<576x128xbf16>
    %cst = arith.constant dense<0.000000e+00> : vector<64x128xf32>
    %2 = tpu.matmul %0, %1, %cst {dimension_numbers = #tpu.dot_dimension_numbers<[1], [0], [0], [1], [0, 0, 1, 1], [], []>} : vector<64x576xbf16>, vector<576x128xbf16>, vector<64x128xf32> -> vector<64x128xf32>
    %3 = vector.extract_strided_slice %2 {offsets = [0, 0], sizes = [16, 128], strides = [1, 1]} : vector<64x128xf32> to vector<16x128xf32>
    %4 = vector.extract_strided_slice %2 {offsets = [16, 0], sizes = [16, 128], strides = [1, 1]} : vector<64x128xf32> to vector<16x128xf32>
    %5 = arith.maximumf %3, %4 : vector<16x128xf32>
    %6 = vector.extract_strided_slice %2 {offsets = [32, 0], sizes = [16, 128], strides = [1, 1]} : vector<64x128xf32> to vector<16x128xf32>
    %7 = vector.extract_strided_slice %2 {offsets = [48, 0], sizes = [16, 128], strides = [1, 1]} : vector<64x128xf32> to vector<16x128xf32>
    %8 = arith.maximumf %6, %7 : vector<16x128xf32>
    %9 = arith.maximumf %5, %8 : vector<16x128xf32>
    %c0_3 = arith.constant 0 : index
    %c0_4 = arith.constant 0 : index
    %10 = vector.load %arg2[%c0_3, %c0_4] : memref<1x128xf32, #tpu.memory_space<vmem>>, vector<1x128xf32>
    %11 = vector.broadcast %10 : vector<1x128xf32> to vector<16x128xf32>
    %12 = arith.addf %9, %11 : vector<16x128xf32>
    %cst_5 = arith.constant 0.000000e+00 : f32
    %13 = vector.broadcast %cst_5 : f32 to vector<16x128xf32>
    %14 = arith.maximumf %12, %13 : vector<16x128xf32>
    %15 = arith.truncf %14 : vector<16x128xf32> to vector<16x128xbf16>
    %c0_6 = arith.constant 0 : index
    %c0_7 = arith.constant 0 : index
    %16 = vector.load %arg3[%c0_6, %c0_7] : memref<16x128xbf16, #tpu.memory_space<vmem>>, vector<16x128xbf16>
    tpu.vector_store %arg3[%c0_6, %c0_7], %15 {strides = array<i32>} : memref<16x128xbf16, #tpu.memory_space<vmem>>, vector<16x128xbf16>,
    return
  }
}

module attributes {stable_mosaic.version = 11 : i64} {
  func.func @_latent_kernel(%arg0: memref<2x768xbf16, #tpu.memory_space<vmem>>, %arg1: memref<768x256xbf16, #tpu.memory_space<vmem>>, %arg2: memref<1x256xf32, #tpu.memory_space<vmem>>, %arg3: memref<2x128xf32, #tpu.memory_space<vmem>>, %arg4: memref<128x768xbf16, #tpu.memory_space<vmem>>, %arg5: memref<1x768xf32, #tpu.memory_space<vmem>>, %arg6: memref<2x256xf32, #tpu.memory_space<vmem>>, %arg7: memref<2x768xbf16, #tpu.memory_space<vmem>>) attributes {dimension_semantics = [], scalar_prefetch = 0 : i64, scratch_operands = 0 : i64, tpu.core_type = #tpu.core_type<tc>} {
    %c0 = arith.constant 0 : index
    %c0_0 = arith.constant 0 : index
    %0 = vector.load %arg0[%c0, %c0_0] : memref<2x768xbf16, #tpu.memory_space<vmem>>, vector<2x768xbf16>
    %c0_1 = arith.constant 0 : index
    %c0_2 = arith.constant 0 : index
    %1 = vector.load %arg1[%c0_1, %c0_2] : memref<768x256xbf16, #tpu.memory_space<vmem>>, vector<768x256xbf16>
    %cst = arith.constant dense<0.000000e+00> : vector<2x256xf32>
    %2 = tpu.matmul %0, %1, %cst {dimension_numbers = #tpu.dot_dimension_numbers<[1], [0], [0], [1], [0, 0, 1, 1], [], []>} : vector<2x768xbf16>, vector<768x256xbf16>, vector<2x256xf32> -> vector<2x256xf32>
    %c0_3 = arith.constant 0 : index
    %c0_4 = arith.constant 0 : index
    %3 = vector.load %arg2[%c0_3, %c0_4] : memref<1x256xf32, #tpu.memory_space<vmem>>, vector<1x256xf32>
    %4 = vector.broadcast %3 : vector<1x256xf32> to vector<2x256xf32>
    %5 = arith.addf %2, %4 : vector<2x256xf32>
    %6 = vector.extract_strided_slice %5 {offsets = [0, 0], sizes = [2, 128], strides = [1, 1]} : vector<2x256xf32> to vector<2x128xf32>
    %7 = vector.extract_strided_slice %5 {offsets = [0, 128], sizes = [2, 128], strides = [1, 1]} : vector<2x256xf32> to vector<2x128xf32>
    %c0_5 = arith.constant 0 : index
    %c0_6 = arith.constant 0 : index
    %8 = vector.load %arg3[%c0_5, %c0_6] : memref<2x128xf32, #tpu.memory_space<vmem>>, vector<2x128xf32>
    %cst_7 = arith.constant 5.000000e-01 : f32
    %9 = vector.broadcast %cst_7 : f32 to vector<2x128xf32>
    %10 = arith.mulf %9, %7 : vector<2x128xf32>
    %11 = math.exp %10 : vector<2x128xf32>
    %12 = arith.mulf %8, %11 : vector<2x128xf32>
    %13 = arith.addf %6, %12 : vector<2x128xf32>
    %14 = arith.truncf %13 : vector<2x128xf32> to vector<2x128xbf16>
    %c0_8 = arith.constant 0 : index
    %c0_9 = arith.constant 0 : index
    %15 = vector.load %arg4[%c0_8, %c0_9] : memref<128x768xbf16, #tpu.memory_space<vmem>>, vector<128x768xbf16>
    %cst_10 = arith.constant dense<0.000000e+00> : vector<2x768xf32>
    %16 = tpu.matmul %14, %15, %cst_10 {dimension_numbers = #tpu.dot_dimension_numbers<[1], [0], [0], [1], [0, 0, 1, 1], [], []>} : vector<2x128xbf16>, vector<128x768xbf16>, vector<2x768xf32> -> vector<2x768xf32>
    %c0_11 = arith.constant 0 : index
    %c0_12 = arith.constant 0 : index
    %17 = vector.load %arg5[%c0_11, %c0_12] : memref<1x768xf32, #tpu.memory_space<vmem>>, vector<1x768xf32>
    %18 = vector.broadcast %17 : vector<1x768xf32> to vector<2x768xf32>
    %19 = arith.addf %16, %18 : vector<2x768xf32>
    %c0_13 = arith.constant 0 : index
    %c0_14 = arith.constant 0 : index
    %20 = vector.load %arg6[%c0_13, %c0_14] : memref<2x256xf32, #tpu.memory_space<vmem>>, vector<2x256xf32>
    tpu.vector_store %arg6[%c0_13, %c0_14], %5 {strides = array<i32>} : memref<2x256xf32, #tpu.memory_space<vmem>>, vector<2x256xf32>,
    %21 = arith.truncf %19 : vector<2x768xf32> to vector<2x768xbf16>
    %c0_15 = arith.constant 0 : index
    %c0_16 = arith.constant 0 : index
    %22 = vector.load %arg7[%c0_15, %c0_16] : memref<2x768xbf16, #tpu.memory_space<vmem>>, vector<2x768xbf16>
    tpu.vector_store %arg7[%c0_15, %c0_16], %21 {strides = array<i32>} : memref<2x768xbf16, #tpu.memory_space<vmem>>, vector<2x768xbf16>,
    return
  }
}

module attributes {stable_mosaic.version = 11 : i64} {
  func.func @_matmul_bias_act_kernel(%arg0: memref<48x1152xbf16, #tpu.memory_space<vmem>>, %arg1: memref<1152x64xbf16, #tpu.memory_space<vmem>>, %arg2: memref<1x64xf32, #tpu.memory_space<vmem>>, %arg3: memref<48x64xbf16, #tpu.memory_space<vmem>>) attributes {dimension_semantics = [], scalar_prefetch = 0 : i64, scratch_operands = 0 : i64, tpu.core_type = #tpu.core_type<tc>} {
    %c0 = arith.constant 0 : index
    %c0_0 = arith.constant 0 : index
    %0 = vector.load %arg0[%c0, %c0_0] : memref<48x1152xbf16, #tpu.memory_space<vmem>>, vector<48x1152xbf16>
    %c0_1 = arith.constant 0 : index
    %c0_2 = arith.constant 0 : index
    %1 = vector.load %arg1[%c0_1, %c0_2] : memref<1152x64xbf16, #tpu.memory_space<vmem>>, vector<1152x64xbf16>
    %cst = arith.constant dense<0.000000e+00> : vector<48x64xf32>
    %2 = tpu.matmul %0, %1, %cst {dimension_numbers = #tpu.dot_dimension_numbers<[1], [0], [0], [1], [0, 0, 1, 1], [], []>} : vector<48x1152xbf16>, vector<1152x64xbf16>, vector<48x64xf32> -> vector<48x64xf32>
    %c0_3 = arith.constant 0 : index
    %c0_4 = arith.constant 0 : index
    %3 = vector.load %arg2[%c0_3, %c0_4] : memref<1x64xf32, #tpu.memory_space<vmem>>, vector<1x64xf32>
    %4 = vector.broadcast %3 : vector<1x64xf32> to vector<48x64xf32>
    %5 = arith.addf %2, %4 : vector<48x64xf32>
    %cst_5 = arith.constant 0.000000e+00 : f32
    %6 = vector.broadcast %cst_5 : f32 to vector<48x64xf32>
    %7 = arith.maximumf %5, %6 : vector<48x64xf32>
    %8 = arith.truncf %7 : vector<48x64xf32> to vector<48x64xbf16>
    %c0_6 = arith.constant 0 : index
    %c0_7 = arith.constant 0 : index
    %9 = vector.load %arg3[%c0_6, %c0_7] : memref<48x64xbf16, #tpu.memory_space<vmem>>, vector<48x64xbf16>
    tpu.vector_store %arg3[%c0_6, %c0_7], %8 {strides = array<i32>} : memref<48x64xbf16, #tpu.memory_space<vmem>>, vector<48x64xbf16>,
    return
  }
}

module attributes {stable_mosaic.version = 11 : i64} {
  func.func @_matmul_bias_act_kernel(%arg0: memref<192x576xbf16, #tpu.memory_space<vmem>>, %arg1: memref<576x32xbf16, #tpu.memory_space<vmem>>, %arg2: memref<1x32xf32, #tpu.memory_space<vmem>>, %arg3: memref<192x32xbf16, #tpu.memory_space<vmem>>) attributes {dimension_semantics = [], scalar_prefetch = 0 : i64, scratch_operands = 0 : i64, tpu.core_type = #tpu.core_type<tc>} {
    %c0 = arith.constant 0 : index
    %c0_0 = arith.constant 0 : index
    %0 = vector.load %arg0[%c0, %c0_0] : memref<192x576xbf16, #tpu.memory_space<vmem>>, vector<192x576xbf16>
    %c0_1 = arith.constant 0 : index
    %c0_2 = arith.constant 0 : index
    %1 = vector.load %arg1[%c0_1, %c0_2] : memref<576x32xbf16, #tpu.memory_space<vmem>>, vector<576x32xbf16>
    %cst = arith.constant dense<0.000000e+00> : vector<192x32xf32>
    %2 = tpu.matmul %0, %1, %cst {dimension_numbers = #tpu.dot_dimension_numbers<[1], [0], [0], [1], [0, 0, 1, 1], [], []>} : vector<192x576xbf16>, vector<576x32xbf16>, vector<192x32xf32> -> vector<192x32xf32>
    %c0_3 = arith.constant 0 : index
    %c0_4 = arith.constant 0 : index
    %3 = vector.load %arg2[%c0_3, %c0_4] : memref<1x32xf32, #tpu.memory_space<vmem>>, vector<1x32xf32>
    %4 = vector.broadcast %3 : vector<1x32xf32> to vector<192x32xf32>
    %5 = arith.addf %2, %4 : vector<192x32xf32>
    %cst_5 = arith.constant 0.000000e+00 : f32
    %6 = vector.broadcast %cst_5 : f32 to vector<192x32xf32>
    %7 = arith.maximumf %5, %6 : vector<192x32xf32>
    %8 = arith.truncf %7 : vector<192x32xf32> to vector<192x32xbf16>
    %c0_6 = arith.constant 0 : index
    %c0_7 = arith.constant 0 : index
    %9 = vector.load %arg3[%c0_6, %c0_7] : memref<192x32xbf16, #tpu.memory_space<vmem>>, vector<192x32xbf16>
    tpu.vector_store %arg3[%c0_6, %c0_7], %8 {strides = array<i32>} : memref<192x32xbf16, #tpu.memory_space<vmem>>, vector<192x32xbf16>,
    return
  }
}

module attributes {stable_mosaic.version = 11 : i64} {
  func.func @_dec3_sigmoid_upsample_kernel(%arg0: memref<48x8192xbf16, #tpu.memory_space<vmem>>, %arg1: memref<8192x16xbf16, #tpu.memory_space<vmem>>, %arg2: memref<1x1xf32, #tpu.memory_space<vmem>>, %arg3: memref<16x20xbf16, #tpu.memory_space<vmem>>, %arg4: memref<28x24xbf16, #tpu.memory_space<vmem>>, %arg5: memref<2x28x20xf32, #tpu.memory_space<vmem>>) attributes {dimension_semantics = [], scalar_prefetch = 0 : i64, scratch_operands = 0 : i64, tpu.core_type = #tpu.core_type<tc>} {
    %c0 = arith.constant 0 : index
    %c0_0 = arith.constant 0 : index
    %0 = vector.load %arg0[%c0, %c0_0] : memref<48x8192xbf16, #tpu.memory_space<vmem>>, vector<48x8192xbf16>
    %c0_1 = arith.constant 0 : index
    %c0_2 = arith.constant 0 : index
    %1 = vector.load %arg1[%c0_1, %c0_2] : memref<8192x16xbf16, #tpu.memory_space<vmem>>, vector<8192x16xbf16>
    %cst = arith.constant dense<0.000000e+00> : vector<48x16xf32>
    %2 = tpu.matmul %0, %1, %cst {dimension_numbers = #tpu.dot_dimension_numbers<[1], [0], [0], [1], [0, 0, 1, 1], [], []>} : vector<48x8192xbf16>, vector<8192x16xbf16>, vector<48x16xf32> -> vector<48x16xf32>
    %c0_3 = arith.constant 0 : index
    %c0_4 = arith.constant 0 : index
    %3 = vector.load %arg2[%c0_3, %c0_4] : memref<1x1xf32, #tpu.memory_space<vmem>>, vector<1x1xf32>
    %4 = vector.broadcast %3 : vector<1x1xf32> to vector<48x16xf32>
    %5 = arith.addf %2, %4 : vector<48x16xf32>
    %6 = arith.negf %5 : vector<48x16xf32>
    %7 = math.exp %6 : vector<48x16xf32>
    %cst_5 = arith.constant 1.000000e+00 : f32
    %8 = vector.broadcast %cst_5 : f32 to vector<48x16xf32>
    %9 = arith.addf %8, %7 : vector<48x16xf32>
    %10 = arith.divf %8, %9 : vector<48x16xf32>
    %11 = arith.truncf %10 : vector<48x16xf32> to vector<48x16xbf16>
    %c0_6 = arith.constant 0 : index
    %c0_7 = arith.constant 0 : index
    %12 = vector.load %arg3[%c0_6, %c0_7] : memref<16x20xbf16, #tpu.memory_space<vmem>>, vector<16x20xbf16>
    %cst_8 = arith.constant dense<0.000000e+00> : vector<48x20xf32>
    %13 = tpu.matmul %11, %12, %cst_8 {dimension_numbers = #tpu.dot_dimension_numbers<[1], [0], [0], [1], [0, 0, 1, 1], [], []>} : vector<48x16xbf16>, vector<16x20xbf16>, vector<48x20xf32> -> vector<48x20xf32>
    %14 = arith.truncf %13 : vector<48x20xf32> to vector<48x20xbf16>
    %15 = vector.shape_cast %14 : vector<48x20xbf16> to vector<2x24x20xbf16>
    %c0_9 = arith.constant 0 : index
    %c0_10 = arith.constant 0 : index
    %16 = vector.load %arg4[%c0_9, %c0_10] : memref<28x24xbf16, #tpu.memory_space<vmem>>, vector<28x24xbf16>
    %17 = vector.shape_cast %16 : vector<28x24xbf16> to vector<1x28x24xbf16>
    %18 = vector.broadcast %17 : vector<1x28x24xbf16> to vector<2x28x24xbf16>
    "tpu.trace_start"() <{level = 10 : i32, message = "nhk,nkw->nhw"}> : () -> ()
    %cst_11 = arith.constant dense<0.000000e+00> : vector<2x28x20xf32>
    %19 = tpu.matmul %18, %15, %cst_11 {dimension_numbers = #tpu.dot_dimension_numbers<[2], [1], [1], [2], [0, 0, 0, 1, 1, 2], [0], [0]>} : vector<2x28x24xbf16>, vector<2x24x20xbf16>, vector<2x28x20xf32> -> vector<2x28x20xf32>
    "tpu.trace_stop"() : () -> ()
    %c0_12 = arith.constant 0 : index
    %c0_13 = arith.constant 0 : index
    %c0_14 = arith.constant 0 : index
    %20 = vector.load %arg5[%c0_12, %c0_13, %c0_14] : memref<2x28x20xf32, #tpu.memory_space<vmem>>, vector<2x28x20xf32>
    tpu.vector_store %arg5[%c0_12, %c0_13, %c0_14], %19 {strides = array<i32>} : memref<2x28x20xf32, #tpu.memory_space<vmem>>, vector<2x28x20xf32>,
    return
  }
}

</mosaic_0001>

<llo_original>
// kernel: vae_forward.7
$region0: #{vae_forward.7}
  #allocation0 [shape = 'u32[]', space=smem, size = 0x4, offset = 0x4, fixed_abs, tag = 'smem constant byte address 0x4 - core index']
  #allocation1 [shape = 'u32[144,128]{1,0:T(1,128)}', space=vmem, size = 0x12000, scoped, tag = 'internal scratch']
  %s0 = inlined_call_operand.vmem [shape: bf16[1120,9], index: 0, kind: input, shape index: {}]
  %s1 = inlined_call_operand.hbm [shape: bf16[9,32], index: 1, kind: input, shape index: {}]
  %s2 = inlined_call_operand.hbm [shape: f32[1,32], index: 2, kind: input, shape index: {}]
  %s3 = inlined_call_operand.vmem [shape: bf16[280,32], index: 3, kind: output, shape index: {}]
  %s4 = sld [smem:[#allocation0]]
  $region30: #{vae_forward.7} parent=0
    _
  %s6 = ssub.s32 1, %s4
  %s7 = scalar_select 0, %s6, %s4
  $region1: #{vae_forward.7} parent=0
    #allocation2 [shape = 'u8[4096]{0}', space=vmem, size = 0x1000, scoped, tag = 'input window, operand 1, single buffered']
    #allocation3 [shape = 's32[1]{0}', space=sflag, size = 0x4, scoped, tag = 'scoped memory for vae_forward.7']
    #allocation4 [shape = 'u8[512]{0}', space=vmem, size = 0x400, scoped, tag = 'input window, operand 2, single buffered']
    #allocation5 [shape = 's32[1]{0}', space=sflag, size = 0x4, scoped, tag = 'scoped memory for vae_forward.7']
    %8 = vsyncpa [#allocation3], 0
    %9 = vsyncpa [#allocation5], 0
    // Predicated region
    $region2: #{vae_forward.7} parent=1 // pred_check
      _
    $region3: #{vae_forward.7} parent=1 // pred_check_branch
      %11 = sbr.rel (0) target = $region5
    $region4: #{vae_forward.7} parent=1 // pred_region
      _
    $region5: #{vae_forward.7} parent=1 // pred_fallthru
      _
    // Predicated region
    $region6: #{vae_forward.7} parent=1 // pred_check
      _
    $region7: #{vae_forward.7} parent=1 // pred_check_branch
      %13 = sbr.rel (0) target = $region9
    $region8: #{vae_forward.7} parent=1 // pred_region
      %s15 = ssub.s32 128, 128
      %16 = vsyncadd [#allocation3], %s15
      %s17 = sshll.u32 [#allocation2], 4
      %s18 = int_to_ptr.vmem [resolvable:$true] %s17
      %23 = dma.hbm_to_vmem [thread:$0]  %s1, 128, %s18, [#allocation3], 64, 64, 4
    $region9: #{vae_forward.7} parent=1 // pred_fallthru
      _
    // Predicated region
    $region10: #{vae_forward.7} parent=1 // pred_check
      _
    $region11: #{vae_forward.7} parent=1 // pred_check_branch
      %25 = sbr.rel (0) target = $region13
    $region12: #{vae_forward.7} parent=1 // pred_region
      %s27 = ssub.s32 16, 16
      %28 = vsyncadd [#allocation5], %s27
      %s30 = sshll.u32 [#allocation4], 4
      %s31 = int_to_ptr.vmem [resolvable:$true] %s30
      %33 = dma.hbm_to_vmem [thread:$0]  %s2, 16, %s31, [#allocation5]
    $region13: #{vae_forward.7} parent=1 // pred_fallthru
      _
    // Predicated region
    $region14: #{vae_forward.7} parent=1 // pred_check
      _
    $region15: #{vae_forward.7} parent=1 // pred_check_branch
      %35 = sbr.rel (0) target = $region17
    $region16: #{vae_forward.7} parent=1 // pred_region
      %36 = dma.done [#allocation3], 128
    $region17: #{vae_forward.7} parent=1 // pred_fallthru
      _
    // Predicated region
    $region18: #{vae_forward.7} parent=1 // pred_check
      _
    $region19: #{vae_forward.7} parent=1 // pred_check_branch
      %38 = sbr.rel (0) target = $region21
    $region20: #{vae_forward.7} parent=1 // pred_region
      %39 = dma.done [#allocation5], 16
    $region21: #{vae_forward.7} parent=1 // pred_fallthru
      _
    %v41 = vld [vmem:[%s0] sm:$0xf]
    %v42 = vld [vmem:[%s0 + $0x4] sm:$0xf]
    %v43 = vld [vmem:[%s0 + $0x8] sm:$0xf]
    %v44 = vld [vmem:[%s0 + $0xc] sm:$0xf]
    %v45 = vld [vmem:[%s0 + $0x10] sm:$0xf]
    %v46 = vld [vmem:[%s0 + $0x14] sm:$0xf]
    %v47 = vld [vmem:[%s0 + $0x18] sm:$0xf]
    %v48 = vld [vmem:[%s0 + $0x1c] sm:$0xf]
    %v49 = vld [vmem:[%s0 + $0x20] sm:$0xf]
    %v50 = vld [vmem:[%s0 + $0x24] sm:$0xf]
    %v51 = vld [vmem:[%s0 + $0x28] sm:$0xf]
    %v52 = vld [vmem:[%s0 + $0x2c] sm:$0xf]
    %v53 = vld [vmem:[%s0 + $0x30] sm:$0xf]
    %v54 = vld [vmem:[%s0 + $0x34] sm:$0xf]
    %v55 = vld [vmem:[%s0 + $0x38] sm:$0xf]
    %v56 = vld [vmem:[%s0 + $0x3c] sm:$0xf]
    %v57 = vld [vmem:[%s0 + $0x40] sm:$0xf]
    %v58 = vld [vmem:[%s0 + $0x44] sm:$0xf]
    %v59 = vld [vmem:[%s0 + $0x48] sm:$0xf]
    %v60 = vld [vmem:[%s0 + $0x4c] sm:$0xf]
    %v61 = vld [vmem:[%s0 + $0x50] sm:$0xf]
    %v62 = vld [vmem:[%s0 + $0x54] sm:$0xf]
    %v63 = vld [vmem:[%s0 + $0x58] sm:$0xf]
    %v64 = vld [vmem:[%s0 + $0x5c] sm:$0xf]
    %v65 = vld [vmem:[%s0 + $0x60] sm:$0xf]
    %v66 = vld [vmem:[%s0 + $0x64] sm:$0xf]
    %v67 = vld [vmem:[%s0 + $0x68] sm:$0xf]
    %v68 = vld [vmem:[%s0 + $0x6c] sm:$0xf]
    %v69 = vld [vmem:[%s0 + $0x70] sm:$0xf]
    %v70 = vld [vmem:[%s0 + $0x74] sm:$0xf]
    %v71 = vld [vmem:[%s0 + $0x78] sm:$0xf]
    %v72 = vld [vmem:[%s0 + $0x7c] sm:$0xf]
    %v73 = vld [vmem:[%s0 + $0x80] sm:$0xf]
    %v74 = vld [vmem:[%s0 + $0x84] sm:$0xf]
    %v75 = vld [vmem:[%s0 + $0x88] sm:$0xf]
    %v76 = vld [vmem:[%s0 + $0x8c] sm:$0xf]
    %v77 = vld [vmem:[%s0 + $0x90] sm:$0xf]
    %v78 = vld [vmem:[%s0 + $0x94] sm:$0xf]
    %v79 = vld [vmem:[%s0 + $0x98] sm:$0xf]
    %v80 = vld [vmem:[%s0 + $0x9c] sm:$0xf]
    %v81 = vld [vmem:[%s0 + $0xa0] sm:$0xf]
    %v82 = vld [vmem:[%s0 + $0xa4] sm:$0xf]
    %v83 = vld [vmem:[%s0 + $0xa8] sm:$0xf]
    %v84 = vld [vmem:[%s0 + $0xac] sm:$0xf]
    %v85 = vld [vmem:[%s0 + $0xb0] sm:$0xf]
    %v86 = vld [vmem:[%s0 + $0xb4] sm:$0xf]
    %v87 = vld [vmem:[%s0 + $0xb8] sm:$0xf]
    %v88 = vld [vmem:[%s0 + $0xbc] sm:$0xf]
    %v89 = vld [vmem:[%s0 + $0xc0] sm:$0xf]
    %v90 = vld [vmem:[%s0 + $0xc4] sm:$0xf]
    %v91 = vld [vmem:[%s0 + $0xc8] sm:$0xf]
    %v92 = vld [vmem:[%s0 + $0xcc] sm:$0xf]
    %v93 = vld [vmem:[%s0 + $0xd0] sm:$0xf]
    %v94 = vld [vmem:[%s0 + $0xd4] sm:$0xf]
    %v95 = vld [vmem:[%s0 + $0xd8] sm:$0xf]
    %v96 = vld [vmem:[%s0 + $0xdc] sm:$0xf]
    %v97 = vld [vmem:[%s0 + $0xe0] sm:$0xf]
    %v98 = vld [vmem:[%s0 + $0xe4] sm:$0xf]
    %v99 = vld [vmem:[%s0 + $0xe8] sm:$0xf]
    %v100 = vld [vmem:[%s0 + $0xec] sm:$0xf]
    %v101 = vld [vmem:[%s0 + $0xf0] sm:$0xf]
    %v102 = vld [vmem:[%s0 + $0xf4] sm:$0xf]
    %v103 = vld [vmem:[%s0 + $0xf8] sm:$0xf]
    %v104 = vld [vmem:[%s0 + $0xfc] sm:$0xf]
    %v105 = vld [vmem:[%s0 + $0x100] sm:$0xf]
    %v106 = vld [vmem:[%s0 + $0x104] sm:$0xf]
    %v107 = vld [vmem:[%s0 + $0x108] sm:$0xf]
    %v108 = vld [vmem:[%s0 + $0x10c] sm:$0xf]
    %v109 = vld [vmem:[%s0 + $0x110] sm:$0xf]
    %v110 = vld [vmem:[%s0 + $0x114] sm:$0xf]
    %v111 = vld [vmem:[%s0 + $0x118] sm:$0xf]
    %v112 = vld [vmem:[%s0 + $0x11c] sm:$0xf]
    %v113 = vld [vmem:[%s0 + $0x120] sm:$0xf]
    %v114 = vld [vmem:[%s0 + $0x124] sm:$0xf]
    %v115 = vld [vmem:[%s0 + $0x128] sm:$0xf]
    %v116 = vld [vmem:[%s0 + $0x12c] sm:$0xf]
    %v117 = vld [vmem:[%s0 + $0x130] sm:$0xf]
    %v118 = vld [vmem:[%s0 + $0x134] sm:$0xf]
    %v119 = vld [vmem:[%s0 + $0x138] sm:$0xf]
    %v120 = vld [vmem:[%s0 + $0x13c] sm:$0xf]
    %v121 = vld [vmem:[%s0 + $0x140] sm:$0xf]
    %v122 = vld [vmem:[%s0 + $0x144] sm:$0xf]
    %v123 = vld [vmem:[%s0 + $0x148] sm:$0xf]
    %v124 = vld [vmem:[%s0 + $0x14c] sm:$0xf]
    %v125 = vld [vmem:[%s0 + $0x150] sm:$0xf]
    %v126 = vld [vmem:[%s0 + $0x154] sm:$0xf]
    %v127 = vld [vmem:[%s0 + $0x158] sm:$0xf]
    %v128 = vld [vmem:[%s0 + $0x15c] sm:$0xf]
    %v129 = vld [vmem:[%s0 + $0x160] sm:$0xf]
    %v130 = vld [vmem:[%s0 + $0x164] sm:$0xf]
    %v131 = vld [vmem:[%s0 + $0x168] sm:$0xf]
    %v132 = vld [vmem:[%s0 + $0x16c] sm:$0xf]
    %v133 = vld [vmem:[%s0 + $0x170] sm:$0xf]
    %v134 = vld [vmem:[%s0 + $0x174] sm:$0xf]
    %v135 = vld [vmem:[%s0 + $0x178] sm:$0xf]
    %v136 = vld [vmem:[%s0 + $0x17c] sm:$0xf]
    %v137 = vld [vmem:[%s0 + $0x180] sm:$0xf]
    %v138 = vld [vmem:[%s0 + $0x184] sm:$0xf]
    %v139 = vld [vmem:[%s0 + $0x188] sm:$0xf]
    %v140 = vld [vmem:[%s0 + $0x18c] sm:$0xf]
    %v141 = vld [vmem:[%s0 + $0x190] sm:$0xf]
    %v142 = vld [vmem:[%s0 + $0x194] sm:$0xf]
    %v143 = vld [vmem:[%s0 + $0x198] sm:$0xf]
    %v144 = vld [vmem:[%s0 + $0x19c] sm:$0xf]
    %v145 = vld [vmem:[%s0 + $0x1a0] sm:$0xf]
    %v146 = vld [vmem:[%s0 + $0x1a4] sm:$0xf]
    %v147 = vld [vmem:[%s0 + $0x1a8] sm:$0xf]
    %v148 = vld [vmem:[%s0 + $0x1ac] sm:$0xf]
    %v149 = vld [vmem:[%s0 + $0x1b0] sm:$0xf]
    %v150 = vld [vmem:[%s0 + $0x1b4] sm:$0xf]
    %v151 = vld [vmem:[%s0 + $0x1b8] sm:$0xf]
    %v152 = vld [vmem:[%s0 + $0x1bc] sm:$0xf]
    %v153 = vld [vmem:[%s0 + $0x1c0] sm:$0xf]
    %v154 = vld [vmem:[%s0 + $0x1c4] sm:$0xf]
    %v155 = vld [vmem:[%s0 + $0x1c8] sm:$0xf]
    %v156 = vld [vmem:[%s0 + $0x1cc] sm:$0xf]
    %v157 = vld [vmem:[%s0 + $0x1d0] sm:$0xf]
    %v158 = vld [vmem:[%s0 + $0x1d4] sm:$0xf]
    %v159 = vld [vmem:[%s0 + $0x1d8] sm:$0xf]
    %v160 = vld [vmem:[%s0 + $0x1dc] sm:$0xf]
    %v161 = vld [vmem:[%s0 + $0x1e0] sm:$0xf]
    %v162 = vld [vmem:[%s0 + $0x1e4] sm:$0xf]
    %v163 = vld [vmem:[%s0 + $0x1e8] sm:$0xf]
    %v164 = vld [vmem:[%s0 + $0x1ec] sm:$0xf]
    %v165 = vld [vmem:[%s0 + $0x1f0] sm:$0xf]
    %v166 = vld [vmem:[%s0 + $0x1f4] sm:$0xf]
    %v167 = vld [vmem:[%s0 + $0x1f8] sm:$0xf]
    %v168 = vld [vmem:[%s0 + $0x1fc] sm:$0xf]
    %v169 = vld [vmem:[%s0 + $0x200] sm:$0xf]
    %v170 = vld [vmem:[%s0 + $0x204] sm:$0xf]
    %v171 = vld [vmem:[%s0 + $0x208] sm:$0xf]
    %v172 = vld [vmem:[%s0 + $0x20c] sm:$0xf]
    %v173 = vld [vmem:[%s0 + $0x210] sm:$0xf]
    %v174 = vld [vmem:[%s0 + $0x214] sm:$0xf]
    %v175 = vld [vmem:[%s0 + $0x218] sm:$0xf]
    %v176 = vld [vmem:[%s0 + $0x21c] sm:$0xf]
    %v177 = vld [vmem:[%s0 + $0x220] sm:$0xf]
    %v178 = vld [vmem:[%s0 + $0x224] sm:$0xf]
    %v179 = vld [vmem:[%s0 + $0x228] sm:$0xf]
    %v180 = vld [vmem:[%s0 + $0x22c] sm:$0xf]
    %v181 = vld [vmem:[#allocation2] sm:$0xf]
    %v182 = vld [vmem:[#allocation2 + $0x4] sm:$0x1]
    %v323 = vunpack.c.l.b16 %v41
    %v324 = vunpack.c.l.b16 %v42
    %v325 = vunpack.c.l.b16 %v43
    %v326 = vunpack.c.l.b16 %v44
    %v327 = vunpack.c.l.b16 %v45
    %v328 = vunpack.c.l.b16 %v46
    %v329 = vunpack.c.l.b16 %v47
    %v330 = vunpack.c.l.b16 %v48
    %v331 = vunpack.c.l.b16 %v49
    %v332 = vunpack.c.l.b16 %v50
    %v333 = vunpack.c.l.b16 %v51
    %v334 = vunpack.c.l.b16 %v52
    %v335 = vunpack.c.l.b16 %v53
    %v336 = vunpack.c.l.b16 %v54
    %v337 = vunpack.c.l.b16 %v55
    %v338 = vunpack.c.l.b16 %v56
    %v339 = vunpack.c.l.b16 %v57
    %v340 = vunpack.c.l.b16 %v58
    %v341 = vunpack.c.l.b16 %v59
    %v342 = vunpack.c.l.b16 %v60
    %v343 = vunpack.c.l.b16 %v61
    %v344 = vunpack.c.l.b16 %v62
    %v345 = vunpack.c.l.b16 %v63
    %v346 = vunpack.c.l.b16 %v64
    %v347 = vunpack.c.l.b16 %v65
    %v348 = vunpack.c.l.b16 %v66
    %v349 = vunpack.c.l.b16 %v67
    %v350 = vunpack.c.l.b16 %v68
    %v351 = vunpack.c.l.b16 %v69
    %v352 = vunpack.c.l.b16 %v70
    %v353 = vunpack.c.l.b16 %v71
    %v354 = vunpack.c.l.b16 %v72
    %v355 = vunpack.c.l.b16 %v73
    %v356 = vunpack.c.l.b16 %v74
    %v357 = vunpack.c.l.b16 %v75
    %v358 = vunpack.c.l.b16 %v76
    %v359 = vunpack.c.l.b16 %v77
    %v360 = vunpack.c.l.b16 %v78
    %v361 = vunpack.c.l.b16 %v79
    %v362 = vunpack.c.l.b16 %v80
    %v363 = vunpack.c.l.b16 %v81
    %v364 = vunpack.c.l.b16 %v82
    %v365 = vunpack.c.l.b16 %v83
    %v366 = vunpack.c.l.b16 %v84
    %v367 = vunpack.c.l.b16 %v85
    %v368 = vunpack.c.l.b16 %v86
    %v369 = vunpack.c.l.b16 %v87
    %v370 = vunpack.c.l.b16 %v88
    %v371 = vunpack.c.l.b16 %v89
    %v372 = vunpack.c.l.b16 %v90
    %v373 = vunpack.c.l.b16 %v91
    %v374 = vunpack.c.l.b16 %v92
    %v375 = vunpack.c.l.b16 %v93
    %v376 = vunpack.c.l.b16 %v94
    %v377 = vunpack.c.l.b16 %v95
    %v378 = vunpack.c.l.b16 %v96
    %v379 = vunpack.c.l.b16 %v97
    %v380 = vunpack.c.l.b16 %v98
    %v381 = vunpack.c.l.b16 %v99
    %v382 = vunpack.c.l.b16 %v100
    %v383 = vunpack.c.l.b16 %v101
    %v384 = vunpack.c.l.b16 %v102
    %v385 = vunpack.c.l.b16 %v103
    %v386 = vunpack.c.l.b16 %v104
    %v387 = vunpack.c.l.b16 %v105
    %v388 = vunpack.c.l.b16 %v106
    %v389 = vunpack.c.l.b16 %v107
    %v390 = vunpack.c.l.b16 %v108
    %v391 = vunpack.c.l.b16 %v109
    %v392 = vunpack.c.l.b16 %v110
    %v393 = vunpack.c.l.b16 %v111
    %v394 = vunpack.c.l.b16 %v112
    %v395 = vunpack.c.l.b16 %v113
    %v396 = vunpack.c.l.b16 %v114
    %v397 = vunpack.c.l.b16 %v115
    %v398 = vunpack.c.l.b16 %v116
    %v399 = vunpack.c.l.b16 %v117
    %v400 = vunpack.c.l.b16 %v118
    %v401 = vunpack.c.l.b16 %v119
    %v402 = vunpack.c.l.b16 %v120
    %v403 = vunpack.c.l.b16 %v121
    %v404 = vunpack.c.l.b16 %v122
    %v405 = vunpack.c.l.b16 %v123
    %v406 = vunpack.c.l.b16 %v124
    %v407 = vunpack.c.l.b16 %v125
    %v408 = vunpack.c.l.b16 %v126
    %v409 = vunpack.c.l.b16 %v127
    %v410 = vunpack.c.l.b16 %v128
    %v411 = vunpack.c.l.b16 %v129
    %v412 = vunpack.c.l.b16 %v130
    %v413 = vunpack.c.l.b16 %v131
    %v414 = vunpack.c.l.b16 %v132
    %v415 = vunpack.c.l.b16 %v133
    %v416 = vunpack.c.l.b16 %v134
    %v417 = vunpack.c.l.b16 %v135
    %v418 = vunpack.c.l.b16 %v136
    %v419 = vunpack.c.l.b16 %v137
    %v420 = vunpack.c.l.b16 %v138
    %v421 = vunpack.c.l.b16 %v139
    %v422 = vunpack.c.l.b16 %v140
    %v423 = vunpack.c.l.b16 %v141
    %v424 = vunpack.c.l.b16 %v142
    %v425 = vunpack.c.l.b16 %v143
    %v426 = vunpack.c.l.b16 %v144
    %v427 = vunpack.c.l.b16 %v145
    %v428 = vunpack.c.l.b16 %v146
    %v429 = vunpack.c.l.b16 %v147
    %v430 = vunpack.c.l.b16 %v148
    %v431 = vunpack.c.l.b16 %v149
    %v432 = vunpack.c.l.b16 %v150
    %v433 = vunpack.c.l.b16 %v151
    %v434 = vunpack.c.l.b16 %v152
    %v435 = vunpack.c.l.b16 %v153
    %v436 = vunpack.c.l.b16 %v154
    %v437 = vunpack.c.l.b16 %v155
    %v438 = vunpack.c.l.b16 %v156
    %v439 = vunpack.c.l.b16 %v157
    %v440 = vunpack.c.l.b16 %v158
    %v441 = vunpack.c.l.b16 %v159
    %v442 = vunpack.c.l.b16 %v160
    %v443 = vunpack.c.l.b16 %v161
    %v444 = vunpack.c.l.b16 %v162
    %v445 = vunpack.c.l.b16 %v163
    %v446 = vunpack.c.l.b16 %v164
    %v447 = vunpack.c.l.b16 %v165
    %v448 = vunpack.c.l.b16 %v166
    %v449 = vunpack.c.l.b16 %v167
    %v450 = vunpack.c.l.b16 %v168
    %v451 = vunpack.c.l.b16 %v169
    %v452 = vunpack.c.l.b16 %v170
    %v453 = vunpack.c.l.b16 %v171
    %v454 = vunpack.c.l.b16 %v172
    %v455 = vunpack.c.l.b16 %v173
    %v456 = vunpack.c.l.b16 %v174
    %v457 = vunpack.c.l.b16 %v175
    %v458 = vunpack.c.l.b16 %v176
    %v459 = vunpack.c.l.b16 %v177
    %v460 = vunpack.c.l.b16 %v178
    %v461 = vunpack.c.l.b16 %v179
    %v462 = vunpack.c.l.b16 %v180
    %v463 = vpack.c.b16 %v324, %v323
    %v464 = vpack.c.b16 %v326, %v325
    %v465 = vpack.c.b16 %v328, %v327
    %v466 = vpack.c.b16 %v330, %v329
    %v467 = vpack.c.b16 %v332, %v331
    %v468 = vpack.c.b16 %v334, %v333
    %v469 = vpack.c.b16 %v336, %v335
    %v470 = vpack.c.b16 %v338, %v337
    %v471 = vpack.c.b16 %v340, %v339
    %v472 = vpack.c.b16 %v342, %v341
    %v473 = vpack.c.b16 %v344, %v343
    %v474 = vpack.c.b16 %v346, %v345
    %v475 = vpack.c.b16 %v348, %v347
    %v476 = vpack.c.b16 %v350, %v349
    %v477 = vpack.c.b16 %v352, %v351
    %v478 = vpack.c.b16 %v354, %v353
    %v479 = vpack.c.b16 %v356, %v355
    %v480 = vpack.c.b16 %v358, %v357
    %v481 = vpack.c.b16 %v360, %v359
    %v482 = vpack.c.b16 %v362, %v361
    %v483 = vpack.c.b16 %v364, %v363
    %v484 = vpack.c.b16 %v366, %v365
    %v485 = vpack.c.b16 %v368, %v367
    %v486 = vpack.c.b16 %v370, %v369
    %v487 = vpack.c.b16 %v372, %v371
    %v488 = vpack.c.b16 %v374, %v373
    %v489 = vpack.c.b16 %v376, %v375
    %v490 = vpack.c.b16 %v378, %v377
    %v491 = vpack.c.b16 %v380, %v379
    %v492 = vpack.c.b16 %v382, %v381
    %v493 = vpack.c.b16 %v384, %v383
    %v494 = vpack.c.b16 %v386, %v385
    %v495 = vpack.c.b16 %v388, %v387
    %v496 = vpack.c.b16 %v390, %v389
    %v497 = vpack.c.b16 %v392, %v391
    %v498 = vpack.c.b16 %v394, %v393
    %v499 = vpack.c.b16 %v396, %v395
    %v500 = vpack.c.b16 %v398, %v397
    %v501 = vpack.c.b16 %v400, %v399
    %v502 = vpack.c.b16 %v402, %v401
    %v503 = vpack.c.b16 %v404, %v403
    %v504 = vpack.c.b16 %v406, %v405
    %v505 = vpack.c.b16 %v408, %v407
    %v506 = vpack.c.b16 %v410, %v409
    %v507 = vpack.c.b16 %v412, %v411
    %v508 = vpack.c.b16 %v414, %v413
    %v509 = vpack.c.b16 %v416, %v415
    %v510 = vpack.c.b16 %v418, %v417
    %v511 = vpack.c.b16 %v420, %v419
    %v512 = vpack.c.b16 %v422, %v421
    %v513 = vpack.c.b16 %v424, %v423
    %v514 = vpack.c.b16 %v426, %v425
    %v515 = vpack.c.b16 %v428, %v427
    %v516 = vpack.c.b16 %v430, %v429
    %v517 = vpack.c.b16 %v432, %v431
    %v518 = vpack.c.b16 %v434, %v433
    %v519 = vpack.c.b16 %v436, %v435
    %v520 = vpack.c.b16 %v438, %v437
    %v521 = vpack.c.b16 %v440, %v439
    %v522 = vpack.c.b16 %v442, %v441
    %v523 = vpack.c.b16 %v444, %v443
    %v524 = vpack.c.b16 %v446, %v445
    %v525 = vpack.c.b16 %v448, %v447
    %v526 = vpack.c.b16 %v450, %v449
    %v527 = vpack.c.b16 %v452, %v451
    %v528 = vpack.c.b16 %v454, %v453
    %v529 = vpack.c.b16 %v456, %v455
    %v530 = vpack.c.b16 %v458, %v457
    %v531 = vpack.c.b16 %v460, %v459
    %v532 = vpack.c.b16 %v462, %v461
    %v535 = vunpack.c.l.b16 %v181
    %v536 = vunpack.c.l.b16 %v182
    %v537 = vpack.c.b16 %v536, %v535
    %vm538 = vcmask 72704
    %v540 = vsel %vm538, %v463, 0
    %v543 = vsel %vm538, %v464, 0
    %v546 = vsel %vm538, %v465, 0
    %v549 = vsel %vm538, %v466, 0
    %v552 = vsel %vm538, %v467, 0
    %v555 = vsel %vm538, %v468, 0
    %v558 = vsel %vm538, %v469, 0
    %v561 = vsel %vm538, %v470, 0
    %v564 = vsel %vm538, %v471, 0
    %v567 = vsel %vm538, %v472, 0
    %v570 = vsel %vm538, %v473, 0
    %v573 = vsel %vm538, %v474, 0
    %v576 = vsel %vm538, %v475, 0
    %v579 = vsel %vm538, %v476, 0
    %v582 = vsel %vm538, %v477, 0
    %v585 = vsel %vm538, %v478, 0
    %v588 = vsel %vm538, %v479, 0
    %v591 = vsel %vm538, %v480, 0
    %v594 = vsel %vm538, %v481, 0
    %v597 = vsel %vm538, %v482, 0
    %v600 = vsel %vm538, %v483, 0
    %v603 = vsel %vm538, %v484, 0
    %v606 = vsel %vm538, %v485, 0
    %v609 = vsel %vm538, %v486, 0
    %v612 = vsel %vm538, %v487, 0
    %v615 = vsel %vm538, %v488, 0
    %v618 = vsel %vm538, %v489, 0
    %v621 = vsel %vm538, %v490, 0
    %v624 = vsel %vm538, %v491, 0
    %v627 = vsel %vm538, %v492, 0
    %v630 = vsel %vm538, %v493, 0
    %v633 = vsel %vm538, %v494, 0
    %v636 = vsel %vm538, %v495, 0
    %v639 = vsel %vm538, %v496, 0
    %v642 = vsel %vm538, %v497, 0
    %v645 = vsel %vm538, %v498, 0
    %v648 = vsel %vm538, %v499, 0
    %v651 = vsel %vm538, %v500, 0
    %v654 = vsel %vm538, %v501, 0
    %v657 = vsel %vm538, %v502, 0
    %v660 = vsel %vm538, %v503, 0
    %v663 = vsel %vm538, %v504, 0
    %v666 = vsel %vm538, %v505, 0
    %v669 = vsel %vm538, %v506, 0
    %v672 = vsel %vm538, %v507, 0
    %v675 = vsel %vm538, %v508, 0
    %v678 = vsel %vm538, %v509, 0
    %v681 = vsel %vm538, %v510, 0
    %v684 = vsel %vm538, %v511, 0
    %v687 = vsel %vm538, %v512, 0
    %v690 = vsel %vm538, %v513, 0
    %v693 = vsel %vm538, %v514, 0
    %v696 = vsel %vm538, %v515, 0
    %v699 = vsel %vm538, %v516, 0
    %v702 = vsel %vm538, %v517, 0
    %v705 = vsel %vm538, %v518, 0
    %v708 = vsel %vm538, %v519, 0
    %v711 = vsel %vm538, %v520, 0
    %v714 = vsel %vm538, %v521, 0
    %v717 = vsel %vm538, %v522, 0
    %v720 = vsel %vm538, %v523, 0
    %v723 = vsel %vm538, %v524, 0
    %v726 = vsel %vm538, %v525, 0
    %v729 = vsel %vm538, %v526, 0
    %v732 = vsel %vm538, %v527, 0
    %v735 = vsel %vm538, %v528, 0
    %v738 = vsel %vm538, %v529, 0
    %v741 = vsel %vm538, %v530, 0
    %v744 = vsel %vm538, %v531, 0
    %v747 = vsel %vm538, %v532, 0
    %vm749 = vcmask 1043456
    %vm750 = vcmask 1044480
    %v751 = vsel %vm749, 4294967295, 65535
    %v752 = vsel %vm750, %v751, 0
    %v754 = vand.u32 %v537, %v752
    %756 = vmatprep.subr.bf16.mxu0 0
    %757 = vmatpush1.bf16.msra.mxu0 %v754
    %758 = vmatprep.subr.bf16.mxu0 0
    %759 = vmatpush1.bf16.msra.mxu0 0
    %760 = vmatprep.subr.bf16.mxu0 0
    %761 = vmatpush1.bf16.msra.mxu0 0
    %762 = vmatprep.subr.bf16.mxu0 0
    %763 = vmatpush1.bf16.msra.mxu0 0
    %764 = vmatprep.subr.bf16.mxu0 0
    %765 = vmatpush1.bf16.msra.mxu0 0
    %766 = vmatprep.subr.bf16.mxu0 0
    %767 = vmatpush1.bf16.msra.mxu0 0
    %768 = vmatprep.subr.bf16.mxu0 0
    %769 = vmatpush1.bf16.msra.mxu0 0
    %770 = vmatprep.subr.bf16.mxu0 0
    %771 = vmatpush1.bf16.msra.mxu0 0
    %772 = vmatprep.subr.bf16.mxu0 0
    %773 = vmatpush1.bf16.msra.mxu0 0
    %774 = vmatprep.subr.bf16.mxu0 0
    %775 = vmatpush1.bf16.msra.mxu0 0
    %776 = vmatprep.subr.bf16.mxu0 0
    %777 = vmatpush1.bf16.msra.mxu0 0
    %778 = vmatprep.subr.bf16.mxu0 0
    %779 = vmatpush1.bf16.msra.mxu0 0
    %780 = vmatprep.subr.bf16.mxu0 0
    %781 = vmatpush1.bf16.msra.mxu0 0
    %782 = vmatprep.subr.bf16.mxu0 0
    %783 = vmatpush1.bf16.msra.mxu0 0
    %784 = vmatprep.subr.bf16.mxu0 0
    %785 = vmatpush1.bf16.msra.mxu0 0
    %786 = vmatprep.subr.bf16.mxu0 0
    %787 = vmatpush1.bf16.msra.mxu0 0
    %788 = vmatprep.mubr.bf16.mxu0 0
    %789 = vmatmul.mubr.bf16.gmra.mrb[0].mxu0 %v540
    %v790 = vpop.f32.mrb[0].mxu0
    %v791 = vadd.f32 0.0, %v790
    %v792 = vpop.f32.mrb[0].mxu0
    %v793 = vpop.f32.mrb[0].mxu0
    %v794 = vadd.f32 0.0, %v793
    %v795 = vpop.f32.mrb[0].mxu0
    %796 = vmatprep.mubr.bf16.mxu0 0
    %797 = vmatmul.mubr.bf16.gmra.mrb[0].mxu0 %v543
    %v798 = vpop.f32.mrb[0].mxu0
    %v799 = vadd.f32 0.0, %v798
    %v800 = vpop.f32.mrb[0].mxu0
    %v801 = vpop.f32.mrb[0].mxu0
    %v802 = vadd.f32 0.0, %v801
    %v803 = vpop.f32.mrb[0].mxu0
    %804 = vmatprep.mubr.bf16.mxu0 0
    %805 = vmatmul.mubr.bf16.gmra.mrb[0].mxu0 %v546
    %v806 = vpop.f32.mrb[0].mxu0
    %v807 = vadd.f32 0.0, %v806
    %v808 = vpop.f32.mrb[0].mxu0
    %v809 = vpop.f32.mrb[0].mxu0
    %v810 = vadd.f32 0.0, %v809
    %v811 = vpop.f32.mrb[0].mxu0
    %812 = vmatprep.mubr.bf16.mxu0 0
    %813 = vmatmul.mubr.bf16.gmra.mrb[0].mxu0 %v549
    %v814 = vpop.f32.mrb[0].mxu0
    %v815 = vadd.f32 0.0, %v814
    %v816 = vpop.f32.mrb[0].mxu0
    %v817 = vpop.f32.mrb[0].mxu0
    %v818 = vadd.f32 0.0, %v817
    %v819 = vpop.f32.mrb[0].mxu0
    %820 = vmatprep.mubr.bf16.mxu0 0
    %821 = vmatmul.mubr.bf16.gmra.mrb[0].mxu0 %v552
    %v822 = vpop.f32.mrb[0].mxu0
    %v823 = vadd.f32 0.0, %v822
    %v824 = vpop.f32.mrb[0].mxu0
    %v825 = vpop.f32.mrb[0].mxu0
    %v826 = vadd.f32 0.0, %v825
    %v827 = vpop.f32.mrb[0].mxu0
    %828 = vmatprep.mubr.bf16.mxu0 0
    %829 = vmatmul.mubr.bf16.gmra.mrb[0].mxu0 %v555
    %v830 = vpop.f32.mrb[0].mxu0
    %v831 = vadd.f32 0.0, %v830
    %v832 = vpop.f32.mrb[0].mxu0
    %v833 = vpop.f32.mrb[0].mxu0
    %v834 = vadd.f32 0.0, %v833
    %v835 = vpop.f32.mrb[0].mxu0
    %836 = vmatprep.mubr.bf16.mxu0 0
    %837 = vmatmul.mubr.bf16.gmra.mrb[0].mxu0 %v558
    %v838 = vpop.f32.mrb[0].mxu0
    %v839 = vadd.f32 0.0, %v838
    %v840 = vpop.f32.mrb[0].mxu0
    %v841 = vpop.f32.mrb[0].mxu0
    %v842 = vadd.f32 0.0, %v841
    %v843 = vpop.f32.mrb[0].mxu0
    %844 = vmatprep.mubr.bf16.mxu0 0
    %845 = vmatmul.mubr.bf16.gmra.mrb[0].mxu0 %v561
    %v846 = vpop.f32.mrb[0].mxu0
    %v847 = vadd.f32 0.0, %v846
    %v848 = vpop.f32.mrb[0].mxu0
    %v849 = vpop.f32.mrb[0].mxu0
    %v850 = vadd.f32 0.0, %v849
    %v851 = vpop.f32.mrb[0].mxu0
    %852 = vmatprep.mubr.bf16.mxu0 0
    %853 = vmatmul.mubr.bf16.gmra.mrb[0].mxu0 %v564
    %v854 = vpop.f32.mrb[0].mxu0
    %v855 = vadd.f32 0.0, %v854
    %v856 = vpop.f32.mrb[0].mxu0
    %v857 = vpop.f32.mrb[0].mxu0
    %v858 = vadd.f32 0.0, %v857
    %v859 = vpop.f32.mrb[0].mxu0
    %860 = vmatprep.mubr.bf16.mxu0 0
    %861 = vmatmul.mubr.bf16.gmra.mrb[0].mxu0 %v567
    %v862 = vpop.f32.mrb[0].mxu0
    %v863 = vadd.f32 0.0, %v862
    %v864 = vpop.f32.mrb[0].mxu0
    %v865 = vpop.f32.mrb[0].mxu0
    %v866 = vadd.f32 0.0, %v865
    %v867 = vpop.f32.mrb[0].mxu0
    %868 = vmatprep.mubr.bf16.mxu0 0
    %869 = vmatmul.mubr.bf16.gmra.mrb[0].mxu0 %v570
    %v870 = vpop.f32.mrb[0].mxu0
    %v871 = vadd.f32 0.0, %v870
    %v872 = vpop.f32.mrb[0].mxu0
    %v873 = vpop.f32.mrb[0].mxu0
    %v874 = vadd.f32 0.0, %v873
    %v875 = vpop.f32.mrb[0].mxu0
    %876 = vmatprep.mubr.bf16.mxu0 0
    %877 = vmatmul.mubr.bf16.gmra.mrb[0].mxu0 %v573
    %v878 = vpop.f32.mrb[0].mxu0
    %v879 = vadd.f32 0.0, %v878
    %v880 = vpop.f32.mrb[0].mxu0
    %v881 = vpop.f32.mrb[0].mxu0
    %v882 = vadd.f32 0.0, %v881
    %v883 = vpop.f32.mrb[0].mxu0
    %884 = vmatprep.mubr.bf16.mxu0 0
    %885 = vmatmul.mubr.bf16.gmra.mrb[0].mxu0 %v576
    %v886 = vpop.f32.mrb[0].mxu0
    %v887 = vadd.f32 0.0, %v886
    %v888 = vpop.f32.mrb[0].mxu0
    %v889 = vpop.f32.mrb[0].mxu0
    %v890 = vadd.f32 0.0, %v889
    %v891 = vpop.f32.mrb[0].mxu0
    %892 = vmatprep.mubr.bf16.mxu0 0
    %893 = vmatmul.mubr.bf16.gmra.mrb[0].mxu0 %v579
    %v894 = vpop.f32.mrb[0].mxu0
    %v895 = vadd.f32 0.0, %v894
    %v896 = vpop.f32.mrb[0].mxu0
    %v897 = vpop.f32.mrb[0].mxu0
    %v898 = vadd.f32 0.0, %v897
    %v899 = vpop.f32.mrb[0].mxu0
    %900 = vmatprep.mubr.bf16.mxu0 0
    %901 = vmatmul.mubr.bf16.gmra.mrb[0].mxu0 %v582
    %v902 = vpop.f32.mrb[0].mxu0
    %v903 = vadd.f32 0.0, %v902
    %v904 = vpop.f32.mrb[0].mxu0
    %v905 = vpop.f32.mrb[0].mxu0
    %v906 = vadd.f32 0.0, %v905
    %v907 = vpop.f32.mrb[0].mxu0
    %908 = vmatprep.mubr.bf16.mxu0 0
    %909 = vmatmul.mubr.bf16.gmra.mrb[0].mxu0 %v585
    %v910 = vpop.f32.mrb[0].mxu0
    %v911 = vadd.f32 0.0, %v910
    %v912 = vpop.f32.mrb[0].mxu0
    %v913 = vpop.f32.mrb[0].mxu0
    %v914 = vadd.f32 0.0, %v913
    %v915 = vpop.f32.mrb[0].mxu0
    %916 = vmatprep.mubr.bf16.mxu0 0
    %917 = vmatmul.mubr.bf16.gmra.mrb[0].mxu0 %v588
    %v918 = vpop.f32.mrb[0].mxu0
    %v919 = vadd.f32 0.0, %v918
    %v920 = vpop.f32.mrb[0].mxu0
    %v921 = vpop.f32.mrb[0].mxu0
    %v922 = vadd.f32 0.0, %v921
    %v923 = vpop.f32.mrb[0].mxu0
    %924 = vmatprep.mubr.bf16.mxu0 0
    %925 = vmatmul.mubr.bf16.gmra.mrb[0].mxu0 %v591
    %v926 = vpop.f32.mrb[0].mxu0
    %v927 = vadd.f32 0.0, %v926
    %v928 = vpop.f32.mrb[0].mxu0
    %v929 = vpop.f32.mrb[0].mxu0
    %v930 = vadd.f32 0.0, %v929
    %v931 = vpop.f32.mrb[0].mxu0
    %932 = vmatprep.mubr.bf16.mxu0 0
    %933 = vmatmul.mubr.bf16.gmra.mrb[0].mxu0 %v594
    %v934 = vpop.f32.mrb[0].mxu0
    %v935 = vadd.f32 0.0, %v934
    %v936 = vpop.f32.mrb[0].mxu0
    %v937 = vpop.f32.mrb[0].mxu0
    %v938 = vadd.f32 0.0, %v937
    %v939 = vpop.f32.mrb[0].mxu0
    %940 = vmatprep.mubr.bf16.mxu0 0
    %941 = vmatmul.mubr.bf16.gmra.mrb[0].mxu0 %v597
    %v942 = vpop.f32.mrb[0].mxu0
    %v943 = vadd.f32 0.0, %v942
    %v944 = vpop.f32.mrb[0].mxu0
    %v945 = vpop.f32.mrb[0].mxu0
    %v946 = vadd.f32 0.0, %v945
    %v947 = vpop.f32.mrb[0].mxu0
    %948 = vmatprep.mubr.bf16.mxu0 0
    %949 = vmatmul.mubr.bf16.gmra.mrb[0].mxu0 %v600
    %v950 = vpop.f32.mrb[0].mxu0
    %v951 = vadd.f32 0.0, %v950
    %v952 = vpop.f32.mrb[0].mxu0
    %v953 = vpop.f32.mrb[0].mxu0
    %v954 = vadd.f32 0.0, %v953
    %v955 = vpop.f32.mrb[0].mxu0
    %956 = vmatprep.mubr.bf16.mxu0 0
    %957 = vmatmul.mubr.bf16.gmra.mrb[0].mxu0 %v603
    %v958 = vpop.f32.mrb[0].mxu0
    %v959 = vadd.f32 0.0, %v958
    %v960 = vpop.f32.mrb[0].mxu0
    %v961 = vpop.f32.mrb[0].mxu0
    %v962 = vadd.f32 0.0, %v961
    %v963 = vpop.f32.mrb[0].mxu0
    %964 = vmatprep.mubr.bf16.mxu0 0
    %965 = vmatmul.mubr.bf16.gmra.mrb[0].mxu0 %v606
    %v966 = vpop.f32.mrb[0].mxu0
    %v967 = vadd.f32 0.0, %v966
    %v968 = vpop.f32.mrb[0].mxu0
    %v969 = vpop.f32.mrb[0].mxu0
    %v970 = vadd.f32 0.0, %v969
    %v971 = vpop.f32.mrb[0].mxu0
    %972 = vmatprep.mubr.bf16.mxu0 0
    %973 = vmatmul.mubr.bf16.gmra.mrb[0].mxu0 %v609
    %v974 = vpop.f32.mrb[0].mxu0
    %v975 = vadd.f32 0.0, %v974
    %v976 = vpop.f32.mrb[0].mxu0
    %v977 = vpop.f32.mrb[0].mxu0
    %v978 = vadd.f32 0.0, %v977
    %v979 = vpop.f32.mrb[0].mxu0
    %980 = vmatprep.mubr.bf16.mxu0 0
    %981 = vmatmul.mubr.bf16.gmra.mrb[0].mxu0 %v612
    %v982 = vpop.f32.mrb[0].mxu0
    %v983 = vadd.f32 0.0, %v982
    %v984 = vpop.f32.mrb[0].mxu0
    %v985 = vpop.f32.mrb[0].mxu0
    %v986 = vadd.f32 0.0, %v985
    %v987 = vpop.f32.mrb[0].mxu0
    %988 = vmatprep.mubr.bf16.mxu0 0
    %989 = vmatmul.mubr.bf16.gmra.mrb[0].mxu0 %v615
    %v990 = vpop.f32.mrb[0].mxu0
    %v991 = vadd.f32 0.0, %v990
    %v992 = vpop.f32.mrb[0].mxu0
    %v993 = vpop.f32.mrb[0].mxu0
    %v994 = vadd.f32 0.0, %v993
    %v995 = vpop.f32.mrb[0].mxu0
    %996 = vmatprep.mubr.bf16.mxu0 0
    %997 = vmatmul.mubr.bf16.gmra.mrb[0].mxu0 %v618
    %v998 = vpop.f32.mrb[0].mxu0
    %v999 = vadd.f32 0.0, %v998
    %v1000 = vpop.f32.mrb[0].mxu0
    %v1001 = vpop.f32.mrb[0].mxu0
    %v1002 = vadd.f32 0.0, %v1001
    %v1003 = vpop.f32.mrb[0].mxu0
    %1004 = vmatprep.mubr.bf16.mxu0 0
    %1005 = vmatmul.mubr.bf16.gmra.mrb[0].mxu0 %v621
    %v1006 = vpop.f32.mrb[0].mxu0
    %v1007 = vadd.f32 0.0, %v1006
    %v1008 = vpop.f32.mrb[0].mxu0
    %v1009 = vpop.f32.mrb[0].mxu0
    %v1010 = vadd.f32 0.0, %v1009
    %v1011 = vpop.f32.mrb[0].mxu0
    %1012 = vmatprep.mubr.bf16.mxu0 0
    %1013 = vmatmul.mubr.bf16.gmra.mrb[0].mxu0 %v624
    %v1014 = vpop.f32.mrb[0].mxu0
    %v1015 = vadd.f32 0.0, %v1014
    %v1016 = vpop.f32.mrb[0].mxu0
    %v1017 = vpop.f32.mrb[0].mxu0
    %v1018 = vadd.f32 0.0, %v1017
    %v1019 = vpop.f32.mrb[0].mxu0
    %1020 = vmatprep.mubr.bf16.mxu0 0
    %1021 = vmatmul.mubr.bf16.gmra.mrb[0].mxu0 %v627
    %v1022 = vpop.f32.mrb[0].mxu0
    %v1023 = vadd.f32 0.0, %v1022
    %v1024 = vpop.f32.mrb[0].mxu0
    %v1025 = vpop.f32.mrb[0].mxu0
    %v1026 = vadd.f32 0.0, %v1025
    %v1027 = vpop.f32.mrb[0].mxu0
    %1028 = vmatprep.mubr.bf16.mxu0 0
    %1029 = vmatmul.mubr.bf16.gmra.mrb[0].mxu0 %v630
    %v1030 = vpop.f32.mrb[0].mxu0
    %v1031 = vadd.f32 0.0, %v1030
    %v1032 = vpop.f32.mrb[0].mxu0
    %v1033 = vpop.f32.mrb[0].mxu0
    %v1034 = vadd.f32 0.0, %v1033
    %v1035 = vpop.f32.mrb[0].mxu0
    %1036 = vmatprep.mubr.bf16.mxu0 0
    %1037 = vmatmul.mubr.bf16.gmra.mrb[0].mxu0 %v633
    %v1038 = vpop.f32.mrb[0].mxu0
    %v1039 = vadd.f32 0.0, %v1038
    %v1040 = vpop.f32.mrb[0].mxu0
    %v1041 = vpop.f32.mrb[0].mxu0
    %v1042 = vadd.f32 0.0, %v1041
    %v1043 = vpop.f32.mrb[0].mxu0
    %1044 = vmatprep.mubr.bf16.mxu0 0
    %1045 = vmatmul.mubr.bf16.gmra.mrb[0].mxu0 %v636
    %v1046 = vpop.f32.mrb[0].mxu0
    %v1047 = vadd.f32 0.0, %v1046
    %v1048 = vpop.f32.mrb[0].mxu0
    %v1049 = vpop.f32.mrb[0].mxu0
    %v1050 = vadd.f32 0.0, %v1049
    %v1051 = vpop.f32.mrb[0].mxu0
    %1052 = vmatprep.mubr.bf16.mxu0 0
    %1053 = vmatmul.mubr.bf16.gmra.mrb[0].mxu0 %v639
    %v1054 = vpop.f32.mrb[0].mxu0
    %v1055 = vadd.f32 0.0, %v1054
    %v1056 = vpop.f32.mrb[0].mxu0
    %v1057 = vpop.f32.mrb[0].mxu0
    %v1058 = vadd.f32 0.0, %v1057
    %v1059 = vpop.f32.mrb[0].mxu0
    %1060 = vmatprep.mubr.bf16.mxu0 0
    %1061 = vmatmul.mubr.bf16.gmra.mrb[0].mxu0 %v642
    %v1062 = vpop.f32.mrb[0].mxu0
    %v1063 = vadd.f32 0.0, %v1062
    %v1064 = vpop.f32.mrb[0].mxu0
    %v1065 = vpop.f32.mrb[0].mxu0
    %v1066 = vadd.f32 0.0, %v1065
    %v1067 = vpop.f32.mrb[0].mxu0
    %1068 = vmatprep.mubr.bf16.mxu0 0
    %1069 = vmatmul.mubr.bf16.gmra.mrb[0].mxu0 %v645
    %v1070 = vpop.f32.mrb[0].mxu0
    %v1071 = vadd.f32 0.0, %v1070
    %v1072 = vpop.f32.mrb[0].mxu0
    %v1073 = vpop.f32.mrb[0].mxu0
    %v1074 = vadd.f32 0.0, %v1073
    %v1075 = vpop.f32.mrb[0].mxu0
    %1076 = vmatprep.mubr.bf16.mxu0 0
    %1077 = vmatmul.mubr.bf16.gmra.mrb[0].mxu0 %v648
    %v1078 = vpop.f32.mrb[0].mxu0
    %v1079 = vadd.f32 0.0, %v1078
    %v1080 = vpop.f32.mrb[0].mxu0
    %v1081 = vpop.f32.mrb[0].mxu0
    %v1082 = vadd.f32 0.0, %v1081
    %v1083 = vpop.f32.mrb[0].mxu0
    %1084 = vmatprep.mubr.bf16.mxu0 0
    %1085 = vmatmul.mubr.bf16.gmra.mrb[0].mxu0 %v651
    %v1086 = vpop.f32.mrb[0].mxu0
    %v1087 = vadd.f32 0.0, %v1086
    %v1088 = vpop.f32.mrb[0].mxu0
    %v1089 = vpop.f32.mrb[0].mxu0
    %v1090 = vadd.f32 0.0, %v1089
    %v1091 = vpop.f32.mrb[0].mxu0
    %1092 = vmatprep.mubr.bf16.mxu0 0
    %1093 = vmatmul.mubr.bf16.gmra.mrb[0].mxu0 %v654
    %v1094 = vpop.f32.mrb[0].mxu0
    %v1095 = vadd.f32 0.0, %v1094
    %v1096 = vpop.f32.mrb[0].mxu0
    %v1097 = vpop.f32.mrb[0].mxu0
    %v1098 = vadd.f32 0.0, %v1097
    %v1099 = vpop.f32.mrb[0].mxu0
    %1100 = vmatprep.mubr.bf16.mxu0 0
    %1101 = vmatmul.mubr.bf16.gmra.mrb[0].mxu0 %v657
    %v1102 = vpop.f32.mrb[0].mxu0
    %v1103 = vadd.f32 0.0, %v1102
    %v1104 = vpop.f32.mrb[0].mxu0
    %v1105 = vpop.f32.mrb[0].mxu0
    %v1106 = vadd.f32 0.0, %v1105
    %v1107 = vpop.f32.mrb[0].mxu0
    %1108 = vmatprep.mubr.bf16.mxu0 0
    %1109 = vmatmul.mubr.bf16.gmra.mrb[0].mxu0 %v660
    %v1110 = vpop.f32.mrb[0].mxu0
    %v1111 = vadd.f32 0.0, %v1110
    %v1112 = vpop.f32.mrb[0].mxu0
    %v1113 = vpop.f32.mrb[0].mxu0
    %v1114 = vadd.f32 0.0, %v1113
    %v1115 = vpop.f32.mrb[0].mxu0
    %1116 = vmatprep.mubr.bf16.mxu0 0
    %1117 = vmatmul.mubr.bf16.gmra.mrb[0].mxu0 %v663
    %v1118 = vpop.f32.mrb[0].mxu0
    %v1119 = vadd.f32 0.0, %v1118
    %v1120 = vpop.f32.mrb[0].mxu0
    %v1121 = vpop.f32.mrb[0].mxu0
    %v1122 = vadd.f32 0.0, %v1121
    %v1123 = vpop.f32.mrb[0].mxu0
    %1124 = vmatprep.mubr.bf16.mxu0 0
    %1125 = vmatmul.mubr.bf16.gmra.mrb[0].mxu0 %v666
    %v1126 = vpop.f32.mrb[0].mxu0
    %v1127 = vadd.f32 0.0, %v1126
    %v1128 = vpop.f32.mrb[0].mxu0
    %v1129 = vpop.f32.mrb[0].mxu0
    %v1130 = vadd.f32 0.0, %v1129
    %v1131 = vpop.f32.mrb[0].mxu0
    %1132 = vmatprep.mubr.bf16.mxu0 0
    %1133 = vmatmul.mubr.bf16.gmra.mrb[0].mxu0 %v669
    %v1134 = vpop.f32.mrb[0].mxu0
    %v1135 = vadd.f32 0.0, %v1134
    %v1136 = vpop.f32.mrb[0].mxu0
    %v1137 = vpop.f32.mrb[0].mxu0
    %v1138 = vadd.f32 0.0, %v1137
    %v1139 = vpop.f32.mrb[0].mxu0
    %1140 = vmatprep.mubr.bf16.mxu0 0
    %1141 = vmatmul.mubr.bf16.gmra.mrb[0].mxu0 %v672
    %v1142 = vpop.f32.mrb[0].mxu0
    %v1143 = vadd.f32 0.0, %v1142
    %v1144 = vpop.f32.mrb[0].mxu0
    %v1145 = vpop.f32.mrb[0].mxu0
    %v1146 = vadd.f32 0.0, %v1145
    %v1147 = vpop.f32.mrb[0].mxu0
    %1148 = vmatprep.mubr.bf16.mxu0 0
    %1149 = vmatmul.mubr.bf16.gmra.mrb[0].mxu0 %v675
    %v1150 = vpop.f32.mrb[0].mxu0
    %v1151 = vadd.f32 0.0, %v1150
    %v1152 = vpop.f32.mrb[0].mxu0
    %v1153 = vpop.f32.mrb[0].mxu0
    %v1154 = vadd.f32 0.0, %v1153
    %v1155 = vpop.f32.mrb[0].mxu0
    %1156 = vmatprep.mubr.bf16.mxu0 0
    %1157 = vmatmul.mubr.bf16.gmra.mrb[0].mxu0 %v678
    %v1158 = vpop.f32.mrb[0].mxu0
    %v1159 = vadd.f32 0.0, %v1158
    %v1160 = vpop.f32.mrb[0].mxu0
    %v1161 = vpop.f32.mrb[0].mxu0
    %v1162 = vadd.f32 0.0, %v1161
    %v1163 = vpop.f32.mrb[0].mxu0
    %1164 = vmatprep.mubr.bf16.mxu0 0
    %1165 = vmatmul.mubr.bf16.gmra.mrb[0].mxu0 %v681
    %v1166 = vpop.f32.mrb[0].mxu0
    %v1167 = vadd.f32 0.0, %v1166
    %v1168 = vpop.f32.mrb[0].mxu0
    %v1169 = vpop.f32.mrb[0].mxu0
    %v1170 = vadd.f32 0.0, %v1169
    %v1171 = vpop.f32.mrb[0].mxu0
    %1172 = vmatprep.mubr.bf16.mxu0 0
    %1173 = vmatmul.mubr.bf16.gmra.mrb[0].mxu0 %v684
    %v1174 = vpop.f32.mrb[0].mxu0
    %v1175 = vadd.f32 0.0, %v1174
    %v1176 = vpop.f32.mrb[0].mxu0
    %v1177 = vpop.f32.mrb[0].mxu0
    %v1178 = vadd.f32 0.0, %v1177
    %v1179 = vpop.f32.mrb[0].mxu0
    %1180 = vmatprep.mubr.bf16.mxu0 0
    %1181 = vmatmul.mubr.bf16.gmra.mrb[0].mxu0 %v687
    %v1182 = vpop.f32.mrb[0].mxu0
    %v1183 = vadd.f32 0.0, %v1182
    %v1184 = vpop.f32.mrb[0].mxu0
    %v1185 = vpop.f32.mrb[0].mxu0
    %v1186 = vadd.f32 0.0, %v1185
    %v1187 = vpop.f32.mrb[0].mxu0
    %1188 = vmatprep.mubr.bf16.mxu0 0
    %1189 = vmatmul.mubr.bf16.gmra.mrb[0].mxu0 %v690
    %v1190 = vpop.f32.mrb[0].mxu0
    %v1191 = vadd.f32 0.0, %v1190
    %v1192 = vpop.f32.mrb[0].mxu0
    %v1193 = vpop.f32.mrb[0].mxu0
    %v1194 = vadd.f32 0.0, %v1193
    %v1195 = vpop.f32.mrb[0].mxu0
    %1196 = vmatprep.mubr.bf16.mxu0 0
    %1197 = vmatmul.mubr.bf16.gmra.mrb[0].mxu0 %v693
    %v1198 = vpop.f32.mrb[0].mxu0
    %v1199 = vadd.f32 0.0, %v1198
    %v1200 = vpop.f32.mrb[0].mxu0
    %v1201 = vpop.f32.mrb[0].mxu0
    %v1202 = vadd.f32 0.0, %v1201
    %v1203 = vpop.f32.mrb[0].mxu0
    %1204 = vmatprep.mubr.bf16.mxu0 0
    %1205 = vmatmul.mubr.bf16.gmra.mrb[0].mxu0 %v696
    %v1206 = vpop.f32.mrb[0].mxu0
    %v1207 = vadd.f32 0.0, %v1206
    %v1208 = vpop.f32.mrb[0].mxu0
    %v1209 = vpop.f32.mrb[0].mxu0
    %v1210 = vadd.f32 0.0, %v1209
    %v1211 = vpop.f32.mrb[0].mxu0
    %1212 = vmatprep.mubr.bf16.mxu0 0
    %1213 = vmatmul.mubr.bf16.gmra.mrb[0].mxu0 %v699
    %v1214 = vpop.f32.mrb[0].mxu0
    %v1215 = vadd.f32 0.0, %v1214
    %v1216 = vpop.f32.mrb[0].mxu0
    %v1217 = vpop.f32.mrb[0].mxu0
    %v1218 = vadd.f32 0.0, %v1217
    %v1219 = vpop.f32.mrb[0].mxu0
    %1220 = vmatprep.mubr.bf16.mxu0 0
    %1221 = vmatmul.mubr.bf16.gmra.mrb[0].mxu0 %v702
    %v1222 = vpop.f32.mrb[0].mxu0
    %v1223 = vadd.f32 0.0, %v1222
    %v1224 = vpop.f32.mrb[0].mxu0
    %v1225 = vpop.f32.mrb[0].mxu0
    %v1226 = vadd.f32 0.0, %v1225
    %v1227 = vpop.f32.mrb[0].mxu0
    %1228 = vmatprep.mubr.bf16.mxu0 0
    %1229 = vmatmul.mubr.bf16.gmra.mrb[0].mxu0 %v705
    %v1230 = vpop.f32.mrb[0].mxu0
    %v1231 = vadd.f32 0.0, %v1230
    %v1232 = vpop.f32.mrb[0].mxu0
    %v1233 = vpop.f32.mrb[0].mxu0
    %v1234 = vadd.f32 0.0, %v1233
    %v1235 = vpop.f32.mrb[0].mxu0
    %1236 = vmatprep.mubr.bf16.mxu0 0
    %1237 = vmatmul.mubr.bf16.gmra.mrb[0].mxu0 %v708
    %v1238 = vpop.f32.mrb[0].mxu0
    %v1239 = vadd.f32 0.0, %v1238
    %v1240 = vpop.f32.mrb[0].mxu0
    %v1241 = vpop.f32.mrb[0].mxu0
    %v1242 = vadd.f32 0.0, %v1241
    %v1243 = vpop.f32.mrb[0].mxu0
    %1244 = vmatprep.mubr.bf16.mxu0 0
    %1245 = vmatmul.mubr.bf16.gmra.mrb[0].mxu0 %v711
    %v1246 = vpop.f32.mrb[0].mxu0
    %v1247 = vadd.f32 0.0, %v1246
    %v1248 = vpop.f32.mrb[0].mxu0
    %v1249 = vpop.f32.mrb[0].mxu0
    %v1250 = vadd.f32 0.0, %v1249
    %v1251 = vpop.f32.mrb[0].mxu0
    %1252 = vmatprep.mubr.bf16.mxu0 0
    %1253 = vmatmul.mubr.bf16.gmra.mrb[0].mxu0 %v714
    %v1254 = vpop.f32.mrb[0].mxu0
    %v1255 = vadd.f32 0.0, %v1254
    %v1256 = vpop.f32.mrb[0].mxu0
    %v1257 = vpop.f32.mrb[0].mxu0
    %v1258 = vadd.f32 0.0, %v1257
    %v1259 = vpop.f32.mrb[0].mxu0
    %1260 = vmatprep.mubr.bf16.mxu0 0
    %1261 = vmatmul.mubr.bf16.gmra.mrb[0].mxu0 %v717
    %v1262 = vpop.f32.mrb[0].mxu0
    %v1263 = vadd.f32 0.0, %v1262
    %v1264 = vpop.f32.mrb[0].mxu0
    %v1265 = vpop.f32.mrb[0].mxu0
    %v1266 = vadd.f32 0.0, %v1265
    %v1267 = vpop.f32.mrb[0].mxu0
    %1268 = vmatprep.mubr.bf16.mxu0 0
    %1269 = vmatmul.mubr.bf16.gmra.mrb[0].mxu0 %v720
    %v1270 = vpop.f32.mrb[0].mxu0
    %v1271 = vadd.f32 0.0, %v1270
    %v1272 = vpop.f32.mrb[0].mxu0
    %v1273 = vpop.f32.mrb[0].mxu0
    %v1274 = vadd.f32 0.0, %v1273
    %v1275 = vpop.f32.mrb[0].mxu0
    %1276 = vmatprep.mubr.bf16.mxu0 0
    %1277 = vmatmul.mubr.bf16.gmra.mrb[0].mxu0 %v723
    %v1278 = vpop.f32.mrb[0].mxu0
    %v1279 = vadd.f32 0.0, %v1278
    %v1280 = vpop.f32.mrb[0].mxu0
    %v1281 = vpop.f32.mrb[0].mxu0
    %v1282 = vadd.f32 0.0, %v1281
    %v1283 = vpop.f32.mrb[0].mxu0
    %1284 = vmatprep.mubr.bf16.mxu0 0
    %1285 = vmatmul.mubr.bf16.gmra.mrb[0].mxu0 %v726
    %v1286 = vpop.f32.mrb[0].mxu0
    %v1287 = vadd.f32 0.0, %v1286
    %v1288 = vpop.f32.mrb[0].mxu0
    %v1289 = vpop.f32.mrb[0].mxu0
    %v1290 = vadd.f32 0.0, %v1289
    %v1291 = vpop.f32.mrb[0].mxu0
    %1292 = vmatprep.mubr.bf16.mxu0 0
    %1293 = vmatmul.mubr.bf16.gmra.mrb[0].mxu0 %v729
    %v1294 = vpop.f32.mrb[0].mxu0
    %v1295 = vadd.f32 0.0, %v1294
    %v1296 = vpop.f32.mrb[0].mxu0
    %v1297 = vpop.f32.mrb[0].mxu0
    %v1298 = vadd.f32 0.0, %v1297
    %v1299 = vpop.f32.mrb[0].mxu0
    %1300 = vmatprep.mubr.bf16.mxu0 0
    %1301 = vmatmul.mubr.bf16.gmra.mrb[0].mxu0 %v732
    %v1302 = vpop.f32.mrb[0].mxu0
    %v1303 = vadd.f32 0.0, %v1302
    %v1304 = vpop.f32.mrb[0].mxu0
    %v1305 = vpop.f32.mrb[0].mxu0
    %v1306 = vadd.f32 0.0, %v1305
    %v1307 = vpop.f32.mrb[0].mxu0
    %1308 = vmatprep.mubr.bf16.mxu0 0
    %1309 = vmatmul.mubr.bf16.gmra.mrb[0].mxu0 %v735
    %v1310 = vpop.f32.mrb[0].mxu0
    %v1311 = vadd.f32 0.0, %v1310
    %v1312 = vpop.f32.mrb[0].mxu0
    %v1313 = vpop.f32.mrb[0].mxu0
    %v1314 = vadd.f32 0.0, %v1313
    %v1315 = vpop.f32.mrb[0].mxu0
    %1316 = vmatprep.mubr.bf16.mxu0 0
    %1317 = vmatmul.mubr.bf16.gmra.mrb[0].mxu0 %v738
    %v1318 = vpop.f32.mrb[0].mxu0
    %v1319 = vadd.f32 0.0, %v1318
    %v1320 = vpop.f32.mrb[0].mxu0
    %v1321 = vpop.f32.mrb[0].mxu0
    %v1322 = vadd.f32 0.0, %v1321
    %v1323 = vpop.f32.mrb[0].mxu0
    %1324 = vmatprep.mubr.bf16.mxu0 0
    %1325 = vmatmul.mubr.bf16.gmra.mrb[0].mxu0 %v741
    %v1326 = vpop.f32.mrb[0].mxu0
    %v1327 = vadd.f32 0.0, %v1326
    %v1328 = vpop.f32.mrb[0].mxu0
    %v1329 = vpop.f32.mrb[0].mxu0
    %v1330 = vadd.f32 0.0, %v1329
    %v1331 = vpop.f32.mrb[0].mxu0
    %1332 = vmatprep.mubr.bf16.mxu0 0
    %1333 = vmatmul.mubr.bf16.gmra.mrb[0].mxu0 %v744
    %v1334 = vpop.f32.mrb[0].mxu0
    %v1335 = vadd.f32 0.0, %v1334
    %v1336 = vpop.f32.mrb[0].mxu0
    %v1337 = vpop.f32.mrb[0].mxu0
    %v1338 = vadd.f32 0.0, %v1337
    %v1339 = vpop.f32.mrb[0].mxu0
    %1340 = vmatprep.mubr.bf16.mxu0 0
    %1341 = vmatmul.mubr.bf16.gmra.mrb[0].mxu0 %v747
    %v1342 = vpop.f32.mrb[0].mxu0
    %v1343 = vadd.f32 0.0, %v1342
    %v1344 = vpop.f32.mrb[0].mxu0
    %v1345 = vpop.f32.mrb[0].mxu0
    %v1346 = vadd.f32 0.0, %v1345
    %v1347 = vpop.f32.mrb[0].mxu0
    %1348 = vdwg.mxu0
    %v1349 = vmax.f32 %v791, %v930
    %v1350 = vmax.f32 %v794, %v935
    %v1351 = vmax.f32 %v799, %v938
    %v1352 = vmax.f32 %v802, %v943
    %v1353 = vmax.f32 %v807, %v946
    %v1354 = vmax.f32 %v810, %v951
    %v1355 = vmax.f32 %v815, %v954
    %v1356 = vmax.f32 %v818, %v959
    %v1357 = vmax.f32 %v823, %v962
    %v1358 = vmax.f32 %v826, %v967
    %v1359 = vmax.f32 %v831, %v970
    %v1360 = vmax.f32 %v834, %v975
    %v1361 = vmax.f32 %v839, %v978
    %v1362 = vmax.f32 %v842, %v983
    %v1363 = vmax.f32 %v847, %v986
    %v1364 = vmax.f32 %v850, %v991
    %v1365 = vmax.f32 %v855, %v994
    %v1366 = vmax.f32 %v858, %v999
    %v1367 = vmax.f32 %v863, %v1002
    %v1368 = vmax.f32 %v866, %v1007
    %v1369 = vmax.f32 %v871, %v1010
    %v1370 = vmax.f32 %v874, %v1015
    %v1371 = vmax.f32 %v879, %v1018
    %v1372 = vmax.f32 %v882, %v1023
    %v1373 = vmax.f32 %v887, %v1026
    %v1374 = vmax.f32 %v890, %v1031
    %v1375 = vmax.f32 %v895, %v1034
    %v1376 = vmax.f32 %v898, %v1039
    %v1377 = vmax.f32 %v903, %v1042
    %v1378 = vmax.f32 %v906, %v1047
    %v1379 = vmax.f32 %v911, %v1050
    %v1380 = vmax.f32 %v914, %v1055
    %v1381 = vmax.f32 %v919, %v1058
    %v1382 = vmax.f32 %v922, %v1063
    %v1383 = vmax.f32 %v927, %v1066
    %v1384 = vmax.f32 %v1071, %v1210
    %v1385 = vmax.f32 %v1074, %v1215
    %v1386 = vmax.f32 %v1079, %v1218
    %v1387 = vmax.f32 %v1082, %v1223
    %v1388 = vmax.f32 %v1087, %v1226
    %v1389 = vmax.f32 %v1090, %v1231
    %v1390 = vmax.f32 %v1095, %v1234
    %v1391 = vmax.f32 %v1098, %v1239
    %v1392 = vmax.f32 %v1103, %v1242
    %v1393 = vmax.f32 %v1106, %v1247
    %v1394 = vmax.f32 %v1111, %v1250
    %v1395 = vmax.f32 %v1114, %v1255
    %v1396 = vmax.f32 %v1119, %v1258
    %v1397 = vmax.f32 %v1122, %v1263
    %v1398 = vmax.f32 %v1127, %v1266
    %v1399 = vmax.f32 %v1130, %v1271
    %v1400 = vmax.f32 %v1135, %v1274
    %v1401 = vmax.f32 %v1138, %v1279
    %v1402 = vmax.f32 %v1143, %v1282
    %v1403 = vmax.f32 %v1146, %v1287
    %v1404 = vmax.f32 %v1151, %v1290
    %v1405 = vmax.f32 %v1154, %v1295
    %v1406 = vmax.f32 %v1159, %v1298
    %v1407 = vmax.f32 %v1162, %v1303
    %v1408 = vmax.f32 %v1167, %v1306
    %v1409 = vmax.f32 %v1170, %v1311
    %v1410 = vmax.f32 %v1175, %v1314
    %v1411 = vmax.f32 %v1178, %v1319
    %v1412 = vmax.f32 %v1183, %v1322
    %v1413 = vmax.f32 %v1186, %v1327
    %v1414 = vmax.f32 %v1191, %v1330
    %v1415 = vmax.f32 %v1194, %v1335
    %v1416 = vmax.f32 %v1199, %v1338
    %v1417 = vmax.f32 %v1202, %v1343
    %v1418 = vmax.f32 %v1207, %v1346
    %v1419 = vmax.f32 %v1349, %v1384
    %v1420 = vmax.f32 %v1350, %v1385
    %v1421 = vmax.f32 %v1351, %v1386
    %v1422 = vmax.f32 %v1352, %v1387
    %v1423 = vmax.f32 %v1353, %v1388
    %v1424 = vmax.f32 %v1354, %v1389
    %v1425 = vmax.f32 %v1355, %v1390
    %v1426 = vmax.f32 %v1356, %v1391
    %v1427 = vmax.f32 %v1357, %v1392
    %v1428 = vmax.f32 %v1358, %v1393
    %v1429 = vmax.f32 %v1359, %v1394
    %v1430 = vmax.f32 %v1360, %v1395
    %v1431 = vmax.f32 %v1361, %v1396
    %v1432 = vmax.f32 %v1362, %v1397
    %v1433 = vmax.f32 %v1363, %v1398
    %v1434 = vmax.f32 %v1364, %v1399
    %v1435 = vmax.f32 %v1365, %v1400
    %v1436 = vmax.f32 %v1366, %v1401
    %v1437 = vmax.f32 %v1367, %v1402
    %v1438 = vmax.f32 %v1368, %v1403
    %v1439 = vmax.f32 %v1369, %v1404
    %v1440 = vmax.f32 %v1370, %v1405
    %v1441 = vmax.f32 %v1371, %v1406
    %v1442 = vmax.f32 %v1372, %v1407
    %v1443 = vmax.f32 %v1373, %v1408
    %v1444 = vmax.f32 %v1374, %v1409
    %v1445 = vmax.f32 %v1375, %v1410
    %v1446 = vmax.f32 %v1376, %v1411
    %v1447 = vmax.f32 %v1377, %v1412
    %v1448 = vmax.f32 %v1378, %v1413
    %v1449 = vmax.f32 %v1379, %v1414
    %v1450 = vmax.f32 %v1380, %v1415
    %v1451 = vmax.f32 %v1381, %v1416
    %v1452 = vmax.f32 %v1382, %v1417
    %v1453 = vmax.f32 %v1383, %v1418
    %v1454 = vld [vmem:[#allocation4] sm:$0x1]
    %v1456 = vlaneseq
    %v1457 = vshrl.u32 %v1456, 7
    %v1458 = vsub.s32 0, %v1457
    %v1459 = vrot.slane %v1454, %v1458
    %v1461 = vadd.f32 %v1419, %v1459
    %v1462 = vadd.f32 %v1420, %v1459
    %v1463 = vadd.f32 %v1421, %v1459
    %v1464 = vadd.f32 %v1422, %v1459
    %v1465 = vadd.f32 %v1423, %v1459
    %v1466 = vadd.f32 %v1424, %v1459
    %v1467 = vadd.f32 %v1425, %v1459
    %v1468 = vadd.f32 %v1426, %v1459
    %v1469 = vadd.f32 %v1427, %v1459
    %v1470 = vadd.f32 %v1428, %v1459
    %v1471 = vadd.f32 %v1429, %v1459
    %v1472 = vadd.f32 %v1430, %v1459
    %v1473 = vadd.f32 %v1431, %v1459
    %v1474 = vadd.f32 %v1432, %v1459
    %v1475 = vadd.f32 %v1433, %v1459
    %v1476 = vadd.f32 %v1434, %v1459
    %v1477 = vadd.f32 %v1435, %v1459
    %v1478 = vadd.f32 %v1436, %v1459
    %v1479 = vadd.f32 %v1437, %v1459
    %v1480 = vadd.f32 %v1438, %v1459
    %v1481 = vadd.f32 %v1439, %v1459
    %v1482 = vadd.f32 %v1440, %v1459
    %v1483 = vadd.f32 %v1441, %v1459
    %v1484 = vadd.f32 %v1442, %v1459
    %v1485 = vadd.f32 %v1443, %v1459
    %v1486 = vadd.f32 %v1444, %v1459
    %v1487 = vadd.f32 %v1445, %v1459
    %v1488 = vadd.f32 %v1446, %v1459
    %v1489 = vadd.f32 %v1447, %v1459
    %v1490 = vadd.f32 %v1448, %v1459
    %v1491 = vadd.f32 %v1449, %v1459
    %v1492 = vadd.f32 %v1450, %v1459
    %v1493 = vadd.f32 %v1451, %v1459
    %v1494 = vadd.f32 %v1452, %v1459
    %v1495 = vadd.f32 %v1453, %v1459
    %v1496 = vmax.f32 %v1461, 0.0
    %v1497 = vmax.f32 %v1462, 0.0
    %v1498 = vmax.f32 %v1463, 0.0
    %v1499 = vmax.f32 %v1464, 0.0
    %v1500 = vmax.f32 %v1465, 0.0
    %v1501 = vmax.f32 %v1466, 0.0
    %v1502 = vmax.f32 %v1467, 0.0
    %v1503 = vmax.f32 %v1468, 0.0
    %v1504 = vmax.f32 %v1469, 0.0
    %v1505 = vmax.f32 %v1470, 0.0
    %v1506 = vmax.f32 %v1471, 0.0
    %v1507 = vmax.f32 %v1472, 0.0
    %v1508 = vmax.f32 %v1473, 0.0
    %v1509 = vmax.f32 %v1474, 0.0
    %v1510 = vmax.f32 %v1475, 0.0
    %v1511 = vmax.f32 %v1476, 0.0
    %v1512 = vmax.f32 %v1477, 0.0
    %v1513 = vmax.f32 %v1478, 0.0
    %v1514 = vmax.f32 %v1479, 0.0
    %v1515 = vmax.f32 %v1480, 0.0
    %v1516 = vmax.f32 %v1481, 0.0
    %v1517 = vmax.f32 %v1482, 0.0
    %v1518 = vmax.f32 %v1483, 0.0
    %v1519 = vmax.f32 %v1484, 0.0
    %v1520 = vmax.f32 %v1485, 0.0
    %v1521 = vmax.f32 %v1486, 0.0
    %v1522 = vmax.f32 %v1487, 0.0
    %v1523 = vmax.f32 %v1488, 0.0
    %v1524 = vmax.f32 %v1489, 0.0
    %v1525 = vmax.f32 %v1490, 0.0
    %v1526 = vmax.f32 %v1491, 0.0
    %v1527 = vmax.f32 %v1492, 0.0
    %v1528 = vmax.f32 %v1493, 0.0
    %v1529 = vmax.f32 %v1494, 0.0
    %v1530 = vmax.f32 %v1495, 0.0
    %v1531 = vpack.c.bf16 %v1497, %v1496
    %v1532 = vpack.c.bf16 %v1499, %v1498
    %v1533 = vpack.c.bf16 %v1501, %v1500
    %v1534 = vpack.c.bf16 %v1503, %v1502
    %v1535 = vpack.c.bf16 %v1505, %v1504
    %v1536 = vpack.c.bf16 %v1507, %v1506
    %v1537 = vpack.c.bf16 %v1509, %v1508
    %v1538 = vpack.c.bf16 %v1511, %v1510
    %v1539 = vpack.c.bf16 %v1513, %v1512
    %v1540 = vpack.c.bf16 %v1515, %v1514
    %v1541 = vpack.c.bf16 %v1517, %v1516
    %v1542 = vpack.c.bf16 %v1519, %v1518
    %v1543 = vpack.c.bf16 %v1521, %v1520
    %v1544 = vpack.c.bf16 %v1523, %v1522
    %v1545 = vpack.c.bf16 %v1525, %v1524
    %v1546 = vpack.c.bf16 %v1527, %v1526
    %v1547 = vpack.c.bf16 %v1529, %v1528
    %v1548 = vpack.c.bf16 %v1530, %v1530
    %v1567 = vunpack.c.l.b16 %v1531
    %v1568 = vunpack.c.h.b16 %v1531
    %v1569 = vunpack.c.l.b16 %v1532
    %v1570 = vunpack.c.h.b16 %v1532
    %v1571 = vunpack.c.l.b16 %v1533
    %v1572 = vunpack.c.h.b16 %v1533
    %v1573 = vunpack.c.l.b16 %v1534
    %v1574 = vunpack.c.h.b16 %v1534
    %v1575 = vunpack.c.l.b16 %v1535
    %v1576 = vunpack.c.h.b16 %v1535
    %v1577 = vunpack.c.l.b16 %v1536
    %v1578 = vunpack.c.h.b16 %v1536
    %v1579 = vunpack.c.l.b16 %v1537
    %v1580 = vunpack.c.h.b16 %v1537
    %v1581 = vunpack.c.l.b16 %v1538
    %v1582 = vunpack.c.h.b16 %v1538
    %v1583 = vunpack.c.l.b16 %v1539
    %v1584 = vunpack.c.h.b16 %v1539
    %v1585 = vunpack.c.l.b16 %v1540
    %v1586 = vunpack.c.h.b16 %v1540
    %v1587 = vunpack.c.l.b16 %v1541
    %v1588 = vunpack.c.h.b16 %v1541
    %v1589 = vunpack.c.l.b16 %v1542
    %v1590 = vunpack.c.h.b16 %v1542
    %v1591 = vunpack.c.l.b16 %v1543
    %v1592 = vunpack.c.h.b16 %v1543
    %v1593 = vunpack.c.l.b16 %v1544
    %v1594 = vunpack.c.h.b16 %v1544
    %v1595 = vunpack.c.l.b16 %v1545
    %v1596 = vunpack.c.h.b16 %v1545
    %v1597 = vunpack.c.l.b16 %v1546
    %v1598 = vunpack.c.h.b16 %v1546
    %v1599 = vunpack.c.l.b16 %v1547
    %v1600 = vunpack.c.h.b16 %v1547
    %v1601 = vunpack.c.l.b16 %v1548
    %v1602 = vpack.c.b16 %v1567, %v1567
    %v1603 = vpack.c.b16 %v1568, %v1568
    %v1604 = vpack.c.b16 %v1569, %v1569
    %v1605 = vpack.c.b16 %v1570, %v1570
    %v1606 = vpack.c.b16 %v1571, %v1571
    %v1607 = vpack.c.b16 %v1572, %v1572
    %v1608 = vpack.c.b16 %v1573, %v1573
    %v1609 = vpack.c.b16 %v1574, %v1574
    %v1610 = vpack.c.b16 %v1575, %v1575
    %v1611 = vpack.c.b16 %v1576, %v1576
    %v1612 = vpack.c.b16 %v1577, %v1577
    %v1613 = vpack.c.b16 %v1578, %v1578
    %v1614 = vpack.c.b16 %v1579, %v1579
    %v1615 = vpack.c.b16 %v1580, %v1580
    %v1616 = vpack.c.b16 %v1581, %v1581
    %v1617 = vpack.c.b16 %v1582, %v1582
    %v1618 = vpack.c.b16 %v1583, %v1583
    %v1619 = vpack.c.b16 %v1584, %v1584
    %v1620 = vpack.c.b16 %v1585, %v1585
    %v1621 = vpack.c.b16 %v1586, %v1586
    %v1622 = vpack.c.b16 %v1587, %v1587
    %v1623 = vpack.c.b16 %v1588, %v1588
    %v1624 = vpack.c.b16 %v1589, %v1589
    %v1625 = vpack.c.b16 %v1590, %v1590
    %v1626 = vpack.c.b16 %v1591, %v1591
    %v1627 = vpack.c.b16 %v1592, %v1592
    %v1628 = vpack.c.b16 %v1593, %v1593
    %v1629 = vpack.c.b16 %v1594, %v1594
    %v1630 = vpack.c.b16 %v1595, %v1595
    %v1631 = vpack.c.b16 %v1596, %v1596
    %v1632 = vpack.c.b16 %v1597, %v1597
    %v1633 = vpack.c.b16 %v1598, %v1598
    %v1634 = vpack.c.b16 %v1599, %v1599
    %v1635 = vpack.c.b16 %v1600, %v1600
    %v1636 = vpack.c.b16 %v1601, %v1601
    %vm1672 = vcmask 257024
    %1673 = vst.msk [vmem:[%s3] sm:$0xf] %vm1672, %v1602
    %1674 = vst.msk [vmem:[%s3 + $0x4] sm:$0xf] %vm1672, %v1603
    %1675 = vst.msk [vmem:[%s3 + $0x8] sm:$0xf] %vm1672, %v1604
    %1676 = vst.msk [vmem:[%s3 + $0xc] sm:$0xf] %vm1672, %v1605
    %1677 = vst.msk [vmem:[%s3 + $0x10] sm:$0xf] %vm1672, %v1606
    %1678 = vst.msk [vmem:[%s3 + $0x14] sm:$0xf] %vm1672, %v1607
    %1679 = vst.msk [vmem:[%s3 + $0x18] sm:$0xf] %vm1672, %v1608
    %1680 = vst.msk [vmem:[%s3 + $0x1c] sm:$0xf] %vm1672, %v1609
    %1681 = vst.msk [vmem:[%s3 + $0x20] sm:$0xf] %vm1672, %v1610
    %1682 = vst.msk [vmem:[%s3 + $0x24] sm:$0xf] %vm1672, %v1611
    %1683 = vst.msk [vmem:[%s3 + $0x28] sm:$0xf] %vm1672, %v1612
    %1684 = vst.msk [vmem:[%s3 + $0x2c] sm:$0xf] %vm1672, %v1613
    %1685 = vst.msk [vmem:[%s3 + $0x30] sm:$0xf] %vm1672, %v1614
    %1686 = vst.msk [vmem:[%s3 + $0x34] sm:$0xf] %vm1672, %v1615
    %1687 = vst.msk [vmem:[%s3 + $0x38] sm:$0xf] %vm1672, %v1616
    %1688 = vst.msk [vmem:[%s3 + $0x3c] sm:$0xf] %vm1672, %v1617
    %1689 = vst.msk [vmem:[%s3 + $0x40] sm:$0xf] %vm1672, %v1618
    %1690 = vst.msk [vmem:[%s3 + $0x44] sm:$0xf] %vm1672, %v1619
    %1691 = vst.msk [vmem:[%s3 + $0x48] sm:$0xf] %vm1672, %v1620
    %1692 = vst.msk [vmem:[%s3 + $0x4c] sm:$0xf] %vm1672, %v1621
    %1693 = vst.msk [vmem:[%s3 + $0x50] sm:$0xf] %vm1672, %v1622
    %1694 = vst.msk [vmem:[%s3 + $0x54] sm:$0xf] %vm1672, %v1623
    %1695 = vst.msk [vmem:[%s3 + $0x58] sm:$0xf] %vm1672, %v1624
    %1696 = vst.msk [vmem:[%s3 + $0x5c] sm:$0xf] %vm1672, %v1625
    %1697 = vst.msk [vmem:[%s3 + $0x60] sm:$0xf] %vm1672, %v1626
    %1698 = vst.msk [vmem:[%s3 + $0x64] sm:$0xf] %vm1672, %v1627
    %1699 = vst.msk [vmem:[%s3 + $0x68] sm:$0xf] %vm1672, %v1628
    %1700 = vst.msk [vmem:[%s3 + $0x6c] sm:$0xf] %vm1672, %v1629
    %1701 = vst.msk [vmem:[%s3 + $0x70] sm:$0xf] %vm1672, %v1630
    %1702 = vst.msk [vmem:[%s3 + $0x74] sm:$0xf] %vm1672, %v1631
    %1703 = vst.msk [vmem:[%s3 + $0x78] sm:$0xf] %vm1672, %v1632
    %1704 = vst.msk [vmem:[%s3 + $0x7c] sm:$0xf] %vm1672, %v1633
    %1705 = vst.msk [vmem:[%s3 + $0x80] sm:$0xf] %vm1672, %v1634
    %1706 = vst.msk [vmem:[%s3 + $0x84] sm:$0xf] %vm1672, %v1635
    %1707 = vst.msk [vmem:[%s3 + $0x88] sm:$0xf] %vm1672, %v1636
    // Predicated region
    $region22: #{vae_forward.7} parent=1 // pred_check
      _
    $region23: #{vae_forward.7} parent=1 // pred_check_branch
      %1709 = sbr.rel (0) target = $region25
    $region24: #{vae_forward.7} parent=1 // pred_region
      _
    $region25: #{vae_forward.7} parent=1 // pred_fallthru
      _
    // Predicated region
    $region26: #{vae_forward.7} parent=1 // pred_check
      _
    $region27: #{vae_forward.7} parent=1 // pred_check_branch
      %1711 = sbr.rel (0) target = $region29
    $region28: #{vae_forward.7} parent=1 // pred_region
      _
    $region29: #{vae_forward.7} parent=1 // pred_fallthru
      _
    %1712 = vsyncpa [#allocation3], 1
    %1713 = vsyncpa [#allocation5], 1

// kernel: vae_forward.8
$region0: #{vae_forward.8}
  #allocation0 [shape = 'u32[]', space=smem, size = 0x4, offset = 0x4, fixed_abs, tag = 'smem constant byte address 0x4 - core index']
  #allocation1 [shape = 'u32[144,128]{1,0:T(1,128)}', space=vmem, size = 0x12000, scoped, tag = 'internal scratch']
  %s0 = inlined_call_operand.vmem [shape: bf16[288,288], index: 0, kind: input, shape index: {}]
  %s1 = inlined_call_operand.vmem [shape: bf16[288,64], index: 1, kind: input, shape index: {}]
  %s2 = inlined_call_operand.vmem [shape: f32[1,64], index: 2, kind: input, shape index: {}]
  %s3 = inlined_call_operand.vmem [shape: bf16[72,64], index: 3, kind: output, shape index: {}]
  %s4 = sld [smem:[#allocation0]]
  $region22: #{vae_forward.8} parent=0
    _
  %s6 = ssub.s32 1, %s4
  %s7 = scalar_select 0, %s6, %s4
  // Predicated region
  $region2: #{vae_forward.8} parent=0 // pred_check
    _
  $region3: #{vae_forward.8} parent=0 // pred_check_branch
    %9 = sbr.rel (0) target = $region5
  $region4: #{vae_forward.8} parent=0 // pred_region
    _
  $region5: #{vae_forward.8} parent=0 // pred_fallthru
    _
  // Predicated region
  $region6: #{vae_forward.8} parent=0 // pred_check
    _
  $region7: #{vae_forward.8} parent=0 // pred_check_branch
    %11 = sbr.rel (0) target = $region9
  $region8: #{vae_forward.8} parent=0 // pred_region
    _
  $region9: #{vae_forward.8} parent=0 // pred_fallthru
    _
  // Predicated region
  $region10: #{vae_forward.8} parent=0 // pred_check
    _
  $region11: #{vae_forward.8} parent=0 // pred_check_branch
    %13 = sbr.rel (0) target = $region13
  $region12: #{vae_forward.8} parent=0 // pred_region
    _
  $region13: #{vae_forward.8} parent=0 // pred_fallthru
    _
  %v15 = vld [vmem:[%s0] sm:$0xff]
  %v16 = vld [vmem:[%s0 + $0x8] sm:$0xf]
  %v17 = vld [vmem:[%s0 + $0xc] sm:$0xff]
  %v18 = vld [vmem:[%s0 + $0x14] sm:$0xf]
  %v19 = vld [vmem:[%s0 + $0x18] sm:$0xff]
  %v20 = vld [vmem:[%s0 + $0x20] sm:$0xf]
  %v21 = vld [vmem:[%s0 + $0x24] sm:$0xff]
  %v22 = vld [vmem:[%s0 + $0x2c] sm:$0xf]
  %v23 = vld [vmem:[%s0 + $0x30] sm:$0xff]
  %v24 = vld [vmem:[%s0 + $0x38] sm:$0xf]
  %v25 = vld [vmem:[%s0 + $0x3c] sm:$0xff]
  %v26 = vld [vmem:[%s0 + $0x44] sm:$0xf]
  %v27 = vld [vmem:[%s0 + $0x48] sm:$0xff]
  %v28 = vld [vmem:[%s0 + $0x50] sm:$0xf]
  %v29 = vld [vmem:[%s0 + $0x54] sm:$0xff]
  %v30 = vld [vmem:[%s0 + $0x5c] sm:$0xf]
  %v31 = vld [vmem:[%s0 + $0x60] sm:$0xff]
  %v32 = vld [vmem:[%s0 + $0x68] sm:$0xf]
  %v33 = vld [vmem:[%s0 + $0x6c] sm:$0xff]
  %v34 = vld [vmem:[%s0 + $0x74] sm:$0xf]
  %v35 = vld [vmem:[%s0 + $0x78] sm:$0xff]
  %v36 = vld [vmem:[%s0 + $0x80] sm:$0xf]
  %v37 = vld [vmem:[%s0 + $0x84] sm:$0xff]
  %v38 = vld [vmem:[%s0 + $0x8c] sm:$0xf]
  %v39 = vld [vmem:[%s0 + $0x90] sm:$0xff]
  %v40 = vld [vmem:[%s0 + $0x98] sm:$0xf]
  %v41 = vld [vmem:[%s0 + $0x9c] sm:$0xff]
  %v42 = vld [vmem:[%s0 + $0xa4] sm:$0xf]
  %v43 = vld [vmem:[%s0 + $0xa8] sm:$0xff]
  %v44 = vld [vmem:[%s0 + $0xb0] sm:$0xf]
  %v45 = vld [vmem:[%s0 + $0xb4] sm:$0xff]
  %v46 = vld [vmem:[%s0 + $0xbc] sm:$0xf]
  %v47 = vld [vmem:[%s0 + $0xc0] sm:$0xff]
  %v48 = vld [vmem:[%s0 + $0xc8] sm:$0xf]
  %v49 = vld [vmem:[%s0 + $0xcc] sm:$0xff]
  %v50 = vld [vmem:[%s0 + $0xd4] sm:$0xf]
  %v51 = vld [vmem:[%s0 + $0xd8] sm:$0xff]
  %v52 = vld [vmem:[%s0 + $0xe0] sm:$0xf]
  %v53 = vld [vmem:[%s0 + $0xe4] sm:$0xff]
  %v54 = vld [vmem:[%s0 + $0xec] sm:$0xf]
  %v55 = vld [vmem:[%s0 + $0xf0] sm:$0xff]
  %v56 = vld [vmem:[%s0 + $0xf8] sm:$0xf]
  %v57 = vld [vmem:[%s0 + $0xfc] sm:$0xff]
  %v58 = vld [vmem:[%s0 + $0x104] sm:$0xf]
  %v59 = vld [vmem:[%s0 + $0x108] sm:$0xff]
  %v60 = vld [vmem:[%s0 + $0x110] sm:$0xf]
  %v61 = vld [vmem:[%s0 + $0x114] sm:$0xff]
  %v62 = vld [vmem:[%s0 + $0x11c] sm:$0xf]
  %v63 = vld [vmem:[%s0 + $0x120] sm:$0xff]
  %v64 = vld [vmem:[%s0 + $0x128] sm:$0xf]
  %v65 = vld [vmem:[%s0 + $0x12c] sm:$0xff]
  %v66 = vld [vmem:[%s0 + $0x134] sm:$0xf]
  %v67 = vld [vmem:[%s0 + $0x138] sm:$0xff]
  %v68 = vld [vmem:[%s0 + $0x140] sm:$0xf]
  %v69 = vld [vmem:[%s0 + $0x144] sm:$0xff]
  %v70 = vld [vmem:[%s0 + $0x14c] sm:$0xf]
  %v71 = vld [vmem:[%s0 + $0x150] sm:$0xff]
  %v72 = vld [vmem:[%s0 + $0x158] sm:$0xf]
  %v73 = vld [vmem:[%s0 + $0x15c] sm:$0xff]
  %v74 = vld [vmem:[%s0 + $0x164] sm:$0xf]
  %v75 = vld [vmem:[%s0 + $0x168] sm:$0xff]
  %v76 = vld [vmem:[%s0 + $0x170] sm:$0xf]
  %v77 = vld [vmem:[%s0 + $0x174] sm:$0xff]
  %v78 = vld [vmem:[%s0 + $0x17c] sm:$0xf]
  %v79 = vld [vmem:[%s0 + $0x180] sm:$0xff]
  %v80 = vld [vmem:[%s0 + $0x188] sm:$0xf]
  %v81 = vld [vmem:[%s0 + $0x18c] sm:$0xff]
  %v82 = vld [vmem:[%s0 + $0x194] sm:$0xf]
  %v83 = vld [vmem:[%s0 + $0x198] sm:$0xff]
  %v84 = vld [vmem:[%s0 + $0x1a0] sm:$0xf]
  %v85 = vld [vmem:[%s0 + $0x1a4] sm:$0xff]
  %v86 = vld [vmem:[%s0 + $0x1ac] sm:$0xf]
  %v87 = vld [vmem:[%s1] sm:$0xf]
  %v88 = vld [vmem:[%s1 + $0x4] sm:$0xf]
  %v89 = vld [vmem:[%s1 + $0x8] sm:$0xf]
  %v90 = vld [vmem:[%s1 + $0xc] sm:$0xf]
  %v91 = vld [vmem:[%s1 + $0x10] sm:$0xf]
  %v92 = vld [vmem:[%s1 + $0x14] sm:$0xf]
  %v93 = vld [vmem:[%s1 + $0x18] sm:$0xf]
  %v94 = vld [vmem:[%s1 + $0x1c] sm:$0xf]
  %v95 = vld [vmem:[%s1 + $0x20] sm:$0xf]
  %v96 = vld [vmem:[%s1 + $0x24] sm:$0xf]
  %v97 = vld [vmem:[%s1 + $0x28] sm:$0xf]
  %v98 = vld [vmem:[%s1 + $0x2c] sm:$0xf]
  %v99 = vld [vmem:[%s1 + $0x30] sm:$0xf]
  %v100 = vld [vmem:[%s1 + $0x34] sm:$0xf]
  %v101 = vld [vmem:[%s1 + $0x38] sm:$0xf]
  %v102 = vld [vmem:[%s1 + $0x3c] sm:$0xf]
  %v103 = vld [vmem:[%s1 + $0x40] sm:$0xf]
  %v104 = vld [vmem:[%s1 + $0x44] sm:$0xf]
  %v105 = vld [vmem:[%s1 + $0x48] sm:$0xf]
  %v106 = vld [vmem:[%s1 + $0x4c] sm:$0xf]
  %v107 = vld [vmem:[%s1 + $0x50] sm:$0xf]
  %v108 = vld [vmem:[%s1 + $0x54] sm:$0xf]
  %v109 = vld [vmem:[%s1 + $0x58] sm:$0xf]
  %v110 = vld [vmem:[%s1 + $0x5c] sm:$0xf]
  %v111 = vld [vmem:[%s1 + $0x60] sm:$0xf]
  %v112 = vld [vmem:[%s1 + $0x64] sm:$0xf]
  %v113 = vld [vmem:[%s1 + $0x68] sm:$0xf]
  %v114 = vld [vmem:[%s1 + $0x6c] sm:$0xf]
  %v115 = vld [vmem:[%s1 + $0x70] sm:$0xf]
  %v116 = vld [vmem:[%s1 + $0x74] sm:$0xf]
  %v117 = vld [vmem:[%s1 + $0x78] sm:$0xf]
  %v118 = vld [vmem:[%s1 + $0x7c] sm:$0xf]
  %v119 = vld [vmem:[%s1 + $0x80] sm:$0xf]
  %v120 = vld [vmem:[%s1 + $0x84] sm:$0xf]
  %v121 = vld [vmem:[%s1 + $0x88] sm:$0xf]
  %v122 = vld [vmem:[%s1 + $0x8c] sm:$0xf]
  %v195 = vunpack.c.l.b16 %v15
  %v196 = vunpack.c.h.b16 %v15
  %v197 = vunpack.c.l.b16 %v16
  %v198 = vunpack.c.l.b16 %v17
  %v199 = vunpack.c.h.b16 %v17
  %v200 = vunpack.c.l.b16 %v18
  %v201 = vunpack.c.l.b16 %v19
  %v202 = vunpack.c.h.b16 %v19
  %v203 = vunpack.c.l.b16 %v20
  %v204 = vunpack.c.l.b16 %v21
  %v205 = vunpack.c.h.b16 %v21
  %v206 = vunpack.c.l.b16 %v22
  %v207 = vunpack.c.l.b16 %v23
  %v208 = vunpack.c.h.b16 %v23
  %v209 = vunpack.c.l.b16 %v24
  %v210 = vunpack.c.l.b16 %v25
  %v211 = vunpack.c.h.b16 %v25
  %v212 = vunpack.c.l.b16 %v26
  %v213 = vunpack.c.l.b16 %v27
  %v214 = vunpack.c.h.b16 %v27
  %v215 = vunpack.c.l.b16 %v28
  %v216 = vunpack.c.l.b16 %v29
  %v217 = vunpack.c.h.b16 %v29
  %v218 = vunpack.c.l.b16 %v30
  %v219 = vunpack.c.l.b16 %v31
  %v220 = vunpack.c.h.b16 %v31
  %v221 = vunpack.c.l.b16 %v32
  %v222 = vunpack.c.l.b16 %v33
  %v223 = vunpack.c.h.b16 %v33
  %v224 = vunpack.c.l.b16 %v34
  %v225 = vunpack.c.l.b16 %v35
  %v226 = vunpack.c.h.b16 %v35
  %v227 = vunpack.c.l.b16 %v36
  %v228 = vunpack.c.l.b16 %v37
  %v229 = vunpack.c.h.b16 %v37
  %v230 = vunpack.c.l.b16 %v38
  %v231 = vunpack.c.l.b16 %v39
  %v232 = vunpack.c.h.b16 %v39
  %v233 = vunpack.c.l.b16 %v40
  %v234 = vunpack.c.l.b16 %v41
  %v235 = vunpack.c.h.b16 %v41
  %v236 = vunpack.c.l.b16 %v42
  %v237 = vunpack.c.l.b16 %v43
  %v238 = vunpack.c.h.b16 %v43
  %v239 = vunpack.c.l.b16 %v44
  %v240 = vunpack.c.l.b16 %v45
  %v241 = vunpack.c.h.b16 %v45
  %v242 = vunpack.c.l.b16 %v46
  %v243 = vunpack.c.l.b16 %v47
  %v244 = vunpack.c.h.b16 %v47
  %v245 = vunpack.c.l.b16 %v48
  %v246 = vunpack.c.l.b16 %v49
  %v247 = vunpack.c.h.b16 %v49
  %v248 = vunpack.c.l.b16 %v50
  %v249 = vunpack.c.l.b16 %v51
  %v250 = vunpack.c.h.b16 %v51
  %v251 = vunpack.c.l.b16 %v52
  %v252 = vunpack.c.l.b16 %v53
  %v253 = vunpack.c.h.b16 %v53
  %v254 = vunpack.c.l.b16 %v54
  %v255 = vunpack.c.l.b16 %v55
  %v256 = vunpack.c.h.b16 %v55
  %v257 = vunpack.c.l.b16 %v56
  %v258 = vunpack.c.l.b16 %v57
  %v259 = vunpack.c.h.b16 %v57
  %v260 = vunpack.c.l.b16 %v58
  %v261 = vunpack.c.l.b16 %v59
  %v262 = vunpack.c.h.b16 %v59
  %v263 = vunpack.c.l.b16 %v60
  %v264 = vunpack.c.l.b16 %v61
  %v265 = vunpack.c.h.b16 %v61
  %v266 = vunpack.c.l.b16 %v62
  %v267 = vunpack.c.l.b16 %v63
  %v268 = vunpack.c.h.b16 %v63
  %v269 = vunpack.c.l.b16 %v64
  %v270 = vunpack.c.l.b16 %v65
  %v271 = vunpack.c.h.b16 %v65
  %v272 = vunpack.c.l.b16 %v66
  %v273 = vunpack.c.l.b16 %v67
  %v274 = vunpack.c.h.b16 %v67
  %v275 = vunpack.c.l.b16 %v68
  %v276 = vunpack.c.l.b16 %v69
  %v277 = vunpack.c.h.b16 %v69
  %v278 = vunpack.c.l.b16 %v70
  %v279 = vunpack.c.l.b16 %v71
  %v280 = vunpack.c.h.b16 %v71
  %v281 = vunpack.c.l.b16 %v72
  %v282 = vunpack.c.l.b16 %v73
  %v283 = vunpack.c.h.b16 %v73
  %v284 = vunpack.c.l.b16 %v74
  %v285 = vunpack.c.l.b16 %v75
  %v286 = vunpack.c.h.b16 %v75
  %v287 = vunpack.c.l.b16 %v76
  %v288 = vunpack.c.l.b16 %v77
  %v289 = vunpack.c.h.b16 %v77
  %v290 = vunpack.c.l.b16 %v78
  %v291 = vunpack.c.l.b16 %v79
  %v292 = vunpack.c.h.b16 %v79
  %v293 = vunpack.c.l.b16 %v80
  %v294 = vunpack.c.l.b16 %v81
  %v295 = vunpack.c.h.b16 %v81
  %v296 = vunpack.c.l.b16 %v82
  %v297 = vunpack.c.l.b16 %v83
  %v298 = vunpack.c.h.b16 %v83
  %v299 = vunpack.c.l.b16 %v84
  %v300 = vunpack.c.l.b16 %v85
  %v301 = vunpack.c.h.b16 %v85
  %v302 = vunpack.c.l.b16 %v86
  %v303 = vpack.c.b16 %v198, %v195
  %v304 = vpack.c.b16 %v199, %v196
  %v305 = vpack.c.b16 %v200, %v197
  %v306 = vpack.c.b16 %v204, %v201
  %v307 = vpack.c.b16 %v205, %v202
  %v308 = vpack.c.b16 %v206, %v203
  %v309 = vpack.c.b16 %v210, %v207
  %v310 = vpack.c.b16 %v211, %v208
  %v311 = vpack.c.b16 %v212, %v209
  %v312 = vpack.c.b16 %v216, %v213
  %v313 = vpack.c.b16 %v217, %v214
  %v314 = vpack.c.b16 %v218, %v215
  %v315 = vpack.c.b16 %v222, %v219
  %v316 = vpack.c.b16 %v223, %v220
  %v317 = vpack.c.b16 %v224, %v221
  %v318 = vpack.c.b16 %v228, %v225
  %v319 = vpack.c.b16 %v229, %v226
  %v320 = vpack.c.b16 %v230, %v227
  %v321 = vpack.c.b16 %v234, %v231
  %v322 = vpack.c.b16 %v235, %v232
  %v323 = vpack.c.b16 %v236, %v233
  %v324 = vpack.c.b16 %v240, %v237
  %v325 = vpack.c.b16 %v241, %v238
  %v326 = vpack.c.b16 %v242, %v239
  %v327 = vpack.c.b16 %v246, %v243
  %v328 = vpack.c.b16 %v247, %v244
  %v329 = vpack.c.b16 %v248, %v245
  %v330 = vpack.c.b16 %v252, %v249
  %v331 = vpack.c.b16 %v253, %v250
  %v332 = vpack.c.b16 %v254, %v251
  %v333 = vpack.c.b16 %v258, %v255
  %v334 = vpack.c.b16 %v259, %v256
  %v335 = vpack.c.b16 %v260, %v257
  %v336 = vpack.c.b16 %v264, %v261
  %v337 = vpack.c.b16 %v265, %v262
  %v338 = vpack.c.b16 %v266, %v263
  %v339 = vpack.c.b16 %v270, %v267
  %v340 = vpack.c.b16 %v271, %v268
  %v341 = vpack.c.b16 %v272, %v269
  %v342 = vpack.c.b16 %v276, %v273
  %v343 = vpack.c.b16 %v277, %v274
  %v344 = vpack.c.b16 %v278, %v275
  %v345 = vpack.c.b16 %v282, %v279
  %v346 = vpack.c.b16 %v283, %v280
  %v347 = vpack.c.b16 %v284, %v281
  %v348 = vpack.c.b16 %v288, %v285
  %v349 = vpack.c.b16 %v289, %v286
  %v350 = vpack.c.b16 %v290, %v287
  %v351 = vpack.c.b16 %v294, %v291
  %v352 = vpack.c.b16 %v295, %v292
  %v353 = vpack.c.b16 %v296, %v293
  %v354 = vpack.c.b16 %v300, %v297
  %v355 = vpack.c.b16 %v301, %v298
  %v356 = vpack.c.b16 %v302, %v299
  %v429 = vunpack.c.l.b16 %v87
  %v430 = vunpack.c.l.b16 %v88
  %v431 = vunpack.c.l.b16 %v89
  %v432 = vunpack.c.l.b16 %v90
  %v433 = vunpack.c.l.b16 %v91
  %v434 = vunpack.c.l.b16 %v92
  %v435 = vunpack.c.l.b16 %v93
  %v436 = vunpack.c.l.b16 %v94
  %v437 = vunpack.c.l.b16 %v95
  %v438 = vunpack.c.l.b16 %v96
  %v439 = vunpack.c.l.b16 %v97
  %v440 = vunpack.c.l.b16 %v98
  %v441 = vunpack.c.l.b16 %v99
  %v442 = vunpack.c.l.b16 %v100
  %v443 = vunpack.c.l.b16 %v101
  %v444 = vunpack.c.l.b16 %v102
  %v445 = vunpack.c.l.b16 %v103
  %v446 = vunpack.c.l.b16 %v104
  %v447 = vunpack.c.l.b16 %v105
  %v448 = vunpack.c.l.b16 %v106
  %v449 = vunpack.c.l.b16 %v107
  %v450 = vunpack.c.l.b16 %v108
  %v451 = vunpack.c.l.b16 %v109
  %v452 = vunpack.c.l.b16 %v110
  %v453 = vunpack.c.l.b16 %v111
  %v454 = vunpack.c.l.b16 %v112
  %v455 = vunpack.c.l.b16 %v113
  %v456 = vunpack.c.l.b16 %v114
  %v457 = vunpack.c.l.b16 %v115
  %v458 = vunpack.c.l.b16 %v116
  %v459 = vunpack.c.l.b16 %v117
  %v460 = vunpack.c.l.b16 %v118
  %v461 = vunpack.c.l.b16 %v119
  %v462 = vunpack.c.l.b16 %v120
  %v463 = vunpack.c.l.b16 %v121
  %v464 = vunpack.c.l.b16 %v122
  %v465 = vpack.c.b16 %v430, %v429
  %v466 = vpack.c.b16 %v432, %v431
  %v467 = vpack.c.b16 %v434, %v433
  %v468 = vpack.c.b16 %v436, %v435
  %v469 = vpack.c.b16 %v438, %v437
  %v470 = vpack.c.b16 %v440, %v439
  %v471 = vpack.c.b16 %v442, %v441
  %v472 = vpack.c.b16 %v444, %v443
  %v473 = vpack.c.b16 %v446, %v445
  %v474 = vpack.c.b16 %v448, %v447
  %v475 = vpack.c.b16 %v450, %v449
  %v476 = vpack.c.b16 %v452, %v451
  %v477 = vpack.c.b16 %v454, %v453
  %v478 = vpack.c.b16 %v456, %v455
  %v479 = vpack.c.b16 %v458, %v457
  %v480 = vpack.c.b16 %v460, %v459
  %v481 = vpack.c.b16 %v462, %v461
  %v482 = vpack.c.b16 %v464, %v463
  %vm501 = vcmask 261120
  %v503 = vsel %vm501, %v305, 0
  %v506 = vsel %vm501, %v308, 0
  %v509 = vsel %vm501, %v311, 0
  %v512 = vsel %vm501, %v314, 0
  %v515 = vsel %vm501, %v317, 0
  %v518 = vsel %vm501, %v320, 0
  %v521 = vsel %vm501, %v323, 0
  %v524 = vsel %vm501, %v326, 0
  %v527 = vsel %vm501, %v329, 0
  %v530 = vsel %vm501, %v332, 0
  %v533 = vsel %vm501, %v335, 0
  %v536 = vsel %vm501, %v338, 0
  %v539 = vsel %vm501, %v341, 0
  %v542 = vsel %vm501, %v344, 0
  %v545 = vsel %vm501, %v347, 0
  %v548 = vsel %vm501, %v350, 0
  %v551 = vsel %vm501, %v353, 0
  %v554 = vsel %vm501, %v356, 0
  %556 = vmatprep.subr.bf16.mxu0 0
  %557 = vmatpush1.bf16.msra.mxu0 %v465
  %558 = vmatprep.subr.bf16.mxu0 0
  %559 = vmatpush1.bf16.msra.mxu0 %v466
  %560 = vmatprep.subr.bf16.mxu0 0
  %561 = vmatpush1.bf16.msra.mxu0 %v467
  %562 = vmatprep.subr.bf16.mxu0 0
  %563 = vmatpush1.bf16.msra.mxu0 %v468
  %564 = vmatprep.subr.bf16.mxu0 0
  %565 = vmatpush1.bf16.msra.mxu0 %v469
  %566 = vmatprep.subr.bf16.mxu0 0
  %567 = vmatpush1.bf16.msra.mxu0 %v470
  %568 = vmatprep.subr.bf16.mxu0 0
  %569 = vmatpush1.bf16.msra.mxu0 %v471
  %570 = vmatprep.subr.bf16.mxu0 0
  %571 = vmatpush1.bf16.msra.mxu0 %v472
  %572 = vmatprep.subr.bf16.mxu0 0
  %573 = vmatpush1.bf16.msra.mxu0 %v473
  %574 = vmatprep.subr.bf16.mxu0 0
  %575 = vmatpush1.bf16.msra.mxu0 %v474
  %576 = vmatprep.subr.bf16.mxu0 0
  %577 = vmatpush1.bf16.msra.mxu0 %v475
  %578 = vmatprep.subr.bf16.mxu0 0
  %579 = vmatpush1.bf16.msra.mxu0 %v476
  %580 = vmatprep.subr.bf16.mxu0 0
  %581 = vmatpush1.bf16.msra.mxu0 %v477
  %582 = vmatprep.subr.bf16.mxu0 0
  %583 = vmatpush1.bf16.msra.mxu0 %v478
  %584 = vmatprep.subr.bf16.mxu0 0
  %585 = vmatpush1.bf16.msra.mxu0 %v479
  %586 = vmatprep.subr.bf16.mxu0 0
  %587 = vmatpush1.bf16.msra.mxu0 %v480
  %588 = vmatprep.mubr.bf16.mxu0 %v304
  %589 = vmatmul.mubr.bf16.gmra.mrb[0].mxu0 %v303
  %v590 = vpop.f32.mrb[0].mxu0
  %v591 = vadd.f32 0.0, %v590
  %v592 = vpop.f32.mrb[0].mxu0
  %v593 = vpop.f32.mrb[0].mxu0
  %v594 = vadd.f32 0.0, %v593
  %v595 = vpop.f32.mrb[0].mxu0
  %596 = vmatprep.mubr.bf16.mxu0 %v307
  %597 = vmatmul.mubr.bf16.gmra.mrb[0].mxu0 %v306
  %v598 = vpop.f32.mrb[0].mxu0
  %v599 = vadd.f32 0.0, %v598
  %v600 = vpop.f32.mrb[0].mxu0
  %v601 = vpop.f32.mrb[0].mxu0
  %v602 = vadd.f32 0.0, %v601
  %v603 = vpop.f32.mrb[0].mxu0
  %604 = vmatprep.mubr.bf16.mxu0 %v310
  %605 = vmatmul.mubr.bf16.gmra.mrb[0].mxu0 %v309
  %v606 = vpop.f32.mrb[0].mxu0
  %v607 = vadd.f32 0.0, %v606
  %v608 = vpop.f32.mrb[0].mxu0
  %v609 = vpop.f32.mrb[0].mxu0
  %v610 = vadd.f32 0.0, %v609
  %v611 = vpop.f32.mrb[0].mxu0
  %612 = vmatprep.mubr.bf16.mxu0 %v313
  %613 = vmatmul.mubr.bf16.gmra.mrb[0].mxu0 %v312
  %v614 = vpop.f32.mrb[0].mxu0
  %v615 = vadd.f32 0.0, %v614
  %v616 = vpop.f32.mrb[0].mxu0
  %v617 = vpop.f32.mrb[0].mxu0
  %v618 = vadd.f32 0.0, %v617
  %v619 = vpop.f32.mrb[0].mxu0
  %620 = vmatprep.mubr.bf16.mxu0 %v316
  %621 = vmatmul.mubr.bf16.gmra.mrb[0].mxu0 %v315
  %v622 = vpop.f32.mrb[0].mxu0
  %v623 = vadd.f32 0.0, %v622
  %v624 = vpop.f32.mrb[0].mxu0
  %v625 = vpop.f32.mrb[0].mxu0
  %v626 = vadd.f32 0.0, %v625
  %v627 = vpop.f32.mrb[0].mxu0
  %628 = vmatprep.mubr.bf16.mxu0 %v319
  %629 = vmatmul.mubr.bf16.gmra.mrb[0].mxu0 %v318
  %v630 = vpop.f32.mrb[0].mxu0
  %v631 = vadd.f32 0.0, %v630
  %v632 = vpop.f32.mrb[0].mxu0
  %v633 = vpop.f32.mrb[0].mxu0
  %v634 = vadd.f32 0.0, %v633
  %v635 = vpop.f32.mrb[0].mxu0
  %636 = vmatprep.mubr.bf16.mxu0 %v322
  %637 = vmatmul.mubr.bf16.gmra.mrb[0].mxu0 %v321
  %v638 = vpop.f32.mrb[0].mxu0
  %v639 = vadd.f32 0.0, %v638
  %v640 = vpop.f32.mrb[0].mxu0
  %v641 = vpop.f32.mrb[0].mxu0
  %v642 = vadd.f32 0.0, %v641
  %v643 = vpop.f32.mrb[0].mxu0
  %644 = vmatprep.mubr.bf16.mxu0 %v325
  %645 = vmatmul.mubr.bf16.gmra.mrb[0].mxu0 %v324
  %v646 = vpop.f32.mrb[0].mxu0
  %v647 = vadd.f32 0.0, %v646
  %v648 = vpop.f32.mrb[0].mxu0
  %v649 = vpop.f32.mrb[0].mxu0
  %v650 = vadd.f32 0.0, %v649
  %v651 = vpop.f32.mrb[0].mxu0
  %652 = vmatprep.mubr.bf16.mxu0 %v328
  %653 = vmatmul.mubr.bf16.gmra.mrb[0].mxu0 %v327
  %v654 = vpop.f32.mrb[0].mxu0
  %v655 = vadd.f32 0.0, %v654
  %v656 = vpop.f32.mrb[0].mxu0
  %v657 = vpop.f32.mrb[0].mxu0
  %v658 = vadd.f32 0.0, %v657
  %v659 = vpop.f32.mrb[0].mxu0
  %660 = vmatprep.mubr.bf16.mxu0 %v331
  %661 = vmatmul.mubr.bf16.gmra.mrb[0].mxu0 %v330
  %v662 = vpop.f32.mrb[0].mxu0
  %v663 = vadd.f32 0.0, %v662
  %v664 = vpop.f32.mrb[0].mxu0
  %v665 = vpop.f32.mrb[0].mxu0
  %v666 = vadd.f32 0.0, %v665
  %v667 = vpop.f32.mrb[0].mxu0
  %668 = vmatprep.mubr.bf16.mxu0 %v334
  %669 = vmatmul.mubr.bf16.gmra.mrb[0].mxu0 %v333
  %v670 = vpop.f32.mrb[0].mxu0
  %v671 = vadd.f32 0.0, %v670
  %v672 = vpop.f32.mrb[0].mxu0
  %v673 = vpop.f32.mrb[0].mxu0
  %v674 = vadd.f32 0.0, %v673
  %v675 = vpop.f32.mrb[0].mxu0
  %676 = vmatprep.mubr.bf16.mxu0 %v337
  %677 = vmatmul.mubr.bf16.gmra.mrb[0].mxu0 %v336
  %v678 = vpop.f32.mrb[0].mxu0
  %v679 = vadd.f32 0.0, %v678
  %v680 = vpop.f32.mrb[0].mxu0
  %v681 = vpop.f32.mrb[0].mxu0
  %v682 = vadd.f32 0.0, %v681
  %v683 = vpop.f32.mrb[0].mxu0
  %684 = vmatprep.mubr.bf16.mxu0 %v340
  %685 = vmatmul.mubr.bf16.gmra.mrb[0].mxu0 %v339
  %v686 = vpop.f32.mrb[0].mxu0
  %v687 = vadd.f32 0.0, %v686
  %v688 = vpop.f32.mrb[0].mxu0
  %v689 = vpop.f32.mrb[0].mxu0
  %v690 = vadd.f32 0.0, %v689
  %v691 = vpop.f32.mrb[0].mxu0
  %692 = vmatprep.mubr.bf16.mxu0 %v343
  %693 = vmatmul.mubr.bf16.gmra.mrb[0].mxu0 %v342
  %v694 = vpop.f32.mrb[0].mxu0
  %v695 = vadd.f32 0.0, %v694
  %v696 = vpop.f32.mrb[0].mxu0
  %v697 = vpop.f32.mrb[0].mxu0
  %v698 = vadd.f32 0.0, %v697
  %v699 = vpop.f32.mrb[0].mxu0
  %700 = vmatprep.mubr.bf16.mxu0 %v346
  %701 = vmatmul.mubr.bf16.gmra.mrb[0].mxu0 %v345
  %v702 = vpop.f32.mrb[0].mxu0
  %v703 = vadd.f32 0.0, %v702
  %v704 = vpop.f32.mrb[0].mxu0
  %v705 = vpop.f32.mrb[0].mxu0
  %v706 = vadd.f32 0.0, %v705
  %v707 = vpop.f32.mrb[0].mxu0
  %708 = vmatprep.mubr.bf16.mxu0 %v349
  %709 = vmatmul.mubr.bf16.gmra.mrb[0].mxu0 %v348
  %v710 = vpop.f32.mrb[0].mxu0
  %v711 = vadd.f32 0.0, %v710
  %v712 = vpop.f32.mrb[0].mxu0
  %v713 = vpop.f32.mrb[0].mxu0
  %v714 = vadd.f32 0.0, %v713
  %v715 = vpop.f32.mrb[0].mxu0
  %716 = vmatprep.mubr.bf16.mxu0 %v352
  %717 = vmatmul.mubr.bf16.gmra.mrb[0].mxu0 %v351
  %v718 = vpop.f32.mrb[0].mxu0
  %v719 = vadd.f32 0.0, %v718
  %v720 = vpop.f32.mrb[0].mxu0
  %v721 = vpop.f32.mrb[0].mxu0
  %v722 = vadd.f32 0.0, %v721
  %v723 = vpop.f32.mrb[0].mxu0
  %724 = vmatprep.mubr.bf16.mxu0 %v355
  %725 = vmatmul.mubr.bf16.gmra.mrb[0].mxu0 %v354
  %v726 = vpop.f32.mrb[0].mxu0
  %v727 = vadd.f32 0.0, %v726
  %v728 = vpop.f32.mrb[0].mxu0
  %v729 = vpop.f32.mrb[0].mxu0
  %v730 = vadd.f32 0.0, %v729
  %v731 = vpop.f32.mrb[0].mxu0
  %732 = vdwg.mxu0
  %733 = vmatprep.subr.bf16.mxu0 0
  %734 = vmatpush1.bf16.msra.mxu0 %v481
  %735 = vmatprep.subr.bf16.mxu0 0
  %736 = vmatpush1.bf16.msra.mxu0 %v482
  %737 = vmatprep.subr.bf16.mxu0 0
  %738 = vmatpush1.bf16.msra.mxu0 0
  %739 = vmatprep.subr.bf16.mxu0 0
  %740 = vmatpush1.bf16.msra.mxu0 0
  %741 = vmatprep.subr.bf16.mxu0 0
  %742 = vmatpush1.bf16.msra.mxu0 0
  %743 = vmatprep.subr.bf16.mxu0 0
  %744 = vmatpush1.bf16.msra.mxu0 0
  %745 = vmatprep.subr.bf16.mxu0 0
  %746 = vmatpush1.bf16.msra.mxu0 0
  %747 = vmatprep.subr.bf16.mxu0 0
  %748 = vmatpush1.bf16.msra.mxu0 0
  %749 = vmatprep.subr.bf16.mxu0 0
  %750 = vmatpush1.bf16.msra.mxu0 0
  %751 = vmatprep.subr.bf16.mxu0 0
  %752 = vmatpush1.bf16.msra.mxu0 0
  %753 = vmatprep.subr.bf16.mxu0 0
  %754 = vmatpush1.bf16.msra.mxu0 0
  %755 = vmatprep.subr.bf16.mxu0 0
  %756 = vmatpush1.bf16.msra.mxu0 0
  %757 = vmatprep.subr.bf16.mxu0 0
  %758 = vmatpush1.bf16.msra.mxu0 0
  %759 = vmatprep.subr.bf16.mxu0 0
  %760 = vmatpush1.bf16.msra.mxu0 0
  %761 = vmatprep.subr.bf16.mxu0 0
  %762 = vmatpush1.bf16.msra.mxu0 0
  %763 = vmatprep.subr.bf16.mxu0 0
  %764 = vmatpush1.bf16.msra.mxu0 0
  %765 = vmatprep.mubr.bf16.mxu0 0
  %766 = vmatmul.mubr.bf16.gmra.mrb[0].mxu0 %v503
  %v767 = vpop.f32.mrb[0].mxu0
  %v768 = vadd.f32 %v591, %v767
  %v769 = vpop.f32.mrb[0].mxu0
  %v770 = vpop.f32.mrb[0].mxu0
  %v771 = vadd.f32 %v594, %v770
  %v772 = vpop.f32.mrb[0].mxu0
  %773 = vmatprep.mubr.bf16.mxu0 0
  %774 = vmatmul.mubr.bf16.gmra.mrb[0].mxu0 %v506
  %v775 = vpop.f32.mrb[0].mxu0
  %v776 = vadd.f32 %v599, %v775
  %v777 = vpop.f32.mrb[0].mxu0
  %v778 = vpop.f32.mrb[0].mxu0
  %v779 = vadd.f32 %v602, %v778
  %v780 = vpop.f32.mrb[0].mxu0
  %781 = vmatprep.mubr.bf16.mxu0 0
  %782 = vmatmul.mubr.bf16.gmra.mrb[0].mxu0 %v509
  %v783 = vpop.f32.mrb[0].mxu0
  %v784 = vadd.f32 %v607, %v783
  %v785 = vpop.f32.mrb[0].mxu0
  %v786 = vpop.f32.mrb[0].mxu0
  %v787 = vadd.f32 %v610, %v786
  %v788 = vpop.f32.mrb[0].mxu0
  %789 = vmatprep.mubr.bf16.mxu0 0
  %790 = vmatmul.mubr.bf16.gmra.mrb[0].mxu0 %v512
  %v791 = vpop.f32.mrb[0].mxu0
  %v792 = vadd.f32 %v615, %v791
  %v793 = vpop.f32.mrb[0].mxu0
  %v794 = vpop.f32.mrb[0].mxu0
  %v795 = vadd.f32 %v618, %v794
  %v796 = vpop.f32.mrb[0].mxu0
  %797 = vmatprep.mubr.bf16.mxu0 0
  %798 = vmatmul.mubr.bf16.gmra.mrb[0].mxu0 %v515
  %v799 = vpop.f32.mrb[0].mxu0
  %v800 = vadd.f32 %v623, %v799
  %v801 = vpop.f32.mrb[0].mxu0
  %v802 = vpop.f32.mrb[0].mxu0
  %v803 = vadd.f32 %v626, %v802
  %v804 = vpop.f32.mrb[0].mxu0
  %805 = vmatprep.mubr.bf16.mxu0 0
  %806 = vmatmul.mubr.bf16.gmra.mrb[0].mxu0 %v518
  %v807 = vpop.f32.mrb[0].mxu0
  %v808 = vadd.f32 %v631, %v807
  %v809 = vpop.f32.mrb[0].mxu0
  %v810 = vpop.f32.mrb[0].mxu0
  %v811 = vadd.f32 %v634, %v810
  %v812 = vpop.f32.mrb[0].mxu0
  %813 = vmatprep.mubr.bf16.mxu0 0
  %814 = vmatmul.mubr.bf16.gmra.mrb[0].mxu0 %v521
  %v815 = vpop.f32.mrb[0].mxu0
  %v816 = vadd.f32 %v639, %v815
  %v817 = vpop.f32.mrb[0].mxu0
  %v818 = vpop.f32.mrb[0].mxu0
  %v819 = vadd.f32 %v642, %v818
  %v820 = vpop.f32.mrb[0].mxu0
  %821 = vmatprep.mubr.bf16.mxu0 0
  %822 = vmatmul.mubr.bf16.gmra.mrb[0].mxu0 %v524
  %v823 = vpop.f32.mrb[0].mxu0
  %v824 = vadd.f32 %v647, %v823
  %v825 = vpop.f32.mrb[0].mxu0
  %v826 = vpop.f32.mrb[0].mxu0
  %v827 = vadd.f32 %v650, %v826
  %v828 = vpop.f32.mrb[0].mxu0
  %829 = vmatprep.mubr.bf16.mxu0 0
  %830 = vmatmul.mubr.bf16.gmra.mrb[0].mxu0 %v527
  %v831 = vpop.f32.mrb[0].mxu0
  %v832 = vadd.f32 %v655, %v831
  %v833 = vpop.f32.mrb[0].mxu0
  %v834 = vpop.f32.mrb[0].mxu0
  %v835 = vadd.f32 %v658, %v834
  %v836 = vpop.f32.mrb[0].mxu0
  %837 = vmatprep.mubr.bf16.mxu0 0
  %838 = vmatmul.mubr.bf16.gmra.mrb[0].mxu0 %v530
  %v839 = vpop.f32.mrb[0].mxu0
  %v840 = vadd.f32 %v663, %v839
  %v841 = vpop.f32.mrb[0].mxu0
  %v842 = vpop.f32.mrb[0].mxu0
  %v843 = vadd.f32 %v666, %v842
  %v844 = vpop.f32.mrb[0].mxu0
  %845 = vmatprep.mubr.bf16.mxu0 0
  %846 = vmatmul.mubr.bf16.gmra.mrb[0].mxu0 %v533
  %v847 = vpop.f32.mrb[0].mxu0
  %v848 = vadd.f32 %v671, %v847
  %v849 = vpop.f32.mrb[0].mxu0
  %v850 = vpop.f32.mrb[0].mxu0
  %v851 = vadd.f32 %v674, %v850
  %v852 = vpop.f32.mrb[0].mxu0
  %853 = vmatprep.mubr.bf16.mxu0 0
  %854 = vmatmul.mubr.bf16.gmra.mrb[0].mxu0 %v536
  %v855 = vpop.f32.mrb[0].mxu0
  %v856 = vadd.f32 %v679, %v855
  %v857 = vpop.f32.mrb[0].mxu0
  %v858 = vpop.f32.mrb[0].mxu0
  %v859 = vadd.f32 %v682, %v858
  %v860 = vpop.f32.mrb[0].mxu0
  %861 = vmatprep.mubr.bf16.mxu0 0
  %862 = vmatmul.mubr.bf16.gmra.mrb[0].mxu0 %v539
  %v863 = vpop.f32.mrb[0].mxu0
  %v864 = vadd.f32 %v687, %v863
  %v865 = vpop.f32.mrb[0].mxu0
  %v866 = vpop.f32.mrb[0].mxu0
  %v867 = vadd.f32 %v690, %v866
  %v868 = vpop.f32.mrb[0].mxu0
  %869 = vmatprep.mubr.bf16.mxu0 0
  %870 = vmatmul.mubr.bf16.gmra.mrb[0].mxu0 %v542
  %v871 = vpop.f32.mrb[0].mxu0
  %v872 = vadd.f32 %v695, %v871
  %v873 = vpop.f32.mrb[0].mxu0
  %v874 = vpop.f32.mrb[0].mxu0
  %v875 = vadd.f32 %v698, %v874
  %v876 = vpop.f32.mrb[0].mxu0
  %877 = vmatprep.mubr.bf16.mxu0 0
  %878 = vmatmul.mubr.bf16.gmra.mrb[0].mxu0 %v545
  %v879 = vpop.f32.mrb[0].mxu0
  %v880 = vadd.f32 %v703, %v879
  %v881 = vpop.f32.mrb[0].mxu0
  %v882 = vpop.f32.mrb[0].mxu0
  %v883 = vadd.f32 %v706, %v882
  %v884 = vpop.f32.mrb[0].mxu0
  %885 = vmatprep.mubr.bf16.mxu0 0
  %886 = vmatmul.mubr.bf16.gmra.mrb[0].mxu0 %v548
  %v887 = vpop.f32.mrb[0].mxu0
  %v888 = vadd.f32 %v711, %v887
  %v889 = vpop.f32.mrb[0].mxu0
  %v890 = vpop.f32.mrb[0].mxu0
  %v891 = vadd.f32 %v714, %v890
  %v892 = vpop.f32.mrb[0].mxu0
  %893 = vmatprep.mubr.bf16.mxu0 0
  %894 = vmatmul.mubr.bf16.gmra.mrb[0].mxu0 %v551
  %v895 = vpop.f32.mrb[0].mxu0
  %v896 = vadd.f32 %v719, %v895
  %v897 = vpop.f32.mrb[0].mxu0
  %v898 = vpop.f32.mrb[0].mxu0
  %v899 = vadd.f32 %v722, %v898
  %v900 = vpop.f32.mrb[0].mxu0
  %901 = vmatprep.mubr.bf16.mxu0 0
  %902 = vmatmul.mubr.bf16.gmra.mrb[0].mxu0 %v554
  %v903 = vpop.f32.mrb[0].mxu0
  %v904 = vadd.f32 %v727, %v903
  %v905 = vpop.f32.mrb[0].mxu0
  %v906 = vpop.f32.mrb[0].mxu0
  %v907 = vadd.f32 %v730, %v906
  %v908 = vpop.f32.mrb[0].mxu0
  %909 = vdwg.mxu0
  %v910 = vmax.f32 %v768, %v803
  %v911 = vmax.f32 %v771, %v808
  %v912 = vmax.f32 %v776, %v811
  %v913 = vmax.f32 %v779, %v816
  %v914 = vmax.f32 %v784, %v819
  %v915 = vmax.f32 %v787, %v824
  %v916 = vmax.f32 %v792, %v827
  %v917 = vmax.f32 %v795, %v832
  %v918 = vmax.f32 %v800, %v835
  %v919 = vmax.f32 %v840, %v875
  %v920 = vmax.f32 %v843, %v880
  %v921 = vmax.f32 %v848, %v883
  %v922 = vmax.f32 %v851, %v888
  %v923 = vmax.f32 %v856, %v891
  %v924 = vmax.f32 %v859, %v896
  %v925 = vmax.f32 %v864, %v899
  %v926 = vmax.f32 %v867, %v904
  %v927 = vmax.f32 %v872, %v907
  %v928 = vmax.f32 %v910, %v919
  %v929 = vmax.f32 %v911, %v920
  %v930 = vmax.f32 %v912, %v921
  %v931 = vmax.f32 %v913, %v922
  %v932 = vmax.f32 %v914, %v923
  %v933 = vmax.f32 %v915, %v924
  %v934 = vmax.f32 %v916, %v925
  %v935 = vmax.f32 %v917, %v926
  %v936 = vmax.f32 %v918, %v927
  %v937 = vld [vmem:[%s2] sm:$0x1]
  %v939 = vlaneseq
  %v940 = vshrl.u32 %v939, 7
  %v941 = vsub.s32 0, %v940
  %v942 = vrot.slane %v937, %v941
  %v944 = vadd.f32 %v928, %v942
  %v945 = vadd.f32 %v929, %v942
  %v946 = vadd.f32 %v930, %v942
  %v947 = vadd.f32 %v931, %v942
  %v948 = vadd.f32 %v932, %v942
  %v949 = vadd.f32 %v933, %v942
  %v950 = vadd.f32 %v934, %v942
  %v951 = vadd.f32 %v935, %v942
  %v952 = vadd.f32 %v936, %v942
  %v953 = vmax.f32 %v944, 0.0
  %v954 = vmax.f32 %v945, 0.0
  %v955 = vmax.f32 %v946, 0.0
  %v956 = vmax.f32 %v947, 0.0
  %v957 = vmax.f32 %v948, 0.0
  %v958 = vmax.f32 %v949, 0.0
  %v959 = vmax.f32 %v950, 0.0
  %v960 = vmax.f32 %v951, 0.0
  %v961 = vmax.f32 %v952, 0.0
  %v962 = vpack.c.bf16 %v954, %v953
  %v963 = vpack.c.bf16 %v956, %v955
  %v964 = vpack.c.bf16 %v958, %v957
  %v965 = vpack.c.bf16 %v960, %v959
  %v966 = vpack.c.bf16 %v961, %v961
  %v972 = vunpack.c.l.b16 %v962
  %v973 = vunpack.c.h.b16 %v962
  %v974 = vunpack.c.l.b16 %v963
  %v975 = vunpack.c.h.b16 %v963
  %v976 = vunpack.c.l.b16 %v964
  %v977 = vunpack.c.h.b16 %v964
  %v978 = vunpack.c.l.b16 %v965
  %v979 = vunpack.c.h.b16 %v965
  %v980 = vunpack.c.l.b16 %v966
  %v981 = vpack.c.b16 %v972, %v972
  %v982 = vpack.c.b16 %v973, %v973
  %v983 = vpack.c.b16 %v974, %v974
  %v984 = vpack.c.b16 %v975, %v975
  %v985 = vpack.c.b16 %v976, %v976
  %v986 = vpack.c.b16 %v977, %v977
  %v987 = vpack.c.b16 %v978, %v978
  %v988 = vpack.c.b16 %v979, %v979
  %v989 = vpack.c.b16 %v980, %v980
  %vm999 = vcmask 519168
  %1000 = vst.msk [vmem:[%s3] sm:$0xf] %vm999, %v981
  %1001 = vst.msk [vmem:[%s3 + $0x4] sm:$0xf] %vm999, %v982
  %1002 = vst.msk [vmem:[%s3 + $0x8] sm:$0xf] %vm999, %v983
  %1003 = vst.msk [vmem:[%s3 + $0xc] sm:$0xf] %vm999, %v984
  %1004 = vst.msk [vmem:[%s3 + $0x10] sm:$0xf] %vm999, %v985
  %1005 = vst.msk [vmem:[%s3 + $0x14] sm:$0xf] %vm999, %v986
  %1006 = vst.msk [vmem:[%s3 + $0x18] sm:$0xf] %vm999, %v987
  %1007 = vst.msk [vmem:[%s3 + $0x1c] sm:$0xf] %vm999, %v988
  %1008 = vst.msk [vmem:[%s3 + $0x20] sm:$0xf] %vm999, %v989
  // Predicated region
  $region14: #{vae_forward.8} parent=0 // pred_check
    _
  $region15: #{vae_forward.8} parent=0 // pred_check_branch
    %1010 = sbr.rel (0) target = $region17
  $region16: #{vae_forward.8} parent=0 // pred_region
    _
  $region17: #{vae_forward.8} parent=0 // pred_fallthru
    _
  // Predicated region
  $region18: #{vae_forward.8} parent=0 // pred_check
    _
  $region19: #{vae_forward.8} parent=0 // pred_check_branch
    %1012 = sbr.rel (0) target = $region21
  $region20: #{vae_forward.8} parent=0 // pred_region
    _
  $region21: #{vae_forward.8} parent=0 // pred_fallthru
    _

// kernel: vae_forward.9
$region0: #{vae_forward.9}
  #allocation0 [shape = 'u32[]', space=smem, size = 0x4, offset = 0x4, fixed_abs, tag = 'smem constant byte address 0x4 - core index']
  #allocation1 [shape = 'u32[144,128]{1,0:T(1,128)}', space=vmem, size = 0x12000, scoped, tag = 'internal scratch']
  %s0 = inlined_call_operand.vmem [shape: bf16[64,576], index: 0, kind: input, shape index: {}]
  %s1 = inlined_call_operand.vmem [shape: bf16[576,128], index: 1, kind: input, shape index: {}]
  %s2 = inlined_call_operand.vmem [shape: f32[1,128], index: 2, kind: input, shape index: {}]
  %s3 = inlined_call_operand.vmem [shape: bf16[16,128], index: 3, kind: output, shape index: {}]
  %s4 = sld [smem:[#allocation0]]
  $region22: #{vae_forward.9} parent=0
    _
  %s6 = ssub.s32 1, %s4
  %s7 = scalar_select 0, %s6, %s4
  // Predicated region
  $region2: #{vae_forward.9} parent=0 // pred_check
    _
  $region3: #{vae_forward.9} parent=0 // pred_check_branch
    %9 = sbr.rel (0) target = $region5
  $region4: #{vae_forward.9} parent=0 // pred_region
    _
  $region5: #{vae_forward.9} parent=0 // pred_fallthru
    _
  // Predicated region
  $region6: #{vae_forward.9} parent=0 // pred_check
    _
  $region7: #{vae_forward.9} parent=0 // pred_check_branch
    %11 = sbr.rel (0) target = $region9
  $region8: #{vae_forward.9} parent=0 // pred_region
    _
  $region9: #{vae_forward.9} parent=0 // pred_fallthru
    _
  // Predicated region
  $region10: #{vae_forward.9} parent=0 // pred_check
    _
  $region11: #{vae_forward.9} parent=0 // pred_check_branch
    %13 = sbr.rel (0) target = $region13
  $region12: #{vae_forward.9} parent=0 // pred_region
    _
  $region13: #{vae_forward.9} parent=0 // pred_fallthru
    _
  %v15 = vld [vmem:[%s0] sm:$0xff]
  %v16 = vld [vmem:[%s0 + $0x8] sm:$0xff]
  %v17 = vld [vmem:[%s0 + $0x10] sm:$0xf]
  %v18 = vld [vmem:[%s0 + $0x14] sm:$0xff]
  %v19 = vld [vmem:[%s0 + $0x1c] sm:$0xff]
  %v20 = vld [vmem:[%s0 + $0x24] sm:$0xf]
  %v21 = vld [vmem:[%s0 + $0x28] sm:$0xff]
  %v22 = vld [vmem:[%s0 + $0x30] sm:$0xff]
  %v23 = vld [vmem:[%s0 + $0x38] sm:$0xf]
  %v24 = vld [vmem:[%s0 + $0x3c] sm:$0xff]
  %v25 = vld [vmem:[%s0 + $0x44] sm:$0xff]
  %v26 = vld [vmem:[%s0 + $0x4c] sm:$0xf]
  %v27 = vld [vmem:[%s0 + $0x50] sm:$0xff]
  %v28 = vld [vmem:[%s0 + $0x58] sm:$0xff]
  %v29 = vld [vmem:[%s0 + $0x60] sm:$0xf]
  %v30 = vld [vmem:[%s0 + $0x64] sm:$0xff]
  %v31 = vld [vmem:[%s0 + $0x6c] sm:$0xff]
  %v32 = vld [vmem:[%s0 + $0x74] sm:$0xf]
  %v33 = vld [vmem:[%s0 + $0x78] sm:$0xff]
  %v34 = vld [vmem:[%s0 + $0x80] sm:$0xff]
  %v35 = vld [vmem:[%s0 + $0x88] sm:$0xf]
  %v36 = vld [vmem:[%s0 + $0x8c] sm:$0xff]
  %v37 = vld [vmem:[%s0 + $0x94] sm:$0xff]
  %v38 = vld [vmem:[%s0 + $0x9c] sm:$0xf]
  %v39 = vld [vmem:[%s1] sm:$0xf]
  %v40 = vld [vmem:[%s1 + $0x4] sm:$0xf]
  %v41 = vld [vmem:[%s1 + $0x8] sm:$0xf]
  %v42 = vld [vmem:[%s1 + $0xc] sm:$0xf]
  %v43 = vld [vmem:[%s1 + $0x10] sm:$0xf]
  %v44 = vld [vmem:[%s1 + $0x14] sm:$0xf]
  %v45 = vld [vmem:[%s1 + $0x18] sm:$0xf]
  %v46 = vld [vmem:[%s1 + $0x1c] sm:$0xf]
  %v47 = vld [vmem:[%s1 + $0x20] sm:$0xf]
  %v48 = vld [vmem:[%s1 + $0x24] sm:$0xf]
  %v49 = vld [vmem:[%s1 + $0x28] sm:$0xf]
  %v50 = vld [vmem:[%s1 + $0x2c] sm:$0xf]
  %v51 = vld [vmem:[%s1 + $0x30] sm:$0xf]
  %v52 = vld [vmem:[%s1 + $0x34] sm:$0xf]
  %v53 = vld [vmem:[%s1 + $0x38] sm:$0xf]
  %v54 = vld [vmem:[%s1 + $0x3c] sm:$0xf]
  %v55 = vld [vmem:[%s1 + $0x40] sm:$0xf]
  %v56 = vld [vmem:[%s1 + $0x44] sm:$0xf]
  %v57 = vld [vmem:[%s1 + $0x48] sm:$0xf]
  %v58 = vld [vmem:[%s1 + $0x4c] sm:$0xf]
  %v59 = vld [vmem:[%s1 + $0x50] sm:$0xf]
  %v60 = vld [vmem:[%s1 + $0x54] sm:$0xf]
  %v61 = vld [vmem:[%s1 + $0x58] sm:$0xf]
  %v62 = vld [vmem:[%s1 + $0x5c] sm:$0xf]
  %v63 = vld [vmem:[%s1 + $0x60] sm:$0xf]
  %v64 = vld [vmem:[%s1 + $0x64] sm:$0xf]
  %v65 = vld [vmem:[%s1 + $0x68] sm:$0xf]
  %v66 = vld [vmem:[%s1 + $0x6c] sm:$0xf]
  %v67 = vld [vmem:[%s1 + $0x70] sm:$0xf]
  %v68 = vld [vmem:[%s1 + $0x74] sm:$0xf]
  %v69 = vld [vmem:[%s1 + $0x78] sm:$0xf]
  %v70 = vld [vmem:[%s1 + $0x7c] sm:$0xf]
  %v71 = vld [vmem:[%s1 + $0x80] sm:$0xf]
  %v72 = vld [vmem:[%s1 + $0x84] sm:$0xf]
  %v73 = vld [vmem:[%s1 + $0x88] sm:$0xf]
  %v74 = vld [vmem:[%s1 + $0x8c] sm:$0xf]
  %v75 = vld [vmem:[%s1 + $0x90] sm:$0xf]
  %v76 = vld [vmem:[%s1 + $0x94] sm:$0xf]
  %v77 = vld [vmem:[%s1 + $0x98] sm:$0xf]
  %v78 = vld [vmem:[%s1 + $0x9c] sm:$0xf]
  %v79 = vld [vmem:[%s1 + $0xa0] sm:$0xf]
  %v80 = vld [vmem:[%s1 + $0xa4] sm:$0xf]
  %v81 = vld [vmem:[%s1 + $0xa8] sm:$0xf]
  %v82 = vld [vmem:[%s1 + $0xac] sm:$0xf]
  %v83 = vld [vmem:[%s1 + $0xb0] sm:$0xf]
  %v84 = vld [vmem:[%s1 + $0xb4] sm:$0xf]
  %v85 = vld [vmem:[%s1 + $0xb8] sm:$0xf]
  %v86 = vld [vmem:[%s1 + $0xbc] sm:$0xf]
  %v87 = vld [vmem:[%s1 + $0xc0] sm:$0xf]
  %v88 = vld [vmem:[%s1 + $0xc4] sm:$0xf]
  %v89 = vld [vmem:[%s1 + $0xc8] sm:$0xf]
  %v90 = vld [vmem:[%s1 + $0xcc] sm:$0xf]
  %v91 = vld [vmem:[%s1 + $0xd0] sm:$0xf]
  %v92 = vld [vmem:[%s1 + $0xd4] sm:$0xf]
  %v93 = vld [vmem:[%s1 + $0xd8] sm:$0xf]
  %v94 = vld [vmem:[%s1 + $0xdc] sm:$0xf]
  %v95 = vld [vmem:[%s1 + $0xe0] sm:$0xf]
  %v96 = vld [vmem:[%s1 + $0xe4] sm:$0xf]
  %v97 = vld [vmem:[%s1 + $0xe8] sm:$0xf]
  %v98 = vld [vmem:[%s1 + $0xec] sm:$0xf]
  %v99 = vld [vmem:[%s1 + $0xf0] sm:$0xf]
  %v100 = vld [vmem:[%s1 + $0xf4] sm:$0xf]
  %v101 = vld [vmem:[%s1 + $0xf8] sm:$0xf]
  %v102 = vld [vmem:[%s1 + $0xfc] sm:$0xf]
  %v103 = vld [vmem:[%s1 + $0x100] sm:$0xf]
  %v104 = vld [vmem:[%s1 + $0x104] sm:$0xf]
  %v105 = vld [vmem:[%s1 + $0x108] sm:$0xf]
  %v106 = vld [vmem:[%s1 + $0x10c] sm:$0xf]
  %v107 = vld [vmem:[%s1 + $0x110] sm:$0xf]
  %v108 = vld [vmem:[%s1 + $0x114] sm:$0xf]
  %v109 = vld [vmem:[%s1 + $0x118] sm:$0xf]
  %v110 = vld [vmem:[%s1 + $0x11c] sm:$0xf]
  %v135 = vunpack.c.l.b16 %v15
  %v136 = vunpack.c.h.b16 %v15
  %v137 = vunpack.c.l.b16 %v16
  %v138 = vunpack.c.h.b16 %v16
  %v139 = vunpack.c.l.b16 %v17
  %v140 = vunpack.c.l.b16 %v18
  %v141 = vunpack.c.h.b16 %v18
  %v142 = vunpack.c.l.b16 %v19
  %v143 = vunpack.c.h.b16 %v19
  %v144 = vunpack.c.l.b16 %v20
  %v145 = vunpack.c.l.b16 %v21
  %v146 = vunpack.c.h.b16 %v21
  %v147 = vunpack.c.l.b16 %v22
  %v148 = vunpack.c.h.b16 %v22
  %v149 = vunpack.c.l.b16 %v23
  %v150 = vunpack.c.l.b16 %v24
  %v151 = vunpack.c.h.b16 %v24
  %v152 = vunpack.c.l.b16 %v25
  %v153 = vunpack.c.h.b16 %v25
  %v154 = vunpack.c.l.b16 %v26
  %v155 = vunpack.c.l.b16 %v27
  %v156 = vunpack.c.h.b16 %v27
  %v157 = vunpack.c.l.b16 %v28
  %v158 = vunpack.c.h.b16 %v28
  %v159 = vunpack.c.l.b16 %v29
  %v160 = vunpack.c.l.b16 %v30
  %v161 = vunpack.c.h.b16 %v30
  %v162 = vunpack.c.l.b16 %v31
  %v163 = vunpack.c.h.b16 %v31
  %v164 = vunpack.c.l.b16 %v32
  %v165 = vunpack.c.l.b16 %v33
  %v166 = vunpack.c.h.b16 %v33
  %v167 = vunpack.c.l.b16 %v34
  %v168 = vunpack.c.h.b16 %v34
  %v169 = vunpack.c.l.b16 %v35
  %v170 = vunpack.c.l.b16 %v36
  %v171 = vunpack.c.h.b16 %v36
  %v172 = vunpack.c.l.b16 %v37
  %v173 = vunpack.c.h.b16 %v37
  %v174 = vunpack.c.l.b16 %v38
  %v175 = vpack.c.b16 %v140, %v135
  %v176 = vpack.c.b16 %v141, %v136
  %v177 = vpack.c.b16 %v142, %v137
  %v178 = vpack.c.b16 %v143, %v138
  %v179 = vpack.c.b16 %v144, %v139
  %v180 = vpack.c.b16 %v150, %v145
  %v181 = vpack.c.b16 %v151, %v146
  %v182 = vpack.c.b16 %v152, %v147
  %v183 = vpack.c.b16 %v153, %v148
  %v184 = vpack.c.b16 %v154, %v149
  %v185 = vpack.c.b16 %v160, %v155
  %v186 = vpack.c.b16 %v161, %v156
  %v187 = vpack.c.b16 %v162, %v157
  %v188 = vpack.c.b16 %v163, %v158
  %v189 = vpack.c.b16 %v164, %v159
  %v190 = vpack.c.b16 %v170, %v165
  %v191 = vpack.c.b16 %v171, %v166
  %v192 = vpack.c.b16 %v172, %v167
  %v193 = vpack.c.b16 %v173, %v168
  %v194 = vpack.c.b16 %v174, %v169
  %v283 = vunpack.c.l.b16 %v39
  %v284 = vunpack.c.l.b16 %v40
  %v285 = vunpack.c.l.b16 %v41
  %v286 = vunpack.c.l.b16 %v42
  %v287 = vunpack.c.l.b16 %v43
  %v288 = vunpack.c.l.b16 %v44
  %v289 = vunpack.c.l.b16 %v45
  %v290 = vunpack.c.l.b16 %v46
  %v291 = vunpack.c.l.b16 %v47
  %v292 = vunpack.c.l.b16 %v48
  %v293 = vunpack.c.l.b16 %v49
  %v294 = vunpack.c.l.b16 %v50
  %v295 = vunpack.c.l.b16 %v51
  %v296 = vunpack.c.l.b16 %v52
  %v297 = vunpack.c.l.b16 %v53
  %v298 = vunpack.c.l.b16 %v54
  %v299 = vunpack.c.l.b16 %v55
  %v300 = vunpack.c.l.b16 %v56
  %v301 = vunpack.c.l.b16 %v57
  %v302 = vunpack.c.l.b16 %v58
  %v303 = vunpack.c.l.b16 %v59
  %v304 = vunpack.c.l.b16 %v60
  %v305 = vunpack.c.l.b16 %v61
  %v306 = vunpack.c.l.b16 %v62
  %v307 = vunpack.c.l.b16 %v63
  %v308 = vunpack.c.l.b16 %v64
  %v309 = vunpack.c.l.b16 %v65
  %v310 = vunpack.c.l.b16 %v66
  %v311 = vunpack.c.l.b16 %v67
  %v312 = vunpack.c.l.b16 %v68
  %v313 = vunpack.c.l.b16 %v69
  %v314 = vunpack.c.l.b16 %v70
  %v315 = vunpack.c.l.b16 %v71
  %v316 = vunpack.c.l.b16 %v72
  %v317 = vunpack.c.l.b16 %v73
  %v318 = vunpack.c.l.b16 %v74
  %v319 = vunpack.c.l.b16 %v75
  %v320 = vunpack.c.l.b16 %v76
  %v321 = vunpack.c.l.b16 %v77
  %v322 = vunpack.c.l.b16 %v78
  %v323 = vunpack.c.l.b16 %v79
  %v324 = vunpack.c.l.b16 %v80
  %v325 = vunpack.c.l.b16 %v81
  %v326 = vunpack.c.l.b16 %v82
  %v327 = vunpack.c.l.b16 %v83
  %v328 = vunpack.c.l.b16 %v84
  %v329 = vunpack.c.l.b16 %v85
  %v330 = vunpack.c.l.b16 %v86
  %v331 = vunpack.c.l.b16 %v87
  %v332 = vunpack.c.l.b16 %v88
  %v333 = vunpack.c.l.b16 %v89
  %v334 = vunpack.c.l.b16 %v90
  %v335 = vunpack.c.l.b16 %v91
  %v336 = vunpack.c.l.b16 %v92
  %v337 = vunpack.c.l.b16 %v93
  %v338 = vunpack.c.l.b16 %v94
  %v339 = vunpack.c.l.b16 %v95
  %v340 = vunpack.c.l.b16 %v96
  %v341 = vunpack.c.l.b16 %v97
  %v342 = vunpack.c.l.b16 %v98
  %v343 = vunpack.c.l.b16 %v99
  %v344 = vunpack.c.l.b16 %v100
  %v345 = vunpack.c.l.b16 %v101
  %v346 = vunpack.c.l.b16 %v102
  %v347 = vunpack.c.l.b16 %v103
  %v348 = vunpack.c.l.b16 %v104
  %v349 = vunpack.c.l.b16 %v105
  %v350 = vunpack.c.l.b16 %v106
  %v351 = vunpack.c.l.b16 %v107
  %v352 = vunpack.c.l.b16 %v108
  %v353 = vunpack.c.l.b16 %v109
  %v354 = vunpack.c.l.b16 %v110
  %v355 = vpack.c.b16 %v284, %v283
  %v356 = vpack.c.b16 %v286, %v285
  %v357 = vpack.c.b16 %v288, %v287
  %v358 = vpack.c.b16 %v290, %v289
  %v359 = vpack.c.b16 %v292, %v291
  %v360 = vpack.c.b16 %v294, %v293
  %v361 = vpack.c.b16 %v296, %v295
  %v362 = vpack.c.b16 %v298, %v297
  %v363 = vpack.c.b16 %v300, %v299
  %v364 = vpack.c.b16 %v302, %v301
  %v365 = vpack.c.b16 %v304, %v303
  %v366 = vpack.c.b16 %v306, %v305
  %v367 = vpack.c.b16 %v308, %v307
  %v368 = vpack.c.b16 %v310, %v309
  %v369 = vpack.c.b16 %v312, %v311
  %v370 = vpack.c.b16 %v314, %v313
  %v371 = vpack.c.b16 %v316, %v315
  %v372 = vpack.c.b16 %v318, %v317
  %v373 = vpack.c.b16 %v320, %v319
  %v374 = vpack.c.b16 %v322, %v321
  %v375 = vpack.c.b16 %v324, %v323
  %v376 = vpack.c.b16 %v326, %v325
  %v377 = vpack.c.b16 %v328, %v327
  %v378 = vpack.c.b16 %v330, %v329
  %v379 = vpack.c.b16 %v332, %v331
  %v380 = vpack.c.b16 %v334, %v333
  %v381 = vpack.c.b16 %v336, %v335
  %v382 = vpack.c.b16 %v338, %v337
  %v383 = vpack.c.b16 %v340, %v339
  %v384 = vpack.c.b16 %v342, %v341
  %v385 = vpack.c.b16 %v344, %v343
  %v386 = vpack.c.b16 %v346, %v345
  %v387 = vpack.c.b16 %v348, %v347
  %v388 = vpack.c.b16 %v350, %v349
  %v389 = vpack.c.b16 %v352, %v351
  %v390 = vpack.c.b16 %v354, %v353
  %vm427 = vcmask 523264
  %v429 = vsel %vm427, %v179, 0
  %v432 = vsel %vm427, %v184, 0
  %v435 = vsel %vm427, %v189, 0
  %v438 = vsel %vm427, %v194, 0
  %440 = vmatprep.subr.bf16.mxu0 0
  %441 = vmatpush1.bf16.msra.mxu0 %v355
  %442 = vmatprep.subr.bf16.mxu0 0
  %443 = vmatpush1.bf16.msra.mxu0 %v356
  %444 = vmatprep.subr.bf16.mxu0 0
  %445 = vmatpush1.bf16.msra.mxu0 %v357
  %446 = vmatprep.subr.bf16.mxu0 0
  %447 = vmatpush1.bf16.msra.mxu0 %v358
  %448 = vmatprep.subr.bf16.mxu0 0
  %449 = vmatpush1.bf16.msra.mxu0 %v359
  %450 = vmatprep.subr.bf16.mxu0 0
  %451 = vmatpush1.bf16.msra.mxu0 %v360
  %452 = vmatprep.subr.bf16.mxu0 0
  %453 = vmatpush1.bf16.msra.mxu0 %v361
  %454 = vmatprep.subr.bf16.mxu0 0
  %455 = vmatpush1.bf16.msra.mxu0 %v362
  %456 = vmatprep.subr.bf16.mxu0 0
  %457 = vmatpush1.bf16.msra.mxu0 %v363
  %458 = vmatprep.subr.bf16.mxu0 0
  %459 = vmatpush1.bf16.msra.mxu0 %v364
  %460 = vmatprep.subr.bf16.mxu0 0
  %461 = vmatpush1.bf16.msra.mxu0 %v365
  %462 = vmatprep.subr.bf16.mxu0 0
  %463 = vmatpush1.bf16.msra.mxu0 %v366
  %464 = vmatprep.subr.bf16.mxu0 0
  %465 = vmatpush1.bf16.msra.mxu0 %v367
  %466 = vmatprep.subr.bf16.mxu0 0
  %467 = vmatpush1.bf16.msra.mxu0 %v368
  %468 = vmatprep.subr.bf16.mxu0 0
  %469 = vmatpush1.bf16.msra.mxu0 %v369
  %470 = vmatprep.subr.bf16.mxu0 0
  %471 = vmatpush1.bf16.msra.mxu0 %v370
  %472 = vmatprep.mubr.bf16.mxu0 %v176
  %473 = vmatmul.mubr.bf16.gmra.mrb[0].mxu0 %v175
  %v474 = vpop.f32.mrb[0].mxu0
  %v475 = vadd.f32 0.0, %v474
  %v476 = vpop.f32.mrb[0].mxu0
  %v477 = vpop.f32.mrb[0].mxu0
  %v478 = vadd.f32 0.0, %v477
  %v479 = vpop.f32.mrb[0].mxu0
  %480 = vmatprep.mubr.bf16.mxu0 %v181
  %481 = vmatmul.mubr.bf16.gmra.mrb[0].mxu0 %v180
  %v482 = vpop.f32.mrb[0].mxu0
  %v483 = vadd.f32 0.0, %v482
  %v484 = vpop.f32.mrb[0].mxu0
  %v485 = vpop.f32.mrb[0].mxu0
  %v486 = vadd.f32 0.0, %v485
  %v487 = vpop.f32.mrb[0].mxu0
  %488 = vmatprep.mubr.bf16.mxu0 %v186
  %489 = vmatmul.mubr.bf16.gmra.mrb[0].mxu0 %v185
  %v490 = vpop.f32.mrb[0].mxu0
  %v491 = vadd.f32 0.0, %v490
  %v492 = vpop.f32.mrb[0].mxu0
  %v493 = vpop.f32.mrb[0].mxu0
  %v494 = vadd.f32 0.0, %v493
  %v495 = vpop.f32.mrb[0].mxu0
  %496 = vmatprep.mubr.bf16.mxu0 %v191
  %497 = vmatmul.mubr.bf16.gmra.mrb[0].mxu0 %v190
  %v498 = vpop.f32.mrb[0].mxu0
  %v499 = vadd.f32 0.0, %v498
  %v500 = vpop.f32.mrb[0].mxu0
  %v501 = vpop.f32.mrb[0].mxu0
  %v502 = vadd.f32 0.0, %v501
  %v503 = vpop.f32.mrb[0].mxu0
  %504 = vdwg.mxu0
  %505 = vmatprep.subr.bf16.mxu0 0
  %506 = vmatpush1.bf16.msra.mxu0 %v371
  %507 = vmatprep.subr.bf16.mxu0 0
  %508 = vmatpush1.bf16.msra.mxu0 %v372
  %509 = vmatprep.subr.bf16.mxu0 0
  %510 = vmatpush1.bf16.msra.mxu0 %v373
  %511 = vmatprep.subr.bf16.mxu0 0
  %512 = vmatpush1.bf16.msra.mxu0 %v374
  %513 = vmatprep.subr.bf16.mxu0 0
  %514 = vmatpush1.bf16.msra.mxu0 %v375
  %515 = vmatprep.subr.bf16.mxu0 0
  %516 = vmatpush1.bf16.msra.mxu0 %v376
  %517 = vmatprep.subr.bf16.mxu0 0
  %518 = vmatpush1.bf16.msra.mxu0 %v377
  %519 = vmatprep.subr.bf16.mxu0 0
  %520 = vmatpush1.bf16.msra.mxu0 %v378
  %521 = vmatprep.subr.bf16.mxu0 0
  %522 = vmatpush1.bf16.msra.mxu0 %v379
  %523 = vmatprep.subr.bf16.mxu0 0
  %524 = vmatpush1.bf16.msra.mxu0 %v380
  %525 = vmatprep.subr.bf16.mxu0 0
  %526 = vmatpush1.bf16.msra.mxu0 %v381
  %527 = vmatprep.subr.bf16.mxu0 0
  %528 = vmatpush1.bf16.msra.mxu0 %v382
  %529 = vmatprep.subr.bf16.mxu0 0
  %530 = vmatpush1.bf16.msra.mxu0 %v383
  %531 = vmatprep.subr.bf16.mxu0 0
  %532 = vmatpush1.bf16.msra.mxu0 %v384
  %533 = vmatprep.subr.bf16.mxu0 0
  %534 = vmatpush1.bf16.msra.mxu0 %v385
  %535 = vmatprep.subr.bf16.mxu0 0
  %536 = vmatpush1.bf16.msra.mxu0 %v386
  %537 = vmatprep.mubr.bf16.mxu0 %v178
  %538 = vmatmul.mubr.bf16.gmra.mrb[0].mxu0 %v177
  %v539 = vpop.f32.mrb[0].mxu0
  %v540 = vadd.f32 %v475, %v539
  %v541 = vpop.f32.mrb[0].mxu0
  %v542 = vpop.f32.mrb[0].mxu0
  %v543 = vadd.f32 %v478, %v542
  %v544 = vpop.f32.mrb[0].mxu0
  %545 = vmatprep.mubr.bf16.mxu0 %v183
  %546 = vmatmul.mubr.bf16.gmra.mrb[0].mxu0 %v182
  %v547 = vpop.f32.mrb[0].mxu0
  %v548 = vadd.f32 %v483, %v547
  %v549 = vpop.f32.mrb[0].mxu0
  %v550 = vpop.f32.mrb[0].mxu0
  %v551 = vadd.f32 %v486, %v550
  %v552 = vpop.f32.mrb[0].mxu0
  %553 = vmatprep.mubr.bf16.mxu0 %v188
  %554 = vmatmul.mubr.bf16.gmra.mrb[0].mxu0 %v187
  %v555 = vpop.f32.mrb[0].mxu0
  %v556 = vadd.f32 %v491, %v555
  %v557 = vpop.f32.mrb[0].mxu0
  %v558 = vpop.f32.mrb[0].mxu0
  %v559 = vadd.f32 %v494, %v558
  %v560 = vpop.f32.mrb[0].mxu0
  %561 = vmatprep.mubr.bf16.mxu0 %v193
  %562 = vmatmul.mubr.bf16.gmra.mrb[0].mxu0 %v192
  %v563 = vpop.f32.mrb[0].mxu0
  %v564 = vadd.f32 %v499, %v563
  %v565 = vpop.f32.mrb[0].mxu0
  %v566 = vpop.f32.mrb[0].mxu0
  %v567 = vadd.f32 %v502, %v566
  %v568 = vpop.f32.mrb[0].mxu0
  %569 = vdwg.mxu0
  %570 = vmatprep.subr.bf16.mxu0 0
  %571 = vmatpush1.bf16.msra.mxu0 %v387
  %572 = vmatprep.subr.bf16.mxu0 0
  %573 = vmatpush1.bf16.msra.mxu0 %v388
  %574 = vmatprep.subr.bf16.mxu0 0
  %575 = vmatpush1.bf16.msra.mxu0 %v389
  %576 = vmatprep.subr.bf16.mxu0 0
  %577 = vmatpush1.bf16.msra.mxu0 %v390
  %578 = vmatprep.subr.bf16.mxu0 0
  %579 = vmatpush1.bf16.msra.mxu0 0
  %580 = vmatprep.subr.bf16.mxu0 0
  %581 = vmatpush1.bf16.msra.mxu0 0
  %582 = vmatprep.subr.bf16.mxu0 0
  %583 = vmatpush1.bf16.msra.mxu0 0
  %584 = vmatprep.subr.bf16.mxu0 0
  %585 = vmatpush1.bf16.msra.mxu0 0
  %586 = vmatprep.subr.bf16.mxu0 0
  %587 = vmatpush1.bf16.msra.mxu0 0
  %588 = vmatprep.subr.bf16.mxu0 0
  %589 = vmatpush1.bf16.msra.mxu0 0
  %590 = vmatprep.subr.bf16.mxu0 0
  %591 = vmatpush1.bf16.msra.mxu0 0
  %592 = vmatprep.subr.bf16.mxu0 0
  %593 = vmatpush1.bf16.msra.mxu0 0
  %594 = vmatprep.subr.bf16.mxu0 0
  %595 = vmatpush1.bf16.msra.mxu0 0
  %596 = vmatprep.subr.bf16.mxu0 0
  %597 = vmatpush1.bf16.msra.mxu0 0
  %598 = vmatprep.subr.bf16.mxu0 0
  %599 = vmatpush1.bf16.msra.mxu0 0
  %600 = vmatprep.subr.bf16.mxu0 0
  %601 = vmatpush1.bf16.msra.mxu0 0
  %602 = vmatprep.mubr.bf16.mxu0 0
  %603 = vmatmul.mubr.bf16.gmra.mrb[0].mxu0 %v429
  %v604 = vpop.f32.mrb[0].mxu0
  %v605 = vadd.f32 %v540, %v604
  %v606 = vpop.f32.mrb[0].mxu0
  %v607 = vpop.f32.mrb[0].mxu0
  %v608 = vadd.f32 %v543, %v607
  %v609 = vpop.f32.mrb[0].mxu0
  %610 = vmatprep.mubr.bf16.mxu0 0
  %611 = vmatmul.mubr.bf16.gmra.mrb[0].mxu0 %v432
  %v612 = vpop.f32.mrb[0].mxu0
  %v613 = vadd.f32 %v548, %v612
  %v614 = vpop.f32.mrb[0].mxu0
  %v615 = vpop.f32.mrb[0].mxu0
  %v616 = vadd.f32 %v551, %v615
  %v617 = vpop.f32.mrb[0].mxu0
  %618 = vmatprep.mubr.bf16.mxu0 0
  %619 = vmatmul.mubr.bf16.gmra.mrb[0].mxu0 %v435
  %v620 = vpop.f32.mrb[0].mxu0
  %v621 = vadd.f32 %v556, %v620
  %v622 = vpop.f32.mrb[0].mxu0
  %v623 = vpop.f32.mrb[0].mxu0
  %v624 = vadd.f32 %v559, %v623
  %v625 = vpop.f32.mrb[0].mxu0
  %626 = vmatprep.mubr.bf16.mxu0 0
  %627 = vmatmul.mubr.bf16.gmra.mrb[0].mxu0 %v438
  %v628 = vpop.f32.mrb[0].mxu0
  %v629 = vadd.f32 %v564, %v628
  %v630 = vpop.f32.mrb[0].mxu0
  %v631 = vpop.f32.mrb[0].mxu0
  %v632 = vadd.f32 %v567, %v631
  %v633 = vpop.f32.mrb[0].mxu0
  %634 = vdwg.mxu0
  %v635 = vmax.f32 %v605, %v613
  %v636 = vmax.f32 %v608, %v616
  %v637 = vmax.f32 %v621, %v629
  %v638 = vmax.f32 %v624, %v632
  %v639 = vmax.f32 %v635, %v637
  %v640 = vmax.f32 %v636, %v638
  %v641 = vld [vmem:[%s2] sm:$0x1]
  %v643 = vlaneseq
  %v644 = vshrl.u32 %v643, 7
  %v645 = vsub.s32 0, %v644
  %v646 = vrot.slane %v641, %v645
  %v648 = vadd.f32 %v639, %v646
  %v649 = vadd.f32 %v640, %v646
  %v650 = vmax.f32 %v648, 0.0
  %v651 = vmax.f32 %v649, 0.0
  %v652 = vpack.c.bf16 %v651, %v650
  %v654 = vunpack.c.l.b16 %v652
  %v655 = vunpack.c.h.b16 %v652
  %v656 = vpack.c.b16 %v654, %v654
  %v657 = vpack.c.b16 %v655, %v655
  %660 = vst [vmem:[%s3] sm:$0xf] %v656
  %661 = vst [vmem:[%s3 + $0x4] sm:$0xf] %v657
  // Predicated region
  $region14: #{vae_forward.9} parent=0 // pred_check
    _
  $region15: #{vae_forward.9} parent=0 // pred_check_branch
    %663 = sbr.rel (0) target = $region17
  $region16: #{vae_forward.9} parent=0 // pred_region
    _
  $region17: #{vae_forward.9} parent=0 // pred_fallthru
    _
  // Predicated region
  $region18: #{vae_forward.9} parent=0 // pred_check
    _
  $region19: #{vae_forward.9} parent=0 // pred_check_branch
    %665 = sbr.rel (0) target = $region21
  $region20: #{vae_forward.9} parent=0 // pred_region
    _
  $region21: #{vae_forward.9} parent=0 // pred_fallthru
    _

// kernel: vae_forward.10
$region0: #{vae_forward.10}
  #allocation0 [shape = 'u32[]', space=smem, size = 0x4, offset = 0x4, fixed_abs, tag = 'smem constant byte address 0x4 - core index']
  #allocation1 [shape = 'u32[144,128]{1,0:T(1,128)}', space=vmem, size = 0x12000, scoped, tag = 'internal scratch']
  %s0 = inlined_call_operand.vmem [shape: bf16[2,768], index: 0, kind: input, shape index: {}]
  %s1 = inlined_call_operand.vmem [shape: bf16[768,256], index: 1, kind: input, shape index: {}]
  %s2 = inlined_call_operand.vmem [shape: f32[1,256], index: 2, kind: input, shape index: {}]
  %s3 = inlined_call_operand.vmem [shape: f32[2,128], index: 3, kind: input, shape index: {}]
  %s4 = inlined_call_operand.vmem [shape: bf16[128,768], index: 4, kind: input, shape index: {}]
  %s5 = inlined_call_operand.vmem [shape: f32[1,768], index: 5, kind: input, shape index: {}]
  %s6 = inlined_call_operand.vmem [shape: f32[2,256], index: 6, kind: output, shape index: {0}]
  %s7 = inlined_call_operand.vmem [shape: bf16[2,768], index: 7, kind: output, shape index: {1}]
  %8 = xla_tuple %s6, %s7
  %s9 = sld [smem:[#allocation0]]
  $region42: #{vae_forward.10} parent=0
    _
  %s11 = ssub.s32 1, %s9
  %s12 = scalar_select 0, %s11, %s9
  // Predicated region
  $region2: #{vae_forward.10} parent=0 // pred_check
    _
  $region3: #{vae_forward.10} parent=0 // pred_check_branch
    %14 = sbr.rel (0) target = $region5
  $region4: #{vae_forward.10} parent=0 // pred_region
    _
  $region5: #{vae_forward.10} parent=0 // pred_fallthru
    _
  // Predicated region
  $region6: #{vae_forward.10} parent=0 // pred_check
    _
  $region7: #{vae_forward.10} parent=0 // pred_check_branch
    %16 = sbr.rel (0) target = $region9
  $region8: #{vae_forward.10} parent=0 // pred_region
    _
  $region9: #{vae_forward.10} parent=0 // pred_fallthru
    _
  // Predicated region
  $region10: #{vae_forward.10} parent=0 // pred_check
    _
  $region11: #{vae_forward.10} parent=0 // pred_check_branch
    %18 = sbr.rel (0) target = $region13
  $region12: #{vae_forward.10} parent=0 // pred_region
    _
  $region13: #{vae_forward.10} parent=0 // pred_fallthru
    _
  // Predicated region
  $region14: #{vae_forward.10} parent=0 // pred_check
    _
  $region15: #{vae_forward.10} parent=0 // pred_check_branch
    %20 = sbr.rel (0) target = $region17
  $region16: #{vae_forward.10} parent=0 // pred_region
    _
  $region17: #{vae_forward.10} parent=0 // pred_fallthru
    _
  // Predicated region
  $region18: #{vae_forward.10} parent=0 // pred_check
    _
  $region19: #{vae_forward.10} parent=0 // pred_check_branch
    %22 = sbr.rel (0) target = $region21
  $region20: #{vae_forward.10} parent=0 // pred_region
    _
  $region21: #{vae_forward.10} parent=0 // pred_fallthru
    _
  // Predicated region
  $region22: #{vae_forward.10} parent=0 // pred_check
    _
  $region23: #{vae_forward.10} parent=0 // pred_check_branch
    %24 = sbr.rel (0) target = $region25
  $region24: #{vae_forward.10} parent=0 // pred_region
    _
  $region25: #{vae_forward.10} parent=0 // pred_fallthru
    _
  %v26 = vld [vmem:[%s0] sm:$0x3f]
  %v27 = vld [vmem:[%s1] sm:$0xff]
  %v28 = vld [vmem:[%s1 + $0x8] sm:$0xff]
  %v29 = vld [vmem:[%s1 + $0x10] sm:$0xff]
  %v30 = vld [vmem:[%s1 + $0x18] sm:$0xff]
  %v31 = vld [vmem:[%s1 + $0x20] sm:$0xff]
  %v32 = vld [vmem:[%s1 + $0x28] sm:$0xff]
  %v33 = vld [vmem:[%s1 + $0x30] sm:$0xff]
  %v34 = vld [vmem:[%s1 + $0x38] sm:$0xff]
  %v35 = vld [vmem:[%s1 + $0x40] sm:$0xff]
  %v36 = vld [vmem:[%s1 + $0x48] sm:$0xff]
  %v37 = vld [vmem:[%s1 + $0x50] sm:$0xff]
  %v38 = vld [vmem:[%s1 + $0x58] sm:$0xff]
  %v39 = vld [vmem:[%s1 + $0x60] sm:$0xff]
  %v40 = vld [vmem:[%s1 + $0x68] sm:$0xff]
  %v41 = vld [vmem:[%s1 + $0x70] sm:$0xff]
  %v42 = vld [vmem:[%s1 + $0x78] sm:$0xff]
  %v43 = vld [vmem:[%s1 + $0x80] sm:$0xff]
  %v44 = vld [vmem:[%s1 + $0x88] sm:$0xff]
  %v45 = vld [vmem:[%s1 + $0x90] sm:$0xff]
  %v46 = vld [vmem:[%s1 + $0x98] sm:$0xff]
  %v47 = vld [vmem:[%s1 + $0xa0] sm:$0xff]
  %v48 = vld [vmem:[%s1 + $0xa8] sm:$0xff]
  %v49 = vld [vmem:[%s1 + $0xb0] sm:$0xff]
  %v50 = vld [vmem:[%s1 + $0xb8] sm:$0xff]
  %v51 = vld [vmem:[%s1 + $0xc0] sm:$0xff]
  %v52 = vld [vmem:[%s1 + $0xc8] sm:$0xff]
  %v53 = vld [vmem:[%s1 + $0xd0] sm:$0xff]
  %v54 = vld [vmem:[%s1 + $0xd8] sm:$0xff]
  %v55 = vld [vmem:[%s1 + $0xe0] sm:$0xff]
  %v56 = vld [vmem:[%s1 + $0xe8] sm:$0xff]
  %v57 = vld [vmem:[%s1 + $0xf0] sm:$0xff]
  %v58 = vld [vmem:[%s1 + $0xf8] sm:$0xff]
  %v59 = vld [vmem:[%s1 + $0x100] sm:$0xff]
  %v60 = vld [vmem:[%s1 + $0x108] sm:$0xff]
  %v61 = vld [vmem:[%s1 + $0x110] sm:$0xff]
  %v62 = vld [vmem:[%s1 + $0x118] sm:$0xff]
  %v63 = vld [vmem:[%s1 + $0x120] sm:$0xff]
  %v64 = vld [vmem:[%s1 + $0x128] sm:$0xff]
  %v65 = vld [vmem:[%s1 + $0x130] sm:$0xff]
  %v66 = vld [vmem:[%s1 + $0x138] sm:$0xff]
  %v67 = vld [vmem:[%s1 + $0x140] sm:$0xff]
  %v68 = vld [vmem:[%s1 + $0x148] sm:$0xff]
  %v69 = vld [vmem:[%s1 + $0x150] sm:$0xff]
  %v70 = vld [vmem:[%s1 + $0x158] sm:$0xff]
  %v71 = vld [vmem:[%s1 + $0x160] sm:$0xff]
  %v72 = vld [vmem:[%s1 + $0x168] sm:$0xff]
  %v73 = vld [vmem:[%s1 + $0x170] sm:$0xff]
  %v74 = vld [vmem:[%s1 + $0x178] sm:$0xff]
  %v75 = vld [vmem:[%s1 + $0x180] sm:$0xff]
  %v76 = vld [vmem:[%s1 + $0x188] sm:$0xff]
  %v77 = vld [vmem:[%s1 + $0x190] sm:$0xff]
  %v78 = vld [vmem:[%s1 + $0x198] sm:$0xff]
  %v79 = vld [vmem:[%s1 + $0x1a0] sm:$0xff]
  %v80 = vld [vmem:[%s1 + $0x1a8] sm:$0xff]
  %v81 = vld [vmem:[%s1 + $0x1b0] sm:$0xff]
  %v82 = vld [vmem:[%s1 + $0x1b8] sm:$0xff]
  %v83 = vld [vmem:[%s1 + $0x1c0] sm:$0xff]
  %v84 = vld [vmem:[%s1 + $0x1c8] sm:$0xff]
  %v85 = vld [vmem:[%s1 + $0x1d0] sm:$0xff]
  %v86 = vld [vmem:[%s1 + $0x1d8] sm:$0xff]
  %v87 = vld [vmem:[%s1 + $0x1e0] sm:$0xff]
  %v88 = vld [vmem:[%s1 + $0x1e8] sm:$0xff]
  %v89 = vld [vmem:[%s1 + $0x1f0] sm:$0xff]
  %v90 = vld [vmem:[%s1 + $0x1f8] sm:$0xff]
  %v91 = vld [vmem:[%s1 + $0x200] sm:$0xff]
  %v92 = vld [vmem:[%s1 + $0x208] sm:$0xff]
  %v93 = vld [vmem:[%s1 + $0x210] sm:$0xff]
  %v94 = vld [vmem:[%s1 + $0x218] sm:$0xff]
  %v95 = vld [vmem:[%s1 + $0x220] sm:$0xff]
  %v96 = vld [vmem:[%s1 + $0x228] sm:$0xff]
  %v97 = vld [vmem:[%s1 + $0x230] sm:$0xff]
  %v98 = vld [vmem:[%s1 + $0x238] sm:$0xff]
  %v99 = vld [vmem:[%s1 + $0x240] sm:$0xff]
  %v100 = vld [vmem:[%s1 + $0x248] sm:$0xff]
  %v101 = vld [vmem:[%s1 + $0x250] sm:$0xff]
  %v102 = vld [vmem:[%s1 + $0x258] sm:$0xff]
  %v103 = vld [vmem:[%s1 + $0x260] sm:$0xff]
  %v104 = vld [vmem:[%s1 + $0x268] sm:$0xff]
  %v105 = vld [vmem:[%s1 + $0x270] sm:$0xff]
  %v106 = vld [vmem:[%s1 + $0x278] sm:$0xff]
  %v107 = vld [vmem:[%s1 + $0x280] sm:$0xff]
  %v108 = vld [vmem:[%s1 + $0x288] sm:$0xff]
  %v109 = vld [vmem:[%s1 + $0x290] sm:$0xff]
  %v110 = vld [vmem:[%s1 + $0x298] sm:$0xff]
  %v111 = vld [vmem:[%s1 + $0x2a0] sm:$0xff]
  %v112 = vld [vmem:[%s1 + $0x2a8] sm:$0xff]
  %v113 = vld [vmem:[%s1 + $0x2b0] sm:$0xff]
  %v114 = vld [vmem:[%s1 + $0x2b8] sm:$0xff]
  %v115 = vld [vmem:[%s1 + $0x2c0] sm:$0xff]
  %v116 = vld [vmem:[%s1 + $0x2c8] sm:$0xff]
  %v117 = vld [vmem:[%s1 + $0x2d0] sm:$0xff]
  %v118 = vld [vmem:[%s1 + $0x2d8] sm:$0xff]
  %v119 = vld [vmem:[%s1 + $0x2e0] sm:$0xff]
  %v120 = vld [vmem:[%s1 + $0x2e8] sm:$0xff]
  %v121 = vld [vmem:[%s1 + $0x2f0] sm:$0xff]
  %v122 = vld [vmem:[%s1 + $0x2f8] sm:$0xff]
  %v123 = vld [vmem:[%s2] sm:$0x3]
  %v125 = vlaneseq
  %v126 = vshrl.u32 %v125, 7
  %v127 = vsub.s32 0, %v126
  %v128 = vrot.slane %v123, %v127
  %v129 = vlaneseq
  %v130 = vshrl.u32 %v129, 7
  %v131 = vsub.s32 1, %v130
  %v132 = vrot.slane %v123, %v131
  %v136 = vcombine.high %v26, %v26
  %v138 = vunpack.c.l.s4 1966171168
  %v139 = vunpack.c.0.s8 %v138
  %v140 = vlaneseq
  %v141 = vshrl.u32 %v140, 7
  %v142 = vsub.s32 %v139, %v141
  %v143 = vrot.slane %v26, %v142
  %v145 = vunpack.c.l.s4 1966171168
  %v146 = vunpack.c.0.s8 %v145
  %v147 = vlaneseq
  %v148 = vshrl.u32 %v147, 7
  %v149 = vsub.s32 %v146, %v148
  %v150 = vrot.slane %v136, %v149
  %v151 = vcombine.high %v143, %v143
  %v152 = vcombine.high %v150, %v150
  %v154 = vunpack.c.l.s4 1966171168
  %v155 = vunpack.c.0.s8 %v154
  %v156 = vlaneseq
  %v157 = vshrl.u32 %v156, 7
  %v158 = vsub.s32 %v155, %v157
  %v159 = vrot.slane %v143, %v158
  %v161 = vunpack.c.l.s4 1966171168
  %v162 = vunpack.c.0.s8 %v161
  %v163 = vlaneseq
  %v164 = vshrl.u32 %v163, 7
  %v165 = vsub.s32 %v162, %v164
  %v166 = vrot.slane %v150, %v165
  %v168 = vunpack.c.l.s4 1966171168
  %v169 = vunpack.c.0.s8 %v168
  %v170 = vlaneseq
  %v171 = vshrl.u32 %v170, 7
  %v172 = vsub.s32 %v169, %v171
  %v173 = vrot.slane %v151, %v172
  %v175 = vunpack.c.l.s4 1966171168
  %v176 = vunpack.c.0.s8 %v175
  %v177 = vlaneseq
  %v178 = vshrl.u32 %v177, 7
  %v179 = vsub.s32 %v176, %v178
  %v180 = vrot.slane %v152, %v179
  %v181 = vcombine.high %v159, %v159
  %v182 = vcombine.high %v173, %v173
  %v285 = vunpack.c.l.b16 %v27
  %v286 = vunpack.c.h.b16 %v27
  %v287 = vunpack.c.l.b16 %v28
  %v288 = vunpack.c.h.b16 %v28
  %v289 = vunpack.c.l.b16 %v29
  %v290 = vunpack.c.h.b16 %v29
  %v291 = vunpack.c.l.b16 %v30
  %v292 = vunpack.c.h.b16 %v30
  %v293 = vunpack.c.l.b16 %v31
  %v294 = vunpack.c.h.b16 %v31
  %v295 = vunpack.c.l.b16 %v32
  %v296 = vunpack.c.h.b16 %v32
  %v297 = vunpack.c.l.b16 %v33
  %v298 = vunpack.c.h.b16 %v33
  %v299 = vunpack.c.l.b16 %v34
  %v300 = vunpack.c.h.b16 %v34
  %v301 = vunpack.c.l.b16 %v35
  %v302 = vunpack.c.h.b16 %v35
  %v303 = vunpack.c.l.b16 %v36
  %v304 = vunpack.c.h.b16 %v36
  %v305 = vunpack.c.l.b16 %v37
  %v306 = vunpack.c.h.b16 %v37
  %v307 = vunpack.c.l.b16 %v38
  %v308 = vunpack.c.h.b16 %v38
  %v309 = vunpack.c.l.b16 %v39
  %v310 = vunpack.c.h.b16 %v39
  %v311 = vunpack.c.l.b16 %v40
  %v312 = vunpack.c.h.b16 %v40
  %v313 = vunpack.c.l.b16 %v41
  %v314 = vunpack.c.h.b16 %v41
  %v315 = vunpack.c.l.b16 %v42
  %v316 = vunpack.c.h.b16 %v42
  %v317 = vunpack.c.l.b16 %v43
  %v318 = vunpack.c.h.b16 %v43
  %v319 = vunpack.c.l.b16 %v44
  %v320 = vunpack.c.h.b16 %v44
  %v321 = vunpack.c.l.b16 %v45
  %v322 = vunpack.c.h.b16 %v45
  %v323 = vunpack.c.l.b16 %v46
  %v324 = vunpack.c.h.b16 %v46
  %v325 = vunpack.c.l.b16 %v47
  %v326 = vunpack.c.h.b16 %v47
  %v327 = vunpack.c.l.b16 %v48
  %v328 = vunpack.c.h.b16 %v48
  %v329 = vunpack.c.l.b16 %v49
  %v330 = vunpack.c.h.b16 %v49
  %v331 = vunpack.c.l.b16 %v50
  %v332 = vunpack.c.h.b16 %v50
  %v333 = vunpack.c.l.b16 %v51
  %v334 = vunpack.c.h.b16 %v51
  %v335 = vunpack.c.l.b16 %v52
  %v336 = vunpack.c.h.b16 %v52
  %v337 = vunpack.c.l.b16 %v53
  %v338 = vunpack.c.h.b16 %v53
  %v339 = vunpack.c.l.b16 %v54
  %v340 = vunpack.c.h.b16 %v54
  %v341 = vunpack.c.l.b16 %v55
  %v342 = vunpack.c.h.b16 %v55
  %v343 = vunpack.c.l.b16 %v56
  %v344 = vunpack.c.h.b16 %v56
  %v345 = vunpack.c.l.b16 %v57
  %v346 = vunpack.c.h.b16 %v57
  %v347 = vunpack.c.l.b16 %v58
  %v348 = vunpack.c.h.b16 %v58
  %v349 = vunpack.c.l.b16 %v59
  %v350 = vunpack.c.h.b16 %v59
  %v351 = vunpack.c.l.b16 %v60
  %v352 = vunpack.c.h.b16 %v60
  %v353 = vunpack.c.l.b16 %v61
  %v354 = vunpack.c.h.b16 %v61
  %v355 = vunpack.c.l.b16 %v62
  %v356 = vunpack.c.h.b16 %v62
  %v357 = vunpack.c.l.b16 %v63
  %v358 = vunpack.c.h.b16 %v63
  %v359 = vunpack.c.l.b16 %v64
  %v360 = vunpack.c.h.b16 %v64
  %v361 = vunpack.c.l.b16 %v65
  %v362 = vunpack.c.h.b16 %v65
  %v363 = vunpack.c.l.b16 %v66
  %v364 = vunpack.c.h.b16 %v66
  %v365 = vunpack.c.l.b16 %v67
  %v366 = vunpack.c.h.b16 %v67
  %v367 = vunpack.c.l.b16 %v68
  %v368 = vunpack.c.h.b16 %v68
  %v369 = vunpack.c.l.b16 %v69
  %v370 = vunpack.c.h.b16 %v69
  %v371 = vunpack.c.l.b16 %v70
  %v372 = vunpack.c.h.b16 %v70
  %v373 = vunpack.c.l.b16 %v71
  %v374 = vunpack.c.h.b16 %v71
  %v375 = vunpack.c.l.b16 %v72
  %v376 = vunpack.c.h.b16 %v72
  %v377 = vunpack.c.l.b16 %v73
  %v378 = vunpack.c.h.b16 %v73
  %v379 = vunpack.c.l.b16 %v74
  %v380 = vunpack.c.h.b16 %v74
  %v381 = vunpack.c.l.b16 %v75
  %v382 = vunpack.c.h.b16 %v75
  %v383 = vunpack.c.l.b16 %v76
  %v384 = vunpack.c.h.b16 %v76
  %v385 = vunpack.c.l.b16 %v77
  %v386 = vunpack.c.h.b16 %v77
  %v387 = vunpack.c.l.b16 %v78
  %v388 = vunpack.c.h.b16 %v78
  %v389 = vunpack.c.l.b16 %v79
  %v390 = vunpack.c.h.b16 %v79
  %v391 = vunpack.c.l.b16 %v80
  %v392 = vunpack.c.h.b16 %v80
  %v393 = vunpack.c.l.b16 %v81
  %v394 = vunpack.c.h.b16 %v81
  %v395 = vunpack.c.l.b16 %v82
  %v396 = vunpack.c.h.b16 %v82
  %v397 = vunpack.c.l.b16 %v83
  %v398 = vunpack.c.h.b16 %v83
  %v399 = vunpack.c.l.b16 %v84
  %v400 = vunpack.c.h.b16 %v84
  %v401 = vunpack.c.l.b16 %v85
  %v402 = vunpack.c.h.b16 %v85
  %v403 = vunpack.c.l.b16 %v86
  %v404 = vunpack.c.h.b16 %v86
  %v405 = vunpack.c.l.b16 %v87
  %v406 = vunpack.c.h.b16 %v87
  %v407 = vunpack.c.l.b16 %v88
  %v408 = vunpack.c.h.b16 %v88
  %v409 = vunpack.c.l.b16 %v89
  %v410 = vunpack.c.h.b16 %v89
  %v411 = vunpack.c.l.b16 %v90
  %v412 = vunpack.c.h.b16 %v90
  %v413 = vunpack.c.l.b16 %v91
  %v414 = vunpack.c.h.b16 %v91
  %v415 = vunpack.c.l.b16 %v92
  %v416 = vunpack.c.h.b16 %v92
  %v417 = vunpack.c.l.b16 %v93
  %v418 = vunpack.c.h.b16 %v93
  %v419 = vunpack.c.l.b16 %v94
  %v420 = vunpack.c.h.b16 %v94
  %v421 = vunpack.c.l.b16 %v95
  %v422 = vunpack.c.h.b16 %v95
  %v423 = vunpack.c.l.b16 %v96
  %v424 = vunpack.c.h.b16 %v96
  %v425 = vunpack.c.l.b16 %v97
  %v426 = vunpack.c.h.b16 %v97
  %v427 = vunpack.c.l.b16 %v98
  %v428 = vunpack.c.h.b16 %v98
  %v429 = vunpack.c.l.b16 %v99
  %v430 = vunpack.c.h.b16 %v99
  %v431 = vunpack.c.l.b16 %v100
  %v432 = vunpack.c.h.b16 %v100
  %v433 = vunpack.c.l.b16 %v101
  %v434 = vunpack.c.h.b16 %v101
  %v435 = vunpack.c.l.b16 %v102
  %v436 = vunpack.c.h.b16 %v102
  %v437 = vunpack.c.l.b16 %v103
  %v438 = vunpack.c.h.b16 %v103
  %v439 = vunpack.c.l.b16 %v104
  %v440 = vunpack.c.h.b16 %v104
  %v441 = vunpack.c.l.b16 %v105
  %v442 = vunpack.c.h.b16 %v105
  %v443 = vunpack.c.l.b16 %v106
  %v444 = vunpack.c.h.b16 %v106
  %v445 = vunpack.c.l.b16 %v107
  %v446 = vunpack.c.h.b16 %v107
  %v447 = vunpack.c.l.b16 %v108
  %v448 = vunpack.c.h.b16 %v108
  %v449 = vunpack.c.l.b16 %v109
  %v450 = vunpack.c.h.b16 %v109
  %v451 = vunpack.c.l.b16 %v110
  %v452 = vunpack.c.h.b16 %v110
  %v453 = vunpack.c.l.b16 %v111
  %v454 = vunpack.c.h.b16 %v111
  %v455 = vunpack.c.l.b16 %v112
  %v456 = vunpack.c.h.b16 %v112
  %v457 = vunpack.c.l.b16 %v113
  %v458 = vunpack.c.h.b16 %v113
  %v459 = vunpack.c.l.b16 %v114
  %v460 = vunpack.c.h.b16 %v114
  %v461 = vunpack.c.l.b16 %v115
  %v462 = vunpack.c.h.b16 %v115
  %v463 = vunpack.c.l.b16 %v116
  %v464 = vunpack.c.h.b16 %v116
  %v465 = vunpack.c.l.b16 %v117
  %v466 = vunpack.c.h.b16 %v117
  %v467 = vunpack.c.l.b16 %v118
  %v468 = vunpack.c.h.b16 %v118
  %v469 = vunpack.c.l.b16 %v119
  %v470 = vunpack.c.h.b16 %v119
  %v471 = vunpack.c.l.b16 %v120
  %v472 = vunpack.c.h.b16 %v120
  %v473 = vunpack.c.l.b16 %v121
  %v474 = vunpack.c.h.b16 %v121
  %v475 = vunpack.c.l.b16 %v122
  %v476 = vunpack.c.h.b16 %v122
  %v477 = vpack.c.b16 %v287, %v285
  %v478 = vpack.c.b16 %v288, %v286
  %v479 = vpack.c.b16 %v291, %v289
  %v480 = vpack.c.b16 %v292, %v290
  %v481 = vpack.c.b16 %v295, %v293
  %v482 = vpack.c.b16 %v296, %v294
  %v483 = vpack.c.b16 %v299, %v297
  %v484 = vpack.c.b16 %v300, %v298
  %v485 = vpack.c.b16 %v303, %v301
  %v486 = vpack.c.b16 %v304, %v302
  %v487 = vpack.c.b16 %v307, %v305
  %v488 = vpack.c.b16 %v308, %v306
  %v489 = vpack.c.b16 %v311, %v309
  %v490 = vpack.c.b16 %v312, %v310
  %v491 = vpack.c.b16 %v315, %v313
  %v492 = vpack.c.b16 %v316, %v314
  %v493 = vpack.c.b16 %v319, %v317
  %v494 = vpack.c.b16 %v320, %v318
  %v495 = vpack.c.b16 %v323, %v321
  %v496 = vpack.c.b16 %v324, %v322
  %v497 = vpack.c.b16 %v327, %v325
  %v498 = vpack.c.b16 %v328, %v326
  %v499 = vpack.c.b16 %v331, %v329
  %v500 = vpack.c.b16 %v332, %v330
  %v501 = vpack.c.b16 %v335, %v333
  %v502 = vpack.c.b16 %v336, %v334
  %v503 = vpack.c.b16 %v339, %v337
  %v504 = vpack.c.b16 %v340, %v338
  %v505 = vpack.c.b16 %v343, %v341
  %v506 = vpack.c.b16 %v344, %v342
  %v507 = vpack.c.b16 %v347, %v345
  %v508 = vpack.c.b16 %v348, %v346
  %v509 = vpack.c.b16 %v351, %v349
  %v510 = vpack.c.b16 %v352, %v350
  %v511 = vpack.c.b16 %v355, %v353
  %v512 = vpack.c.b16 %v356, %v354
  %v513 = vpack.c.b16 %v359, %v357
  %v514 = vpack.c.b16 %v360, %v358
  %v515 = vpack.c.b16 %v363, %v361
  %v516 = vpack.c.b16 %v364, %v362
  %v517 = vpack.c.b16 %v367, %v365
  %v518 = vpack.c.b16 %v368, %v366
  %v519 = vpack.c.b16 %v371, %v369
  %v520 = vpack.c.b16 %v372, %v370
  %v521 = vpack.c.b16 %v375, %v373
  %v522 = vpack.c.b16 %v376, %v374
  %v523 = vpack.c.b16 %v379, %v377
  %v524 = vpack.c.b16 %v380, %v378
  %v525 = vpack.c.b16 %v383, %v381
  %v526 = vpack.c.b16 %v384, %v382
  %v527 = vpack.c.b16 %v387, %v385
  %v528 = vpack.c.b16 %v388, %v386
  %v529 = vpack.c.b16 %v391, %v389
  %v530 = vpack.c.b16 %v392, %v390
  %v531 = vpack.c.b16 %v395, %v393
  %v532 = vpack.c.b16 %v396, %v394
  %v533 = vpack.c.b16 %v399, %v397
  %v534 = vpack.c.b16 %v400, %v398
  %v535 = vpack.c.b16 %v403, %v401
  %v536 = vpack.c.b16 %v404, %v402
  %v537 = vpack.c.b16 %v407, %v405
  %v538 = vpack.c.b16 %v408, %v406
  %v539 = vpack.c.b16 %v411, %v409
  %v540 = vpack.c.b16 %v412, %v410
  %v541 = vpack.c.b16 %v415, %v413
  %v542 = vpack.c.b16 %v416, %v414
  %v543 = vpack.c.b16 %v419, %v417
  %v544 = vpack.c.b16 %v420, %v418
  %v545 = vpack.c.b16 %v423, %v421
  %v546 = vpack.c.b16 %v424, %v422
  %v547 = vpack.c.b16 %v427, %v425
  %v548 = vpack.c.b16 %v428, %v426
  %v549 = vpack.c.b16 %v431, %v429
  %v550 = vpack.c.b16 %v432, %v430
  %v551 = vpack.c.b16 %v435, %v433
  %v552 = vpack.c.b16 %v436, %v434
  %v553 = vpack.c.b16 %v439, %v437
  %v554 = vpack.c.b16 %v440, %v438
  %v555 = vpack.c.b16 %v443, %v441
  %v556 = vpack.c.b16 %v444, %v442
  %v557 = vpack.c.b16 %v447, %v445
  %v558 = vpack.c.b16 %v448, %v446
  %v559 = vpack.c.b16 %v451, %v449
  %v560 = vpack.c.b16 %v452, %v450
  %v561 = vpack.c.b16 %v455, %v453
  %v562 = vpack.c.b16 %v456, %v454
  %v563 = vpack.c.b16 %v459, %v457
  %v564 = vpack.c.b16 %v460, %v458
  %v565 = vpack.c.b16 %v463, %v461
  %v566 = vpack.c.b16 %v464, %v462
  %v567 = vpack.c.b16 %v467, %v465
  %v568 = vpack.c.b16 %v468, %v466
  %v569 = vpack.c.b16 %v471, %v469
  %v570 = vpack.c.b16 %v472, %v470
  %v571 = vpack.c.b16 %v475, %v473
  %v572 = vpack.c.b16 %v476, %v474
  %669 = vmatprep.subr.bf16.mxu0 %v478
  %670 = vmatpush1.bf16.msra.mxu0 %v477
  %671 = vmatprep.subr.bf16.mxu0 %v480
  %672 = vmatpush1.bf16.msra.mxu0 %v479
  %673 = vmatprep.subr.bf16.mxu0 %v482
  %674 = vmatpush1.bf16.msra.mxu0 %v481
  %675 = vmatprep.subr.bf16.mxu0 %v484
  %676 = vmatpush1.bf16.msra.mxu0 %v483
  %677 = vmatprep.subr.bf16.mxu0 %v486
  %678 = vmatpush1.bf16.msra.mxu0 %v485
  %679 = vmatprep.subr.bf16.mxu0 %v488
  %680 = vmatpush1.bf16.msra.mxu0 %v487
  %681 = vmatprep.subr.bf16.mxu0 %v490
  %682 = vmatpush1.bf16.msra.mxu0 %v489
  %683 = vmatprep.subr.bf16.mxu0 %v492
  %684 = vmatpush1.bf16.msra.mxu0 %v491
  %685 = vmatprep.subr.bf16.mxu0 %v494
  %686 = vmatpush1.bf16.msra.mxu0 %v493
  %687 = vmatprep.subr.bf16.mxu0 %v496
  %688 = vmatpush1.bf16.msra.mxu0 %v495
  %689 = vmatprep.subr.bf16.mxu0 %v498
  %690 = vmatpush1.bf16.msra.mxu0 %v497
  %691 = vmatprep.subr.bf16.mxu0 %v500
  %692 = vmatpush1.bf16.msra.mxu0 %v499
  %693 = vmatprep.subr.bf16.mxu0 %v502
  %694 = vmatpush1.bf16.msra.mxu0 %v501
  %695 = vmatprep.subr.bf16.mxu0 %v504
  %696 = vmatpush1.bf16.msra.mxu0 %v503
  %697 = vmatprep.subr.bf16.mxu0 %v506
  %698 = vmatpush1.bf16.msra.mxu0 %v505
  %699 = vmatprep.subr.bf16.mxu0 %v508
  %700 = vmatpush1.bf16.msra.mxu0 %v507
  %701 = vmatprep.mubr.bf16.mxu0 %v173
  %702 = vmatmul.mubr.bf16.gmra.mrb[0].mxu0 %v159
  %v703 = vpop.f32.mrb[0].mxu0
  %v704 = vadd.f32 %v128, %v703
  %v705 = vpop.f32.mrb[0].mxu0
  %v706 = vadd.f32 %v132, %v705
  %v707 = vpop.f32.mrb[0].mxu0
  %v708 = vpop.f32.mrb[0].mxu0
  %709 = vdwg.mxu0
  %710 = vmatprep.subr.bf16.mxu0 %v510
  %711 = vmatpush1.bf16.msra.mxu0 %v509
  %712 = vmatprep.subr.bf16.mxu0 %v512
  %713 = vmatpush1.bf16.msra.mxu0 %v511
  %714 = vmatprep.subr.bf16.mxu0 %v514
  %715 = vmatpush1.bf16.msra.mxu0 %v513
  %716 = vmatprep.subr.bf16.mxu0 %v516
  %717 = vmatpush1.bf16.msra.mxu0 %v515
  %718 = vmatprep.subr.bf16.mxu0 %v518
  %719 = vmatpush1.bf16.msra.mxu0 %v517
  %720 = vmatprep.subr.bf16.mxu0 %v520
  %721 = vmatpush1.bf16.msra.mxu0 %v519
  %722 = vmatprep.subr.bf16.mxu0 %v522
  %723 = vmatpush1.bf16.msra.mxu0 %v521
  %724 = vmatprep.subr.bf16.mxu0 %v524
  %725 = vmatpush1.bf16.msra.mxu0 %v523
  %726 = vmatprep.subr.bf16.mxu0 %v526
  %727 = vmatpush1.bf16.msra.mxu0 %v525
  %728 = vmatprep.subr.bf16.mxu0 %v528
  %729 = vmatpush1.bf16.msra.mxu0 %v527
  %730 = vmatprep.subr.bf16.mxu0 %v530
  %731 = vmatpush1.bf16.msra.mxu0 %v529
  %732 = vmatprep.subr.bf16.mxu0 %v532
  %733 = vmatpush1.bf16.msra.mxu0 %v531
  %734 = vmatprep.subr.bf16.mxu0 %v534
  %735 = vmatpush1.bf16.msra.mxu0 %v533
  %736 = vmatprep.subr.bf16.mxu0 %v536
  %737 = vmatpush1.bf16.msra.mxu0 %v535
  %738 = vmatprep.subr.bf16.mxu0 %v538
  %739 = vmatpush1.bf16.msra.mxu0 %v537
  %740 = vmatprep.subr.bf16.mxu0 %v540
  %741 = vmatpush1.bf16.msra.mxu0 %v539
  %742 = vmatprep.mubr.bf16.mxu0 %v182
  %743 = vmatmul.mubr.bf16.gmra.mrb[0].mxu0 %v181
  %v744 = vpop.f32.mrb[0].mxu0
  %v745 = vadd.f32 %v704, %v744
  %v746 = vpop.f32.mrb[0].mxu0
  %v747 = vadd.f32 %v706, %v746
  %v748 = vpop.f32.mrb[0].mxu0
  %v749 = vpop.f32.mrb[0].mxu0
  %750 = vdwg.mxu0
  %751 = vmatprep.subr.bf16.mxu0 %v542
  %752 = vmatpush1.bf16.msra.mxu0 %v541
  %753 = vmatprep.subr.bf16.mxu0 %v544
  %754 = vmatpush1.bf16.msra.mxu0 %v543
  %755 = vmatprep.subr.bf16.mxu0 %v546
  %756 = vmatpush1.bf16.msra.mxu0 %v545
  %757 = vmatprep.subr.bf16.mxu0 %v548
  %758 = vmatpush1.bf16.msra.mxu0 %v547
  %759 = vmatprep.subr.bf16.mxu0 %v550
  %760 = vmatpush1.bf16.msra.mxu0 %v549
  %761 = vmatprep.subr.bf16.mxu0 %v552
  %762 = vmatpush1.bf16.msra.mxu0 %v551
  %763 = vmatprep.subr.bf16.mxu0 %v554
  %764 = vmatpush1.bf16.msra.mxu0 %v553
  %765 = vmatprep.subr.bf16.mxu0 %v556
  %766 = vmatpush1.bf16.msra.mxu0 %v555
  %767 = vmatprep.subr.bf16.mxu0 %v558
  %768 = vmatpush1.bf16.msra.mxu0 %v557
  %769 = vmatprep.subr.bf16.mxu0 %v560
  %770 = vmatpush1.bf16.msra.mxu0 %v559
  %771 = vmatprep.subr.bf16.mxu0 %v562
  %772 = vmatpush1.bf16.msra.mxu0 %v561
  %773 = vmatprep.subr.bf16.mxu0 %v564
  %774 = vmatpush1.bf16.msra.mxu0 %v563
  %775 = vmatprep.subr.bf16.mxu0 %v566
  %776 = vmatpush1.bf16.msra.mxu0 %v565
  %777 = vmatprep.subr.bf16.mxu0 %v568
  %778 = vmatpush1.bf16.msra.mxu0 %v567
  %779 = vmatprep.subr.bf16.mxu0 %v570
  %780 = vmatpush1.bf16.msra.mxu0 %v569
  %781 = vmatprep.subr.bf16.mxu0 %v572
  %782 = vmatpush1.bf16.msra.mxu0 %v571
  %783 = vmatprep.mubr.bf16.mxu0 %v180
  %784 = vmatmul.mubr.bf16.gmra.mrb[0].mxu0 %v166
  %v785 = vpop.f32.mrb[0].mxu0
  %v786 = vadd.f32 %v745, %v785
  %v787 = vpop.f32.mrb[0].mxu0
  %v788 = vadd.f32 %v747, %v787
  %v789 = vpop.f32.mrb[0].mxu0
  %v790 = vpop.f32.mrb[0].mxu0
  %791 = vdwg.mxu0
  %v792 = vld [vmem:[%s3] sm:$0x3]
  %v793 = vmul.f32 %v788, 0.5
  %v794 = vmul.f32 %v793, 1.442695
  %v795 = vpow.pop %v794
  %v796 = vmul.f32 %v792, %v795
  %v797 = vadd.f32 %v786, %v796
  %v798 = vpack.c.bf16 %v797, %v797
  %v799 = vld [vmem:[%s4] sm:$0xff]
  %v800 = vld [vmem:[%s4 + $0x8] sm:$0xff]
  %v801 = vld [vmem:[%s4 + $0x10] sm:$0xff]
  %v802 = vld [vmem:[%s4 + $0x18] sm:$0xff]
  %v803 = vld [vmem:[%s4 + $0x20] sm:$0xff]
  %v804 = vld [vmem:[%s4 + $0x28] sm:$0xff]
  %v805 = vld [vmem:[%s4 + $0x30] sm:$0xff]
  %v806 = vld [vmem:[%s4 + $0x38] sm:$0xff]
  %v807 = vld [vmem:[%s4 + $0x40] sm:$0xff]
  %v808 = vld [vmem:[%s4 + $0x48] sm:$0xff]
  %v809 = vld [vmem:[%s4 + $0x50] sm:$0xff]
  %v810 = vld [vmem:[%s4 + $0x58] sm:$0xff]
  %v811 = vld [vmem:[%s4 + $0x60] sm:$0xff]
  %v812 = vld [vmem:[%s4 + $0x68] sm:$0xff]
  %v813 = vld [vmem:[%s4 + $0x70] sm:$0xff]
  %v814 = vld [vmem:[%s4 + $0x78] sm:$0xff]
  %v815 = vld [vmem:[%s4 + $0x80] sm:$0xff]
  %v816 = vld [vmem:[%s4 + $0x88] sm:$0xff]
  %v817 = vld [vmem:[%s4 + $0x90] sm:$0xff]
  %v818 = vld [vmem:[%s4 + $0x98] sm:$0xff]
  %v819 = vld [vmem:[%s4 + $0xa0] sm:$0xff]
  %v820 = vld [vmem:[%s4 + $0xa8] sm:$0xff]
  %v821 = vld [vmem:[%s4 + $0xb0] sm:$0xff]
  %v822 = vld [vmem:[%s4 + $0xb8] sm:$0xff]
  %v823 = vld [vmem:[%s4 + $0xc0] sm:$0xff]
  %v824 = vld [vmem:[%s4 + $0xc8] sm:$0xff]
  %v825 = vld [vmem:[%s4 + $0xd0] sm:$0xff]
  %v826 = vld [vmem:[%s4 + $0xd8] sm:$0xff]
  %v827 = vld [vmem:[%s4 + $0xe0] sm:$0xff]
  %v828 = vld [vmem:[%s4 + $0xe8] sm:$0xff]
  %v829 = vld [vmem:[%s4 + $0xf0] sm:$0xff]
  %v830 = vld [vmem:[%s4 + $0xf8] sm:$0xff]
  %v831 = vld [vmem:[%s4 + $0x100] sm:$0xff]
  %v832 = vld [vmem:[%s4 + $0x108] sm:$0xff]
  %v833 = vld [vmem:[%s4 + $0x110] sm:$0xff]
  %v834 = vld [vmem:[%s4 + $0x118] sm:$0xff]
  %v835 = vld [vmem:[%s4 + $0x120] sm:$0xff]
  %v836 = vld [vmem:[%s4 + $0x128] sm:$0xff]
  %v837 = vld [vmem:[%s4 + $0x130] sm:$0xff]
  %v838 = vld [vmem:[%s4 + $0x138] sm:$0xff]
  %v839 = vld [vmem:[%s4 + $0x140] sm:$0xff]
  %v840 = vld [vmem:[%s4 + $0x148] sm:$0xff]
  %v841 = vld [vmem:[%s4 + $0x150] sm:$0xff]
  %v842 = vld [vmem:[%s4 + $0x158] sm:$0xff]
  %v843 = vld [vmem:[%s4 + $0x160] sm:$0xff]
  %v844 = vld [vmem:[%s4 + $0x168] sm:$0xff]
  %v845 = vld [vmem:[%s4 + $0x170] sm:$0xff]
  %v846 = vld [vmem:[%s4 + $0x178] sm:$0xff]
  %v847 = vld [vmem:[%s5] sm:$0x3f]
  %v849 = vlaneseq
  %v850 = vshrl.u32 %v849, 7
  %v851 = vsub.s32 0, %v850
  %v852 = vrot.slane %v847, %v851
  %v853 = vlaneseq
  %v854 = vshrl.u32 %v853, 7
  %v855 = vsub.s32 1, %v854
  %v856 = vrot.slane %v847, %v855
  %v857 = vlaneseq
  %v858 = vshrl.u32 %v857, 7
  %v859 = vsub.s32 2, %v858
  %v860 = vrot.slane %v847, %v859
  %v861 = vlaneseq
  %v862 = vshrl.u32 %v861, 7
  %v863 = vsub.s32 3, %v862
  %v864 = vrot.slane %v847, %v863
  %v865 = vlaneseq
  %v866 = vshrl.u32 %v865, 7
  %v867 = vsub.s32 4, %v866
  %v868 = vrot.slane %v847, %v867
  %v869 = vlaneseq
  %v870 = vshrl.u32 %v869, 7
  %v871 = vsub.s32 5, %v870
  %v872 = vrot.slane %v847, %v871
  %v927 = vunpack.c.l.b16 %v799
  %v928 = vunpack.c.h.b16 %v799
  %v929 = vunpack.c.l.b16 %v800
  %v930 = vunpack.c.h.b16 %v800
  %v931 = vunpack.c.l.b16 %v801
  %v932 = vunpack.c.h.b16 %v801
  %v933 = vunpack.c.l.b16 %v802
  %v934 = vunpack.c.h.b16 %v802
  %v935 = vunpack.c.l.b16 %v803
  %v936 = vunpack.c.h.b16 %v803
  %v937 = vunpack.c.l.b16 %v804
  %v938 = vunpack.c.h.b16 %v804
  %v939 = vunpack.c.l.b16 %v805
  %v940 = vunpack.c.h.b16 %v805
  %v941 = vunpack.c.l.b16 %v806
  %v942 = vunpack.c.h.b16 %v806
  %v943 = vunpack.c.l.b16 %v807
  %v944 = vunpack.c.h.b16 %v807
  %v945 = vunpack.c.l.b16 %v808
  %v946 = vunpack.c.h.b16 %v808
  %v947 = vunpack.c.l.b16 %v809
  %v948 = vunpack.c.h.b16 %v809
  %v949 = vunpack.c.l.b16 %v810
  %v950 = vunpack.c.h.b16 %v810
  %v951 = vunpack.c.l.b16 %v811
  %v952 = vunpack.c.h.b16 %v811
  %v953 = vunpack.c.l.b16 %v812
  %v954 = vunpack.c.h.b16 %v812
  %v955 = vunpack.c.l.b16 %v813
  %v956 = vunpack.c.h.b16 %v813
  %v957 = vunpack.c.l.b16 %v814
  %v958 = vunpack.c.h.b16 %v814
  %v959 = vunpack.c.l.b16 %v815
  %v960 = vunpack.c.h.b16 %v815
  %v961 = vunpack.c.l.b16 %v816
  %v962 = vunpack.c.h.b16 %v816
  %v963 = vunpack.c.l.b16 %v817
  %v964 = vunpack.c.h.b16 %v817
  %v965 = vunpack.c.l.b16 %v818
  %v966 = vunpack.c.h.b16 %v818
  %v967 = vunpack.c.l.b16 %v819
  %v968 = vunpack.c.h.b16 %v819
  %v969 = vunpack.c.l.b16 %v820
  %v970 = vunpack.c.h.b16 %v820
  %v971 = vunpack.c.l.b16 %v821
  %v972 = vunpack.c.h.b16 %v821
  %v973 = vunpack.c.l.b16 %v822
  %v974 = vunpack.c.h.b16 %v822
  %v975 = vunpack.c.l.b16 %v823
  %v976 = vunpack.c.h.b16 %v823
  %v977 = vunpack.c.l.b16 %v824
  %v978 = vunpack.c.h.b16 %v824
  %v979 = vunpack.c.l.b16 %v825
  %v980 = vunpack.c.h.b16 %v825
  %v981 = vunpack.c.l.b16 %v826
  %v982 = vunpack.c.h.b16 %v826
  %v983 = vunpack.c.l.b16 %v827
  %v984 = vunpack.c.h.b16 %v827
  %v985 = vunpack.c.l.b16 %v828
  %v986 = vunpack.c.h.b16 %v828
  %v987 = vunpack.c.l.b16 %v829
  %v988 = vunpack.c.h.b16 %v829
  %v989 = vunpack.c.l.b16 %v830
  %v990 = vunpack.c.h.b16 %v830
  %v991 = vunpack.c.l.b16 %v831
  %v992 = vunpack.c.h.b16 %v831
  %v993 = vunpack.c.l.b16 %v832
  %v994 = vunpack.c.h.b16 %v832
  %v995 = vunpack.c.l.b16 %v833
  %v996 = vunpack.c.h.b16 %v833
  %v997 = vunpack.c.l.b16 %v834
  %v998 = vunpack.c.h.b16 %v834
  %v999 = vunpack.c.l.b16 %v835
  %v1000 = vunpack.c.h.b16 %v835
  %v1001 = vunpack.c.l.b16 %v836
  %v1002 = vunpack.c.h.b16 %v836
  %v1003 = vunpack.c.l.b16 %v837
  %v1004 = vunpack.c.h.b16 %v837
  %v1005 = vunpack.c.l.b16 %v838
  %v1006 = vunpack.c.h.b16 %v838
  %v1007 = vunpack.c.l.b16 %v839
  %v1008 = vunpack.c.h.b16 %v839
  %v1009 = vunpack.c.l.b16 %v840
  %v1010 = vunpack.c.h.b16 %v840
  %v1011 = vunpack.c.l.b16 %v841
  %v1012 = vunpack.c.h.b16 %v841
  %v1013 = vunpack.c.l.b16 %v842
  %v1014 = vunpack.c.h.b16 %v842
  %v1015 = vunpack.c.l.b16 %v843
  %v1016 = vunpack.c.h.b16 %v843
  %v1017 = vunpack.c.l.b16 %v844
  %v1018 = vunpack.c.h.b16 %v844
  %v1019 = vunpack.c.l.b16 %v845
  %v1020 = vunpack.c.h.b16 %v845
  %v1021 = vunpack.c.l.b16 %v846
  %v1022 = vunpack.c.h.b16 %v846
  %v1023 = vpack.c.b16 %v933, %v927
  %v1024 = vpack.c.b16 %v934, %v928
  %v1025 = vpack.c.b16 %v935, %v929
  %v1026 = vpack.c.b16 %v936, %v930
  %v1027 = vpack.c.b16 %v937, %v931
  %v1028 = vpack.c.b16 %v938, %v932
  %v1029 = vpack.c.b16 %v945, %v939
  %v1030 = vpack.c.b16 %v946, %v940
  %v1031 = vpack.c.b16 %v947, %v941
  %v1032 = vpack.c.b16 %v948, %v942
  %v1033 = vpack.c.b16 %v949, %v943
  %v1034 = vpack.c.b16 %v950, %v944
  %v1035 = vpack.c.b16 %v957, %v951
  %v1036 = vpack.c.b16 %v958, %v952
  %v1037 = vpack.c.b16 %v959, %v953
  %v1038 = vpack.c.b16 %v960, %v954
  %v1039 = vpack.c.b16 %v961, %v955
  %v1040 = vpack.c.b16 %v962, %v956
  %v1041 = vpack.c.b16 %v969, %v963
  %v1042 = vpack.c.b16 %v970, %v964
  %v1043 = vpack.c.b16 %v971, %v965
  %v1044 = vpack.c.b16 %v972, %v966
  %v1045 = vpack.c.b16 %v973, %v967
  %v1046 = vpack.c.b16 %v974, %v968
  %v1047 = vpack.c.b16 %v981, %v975
  %v1048 = vpack.c.b16 %v982, %v976
  %v1049 = vpack.c.b16 %v983, %v977
  %v1050 = vpack.c.b16 %v984, %v978
  %v1051 = vpack.c.b16 %v985, %v979
  %v1052 = vpack.c.b16 %v986, %v980
  %v1053 = vpack.c.b16 %v993, %v987
  %v1054 = vpack.c.b16 %v994, %v988
  %v1055 = vpack.c.b16 %v995, %v989
  %v1056 = vpack.c.b16 %v996, %v990
  %v1057 = vpack.c.b16 %v997, %v991
  %v1058 = vpack.c.b16 %v998, %v992
  %v1059 = vpack.c.b16 %v1005, %v999
  %v1060 = vpack.c.b16 %v1006, %v1000
  %v1061 = vpack.c.b16 %v1007, %v1001
  %v1062 = vpack.c.b16 %v1008, %v1002
  %v1063 = vpack.c.b16 %v1009, %v1003
  %v1064 = vpack.c.b16 %v1010, %v1004
  %v1065 = vpack.c.b16 %v1017, %v1011
  %v1066 = vpack.c.b16 %v1018, %v1012
  %v1067 = vpack.c.b16 %v1019, %v1013
  %v1068 = vpack.c.b16 %v1020, %v1014
  %v1069 = vpack.c.b16 %v1021, %v1015
  %v1070 = vpack.c.b16 %v1022, %v1016
  %1119 = vmatprep.subr.bf16.mxu0 %v1024
  %1120 = vmatpush1.bf16.msra.mxu0 %v1023
  %1121 = vmatprep.subr.bf16.mxu0 %v1030
  %1122 = vmatpush1.bf16.msra.mxu0 %v1029
  %1123 = vmatprep.subr.bf16.mxu0 %v1036
  %1124 = vmatpush1.bf16.msra.mxu0 %v1035
  %1125 = vmatprep.subr.bf16.mxu0 %v1042
  %1126 = vmatpush1.bf16.msra.mxu0 %v1041
  %1127 = vmatprep.subr.bf16.mxu0 %v1048
  %1128 = vmatpush1.bf16.msra.mxu0 %v1047
  %1129 = vmatprep.subr.bf16.mxu0 %v1054
  %1130 = vmatpush1.bf16.msra.mxu0 %v1053
  %1131 = vmatprep.subr.bf16.mxu0 %v1060
  %1132 = vmatpush1.bf16.msra.mxu0 %v1059
  %1133 = vmatprep.subr.bf16.mxu0 %v1066
  %1134 = vmatpush1.bf16.msra.mxu0 %v1065
  %1135 = vmatprep.subr.bf16.mxu0 0
  %1136 = vmatpush1.bf16.msra.mxu0 0
  %1137 = vmatprep.subr.bf16.mxu0 0
  %1138 = vmatpush1.bf16.msra.mxu0 0
  %1139 = vmatprep.subr.bf16.mxu0 0
  %1140 = vmatpush1.bf16.msra.mxu0 0
  %1141 = vmatprep.subr.bf16.mxu0 0
  %1142 = vmatpush1.bf16.msra.mxu0 0
  %1143 = vmatprep.subr.bf16.mxu0 0
  %1144 = vmatpush1.bf16.msra.mxu0 0
  %1145 = vmatprep.subr.bf16.mxu0 0
  %1146 = vmatpush1.bf16.msra.mxu0 0
  %1147 = vmatprep.subr.bf16.mxu0 0
  %1148 = vmatpush1.bf16.msra.mxu0 0
  %1149 = vmatprep.subr.bf16.mxu0 0
  %1150 = vmatpush1.bf16.msra.mxu0 0
  %1151 = vmatprep.mubr.bf16.mxu0 0
  %1152 = vmatmul.mubr.bf16.gmra.mrb[0].mxu0 %v798
  %v1153 = vpop.f32.mrb[0].mxu0
  %v1154 = vadd.f32 %v852, %v1153
  %v1155 = vpop.f32.mrb[0].mxu0
  %v1156 = vadd.f32 %v856, %v1155
  %v1157 = vpop.f32.mrb[0].mxu0
  %v1158 = vpop.f32.mrb[0].mxu0
  %1159 = vdwg.mxu0
  %1160 = vmatprep.subr.bf16.mxu0 %v1026
  %1161 = vmatpush1.bf16.msra.mxu0 %v1025
  %1162 = vmatprep.subr.bf16.mxu0 %v1032
  %1163 = vmatpush1.bf16.msra.mxu0 %v1031
  %1164 = vmatprep.subr.bf16.mxu0 %v1038
  %1165 = vmatpush1.bf16.msra.mxu0 %v1037
  %1166 = vmatprep.subr.bf16.mxu0 %v1044
  %1167 = vmatpush1.bf16.msra.mxu0 %v1043
  %1168 = vmatprep.subr.bf16.mxu0 %v1050
  %1169 = vmatpush1.bf16.msra.mxu0 %v1049
  %1170 = vmatprep.subr.bf16.mxu0 %v1056
  %1171 = vmatpush1.bf16.msra.mxu0 %v1055
  %1172 = vmatprep.subr.bf16.mxu0 %v1062
  %1173 = vmatpush1.bf16.msra.mxu0 %v1061
  %1174 = vmatprep.subr.bf16.mxu0 %v1068
  %1175 = vmatpush1.bf16.msra.mxu0 %v1067
  %1176 = vmatprep.subr.bf16.mxu0 0
  %1177 = vmatpush1.bf16.msra.mxu0 0
  %1178 = vmatprep.subr.bf16.mxu0 0
  %1179 = vmatpush1.bf16.msra.mxu0 0
  %1180 = vmatprep.subr.bf16.mxu0 0
  %1181 = vmatpush1.bf16.msra.mxu0 0
  %1182 = vmatprep.subr.bf16.mxu0 0
  %1183 = vmatpush1.bf16.msra.mxu0 0
  %1184 = vmatprep.subr.bf16.mxu0 0
  %1185 = vmatpush1.bf16.msra.mxu0 0
  %1186 = vmatprep.subr.bf16.mxu0 0
  %1187 = vmatpush1.bf16.msra.mxu0 0
  %1188 = vmatprep.subr.bf16.mxu0 0
  %1189 = vmatpush1.bf16.msra.mxu0 0
  %1190 = vmatprep.subr.bf16.mxu0 0
  %1191 = vmatpush1.bf16.msra.mxu0 0
  %1192 = vmatprep.mubr.bf16.mxu0 0
  %1193 = vmatmul.mubr.bf16.gmra.mrb[0].mxu0 %v798
  %v1194 = vpop.f32.mrb[0].mxu0
  %v1195 = vadd.f32 %v860, %v1194
  %v1196 = vpop.f32.mrb[0].mxu0
  %v1197 = vadd.f32 %v864, %v1196
  %v1198 = vpop.f32.mrb[0].mxu0
  %v1199 = vpop.f32.mrb[0].mxu0
  %1200 = vdwg.mxu0
  %1201 = vmatprep.subr.bf16.mxu0 %v1028
  %1202 = vmatpush1.bf16.msra.mxu0 %v1027
  %1203 = vmatprep.subr.bf16.mxu0 %v1034
  %1204 = vmatpush1.bf16.msra.mxu0 %v1033
  %1205 = vmatprep.subr.bf16.mxu0 %v1040
  %1206 = vmatpush1.bf16.msra.mxu0 %v1039
  %1207 = vmatprep.subr.bf16.mxu0 %v1046
  %1208 = vmatpush1.bf16.msra.mxu0 %v1045
  %1209 = vmatprep.subr.bf16.mxu0 %v1052
  %1210 = vmatpush1.bf16.msra.mxu0 %v1051
  %1211 = vmatprep.subr.bf16.mxu0 %v1058
  %1212 = vmatpush1.bf16.msra.mxu0 %v1057
  %1213 = vmatprep.subr.bf16.mxu0 %v1064
  %1214 = vmatpush1.bf16.msra.mxu0 %v1063
  %1215 = vmatprep.subr.bf16.mxu0 %v1070
  %1216 = vmatpush1.bf16.msra.mxu0 %v1069
  %1217 = vmatprep.subr.bf16.mxu0 0
  %1218 = vmatpush1.bf16.msra.mxu0 0
  %1219 = vmatprep.subr.bf16.mxu0 0
  %1220 = vmatpush1.bf16.msra.mxu0 0
  %1221 = vmatprep.subr.bf16.mxu0 0
  %1222 = vmatpush1.bf16.msra.mxu0 0
  %1223 = vmatprep.subr.bf16.mxu0 0
  %1224 = vmatpush1.bf16.msra.mxu0 0
  %1225 = vmatprep.subr.bf16.mxu0 0
  %1226 = vmatpush1.bf16.msra.mxu0 0
  %1227 = vmatprep.subr.bf16.mxu0 0
  %1228 = vmatpush1.bf16.msra.mxu0 0
  %1229 = vmatprep.subr.bf16.mxu0 0
  %1230 = vmatpush1.bf16.msra.mxu0 0
  %1231 = vmatprep.subr.bf16.mxu0 0
  %1232 = vmatpush1.bf16.msra.mxu0 0
  %1233 = vmatprep.mubr.bf16.mxu0 0
  %1234 = vmatmul.mubr.bf16.gmra.mrb[0].mxu0 %v798
  %v1235 = vpop.f32.mrb[0].mxu0
  %v1236 = vadd.f32 %v868, %v1235
  %v1237 = vpop.f32.mrb[0].mxu0
  %v1238 = vadd.f32 %v872, %v1237
  %v1239 = vpop.f32.mrb[0].mxu0
  %v1240 = vpop.f32.mrb[0].mxu0
  %1241 = vdwg.mxu0
  %v1244 = vcombine.low %v786, %v788
  %v1246 = vunpack.c.l.s4 1983009808
  %v1247 = vunpack.c.0.s8 %v1246
  %v1248 = vlaneseq
  %v1249 = vshrl.u32 %v1248, 7
  %v1250 = vsub.s32 %v1247, %v1249
  %v1251 = vrot.slane %v1244, %v1250
  %1253 = vst [vmem:[%s6] sm:$0xf] %v1251
  %v1254 = vpack.c.bf16 %v1154, %v1154
  %v1255 = vpack.c.bf16 %v1156, %v1156
  %v1256 = vpack.c.bf16 %v1195, %v1195
  %v1257 = vpack.c.bf16 %v1197, %v1197
  %v1258 = vpack.c.bf16 %v1236, %v1236
  %v1259 = vpack.c.bf16 %v1238, %v1238
  %v1266 = vcombine.low %v1254, %v1255
  %v1267 = vcombine.low %v1256, %v1257
  %v1268 = vcombine.low %v1258, %v1259
  %v1270 = vunpack.c.l.s4 1966171168
  %v1271 = vunpack.c.0.s8 %v1270
  %v1272 = vlaneseq
  %v1273 = vshrl.u32 %v1272, 7
  %v1274 = vsub.s32 %v1271, %v1273
  %v1275 = vrot.slane %v1266, %v1274
  %v1277 = vunpack.c.l.s4 1966171168
  %v1278 = vunpack.c.0.s8 %v1277
  %v1279 = vlaneseq
  %v1280 = vshrl.u32 %v1279, 7
  %v1281 = vsub.s32 %v1278, %v1280
  %v1282 = vrot.slane %v1267, %v1281
  %v1284 = vunpack.c.l.s4 1966171168
  %v1285 = vunpack.c.0.s8 %v1284
  %v1286 = vlaneseq
  %v1287 = vshrl.u32 %v1286, 7
  %v1288 = vsub.s32 %v1285, %v1287
  %v1289 = vrot.slane %v1268, %v1288
  %v1290 = vcombine.low %v1275, %v1282
  %v1292 = vunpack.c.l.s4 1966171168
  %v1293 = vunpack.c.0.s8 %v1292
  %v1294 = vlaneseq
  %v1295 = vshrl.u32 %v1294, 7
  %v1296 = vsub.s32 %v1293, %v1295
  %v1297 = vrot.slane %v1290, %v1296
  %v1299 = vunpack.c.l.s4 1966171168
  %v1300 = vunpack.c.0.s8 %v1299
  %v1301 = vlaneseq
  %v1302 = vshrl.u32 %v1301, 7
  %v1303 = vsub.s32 %v1300, %v1302
  %v1304 = vrot.slane %v1289, %v1303
  %v1305 = vcombine.low %v1297, %v1304
  %1307 = vst [vmem:[%s7] sm:$0x3f] %v1305
  // Predicated region
  $region26: #{vae_forward.10} parent=0 // pred_check
    _
  $region27: #{vae_forward.10} parent=0 // pred_check_branch
    %1309 = sbr.rel (0) target = $region29
  $region28: #{vae_forward.10} parent=0 // pred_region
    _
  $region29: #{vae_forward.10} parent=0 // pred_fallthru
    _
  // Predicated region
  $region30: #{vae_forward.10} parent=0 // pred_check
    _
  $region31: #{vae_forward.10} parent=0 // pred_check_branch
    %1311 = sbr.rel (0) target = $region33
  $region32: #{vae_forward.10} parent=0 // pred_region
    _
  $region33: #{vae_forward.10} parent=0 // pred_fallthru
    _
  // Predicated region
  $region34: #{vae_forward.10} parent=0 // pred_check
    _
  $region35: #{vae_forward.10} parent=0 // pred_check_branch
    %1313 = sbr.rel (0) target = $region37
  $region36: #{vae_forward.10} parent=0 // pred_region
    _
  $region37: #{vae_forward.10} parent=0 // pred_fallthru
    _
  // Predicated region
  $region38: #{vae_forward.10} parent=0 // pred_check
    _
  $region39: #{vae_forward.10} parent=0 // pred_check_branch
    %1315 = sbr.rel (0) target = $region41
  $region40: #{vae_forward.10} parent=0 // pred_region
    _
  $region41: #{vae_forward.10} parent=0 // pred_fallthru
    _

// kernel: vae_forward.11
$region0: #{vae_forward.11}
  #allocation0 [shape = 'u32[]', space=smem, size = 0x4, offset = 0x4, fixed_abs, tag = 'smem constant byte address 0x4 - core index']
  #allocation1 [shape = 'u32[144,128]{1,0:T(1,128)}', space=vmem, size = 0x12000, scoped, tag = 'internal scratch']
  %s0 = inlined_call_operand.vmem [shape: bf16[48,1152], index: 0, kind: input, shape index: {}]
  %s1 = inlined_call_operand.vmem [shape: bf16[1152,64], index: 1, kind: input, shape index: {}]
  %s2 = inlined_call_operand.vmem [shape: f32[1,64], index: 2, kind: input, shape index: {}]
  %s3 = inlined_call_operand.vmem [shape: bf16[48,64], index: 3, kind: output, shape index: {}]
  %s4 = sld [smem:[#allocation0]]
  $region22: #{vae_forward.11} parent=0
    _
  %s6 = ssub.s32 1, %s4
  %s7 = scalar_select 0, %s6, %s4
  // Predicated region
  $region2: #{vae_forward.11} parent=0 // pred_check
    _
  $region3: #{vae_forward.11} parent=0 // pred_check_branch
    %9 = sbr.rel (0) target = $region5
  $region4: #{vae_forward.11} parent=0 // pred_region
    _
  $region5: #{vae_forward.11} parent=0 // pred_fallthru
    _
  // Predicated region
  $region6: #{vae_forward.11} parent=0 // pred_check
    _
  $region7: #{vae_forward.11} parent=0 // pred_check_branch
    %11 = sbr.rel (0) target = $region9
  $region8: #{vae_forward.11} parent=0 // pred_region
    _
  $region9: #{vae_forward.11} parent=0 // pred_fallthru
    _
  // Predicated region
  $region10: #{vae_forward.11} parent=0 // pred_check
    _
  $region11: #{vae_forward.11} parent=0 // pred_check_branch
    %13 = sbr.rel (0) target = $region13
  $region12: #{vae_forward.11} parent=0 // pred_region
    _
  $region13: #{vae_forward.11} parent=0 // pred_fallthru
    _
  %v15 = vld [vmem:[%s0] sm:$0xff]
  %v16 = vld [vmem:[%s0 + $0x8] sm:$0xff]
  %v17 = vld [vmem:[%s0 + $0x10] sm:$0xff]
  %v18 = vld [vmem:[%s0 + $0x18] sm:$0xff]
  %v19 = vld [vmem:[%s0 + $0x20] sm:$0xf]
  %v20 = vld [vmem:[%s0 + $0x24] sm:$0xff]
  %v21 = vld [vmem:[%s0 + $0x2c] sm:$0xff]
  %v22 = vld [vmem:[%s0 + $0x34] sm:$0xff]
  %v23 = vld [vmem:[%s0 + $0x3c] sm:$0xff]
  %v24 = vld [vmem:[%s0 + $0x44] sm:$0xf]
  %v25 = vld [vmem:[%s0 + $0x48] sm:$0xff]
  %v26 = vld [vmem:[%s0 + $0x50] sm:$0xff]
  %v27 = vld [vmem:[%s0 + $0x58] sm:$0xff]
  %v28 = vld [vmem:[%s0 + $0x60] sm:$0xff]
  %v29 = vld [vmem:[%s0 + $0x68] sm:$0xf]
  %v30 = vld [vmem:[%s0 + $0x6c] sm:$0xff]
  %v31 = vld [vmem:[%s0 + $0x74] sm:$0xff]
  %v32 = vld [vmem:[%s0 + $0x7c] sm:$0xff]
  %v33 = vld [vmem:[%s0 + $0x84] sm:$0xff]
  %v34 = vld [vmem:[%s0 + $0x8c] sm:$0xf]
  %v35 = vld [vmem:[%s0 + $0x90] sm:$0xff]
  %v36 = vld [vmem:[%s0 + $0x98] sm:$0xff]
  %v37 = vld [vmem:[%s0 + $0xa0] sm:$0xff]
  %v38 = vld [vmem:[%s0 + $0xa8] sm:$0xff]
  %v39 = vld [vmem:[%s0 + $0xb0] sm:$0xf]
  %v40 = vld [vmem:[%s0 + $0xb4] sm:$0xff]
  %v41 = vld [vmem:[%s0 + $0xbc] sm:$0xff]
  %v42 = vld [vmem:[%s0 + $0xc4] sm:$0xff]
  %v43 = vld [vmem:[%s0 + $0xcc] sm:$0xff]
  %v44 = vld [vmem:[%s0 + $0xd4] sm:$0xf]
  %v45 = vld [vmem:[%s1] sm:$0xf]
  %v46 = vld [vmem:[%s1 + $0x4] sm:$0xf]
  %v47 = vld [vmem:[%s1 + $0x8] sm:$0xf]
  %v48 = vld [vmem:[%s1 + $0xc] sm:$0xf]
  %v49 = vld [vmem:[%s1 + $0x10] sm:$0xf]
  %v50 = vld [vmem:[%s1 + $0x14] sm:$0xf]
  %v51 = vld [vmem:[%s1 + $0x18] sm:$0xf]
  %v52 = vld [vmem:[%s1 + $0x1c] sm:$0xf]
  %v53 = vld [vmem:[%s1 + $0x20] sm:$0xf]
  %v54 = vld [vmem:[%s1 + $0x24] sm:$0xf]
  %v55 = vld [vmem:[%s1 + $0x28] sm:$0xf]
  %v56 = vld [vmem:[%s1 + $0x2c] sm:$0xf]
  %v57 = vld [vmem:[%s1 + $0x30] sm:$0xf]
  %v58 = vld [vmem:[%s1 + $0x34] sm:$0xf]
  %v59 = vld [vmem:[%s1 + $0x38] sm:$0xf]
  %v60 = vld [vmem:[%s1 + $0x3c] sm:$0xf]
  %v61 = vld [vmem:[%s1 + $0x40] sm:$0xf]
  %v62 = vld [vmem:[%s1 + $0x44] sm:$0xf]
  %v63 = vld [vmem:[%s1 + $0x48] sm:$0xf]
  %v64 = vld [vmem:[%s1 + $0x4c] sm:$0xf]
  %v65 = vld [vmem:[%s1 + $0x50] sm:$0xf]
  %v66 = vld [vmem:[%s1 + $0x54] sm:$0xf]
  %v67 = vld [vmem:[%s1 + $0x58] sm:$0xf]
  %v68 = vld [vmem:[%s1 + $0x5c] sm:$0xf]
  %v69 = vld [vmem:[%s1 + $0x60] sm:$0xf]
  %v70 = vld [vmem:[%s1 + $0x64] sm:$0xf]
  %v71 = vld [vmem:[%s1 + $0x68] sm:$0xf]
  %v72 = vld [vmem:[%s1 + $0x6c] sm:$0xf]
  %v73 = vld [vmem:[%s1 + $0x70] sm:$0xf]
  %v74 = vld [vmem:[%s1 + $0x74] sm:$0xf]
  %v75 = vld [vmem:[%s1 + $0x78] sm:$0xf]
  %v76 = vld [vmem:[%s1 + $0x7c] sm:$0xf]
  %v77 = vld [vmem:[%s1 + $0x80] sm:$0xf]
  %v78 = vld [vmem:[%s1 + $0x84] sm:$0xf]
  %v79 = vld [vmem:[%s1 + $0x88] sm:$0xf]
  %v80 = vld [vmem:[%s1 + $0x8c] sm:$0xf]
  %v81 = vld [vmem:[%s1 + $0x90] sm:$0xf]
  %v82 = vld [vmem:[%s1 + $0x94] sm:$0xf]
  %v83 = vld [vmem:[%s1 + $0x98] sm:$0xf]
  %v84 = vld [vmem:[%s1 + $0x9c] sm:$0xf]
  %v85 = vld [vmem:[%s1 + $0xa0] sm:$0xf]
  %v86 = vld [vmem:[%s1 + $0xa4] sm:$0xf]
  %v87 = vld [vmem:[%s1 + $0xa8] sm:$0xf]
  %v88 = vld [vmem:[%s1 + $0xac] sm:$0xf]
  %v89 = vld [vmem:[%s1 + $0xb0] sm:$0xf]
  %v90 = vld [vmem:[%s1 + $0xb4] sm:$0xf]
  %v91 = vld [vmem:[%s1 + $0xb8] sm:$0xf]
  %v92 = vld [vmem:[%s1 + $0xbc] sm:$0xf]
  %v93 = vld [vmem:[%s1 + $0xc0] sm:$0xf]
  %v94 = vld [vmem:[%s1 + $0xc4] sm:$0xf]
  %v95 = vld [vmem:[%s1 + $0xc8] sm:$0xf]
  %v96 = vld [vmem:[%s1 + $0xcc] sm:$0xf]
  %v97 = vld [vmem:[%s1 + $0xd0] sm:$0xf]
  %v98 = vld [vmem:[%s1 + $0xd4] sm:$0xf]
  %v99 = vld [vmem:[%s1 + $0xd8] sm:$0xf]
  %v100 = vld [vmem:[%s1 + $0xdc] sm:$0xf]
  %v101 = vld [vmem:[%s1 + $0xe0] sm:$0xf]
  %v102 = vld [vmem:[%s1 + $0xe4] sm:$0xf]
  %v103 = vld [vmem:[%s1 + $0xe8] sm:$0xf]
  %v104 = vld [vmem:[%s1 + $0xec] sm:$0xf]
  %v105 = vld [vmem:[%s1 + $0xf0] sm:$0xf]
  %v106 = vld [vmem:[%s1 + $0xf4] sm:$0xf]
  %v107 = vld [vmem:[%s1 + $0xf8] sm:$0xf]
  %v108 = vld [vmem:[%s1 + $0xfc] sm:$0xf]
  %v109 = vld [vmem:[%s1 + $0x100] sm:$0xf]
  %v110 = vld [vmem:[%s1 + $0x104] sm:$0xf]
  %v111 = vld [vmem:[%s1 + $0x108] sm:$0xf]
  %v112 = vld [vmem:[%s1 + $0x10c] sm:$0xf]
  %v113 = vld [vmem:[%s1 + $0x110] sm:$0xf]
  %v114 = vld [vmem:[%s1 + $0x114] sm:$0xf]
  %v115 = vld [vmem:[%s1 + $0x118] sm:$0xf]
  %v116 = vld [vmem:[%s1 + $0x11c] sm:$0xf]
  %v117 = vld [vmem:[%s1 + $0x120] sm:$0xf]
  %v118 = vld [vmem:[%s1 + $0x124] sm:$0xf]
  %v119 = vld [vmem:[%s1 + $0x128] sm:$0xf]
  %v120 = vld [vmem:[%s1 + $0x12c] sm:$0xf]
  %v121 = vld [vmem:[%s1 + $0x130] sm:$0xf]
  %v122 = vld [vmem:[%s1 + $0x134] sm:$0xf]
  %v123 = vld [vmem:[%s1 + $0x138] sm:$0xf]
  %v124 = vld [vmem:[%s1 + $0x13c] sm:$0xf]
  %v125 = vld [vmem:[%s1 + $0x140] sm:$0xf]
  %v126 = vld [vmem:[%s1 + $0x144] sm:$0xf]
  %v127 = vld [vmem:[%s1 + $0x148] sm:$0xf]
  %v128 = vld [vmem:[%s1 + $0x14c] sm:$0xf]
  %v129 = vld [vmem:[%s1 + $0x150] sm:$0xf]
  %v130 = vld [vmem:[%s1 + $0x154] sm:$0xf]
  %v131 = vld [vmem:[%s1 + $0x158] sm:$0xf]
  %v132 = vld [vmem:[%s1 + $0x15c] sm:$0xf]
  %v133 = vld [vmem:[%s1 + $0x160] sm:$0xf]
  %v134 = vld [vmem:[%s1 + $0x164] sm:$0xf]
  %v135 = vld [vmem:[%s1 + $0x168] sm:$0xf]
  %v136 = vld [vmem:[%s1 + $0x16c] sm:$0xf]
  %v137 = vld [vmem:[%s1 + $0x170] sm:$0xf]
  %v138 = vld [vmem:[%s1 + $0x174] sm:$0xf]
  %v139 = vld [vmem:[%s1 + $0x178] sm:$0xf]
  %v140 = vld [vmem:[%s1 + $0x17c] sm:$0xf]
  %v141 = vld [vmem:[%s1 + $0x180] sm:$0xf]
  %v142 = vld [vmem:[%s1 + $0x184] sm:$0xf]
  %v143 = vld [vmem:[%s1 + $0x188] sm:$0xf]
  %v144 = vld [vmem:[%s1 + $0x18c] sm:$0xf]
  %v145 = vld [vmem:[%s1 + $0x190] sm:$0xf]
  %v146 = vld [vmem:[%s1 + $0x194] sm:$0xf]
  %v147 = vld [vmem:[%s1 + $0x198] sm:$0xf]
  %v148 = vld [vmem:[%s1 + $0x19c] sm:$0xf]
  %v149 = vld [vmem:[%s1 + $0x1a0] sm:$0xf]
  %v150 = vld [vmem:[%s1 + $0x1a4] sm:$0xf]
  %v151 = vld [vmem:[%s1 + $0x1a8] sm:$0xf]
  %v152 = vld [vmem:[%s1 + $0x1ac] sm:$0xf]
  %v153 = vld [vmem:[%s1 + $0x1b0] sm:$0xf]
  %v154 = vld [vmem:[%s1 + $0x1b4] sm:$0xf]
  %v155 = vld [vmem:[%s1 + $0x1b8] sm:$0xf]
  %v156 = vld [vmem:[%s1 + $0x1bc] sm:$0xf]
  %v157 = vld [vmem:[%s1 + $0x1c0] sm:$0xf]
  %v158 = vld [vmem:[%s1 + $0x1c4] sm:$0xf]
  %v159 = vld [vmem:[%s1 + $0x1c8] sm:$0xf]
  %v160 = vld [vmem:[%s1 + $0x1cc] sm:$0xf]
  %v161 = vld [vmem:[%s1 + $0x1d0] sm:$0xf]
  %v162 = vld [vmem:[%s1 + $0x1d4] sm:$0xf]
  %v163 = vld [vmem:[%s1 + $0x1d8] sm:$0xf]
  %v164 = vld [vmem:[%s1 + $0x1dc] sm:$0xf]
  %v165 = vld [vmem:[%s1 + $0x1e0] sm:$0xf]
  %v166 = vld [vmem:[%s1 + $0x1e4] sm:$0xf]
  %v167 = vld [vmem:[%s1 + $0x1e8] sm:$0xf]
  %v168 = vld [vmem:[%s1 + $0x1ec] sm:$0xf]
  %v169 = vld [vmem:[%s1 + $0x1f0] sm:$0xf]
  %v170 = vld [vmem:[%s1 + $0x1f4] sm:$0xf]
  %v171 = vld [vmem:[%s1 + $0x1f8] sm:$0xf]
  %v172 = vld [vmem:[%s1 + $0x1fc] sm:$0xf]
  %v173 = vld [vmem:[%s1 + $0x200] sm:$0xf]
  %v174 = vld [vmem:[%s1 + $0x204] sm:$0xf]
  %v175 = vld [vmem:[%s1 + $0x208] sm:$0xf]
  %v176 = vld [vmem:[%s1 + $0x20c] sm:$0xf]
  %v177 = vld [vmem:[%s1 + $0x210] sm:$0xf]
  %v178 = vld [vmem:[%s1 + $0x214] sm:$0xf]
  %v179 = vld [vmem:[%s1 + $0x218] sm:$0xf]
  %v180 = vld [vmem:[%s1 + $0x21c] sm:$0xf]
  %v181 = vld [vmem:[%s1 + $0x220] sm:$0xf]
  %v182 = vld [vmem:[%s1 + $0x224] sm:$0xf]
  %v183 = vld [vmem:[%s1 + $0x228] sm:$0xf]
  %v184 = vld [vmem:[%s1 + $0x22c] sm:$0xf]
  %v185 = vld [vmem:[%s1 + $0x230] sm:$0xf]
  %v186 = vld [vmem:[%s1 + $0x234] sm:$0xf]
  %v187 = vld [vmem:[%s1 + $0x238] sm:$0xf]
  %v188 = vld [vmem:[%s1 + $0x23c] sm:$0xf]
  %v189 = vld [vmem:[%s2] sm:$0x1]
  %v191 = vlaneseq
  %v192 = vshrl.u32 %v191, 7
  %v193 = vsub.s32 0, %v192
  %v194 = vrot.slane %v189, %v193
  %v226 = vunpack.c.l.b16 %v15
  %v227 = vunpack.c.h.b16 %v15
  %v228 = vunpack.c.l.b16 %v16
  %v229 = vunpack.c.h.b16 %v16
  %v230 = vunpack.c.l.b16 %v17
  %v231 = vunpack.c.h.b16 %v17
  %v232 = vunpack.c.l.b16 %v18
  %v233 = vunpack.c.h.b16 %v18
  %v234 = vunpack.c.l.b16 %v19
  %v235 = vunpack.c.l.b16 %v20
  %v236 = vunpack.c.h.b16 %v20
  %v237 = vunpack.c.l.b16 %v21
  %v238 = vunpack.c.h.b16 %v21
  %v239 = vunpack.c.l.b16 %v22
  %v240 = vunpack.c.h.b16 %v22
  %v241 = vunpack.c.l.b16 %v23
  %v242 = vunpack.c.h.b16 %v23
  %v243 = vunpack.c.l.b16 %v24
  %v244 = vunpack.c.l.b16 %v25
  %v245 = vunpack.c.h.b16 %v25
  %v246 = vunpack.c.l.b16 %v26
  %v247 = vunpack.c.h.b16 %v26
  %v248 = vunpack.c.l.b16 %v27
  %v249 = vunpack.c.h.b16 %v27
  %v250 = vunpack.c.l.b16 %v28
  %v251 = vunpack.c.h.b16 %v28
  %v252 = vunpack.c.l.b16 %v29
  %v253 = vunpack.c.l.b16 %v30
  %v254 = vunpack.c.h.b16 %v30
  %v255 = vunpack.c.l.b16 %v31
  %v256 = vunpack.c.h.b16 %v31
  %v257 = vunpack.c.l.b16 %v32
  %v258 = vunpack.c.h.b16 %v32
  %v259 = vunpack.c.l.b16 %v33
  %v260 = vunpack.c.h.b16 %v33
  %v261 = vunpack.c.l.b16 %v34
  %v262 = vunpack.c.l.b16 %v35
  %v263 = vunpack.c.h.b16 %v35
  %v264 = vunpack.c.l.b16 %v36
  %v265 = vunpack.c.h.b16 %v36
  %v266 = vunpack.c.l.b16 %v37
  %v267 = vunpack.c.h.b16 %v37
  %v268 = vunpack.c.l.b16 %v38
  %v269 = vunpack.c.h.b16 %v38
  %v270 = vunpack.c.l.b16 %v39
  %v271 = vunpack.c.l.b16 %v40
  %v272 = vunpack.c.h.b16 %v40
  %v273 = vunpack.c.l.b16 %v41
  %v274 = vunpack.c.h.b16 %v41
  %v275 = vunpack.c.l.b16 %v42
  %v276 = vunpack.c.h.b16 %v42
  %v277 = vunpack.c.l.b16 %v43
  %v278 = vunpack.c.h.b16 %v43
  %v279 = vunpack.c.l.b16 %v44
  %v280 = vpack.c.b16 %v235, %v226
  %v281 = vpack.c.b16 %v236, %v227
  %v282 = vpack.c.b16 %v237, %v228
  %v283 = vpack.c.b16 %v238, %v229
  %v284 = vpack.c.b16 %v239, %v230
  %v285 = vpack.c.b16 %v240, %v231
  %v286 = vpack.c.b16 %v241, %v232
  %v287 = vpack.c.b16 %v242, %v233
  %v288 = vpack.c.b16 %v243, %v234
  %v289 = vpack.c.b16 %v253, %v244
  %v290 = vpack.c.b16 %v254, %v245
  %v291 = vpack.c.b16 %v255, %v246
  %v292 = vpack.c.b16 %v256, %v247
  %v293 = vpack.c.b16 %v257, %v248
  %v294 = vpack.c.b16 %v258, %v249
  %v295 = vpack.c.b16 %v259, %v250
  %v296 = vpack.c.b16 %v260, %v251
  %v297 = vpack.c.b16 %v261, %v252
  %v298 = vpack.c.b16 %v271, %v262
  %v299 = vpack.c.b16 %v272, %v263
  %v300 = vpack.c.b16 %v273, %v264
  %v301 = vpack.c.b16 %v274, %v265
  %v302 = vpack.c.b16 %v275, %v266
  %v303 = vpack.c.b16 %v276, %v267
  %v304 = vpack.c.b16 %v277, %v268
  %v305 = vpack.c.b16 %v278, %v269
  %v306 = vpack.c.b16 %v279, %v270
  %v478 = vunpack.c.l.b16 %v45
  %v479 = vunpack.c.l.b16 %v46
  %v480 = vunpack.c.l.b16 %v47
  %v481 = vunpack.c.l.b16 %v48
  %v482 = vunpack.c.l.b16 %v49
  %v483 = vunpack.c.l.b16 %v50
  %v484 = vunpack.c.l.b16 %v51
  %v485 = vunpack.c.l.b16 %v52
  %v486 = vunpack.c.l.b16 %v53
  %v487 = vunpack.c.l.b16 %v54
  %v488 = vunpack.c.l.b16 %v55
  %v489 = vunpack.c.l.b16 %v56
  %v490 = vunpack.c.l.b16 %v57
  %v491 = vunpack.c.l.b16 %v58
  %v492 = vunpack.c.l.b16 %v59
  %v493 = vunpack.c.l.b16 %v60
  %v494 = vunpack.c.l.b16 %v61
  %v495 = vunpack.c.l.b16 %v62
  %v496 = vunpack.c.l.b16 %v63
  %v497 = vunpack.c.l.b16 %v64
  %v498 = vunpack.c.l.b16 %v65
  %v499 = vunpack.c.l.b16 %v66
  %v500 = vunpack.c.l.b16 %v67
  %v501 = vunpack.c.l.b16 %v68
  %v502 = vunpack.c.l.b16 %v69
  %v503 = vunpack.c.l.b16 %v70
  %v504 = vunpack.c.l.b16 %v71
  %v505 = vunpack.c.l.b16 %v72
  %v506 = vunpack.c.l.b16 %v73
  %v507 = vunpack.c.l.b16 %v74
  %v508 = vunpack.c.l.b16 %v75
  %v509 = vunpack.c.l.b16 %v76
  %v510 = vunpack.c.l.b16 %v77
  %v511 = vunpack.c.l.b16 %v78
  %v512 = vunpack.c.l.b16 %v79
  %v513 = vunpack.c.l.b16 %v80
  %v514 = vunpack.c.l.b16 %v81
  %v515 = vunpack.c.l.b16 %v82
  %v516 = vunpack.c.l.b16 %v83
  %v517 = vunpack.c.l.b16 %v84
  %v518 = vunpack.c.l.b16 %v85
  %v519 = vunpack.c.l.b16 %v86
  %v520 = vunpack.c.l.b16 %v87
  %v521 = vunpack.c.l.b16 %v88
  %v522 = vunpack.c.l.b16 %v89
  %v523 = vunpack.c.l.b16 %v90
  %v524 = vunpack.c.l.b16 %v91
  %v525 = vunpack.c.l.b16 %v92
  %v526 = vunpack.c.l.b16 %v93
  %v527 = vunpack.c.l.b16 %v94
  %v528 = vunpack.c.l.b16 %v95
  %v529 = vunpack.c.l.b16 %v96
  %v530 = vunpack.c.l.b16 %v97
  %v531 = vunpack.c.l.b16 %v98
  %v532 = vunpack.c.l.b16 %v99
  %v533 = vunpack.c.l.b16 %v100
  %v534 = vunpack.c.l.b16 %v101
  %v535 = vunpack.c.l.b16 %v102
  %v536 = vunpack.c.l.b16 %v103
  %v537 = vunpack.c.l.b16 %v104
  %v538 = vunpack.c.l.b16 %v105
  %v539 = vunpack.c.l.b16 %v106
  %v540 = vunpack.c.l.b16 %v107
  %v541 = vunpack.c.l.b16 %v108
  %v542 = vunpack.c.l.b16 %v109
  %v543 = vunpack.c.l.b16 %v110
  %v544 = vunpack.c.l.b16 %v111
  %v545 = vunpack.c.l.b16 %v112
  %v546 = vunpack.c.l.b16 %v113
  %v547 = vunpack.c.l.b16 %v114
  %v548 = vunpack.c.l.b16 %v115
  %v549 = vunpack.c.l.b16 %v116
  %v550 = vunpack.c.l.b16 %v117
  %v551 = vunpack.c.l.b16 %v118
  %v552 = vunpack.c.l.b16 %v119
  %v553 = vunpack.c.l.b16 %v120
  %v554 = vunpack.c.l.b16 %v121
  %v555 = vunpack.c.l.b16 %v122
  %v556 = vunpack.c.l.b16 %v123
  %v557 = vunpack.c.l.b16 %v124
  %v558 = vunpack.c.l.b16 %v125
  %v559 = vunpack.c.l.b16 %v126
  %v560 = vunpack.c.l.b16 %v127
  %v561 = vunpack.c.l.b16 %v128
  %v562 = vunpack.c.l.b16 %v129
  %v563 = vunpack.c.l.b16 %v130
  %v564 = vunpack.c.l.b16 %v131
  %v565 = vunpack.c.l.b16 %v132
  %v566 = vunpack.c.l.b16 %v133
  %v567 = vunpack.c.l.b16 %v134
  %v568 = vunpack.c.l.b16 %v135
  %v569 = vunpack.c.l.b16 %v136
  %v570 = vunpack.c.l.b16 %v137
  %v571 = vunpack.c.l.b16 %v138
  %v572 = vunpack.c.l.b16 %v139
  %v573 = vunpack.c.l.b16 %v140
  %v574 = vunpack.c.l.b16 %v141
  %v575 = vunpack.c.l.b16 %v142
  %v576 = vunpack.c.l.b16 %v143
  %v577 = vunpack.c.l.b16 %v144
  %v578 = vunpack.c.l.b16 %v145
  %v579 = vunpack.c.l.b16 %v146
  %v580 = vunpack.c.l.b16 %v147
  %v581 = vunpack.c.l.b16 %v148
  %v582 = vunpack.c.l.b16 %v149
  %v583 = vunpack.c.l.b16 %v150
  %v584 = vunpack.c.l.b16 %v151
  %v585 = vunpack.c.l.b16 %v152
  %v586 = vunpack.c.l.b16 %v153
  %v587 = vunpack.c.l.b16 %v154
  %v588 = vunpack.c.l.b16 %v155
  %v589 = vunpack.c.l.b16 %v156
  %v590 = vunpack.c.l.b16 %v157
  %v591 = vunpack.c.l.b16 %v158
  %v592 = vunpack.c.l.b16 %v159
  %v593 = vunpack.c.l.b16 %v160
  %v594 = vunpack.c.l.b16 %v161
  %v595 = vunpack.c.l.b16 %v162
  %v596 = vunpack.c.l.b16 %v163
  %v597 = vunpack.c.l.b16 %v164
  %v598 = vunpack.c.l.b16 %v165
  %v599 = vunpack.c.l.b16 %v166
  %v600 = vunpack.c.l.b16 %v167
  %v601 = vunpack.c.l.b16 %v168
  %v602 = vunpack.c.l.b16 %v169
  %v603 = vunpack.c.l.b16 %v170
  %v604 = vunpack.c.l.b16 %v171
  %v605 = vunpack.c.l.b16 %v172
  %v606 = vunpack.c.l.b16 %v173
  %v607 = vunpack.c.l.b16 %v174
  %v608 = vunpack.c.l.b16 %v175
  %v609 = vunpack.c.l.b16 %v176
  %v610 = vunpack.c.l.b16 %v177
  %v611 = vunpack.c.l.b16 %v178
  %v612 = vunpack.c.l.b16 %v179
  %v613 = vunpack.c.l.b16 %v180
  %v614 = vunpack.c.l.b16 %v181
  %v615 = vunpack.c.l.b16 %v182
  %v616 = vunpack.c.l.b16 %v183
  %v617 = vunpack.c.l.b16 %v184
  %v618 = vunpack.c.l.b16 %v185
  %v619 = vunpack.c.l.b16 %v186
  %v620 = vunpack.c.l.b16 %v187
  %v621 = vunpack.c.l.b16 %v188
  %v622 = vpack.c.b16 %v479, %v478
  %v623 = vpack.c.b16 %v481, %v480
  %v624 = vpack.c.b16 %v483, %v482
  %v625 = vpack.c.b16 %v485, %v484
  %v626 = vpack.c.b16 %v487, %v486
  %v627 = vpack.c.b16 %v489, %v488
  %v628 = vpack.c.b16 %v491, %v490
  %v629 = vpack.c.b16 %v493, %v492
  %v630 = vpack.c.b16 %v495, %v494
  %v631 = vpack.c.b16 %v497, %v496
  %v632 = vpack.c.b16 %v499, %v498
  %v633 = vpack.c.b16 %v501, %v500
  %v634 = vpack.c.b16 %v503, %v502
  %v635 = vpack.c.b16 %v505, %v504
  %v636 = vpack.c.b16 %v507, %v506
  %v637 = vpack.c.b16 %v509, %v508
  %v638 = vpack.c.b16 %v511, %v510
  %v639 = vpack.c.b16 %v513, %v512
  %v640 = vpack.c.b16 %v515, %v514
  %v641 = vpack.c.b16 %v517, %v516
  %v642 = vpack.c.b16 %v519, %v518
  %v643 = vpack.c.b16 %v521, %v520
  %v644 = vpack.c.b16 %v523, %v522
  %v645 = vpack.c.b16 %v525, %v524
  %v646 = vpack.c.b16 %v527, %v526
  %v647 = vpack.c.b16 %v529, %v528
  %v648 = vpack.c.b16 %v531, %v530
  %v649 = vpack.c.b16 %v533, %v532
  %v650 = vpack.c.b16 %v535, %v534
  %v651 = vpack.c.b16 %v537, %v536
  %v652 = vpack.c.b16 %v539, %v538
  %v653 = vpack.c.b16 %v541, %v540
  %v654 = vpack.c.b16 %v543, %v542
  %v655 = vpack.c.b16 %v545, %v544
  %v656 = vpack.c.b16 %v547, %v546
  %v657 = vpack.c.b16 %v549, %v548
  %v658 = vpack.c.b16 %v551, %v550
  %v659 = vpack.c.b16 %v553, %v552
  %v660 = vpack.c.b16 %v555, %v554
  %v661 = vpack.c.b16 %v557, %v556
  %v662 = vpack.c.b16 %v559, %v558
  %v663 = vpack.c.b16 %v561, %v560
  %v664 = vpack.c.b16 %v563, %v562
  %v665 = vpack.c.b16 %v565, %v564
  %v666 = vpack.c.b16 %v567, %v566
  %v667 = vpack.c.b16 %v569, %v568
  %v668 = vpack.c.b16 %v571, %v570
  %v669 = vpack.c.b16 %v573, %v572
  %v670 = vpack.c.b16 %v575, %v574
  %v671 = vpack.c.b16 %v577, %v576
  %v672 = vpack.c.b16 %v579, %v578
  %v673 = vpack.c.b16 %v581, %v580
  %v674 = vpack.c.b16 %v583, %v582
  %v675 = vpack.c.b16 %v585, %v584
  %v676 = vpack.c.b16 %v587, %v586
  %v677 = vpack.c.b16 %v589, %v588
  %v678 = vpack.c.b16 %v591, %v590
  %v679 = vpack.c.b16 %v593, %v592
  %v680 = vpack.c.b16 %v595, %v594
  %v681 = vpack.c.b16 %v597, %v596
  %v682 = vpack.c.b16 %v599, %v598
  %v683 = vpack.c.b16 %v601, %v600
  %v684 = vpack.c.b16 %v603, %v602
  %v685 = vpack.c.b16 %v605, %v604
  %v686 = vpack.c.b16 %v607, %v606
  %v687 = vpack.c.b16 %v609, %v608
  %v688 = vpack.c.b16 %v611, %v610
  %v689 = vpack.c.b16 %v613, %v612
  %v690 = vpack.c.b16 %v615, %v614
  %v691 = vpack.c.b16 %v617, %v616
  %v692 = vpack.c.b16 %v619, %v618
  %v693 = vpack.c.b16 %v621, %v620
  %766 = vmatprep.subr.bf16.mxu0 0
  %767 = vmatpush1.bf16.msra.mxu0 %v622
  %768 = vmatprep.subr.bf16.mxu0 0
  %769 = vmatpush1.bf16.msra.mxu0 %v623
  %770 = vmatprep.subr.bf16.mxu0 0
  %771 = vmatpush1.bf16.msra.mxu0 %v624
  %772 = vmatprep.subr.bf16.mxu0 0
  %773 = vmatpush1.bf16.msra.mxu0 %v625
  %774 = vmatprep.subr.bf16.mxu0 0
  %775 = vmatpush1.bf16.msra.mxu0 %v626
  %776 = vmatprep.subr.bf16.mxu0 0
  %777 = vmatpush1.bf16.msra.mxu0 %v627
  %778 = vmatprep.subr.bf16.mxu0 0
  %779 = vmatpush1.bf16.msra.mxu0 %v628
  %780 = vmatprep.subr.bf16.mxu0 0
  %781 = vmatpush1.bf16.msra.mxu0 %v629
  %782 = vmatprep.subr.bf16.mxu0 0
  %783 = vmatpush1.bf16.msra.mxu0 %v630
  %784 = vmatprep.subr.bf16.mxu0 0
  %785 = vmatpush1.bf16.msra.mxu0 %v631
  %786 = vmatprep.subr.bf16.mxu0 0
  %787 = vmatpush1.bf16.msra.mxu0 %v632
  %788 = vmatprep.subr.bf16.mxu0 0
  %789 = vmatpush1.bf16.msra.mxu0 %v633
  %790 = vmatprep.subr.bf16.mxu0 0
  %791 = vmatpush1.bf16.msra.mxu0 %v634
  %792 = vmatprep.subr.bf16.mxu0 0
  %793 = vmatpush1.bf16.msra.mxu0 %v635
  %794 = vmatprep.subr.bf16.mxu0 0
  %795 = vmatpush1.bf16.msra.mxu0 %v636
  %796 = vmatprep.subr.bf16.mxu0 0
  %797 = vmatpush1.bf16.msra.mxu0 %v637
  %798 = vmatprep.mubr.bf16.mxu0 %v281
  %799 = vmatmul.mubr.bf16.gmra.mrb[0].mxu0 %v280
  %v800 = vpop.f32.mrb[0].mxu0
  %v801 = vadd.f32 %v194, %v800
  %v802 = vpop.f32.mrb[0].mxu0
  %v803 = vpop.f32.mrb[0].mxu0
  %v804 = vadd.f32 %v194, %v803
  %v805 = vpop.f32.mrb[0].mxu0
  %806 = vmatprep.mubr.bf16.mxu0 %v290
  %807 = vmatmul.mubr.bf16.gmra.mrb[0].mxu0 %v289
  %v808 = vpop.f32.mrb[0].mxu0
  %v809 = vadd.f32 %v194, %v808
  %v810 = vpop.f32.mrb[0].mxu0
  %v811 = vpop.f32.mrb[0].mxu0
  %v812 = vadd.f32 %v194, %v811
  %v813 = vpop.f32.mrb[0].mxu0
  %814 = vmatprep.mubr.bf16.mxu0 %v299
  %815 = vmatmul.mubr.bf16.gmra.mrb[0].mxu0 %v298
  %v816 = vpop.f32.mrb[0].mxu0
  %v817 = vadd.f32 %v194, %v816
  %v818 = vpop.f32.mrb[0].mxu0
  %v819 = vpop.f32.mrb[0].mxu0
  %v820 = vadd.f32 %v194, %v819
  %v821 = vpop.f32.mrb[0].mxu0
  %822 = vdwg.mxu0
  %823 = vmatprep.subr.bf16.mxu0 0
  %824 = vmatpush1.bf16.msra.mxu0 %v638
  %825 = vmatprep.subr.bf16.mxu0 0
  %826 = vmatpush1.bf16.msra.mxu0 %v639
  %827 = vmatprep.subr.bf16.mxu0 0
  %828 = vmatpush1.bf16.msra.mxu0 %v640
  %829 = vmatprep.subr.bf16.mxu0 0
  %830 = vmatpush1.bf16.msra.mxu0 %v641
  %831 = vmatprep.subr.bf16.mxu0 0
  %832 = vmatpush1.bf16.msra.mxu0 %v642
  %833 = vmatprep.subr.bf16.mxu0 0
  %834 = vmatpush1.bf16.msra.mxu0 %v643
  %835 = vmatprep.subr.bf16.mxu0 0
  %836 = vmatpush1.bf16.msra.mxu0 %v644
  %837 = vmatprep.subr.bf16.mxu0 0
  %838 = vmatpush1.bf16.msra.mxu0 %v645
  %839 = vmatprep.subr.bf16.mxu0 0
  %840 = vmatpush1.bf16.msra.mxu0 %v646
  %841 = vmatprep.subr.bf16.mxu0 0
  %842 = vmatpush1.bf16.msra.mxu0 %v647
  %843 = vmatprep.subr.bf16.mxu0 0
  %844 = vmatpush1.bf16.msra.mxu0 %v648
  %845 = vmatprep.subr.bf16.mxu0 0
  %846 = vmatpush1.bf16.msra.mxu0 %v649
  %847 = vmatprep.subr.bf16.mxu0 0
  %848 = vmatpush1.bf16.msra.mxu0 %v650
  %849 = vmatprep.subr.bf16.mxu0 0
  %850 = vmatpush1.bf16.msra.mxu0 %v651
  %851 = vmatprep.subr.bf16.mxu0 0
  %852 = vmatpush1.bf16.msra.mxu0 %v652
  %853 = vmatprep.subr.bf16.mxu0 0
  %854 = vmatpush1.bf16.msra.mxu0 %v653
  %855 = vmatprep.mubr.bf16.mxu0 %v283
  %856 = vmatmul.mubr.bf16.gmra.mrb[0].mxu0 %v282
  %v857 = vpop.f32.mrb[0].mxu0
  %v858 = vadd.f32 %v801, %v857
  %v859 = vpop.f32.mrb[0].mxu0
  %v860 = vpop.f32.mrb[0].mxu0
  %v861 = vadd.f32 %v804, %v860
  %v862 = vpop.f32.mrb[0].mxu0
  %863 = vmatprep.mubr.bf16.mxu0 %v292
  %864 = vmatmul.mubr.bf16.gmra.mrb[0].mxu0 %v291
  %v865 = vpop.f32.mrb[0].mxu0
  %v866 = vadd.f32 %v809, %v865
  %v867 = vpop.f32.mrb[0].mxu0
  %v868 = vpop.f32.mrb[0].mxu0
  %v869 = vadd.f32 %v812, %v868
  %v870 = vpop.f32.mrb[0].mxu0
  %871 = vmatprep.mubr.bf16.mxu0 %v301
  %872 = vmatmul.mubr.bf16.gmra.mrb[0].mxu0 %v300
  %v873 = vpop.f32.mrb[0].mxu0
  %v874 = vadd.f32 %v817, %v873
  %v875 = vpop.f32.mrb[0].mxu0
  %v876 = vpop.f32.mrb[0].mxu0
  %v877 = vadd.f32 %v820, %v876
  %v878 = vpop.f32.mrb[0].mxu0
  %879 = vdwg.mxu0
  %880 = vmatprep.subr.bf16.mxu0 0
  %881 = vmatpush1.bf16.msra.mxu0 %v654
  %882 = vmatprep.subr.bf16.mxu0 0
  %883 = vmatpush1.bf16.msra.mxu0 %v655
  %884 = vmatprep.subr.bf16.mxu0 0
  %885 = vmatpush1.bf16.msra.mxu0 %v656
  %886 = vmatprep.subr.bf16.mxu0 0
  %887 = vmatpush1.bf16.msra.mxu0 %v657
  %888 = vmatprep.subr.bf16.mxu0 0
  %889 = vmatpush1.bf16.msra.mxu0 %v658
  %890 = vmatprep.subr.bf16.mxu0 0
  %891 = vmatpush1.bf16.msra.mxu0 %v659
  %892 = vmatprep.subr.bf16.mxu0 0
  %893 = vmatpush1.bf16.msra.mxu0 %v660
  %894 = vmatprep.subr.bf16.mxu0 0
  %895 = vmatpush1.bf16.msra.mxu0 %v661
  %896 = vmatprep.subr.bf16.mxu0 0
  %897 = vmatpush1.bf16.msra.mxu0 %v662
  %898 = vmatprep.subr.bf16.mxu0 0
  %899 = vmatpush1.bf16.msra.mxu0 %v663
  %900 = vmatprep.subr.bf16.mxu0 0
  %901 = vmatpush1.bf16.msra.mxu0 %v664
  %902 = vmatprep.subr.bf16.mxu0 0
  %903 = vmatpush1.bf16.msra.mxu0 %v665
  %904 = vmatprep.subr.bf16.mxu0 0
  %905 = vmatpush1.bf16.msra.mxu0 %v666
  %906 = vmatprep.subr.bf16.mxu0 0
  %907 = vmatpush1.bf16.msra.mxu0 %v667
  %908 = vmatprep.subr.bf16.mxu0 0
  %909 = vmatpush1.bf16.msra.mxu0 %v668
  %910 = vmatprep.subr.bf16.mxu0 0
  %911 = vmatpush1.bf16.msra.mxu0 %v669
  %912 = vmatprep.mubr.bf16.mxu0 %v285
  %913 = vmatmul.mubr.bf16.gmra.mrb[0].mxu0 %v284
  %v914 = vpop.f32.mrb[0].mxu0
  %v915 = vadd.f32 %v858, %v914
  %v916 = vpop.f32.mrb[0].mxu0
  %v917 = vpop.f32.mrb[0].mxu0
  %v918 = vadd.f32 %v861, %v917
  %v919 = vpop.f32.mrb[0].mxu0
  %920 = vmatprep.mubr.bf16.mxu0 %v294
  %921 = vmatmul.mubr.bf16.gmra.mrb[0].mxu0 %v293
  %v922 = vpop.f32.mrb[0].mxu0
  %v923 = vadd.f32 %v866, %v922
  %v924 = vpop.f32.mrb[0].mxu0
  %v925 = vpop.f32.mrb[0].mxu0
  %v926 = vadd.f32 %v869, %v925
  %v927 = vpop.f32.mrb[0].mxu0
  %928 = vmatprep.mubr.bf16.mxu0 %v303
  %929 = vmatmul.mubr.bf16.gmra.mrb[0].mxu0 %v302
  %v930 = vpop.f32.mrb[0].mxu0
  %v931 = vadd.f32 %v874, %v930
  %v932 = vpop.f32.mrb[0].mxu0
  %v933 = vpop.f32.mrb[0].mxu0
  %v934 = vadd.f32 %v877, %v933
  %v935 = vpop.f32.mrb[0].mxu0
  %936 = vdwg.mxu0
  %937 = vmatprep.subr.bf16.mxu0 0
  %938 = vmatpush1.bf16.msra.mxu0 %v670
  %939 = vmatprep.subr.bf16.mxu0 0
  %940 = vmatpush1.bf16.msra.mxu0 %v671
  %941 = vmatprep.subr.bf16.mxu0 0
  %942 = vmatpush1.bf16.msra.mxu0 %v672
  %943 = vmatprep.subr.bf16.mxu0 0
  %944 = vmatpush1.bf16.msra.mxu0 %v673
  %945 = vmatprep.subr.bf16.mxu0 0
  %946 = vmatpush1.bf16.msra.mxu0 %v674
  %947 = vmatprep.subr.bf16.mxu0 0
  %948 = vmatpush1.bf16.msra.mxu0 %v675
  %949 = vmatprep.subr.bf16.mxu0 0
  %950 = vmatpush1.bf16.msra.mxu0 %v676
  %951 = vmatprep.subr.bf16.mxu0 0
  %952 = vmatpush1.bf16.msra.mxu0 %v677
  %953 = vmatprep.subr.bf16.mxu0 0
  %954 = vmatpush1.bf16.msra.mxu0 %v678
  %955 = vmatprep.subr.bf16.mxu0 0
  %956 = vmatpush1.bf16.msra.mxu0 %v679
  %957 = vmatprep.subr.bf16.mxu0 0
  %958 = vmatpush1.bf16.msra.mxu0 %v680
  %959 = vmatprep.subr.bf16.mxu0 0
  %960 = vmatpush1.bf16.msra.mxu0 %v681
  %961 = vmatprep.subr.bf16.mxu0 0
  %962 = vmatpush1.bf16.msra.mxu0 %v682
  %963 = vmatprep.subr.bf16.mxu0 0
  %964 = vmatpush1.bf16.msra.mxu0 %v683
  %965 = vmatprep.subr.bf16.mxu0 0
  %966 = vmatpush1.bf16.msra.mxu0 %v684
  %967 = vmatprep.subr.bf16.mxu0 0
  %968 = vmatpush1.bf16.msra.mxu0 %v685
  %969 = vmatprep.mubr.bf16.mxu0 %v287
  %970 = vmatmul.mubr.bf16.gmra.mrb[0].mxu0 %v286
  %v971 = vpop.f32.mrb[0].mxu0
  %v972 = vadd.f32 %v915, %v971
  %v973 = vpop.f32.mrb[0].mxu0
  %v974 = vpop.f32.mrb[0].mxu0
  %v975 = vadd.f32 %v918, %v974
  %v976 = vpop.f32.mrb[0].mxu0
  %977 = vmatprep.mubr.bf16.mxu0 %v296
  %978 = vmatmul.mubr.bf16.gmra.mrb[0].mxu0 %v295
  %v979 = vpop.f32.mrb[0].mxu0
  %v980 = vadd.f32 %v923, %v979
  %v981 = vpop.f32.mrb[0].mxu0
  %v982 = vpop.f32.mrb[0].mxu0
  %v983 = vadd.f32 %v926, %v982
  %v984 = vpop.f32.mrb[0].mxu0
  %985 = vmatprep.mubr.bf16.mxu0 %v305
  %986 = vmatmul.mubr.bf16.gmra.mrb[0].mxu0 %v304
  %v987 = vpop.f32.mrb[0].mxu0
  %v988 = vadd.f32 %v931, %v987
  %v989 = vpop.f32.mrb[0].mxu0
  %v990 = vpop.f32.mrb[0].mxu0
  %v991 = vadd.f32 %v934, %v990
  %v992 = vpop.f32.mrb[0].mxu0
  %993 = vdwg.mxu0
  %994 = vmatprep.subr.bf16.mxu0 0
  %995 = vmatpush1.bf16.msra.mxu0 %v686
  %996 = vmatprep.subr.bf16.mxu0 0
  %997 = vmatpush1.bf16.msra.mxu0 %v687
  %998 = vmatprep.subr.bf16.mxu0 0
  %999 = vmatpush1.bf16.msra.mxu0 %v688
  %1000 = vmatprep.subr.bf16.mxu0 0
  %1001 = vmatpush1.bf16.msra.mxu0 %v689
  %1002 = vmatprep.subr.bf16.mxu0 0
  %1003 = vmatpush1.bf16.msra.mxu0 %v690
  %1004 = vmatprep.subr.bf16.mxu0 0
  %1005 = vmatpush1.bf16.msra.mxu0 %v691
  %1006 = vmatprep.subr.bf16.mxu0 0
  %1007 = vmatpush1.bf16.msra.mxu0 %v692
  %1008 = vmatprep.subr.bf16.mxu0 0
  %1009 = vmatpush1.bf16.msra.mxu0 %v693
  %1010 = vmatprep.subr.bf16.mxu0 0
  %1011 = vmatpush1.bf16.msra.mxu0 0
  %1012 = vmatprep.subr.bf16.mxu0 0
  %1013 = vmatpush1.bf16.msra.mxu0 0
  %1014 = vmatprep.subr.bf16.mxu0 0
  %1015 = vmatpush1.bf16.msra.mxu0 0
  %1016 = vmatprep.subr.bf16.mxu0 0
  %1017 = vmatpush1.bf16.msra.mxu0 0
  %1018 = vmatprep.subr.bf16.mxu0 0
  %1019 = vmatpush1.bf16.msra.mxu0 0
  %1020 = vmatprep.subr.bf16.mxu0 0
  %1021 = vmatpush1.bf16.msra.mxu0 0
  %1022 = vmatprep.subr.bf16.mxu0 0
  %1023 = vmatpush1.bf16.msra.mxu0 0
  %1024 = vmatprep.subr.bf16.mxu0 0
  %1025 = vmatpush1.bf16.msra.mxu0 0
  %1026 = vmatprep.mubr.bf16.mxu0 0
  %1027 = vmatmul.mubr.bf16.gmra.mrb[0].mxu0 %v288
  %v1028 = vpop.f32.mrb[0].mxu0
  %v1029 = vadd.f32 %v972, %v1028
  %v1030 = vpop.f32.mrb[0].mxu0
  %v1031 = vpop.f32.mrb[0].mxu0
  %v1032 = vadd.f32 %v975, %v1031
  %v1033 = vpop.f32.mrb[0].mxu0
  %1034 = vmatprep.mubr.bf16.mxu0 0
  %1035 = vmatmul.mubr.bf16.gmra.mrb[0].mxu0 %v297
  %v1036 = vpop.f32.mrb[0].mxu0
  %v1037 = vadd.f32 %v980, %v1036
  %v1038 = vpop.f32.mrb[0].mxu0
  %v1039 = vpop.f32.mrb[0].mxu0
  %v1040 = vadd.f32 %v983, %v1039
  %v1041 = vpop.f32.mrb[0].mxu0
  %1042 = vmatprep.mubr.bf16.mxu0 0
  %1043 = vmatmul.mubr.bf16.gmra.mrb[0].mxu0 %v306
  %v1044 = vpop.f32.mrb[0].mxu0
  %v1045 = vadd.f32 %v988, %v1044
  %v1046 = vpop.f32.mrb[0].mxu0
  %v1047 = vpop.f32.mrb[0].mxu0
  %v1048 = vadd.f32 %v991, %v1047
  %v1049 = vpop.f32.mrb[0].mxu0
  %1050 = vdwg.mxu0
  %v1051 = vmax.f32 %v1029, 0.0
  %v1052 = vmax.f32 %v1032, 0.0
  %v1053 = vmax.f32 %v1037, 0.0
  %v1054 = vmax.f32 %v1040, 0.0
  %v1055 = vmax.f32 %v1045, 0.0
  %v1056 = vmax.f32 %v1048, 0.0
  %v1057 = vpack.c.bf16 %v1052, %v1051
  %v1058 = vpack.c.bf16 %v1054, %v1053
  %v1059 = vpack.c.bf16 %v1056, %v1055
  %v1063 = vunpack.c.l.b16 %v1057
  %v1064 = vunpack.c.h.b16 %v1057
  %v1065 = vunpack.c.l.b16 %v1058
  %v1066 = vunpack.c.h.b16 %v1058
  %v1067 = vunpack.c.l.b16 %v1059
  %v1068 = vunpack.c.h.b16 %v1059
  %v1069 = vpack.c.b16 %v1063, %v1063
  %v1070 = vpack.c.b16 %v1064, %v1064
  %v1071 = vpack.c.b16 %v1065, %v1065
  %v1072 = vpack.c.b16 %v1066, %v1066
  %v1073 = vpack.c.b16 %v1067, %v1067
  %v1074 = vpack.c.b16 %v1068, %v1068
  %vm1081 = vcmask 519168
  %1082 = vst.msk [vmem:[%s3] sm:$0xf] %vm1081, %v1069
  %1083 = vst.msk [vmem:[%s3 + $0x4] sm:$0xf] %vm1081, %v1070
  %1084 = vst.msk [vmem:[%s3 + $0x8] sm:$0xf] %vm1081, %v1071
  %1085 = vst.msk [vmem:[%s3 + $0xc] sm:$0xf] %vm1081, %v1072
  %1086 = vst.msk [vmem:[%s3 + $0x10] sm:$0xf] %vm1081, %v1073
  %1087 = vst.msk [vmem:[%s3 + $0x14] sm:$0xf] %vm1081, %v1074
  // Predicated region
  $region14: #{vae_forward.11} parent=0 // pred_check
    _
  $region15: #{vae_forward.11} parent=0 // pred_check_branch
    %1089 = sbr.rel (0) target = $region17
  $region16: #{vae_forward.11} parent=0 // pred_region
    _
  $region17: #{vae_forward.11} parent=0 // pred_fallthru
    _
  // Predicated region
  $region18: #{vae_forward.11} parent=0 // pred_check
    _
  $region19: #{vae_forward.11} parent=0 // pred_check_branch
    %1091 = sbr.rel (0) target = $region21
  $region20: #{vae_forward.11} parent=0 // pred_region
    _
  $region21: #{vae_forward.11} parent=0 // pred_fallthru
    _

// kernel: vae_forward.12
$region0: #{vae_forward.12}
  #allocation0 [shape = 'u32[]', space=smem, size = 0x4, offset = 0x4, fixed_abs, tag = 'smem constant byte address 0x4 - core index']
  #allocation1 [shape = 'u32[144,128]{1,0:T(1,128)}', space=vmem, size = 0x12000, scoped, tag = 'internal scratch']
  %s0 = inlined_call_operand.vmem [shape: bf16[192,576], index: 0, kind: input, shape index: {}]
  %s1 = inlined_call_operand.vmem [shape: bf16[576,32], index: 1, kind: input, shape index: {}]
  %s2 = inlined_call_operand.vmem [shape: f32[1,32], index: 2, kind: input, shape index: {}]
  %s3 = inlined_call_operand.vmem [shape: bf16[192,32], index: 3, kind: output, shape index: {}]
  %s4 = sld [smem:[#allocation0]]
  $region22: #{vae_forward.12} parent=0
    _
  %s6 = ssub.s32 1, %s4
  %s7 = scalar_select 0, %s6, %s4
  // Predicated region
  $region2: #{vae_forward.12} parent=0 // pred_check
    _
  $region3: #{vae_forward.12} parent=0 // pred_check_branch
    %9 = sbr.rel (0) target = $region5
  $region4: #{vae_forward.12} parent=0 // pred_region
    _
  $region5: #{vae_forward.12} parent=0 // pred_fallthru
    _
  // Predicated region
  $region6: #{vae_forward.12} parent=0 // pred_check
    _
  $region7: #{vae_forward.12} parent=0 // pred_check_branch
    %11 = sbr.rel (0) target = $region9
  $region8: #{vae_forward.12} parent=0 // pred_region
    _
  $region9: #{vae_forward.12} parent=0 // pred_fallthru
    _
  // Predicated region
  $region10: #{vae_forward.12} parent=0 // pred_check
    _
  $region11: #{vae_forward.12} parent=0 // pred_check_branch
    %13 = sbr.rel (0) target = $region13
  $region12: #{vae_forward.12} parent=0 // pred_region
    _
  $region13: #{vae_forward.12} parent=0 // pred_fallthru
    _
  %v15 = vld [vmem:[%s0] sm:$0xff]
  %v16 = vld [vmem:[%s0 + $0x8] sm:$0xff]
  %v17 = vld [vmem:[%s0 + $0x10] sm:$0xf]
  %v18 = vld [vmem:[%s0 + $0x14] sm:$0xff]
  %v19 = vld [vmem:[%s0 + $0x1c] sm:$0xff]
  %v20 = vld [vmem:[%s0 + $0x24] sm:$0xf]
  %v21 = vld [vmem:[%s0 + $0x28] sm:$0xff]
  %v22 = vld [vmem:[%s0 + $0x30] sm:$0xff]
  %v23 = vld [vmem:[%s0 + $0x38] sm:$0xf]
  %v24 = vld [vmem:[%s0 + $0x3c] sm:$0xff]
  %v25 = vld [vmem:[%s0 + $0x44] sm:$0xff]
  %v26 = vld [vmem:[%s0 + $0x4c] sm:$0xf]
  %v27 = vld [vmem:[%s0 + $0x50] sm:$0xff]
  %v28 = vld [vmem:[%s0 + $0x58] sm:$0xff]
  %v29 = vld [vmem:[%s0 + $0x60] sm:$0xf]
  %v30 = vld [vmem:[%s0 + $0x64] sm:$0xff]
  %v31 = vld [vmem:[%s0 + $0x6c] sm:$0xff]
  %v32 = vld [vmem:[%s0 + $0x74] sm:$0xf]
  %v33 = vld [vmem:[%s0 + $0x78] sm:$0xff]
  %v34 = vld [vmem:[%s0 + $0x80] sm:$0xff]
  %v35 = vld [vmem:[%s0 + $0x88] sm:$0xf]
  %v36 = vld [vmem:[%s0 + $0x8c] sm:$0xff]
  %v37 = vld [vmem:[%s0 + $0x94] sm:$0xff]
  %v38 = vld [vmem:[%s0 + $0x9c] sm:$0xf]
  %v39 = vld [vmem:[%s0 + $0xa0] sm:$0xff]
  %v40 = vld [vmem:[%s0 + $0xa8] sm:$0xff]
  %v41 = vld [vmem:[%s0 + $0xb0] sm:$0xf]
  %v42 = vld [vmem:[%s0 + $0xb4] sm:$0xff]
  %v43 = vld [vmem:[%s0 + $0xbc] sm:$0xff]
  %v44 = vld [vmem:[%s0 + $0xc4] sm:$0xf]
  %v45 = vld [vmem:[%s0 + $0xc8] sm:$0xff]
  %v46 = vld [vmem:[%s0 + $0xd0] sm:$0xff]
  %v47 = vld [vmem:[%s0 + $0xd8] sm:$0xf]
  %v48 = vld [vmem:[%s0 + $0xdc] sm:$0xff]
  %v49 = vld [vmem:[%s0 + $0xe4] sm:$0xff]
  %v50 = vld [vmem:[%s0 + $0xec] sm:$0xf]
  %v51 = vld [vmem:[%s0 + $0xf0] sm:$0xff]
  %v52 = vld [vmem:[%s0 + $0xf8] sm:$0xff]
  %v53 = vld [vmem:[%s0 + $0x100] sm:$0xf]
  %v54 = vld [vmem:[%s0 + $0x104] sm:$0xff]
  %v55 = vld [vmem:[%s0 + $0x10c] sm:$0xff]
  %v56 = vld [vmem:[%s0 + $0x114] sm:$0xf]
  %v57 = vld [vmem:[%s0 + $0x118] sm:$0xff]
  %v58 = vld [vmem:[%s0 + $0x120] sm:$0xff]
  %v59 = vld [vmem:[%s0 + $0x128] sm:$0xf]
  %v60 = vld [vmem:[%s0 + $0x12c] sm:$0xff]
  %v61 = vld [vmem:[%s0 + $0x134] sm:$0xff]
  %v62 = vld [vmem:[%s0 + $0x13c] sm:$0xf]
  %v63 = vld [vmem:[%s0 + $0x140] sm:$0xff]
  %v64 = vld [vmem:[%s0 + $0x148] sm:$0xff]
  %v65 = vld [vmem:[%s0 + $0x150] sm:$0xf]
  %v66 = vld [vmem:[%s0 + $0x154] sm:$0xff]
  %v67 = vld [vmem:[%s0 + $0x15c] sm:$0xff]
  %v68 = vld [vmem:[%s0 + $0x164] sm:$0xf]
  %v69 = vld [vmem:[%s0 + $0x168] sm:$0xff]
  %v70 = vld [vmem:[%s0 + $0x170] sm:$0xff]
  %v71 = vld [vmem:[%s0 + $0x178] sm:$0xf]
  %v72 = vld [vmem:[%s0 + $0x17c] sm:$0xff]
  %v73 = vld [vmem:[%s0 + $0x184] sm:$0xff]
  %v74 = vld [vmem:[%s0 + $0x18c] sm:$0xf]
  %v75 = vld [vmem:[%s0 + $0x190] sm:$0xff]
  %v76 = vld [vmem:[%s0 + $0x198] sm:$0xff]
  %v77 = vld [vmem:[%s0 + $0x1a0] sm:$0xf]
  %v78 = vld [vmem:[%s0 + $0x1a4] sm:$0xff]
  %v79 = vld [vmem:[%s0 + $0x1ac] sm:$0xff]
  %v80 = vld [vmem:[%s0 + $0x1b4] sm:$0xf]
  %v81 = vld [vmem:[%s0 + $0x1b8] sm:$0xff]
  %v82 = vld [vmem:[%s0 + $0x1c0] sm:$0xff]
  %v83 = vld [vmem:[%s0 + $0x1c8] sm:$0xf]
  %v84 = vld [vmem:[%s0 + $0x1cc] sm:$0xff]
  %v85 = vld [vmem:[%s0 + $0x1d4] sm:$0xff]
  %v86 = vld [vmem:[%s0 + $0x1dc] sm:$0xf]
  %v87 = vld [vmem:[%s1] sm:$0xf]
  %v88 = vld [vmem:[%s1 + $0x4] sm:$0xf]
  %v89 = vld [vmem:[%s1 + $0x8] sm:$0xf]
  %v90 = vld [vmem:[%s1 + $0xc] sm:$0xf]
  %v91 = vld [vmem:[%s1 + $0x10] sm:$0xf]
  %v92 = vld [vmem:[%s1 + $0x14] sm:$0xf]
  %v93 = vld [vmem:[%s1 + $0x18] sm:$0xf]
  %v94 = vld [vmem:[%s1 + $0x1c] sm:$0xf]
  %v95 = vld [vmem:[%s1 + $0x20] sm:$0xf]
  %v96 = vld [vmem:[%s1 + $0x24] sm:$0xf]
  %v97 = vld [vmem:[%s1 + $0x28] sm:$0xf]
  %v98 = vld [vmem:[%s1 + $0x2c] sm:$0xf]
  %v99 = vld [vmem:[%s1 + $0x30] sm:$0xf]
  %v100 = vld [vmem:[%s1 + $0x34] sm:$0xf]
  %v101 = vld [vmem:[%s1 + $0x38] sm:$0xf]
  %v102 = vld [vmem:[%s1 + $0x3c] sm:$0xf]
  %v103 = vld [vmem:[%s1 + $0x40] sm:$0xf]
  %v104 = vld [vmem:[%s1 + $0x44] sm:$0xf]
  %v105 = vld [vmem:[%s1 + $0x48] sm:$0xf]
  %v106 = vld [vmem:[%s1 + $0x4c] sm:$0xf]
  %v107 = vld [vmem:[%s1 + $0x50] sm:$0xf]
  %v108 = vld [vmem:[%s1 + $0x54] sm:$0xf]
  %v109 = vld [vmem:[%s1 + $0x58] sm:$0xf]
  %v110 = vld [vmem:[%s1 + $0x5c] sm:$0xf]
  %v111 = vld [vmem:[%s1 + $0x60] sm:$0xf]
  %v112 = vld [vmem:[%s1 + $0x64] sm:$0xf]
  %v113 = vld [vmem:[%s1 + $0x68] sm:$0xf]
  %v114 = vld [vmem:[%s1 + $0x6c] sm:$0xf]
  %v115 = vld [vmem:[%s1 + $0x70] sm:$0xf]
  %v116 = vld [vmem:[%s1 + $0x74] sm:$0xf]
  %v117 = vld [vmem:[%s1 + $0x78] sm:$0xf]
  %v118 = vld [vmem:[%s1 + $0x7c] sm:$0xf]
  %v119 = vld [vmem:[%s1 + $0x80] sm:$0xf]
  %v120 = vld [vmem:[%s1 + $0x84] sm:$0xf]
  %v121 = vld [vmem:[%s1 + $0x88] sm:$0xf]
  %v122 = vld [vmem:[%s1 + $0x8c] sm:$0xf]
  %v123 = vld [vmem:[%s1 + $0x90] sm:$0xf]
  %v124 = vld [vmem:[%s1 + $0x94] sm:$0xf]
  %v125 = vld [vmem:[%s1 + $0x98] sm:$0xf]
  %v126 = vld [vmem:[%s1 + $0x9c] sm:$0xf]
  %v127 = vld [vmem:[%s1 + $0xa0] sm:$0xf]
  %v128 = vld [vmem:[%s1 + $0xa4] sm:$0xf]
  %v129 = vld [vmem:[%s1 + $0xa8] sm:$0xf]
  %v130 = vld [vmem:[%s1 + $0xac] sm:$0xf]
  %v131 = vld [vmem:[%s1 + $0xb0] sm:$0xf]
  %v132 = vld [vmem:[%s1 + $0xb4] sm:$0xf]
  %v133 = vld [vmem:[%s1 + $0xb8] sm:$0xf]
  %v134 = vld [vmem:[%s1 + $0xbc] sm:$0xf]
  %v135 = vld [vmem:[%s1 + $0xc0] sm:$0xf]
  %v136 = vld [vmem:[%s1 + $0xc4] sm:$0xf]
  %v137 = vld [vmem:[%s1 + $0xc8] sm:$0xf]
  %v138 = vld [vmem:[%s1 + $0xcc] sm:$0xf]
  %v139 = vld [vmem:[%s1 + $0xd0] sm:$0xf]
  %v140 = vld [vmem:[%s1 + $0xd4] sm:$0xf]
  %v141 = vld [vmem:[%s1 + $0xd8] sm:$0xf]
  %v142 = vld [vmem:[%s1 + $0xdc] sm:$0xf]
  %v143 = vld [vmem:[%s1 + $0xe0] sm:$0xf]
  %v144 = vld [vmem:[%s1 + $0xe4] sm:$0xf]
  %v145 = vld [vmem:[%s1 + $0xe8] sm:$0xf]
  %v146 = vld [vmem:[%s1 + $0xec] sm:$0xf]
  %v147 = vld [vmem:[%s1 + $0xf0] sm:$0xf]
  %v148 = vld [vmem:[%s1 + $0xf4] sm:$0xf]
  %v149 = vld [vmem:[%s1 + $0xf8] sm:$0xf]
  %v150 = vld [vmem:[%s1 + $0xfc] sm:$0xf]
  %v151 = vld [vmem:[%s1 + $0x100] sm:$0xf]
  %v152 = vld [vmem:[%s1 + $0x104] sm:$0xf]
  %v153 = vld [vmem:[%s1 + $0x108] sm:$0xf]
  %v154 = vld [vmem:[%s1 + $0x10c] sm:$0xf]
  %v155 = vld [vmem:[%s1 + $0x110] sm:$0xf]
  %v156 = vld [vmem:[%s1 + $0x114] sm:$0xf]
  %v157 = vld [vmem:[%s1 + $0x118] sm:$0xf]
  %v158 = vld [vmem:[%s1 + $0x11c] sm:$0xf]
  %v159 = vld [vmem:[%s2] sm:$0x1]
  %v161 = vlaneseq
  %v162 = vshrl.u32 %v161, 7
  %v163 = vsub.s32 0, %v162
  %v164 = vrot.slane %v159, %v163
  %v238 = vunpack.c.l.b16 %v15
  %v239 = vunpack.c.h.b16 %v15
  %v240 = vunpack.c.l.b16 %v16
  %v241 = vunpack.c.h.b16 %v16
  %v242 = vunpack.c.l.b16 %v17
  %v243 = vunpack.c.l.b16 %v18
  %v244 = vunpack.c.h.b16 %v18
  %v245 = vunpack.c.l.b16 %v19
  %v246 = vunpack.c.h.b16 %v19
  %v247 = vunpack.c.l.b16 %v20
  %v248 = vunpack.c.l.b16 %v21
  %v249 = vunpack.c.h.b16 %v21
  %v250 = vunpack.c.l.b16 %v22
  %v251 = vunpack.c.h.b16 %v22
  %v252 = vunpack.c.l.b16 %v23
  %v253 = vunpack.c.l.b16 %v24
  %v254 = vunpack.c.h.b16 %v24
  %v255 = vunpack.c.l.b16 %v25
  %v256 = vunpack.c.h.b16 %v25
  %v257 = vunpack.c.l.b16 %v26
  %v258 = vunpack.c.l.b16 %v27
  %v259 = vunpack.c.h.b16 %v27
  %v260 = vunpack.c.l.b16 %v28
  %v261 = vunpack.c.h.b16 %v28
  %v262 = vunpack.c.l.b16 %v29
  %v263 = vunpack.c.l.b16 %v30
  %v264 = vunpack.c.h.b16 %v30
  %v265 = vunpack.c.l.b16 %v31
  %v266 = vunpack.c.h.b16 %v31
  %v267 = vunpack.c.l.b16 %v32
  %v268 = vunpack.c.l.b16 %v33
  %v269 = vunpack.c.h.b16 %v33
  %v270 = vunpack.c.l.b16 %v34
  %v271 = vunpack.c.h.b16 %v34
  %v272 = vunpack.c.l.b16 %v35
  %v273 = vunpack.c.l.b16 %v36
  %v274 = vunpack.c.h.b16 %v36
  %v275 = vunpack.c.l.b16 %v37
  %v276 = vunpack.c.h.b16 %v37
  %v277 = vunpack.c.l.b16 %v38
  %v278 = vunpack.c.l.b16 %v39
  %v279 = vunpack.c.h.b16 %v39
  %v280 = vunpack.c.l.b16 %v40
  %v281 = vunpack.c.h.b16 %v40
  %v282 = vunpack.c.l.b16 %v41
  %v283 = vunpack.c.l.b16 %v42
  %v284 = vunpack.c.h.b16 %v42
  %v285 = vunpack.c.l.b16 %v43
  %v286 = vunpack.c.h.b16 %v43
  %v287 = vunpack.c.l.b16 %v44
  %v288 = vunpack.c.l.b16 %v45
  %v289 = vunpack.c.h.b16 %v45
  %v290 = vunpack.c.l.b16 %v46
  %v291 = vunpack.c.h.b16 %v46
  %v292 = vunpack.c.l.b16 %v47
  %v293 = vunpack.c.l.b16 %v48
  %v294 = vunpack.c.h.b16 %v48
  %v295 = vunpack.c.l.b16 %v49
  %v296 = vunpack.c.h.b16 %v49
  %v297 = vunpack.c.l.b16 %v50
  %v298 = vunpack.c.l.b16 %v51
  %v299 = vunpack.c.h.b16 %v51
  %v300 = vunpack.c.l.b16 %v52
  %v301 = vunpack.c.h.b16 %v52
  %v302 = vunpack.c.l.b16 %v53
  %v303 = vunpack.c.l.b16 %v54
  %v304 = vunpack.c.h.b16 %v54
  %v305 = vunpack.c.l.b16 %v55
  %v306 = vunpack.c.h.b16 %v55
  %v307 = vunpack.c.l.b16 %v56
  %v308 = vunpack.c.l.b16 %v57
  %v309 = vunpack.c.h.b16 %v57
  %v310 = vunpack.c.l.b16 %v58
  %v311 = vunpack.c.h.b16 %v58
  %v312 = vunpack.c.l.b16 %v59
  %v313 = vunpack.c.l.b16 %v60
  %v314 = vunpack.c.h.b16 %v60
  %v315 = vunpack.c.l.b16 %v61
  %v316 = vunpack.c.h.b16 %v61
  %v317 = vunpack.c.l.b16 %v62
  %v318 = vunpack.c.l.b16 %v63
  %v319 = vunpack.c.h.b16 %v63
  %v320 = vunpack.c.l.b16 %v64
  %v321 = vunpack.c.h.b16 %v64
  %v322 = vunpack.c.l.b16 %v65
  %v323 = vunpack.c.l.b16 %v66
  %v324 = vunpack.c.h.b16 %v66
  %v325 = vunpack.c.l.b16 %v67
  %v326 = vunpack.c.h.b16 %v67
  %v327 = vunpack.c.l.b16 %v68
  %v328 = vunpack.c.l.b16 %v69
  %v329 = vunpack.c.h.b16 %v69
  %v330 = vunpack.c.l.b16 %v70
  %v331 = vunpack.c.h.b16 %v70
  %v332 = vunpack.c.l.b16 %v71
  %v333 = vunpack.c.l.b16 %v72
  %v334 = vunpack.c.h.b16 %v72
  %v335 = vunpack.c.l.b16 %v73
  %v336 = vunpack.c.h.b16 %v73
  %v337 = vunpack.c.l.b16 %v74
  %v338 = vunpack.c.l.b16 %v75
  %v339 = vunpack.c.h.b16 %v75
  %v340 = vunpack.c.l.b16 %v76
  %v341 = vunpack.c.h.b16 %v76
  %v342 = vunpack.c.l.b16 %v77
  %v343 = vunpack.c.l.b16 %v78
  %v344 = vunpack.c.h.b16 %v78
  %v345 = vunpack.c.l.b16 %v79
  %v346 = vunpack.c.h.b16 %v79
  %v347 = vunpack.c.l.b16 %v80
  %v348 = vunpack.c.l.b16 %v81
  %v349 = vunpack.c.h.b16 %v81
  %v350 = vunpack.c.l.b16 %v82
  %v351 = vunpack.c.h.b16 %v82
  %v352 = vunpack.c.l.b16 %v83
  %v353 = vunpack.c.l.b16 %v84
  %v354 = vunpack.c.h.b16 %v84
  %v355 = vunpack.c.l.b16 %v85
  %v356 = vunpack.c.h.b16 %v85
  %v357 = vunpack.c.l.b16 %v86
  %v358 = vpack.c.b16 %v243, %v238
  %v359 = vpack.c.b16 %v244, %v239
  %v360 = vpack.c.b16 %v245, %v240
  %v361 = vpack.c.b16 %v246, %v241
  %v362 = vpack.c.b16 %v247, %v242
  %v363 = vpack.c.b16 %v253, %v248
  %v364 = vpack.c.b16 %v254, %v249
  %v365 = vpack.c.b16 %v255, %v250
  %v366 = vpack.c.b16 %v256, %v251
  %v367 = vpack.c.b16 %v257, %v252
  %v368 = vpack.c.b16 %v263, %v258
  %v369 = vpack.c.b16 %v264, %v259
  %v370 = vpack.c.b16 %v265, %v260
  %v371 = vpack.c.b16 %v266, %v261
  %v372 = vpack.c.b16 %v267, %v262
  %v373 = vpack.c.b16 %v273, %v268
  %v374 = vpack.c.b16 %v274, %v269
  %v375 = vpack.c.b16 %v275, %v270
  %v376 = vpack.c.b16 %v276, %v271
  %v377 = vpack.c.b16 %v277, %v272
  %v378 = vpack.c.b16 %v283, %v278
  %v379 = vpack.c.b16 %v284, %v279
  %v380 = vpack.c.b16 %v285, %v280
  %v381 = vpack.c.b16 %v286, %v281
  %v382 = vpack.c.b16 %v287, %v282
  %v383 = vpack.c.b16 %v293, %v288
  %v384 = vpack.c.b16 %v294, %v289
  %v385 = vpack.c.b16 %v295, %v290
  %v386 = vpack.c.b16 %v296, %v291
  %v387 = vpack.c.b16 %v297, %v292
  %v388 = vpack.c.b16 %v303, %v298
  %v389 = vpack.c.b16 %v304, %v299
  %v390 = vpack.c.b16 %v305, %v300
  %v391 = vpack.c.b16 %v306, %v301
  %v392 = vpack.c.b16 %v307, %v302
  %v393 = vpack.c.b16 %v313, %v308
  %v394 = vpack.c.b16 %v314, %v309
  %v395 = vpack.c.b16 %v315, %v310
  %v396 = vpack.c.b16 %v316, %v311
  %v397 = vpack.c.b16 %v317, %v312
  %v398 = vpack.c.b16 %v323, %v318
  %v399 = vpack.c.b16 %v324, %v319
  %v400 = vpack.c.b16 %v325, %v320
  %v401 = vpack.c.b16 %v326, %v321
  %v402 = vpack.c.b16 %v327, %v322
  %v403 = vpack.c.b16 %v333, %v328
  %v404 = vpack.c.b16 %v334, %v329
  %v405 = vpack.c.b16 %v335, %v330
  %v406 = vpack.c.b16 %v336, %v331
  %v407 = vpack.c.b16 %v337, %v332
  %v408 = vpack.c.b16 %v343, %v338
  %v409 = vpack.c.b16 %v344, %v339
  %v410 = vpack.c.b16 %v345, %v340
  %v411 = vpack.c.b16 %v346, %v341
  %v412 = vpack.c.b16 %v347, %v342
  %v413 = vpack.c.b16 %v353, %v348
  %v414 = vpack.c.b16 %v354, %v349
  %v415 = vpack.c.b16 %v355, %v350
  %v416 = vpack.c.b16 %v356, %v351
  %v417 = vpack.c.b16 %v357, %v352
  %v538 = vunpack.c.l.b16 %v87
  %v539 = vunpack.c.l.b16 %v88
  %v540 = vunpack.c.l.b16 %v89
  %v541 = vunpack.c.l.b16 %v90
  %v542 = vunpack.c.l.b16 %v91
  %v543 = vunpack.c.l.b16 %v92
  %v544 = vunpack.c.l.b16 %v93
  %v545 = vunpack.c.l.b16 %v94
  %v546 = vunpack.c.l.b16 %v95
  %v547 = vunpack.c.l.b16 %v96
  %v548 = vunpack.c.l.b16 %v97
  %v549 = vunpack.c.l.b16 %v98
  %v550 = vunpack.c.l.b16 %v99
  %v551 = vunpack.c.l.b16 %v100
  %v552 = vunpack.c.l.b16 %v101
  %v553 = vunpack.c.l.b16 %v102
  %v554 = vunpack.c.l.b16 %v103
  %v555 = vunpack.c.l.b16 %v104
  %v556 = vunpack.c.l.b16 %v105
  %v557 = vunpack.c.l.b16 %v106
  %v558 = vunpack.c.l.b16 %v107
  %v559 = vunpack.c.l.b16 %v108
  %v560 = vunpack.c.l.b16 %v109
  %v561 = vunpack.c.l.b16 %v110
  %v562 = vunpack.c.l.b16 %v111
  %v563 = vunpack.c.l.b16 %v112
  %v564 = vunpack.c.l.b16 %v113
  %v565 = vunpack.c.l.b16 %v114
  %v566 = vunpack.c.l.b16 %v115
  %v567 = vunpack.c.l.b16 %v116
  %v568 = vunpack.c.l.b16 %v117
  %v569 = vunpack.c.l.b16 %v118
  %v570 = vunpack.c.l.b16 %v119
  %v571 = vunpack.c.l.b16 %v120
  %v572 = vunpack.c.l.b16 %v121
  %v573 = vunpack.c.l.b16 %v122
  %v574 = vunpack.c.l.b16 %v123
  %v575 = vunpack.c.l.b16 %v124
  %v576 = vunpack.c.l.b16 %v125
  %v577 = vunpack.c.l.b16 %v126
  %v578 = vunpack.c.l.b16 %v127
  %v579 = vunpack.c.l.b16 %v128
  %v580 = vunpack.c.l.b16 %v129
  %v581 = vunpack.c.l.b16 %v130
  %v582 = vunpack.c.l.b16 %v131
  %v583 = vunpack.c.l.b16 %v132
  %v584 = vunpack.c.l.b16 %v133
  %v585 = vunpack.c.l.b16 %v134
  %v586 = vunpack.c.l.b16 %v135
  %v587 = vunpack.c.l.b16 %v136
  %v588 = vunpack.c.l.b16 %v137
  %v589 = vunpack.c.l.b16 %v138
  %v590 = vunpack.c.l.b16 %v139
  %v591 = vunpack.c.l.b16 %v140
  %v592 = vunpack.c.l.b16 %v141
  %v593 = vunpack.c.l.b16 %v142
  %v594 = vunpack.c.l.b16 %v143
  %v595 = vunpack.c.l.b16 %v144
  %v596 = vunpack.c.l.b16 %v145
  %v597 = vunpack.c.l.b16 %v146
  %v598 = vunpack.c.l.b16 %v147
  %v599 = vunpack.c.l.b16 %v148
  %v600 = vunpack.c.l.b16 %v149
  %v601 = vunpack.c.l.b16 %v150
  %v602 = vunpack.c.l.b16 %v151
  %v603 = vunpack.c.l.b16 %v152
  %v604 = vunpack.c.l.b16 %v153
  %v605 = vunpack.c.l.b16 %v154
  %v606 = vunpack.c.l.b16 %v155
  %v607 = vunpack.c.l.b16 %v156
  %v608 = vunpack.c.l.b16 %v157
  %v609 = vunpack.c.l.b16 %v158
  %v610 = vpack.c.b16 %v539, %v538
  %v611 = vpack.c.b16 %v541, %v540
  %v612 = vpack.c.b16 %v543, %v542
  %v613 = vpack.c.b16 %v545, %v544
  %v614 = vpack.c.b16 %v547, %v546
  %v615 = vpack.c.b16 %v549, %v548
  %v616 = vpack.c.b16 %v551, %v550
  %v617 = vpack.c.b16 %v553, %v552
  %v618 = vpack.c.b16 %v555, %v554
  %v619 = vpack.c.b16 %v557, %v556
  %v620 = vpack.c.b16 %v559, %v558
  %v621 = vpack.c.b16 %v561, %v560
  %v622 = vpack.c.b16 %v563, %v562
  %v623 = vpack.c.b16 %v565, %v564
  %v624 = vpack.c.b16 %v567, %v566
  %v625 = vpack.c.b16 %v569, %v568
  %v626 = vpack.c.b16 %v571, %v570
  %v627 = vpack.c.b16 %v573, %v572
  %v628 = vpack.c.b16 %v575, %v574
  %v629 = vpack.c.b16 %v577, %v576
  %v630 = vpack.c.b16 %v579, %v578
  %v631 = vpack.c.b16 %v581, %v580
  %v632 = vpack.c.b16 %v583, %v582
  %v633 = vpack.c.b16 %v585, %v584
  %v634 = vpack.c.b16 %v587, %v586
  %v635 = vpack.c.b16 %v589, %v588
  %v636 = vpack.c.b16 %v591, %v590
  %v637 = vpack.c.b16 %v593, %v592
  %v638 = vpack.c.b16 %v595, %v594
  %v639 = vpack.c.b16 %v597, %v596
  %v640 = vpack.c.b16 %v599, %v598
  %v641 = vpack.c.b16 %v601, %v600
  %v642 = vpack.c.b16 %v603, %v602
  %v643 = vpack.c.b16 %v605, %v604
  %v644 = vpack.c.b16 %v607, %v606
  %v645 = vpack.c.b16 %v609, %v608
  %vm682 = vcmask 523264
  %v684 = vsel %vm682, %v362, 0
  %v687 = vsel %vm682, %v367, 0
  %v690 = vsel %vm682, %v372, 0
  %v693 = vsel %vm682, %v377, 0
  %v696 = vsel %vm682, %v382, 0
  %v699 = vsel %vm682, %v387, 0
  %v702 = vsel %vm682, %v392, 0
  %v705 = vsel %vm682, %v397, 0
  %v708 = vsel %vm682, %v402, 0
  %v711 = vsel %vm682, %v407, 0
  %v714 = vsel %vm682, %v412, 0
  %v717 = vsel %vm682, %v417, 0
  %719 = vmatprep.subr.bf16.mxu0 0
  %720 = vmatpush1.bf16.msra.mxu0 %v610
  %721 = vmatprep.subr.bf16.mxu0 0
  %722 = vmatpush1.bf16.msra.mxu0 %v611
  %723 = vmatprep.subr.bf16.mxu0 0
  %724 = vmatpush1.bf16.msra.mxu0 %v612
  %725 = vmatprep.subr.bf16.mxu0 0
  %726 = vmatpush1.bf16.msra.mxu0 %v613
  %727 = vmatprep.subr.bf16.mxu0 0
  %728 = vmatpush1.bf16.msra.mxu0 %v614
  %729 = vmatprep.subr.bf16.mxu0 0
  %730 = vmatpush1.bf16.msra.mxu0 %v615
  %731 = vmatprep.subr.bf16.mxu0 0
  %732 = vmatpush1.bf16.msra.mxu0 %v616
  %733 = vmatprep.subr.bf16.mxu0 0
  %734 = vmatpush1.bf16.msra.mxu0 %v617
  %735 = vmatprep.subr.bf16.mxu0 0
  %736 = vmatpush1.bf16.msra.mxu0 %v618
  %737 = vmatprep.subr.bf16.mxu0 0
  %738 = vmatpush1.bf16.msra.mxu0 %v619
  %739 = vmatprep.subr.bf16.mxu0 0
  %740 = vmatpush1.bf16.msra.mxu0 %v620
  %741 = vmatprep.subr.bf16.mxu0 0
  %742 = vmatpush1.bf16.msra.mxu0 %v621
  %743 = vmatprep.subr.bf16.mxu0 0
  %744 = vmatpush1.bf16.msra.mxu0 %v622
  %745 = vmatprep.subr.bf16.mxu0 0
  %746 = vmatpush1.bf16.msra.mxu0 %v623
  %747 = vmatprep.subr.bf16.mxu0 0
  %748 = vmatpush1.bf16.msra.mxu0 %v624
  %749 = vmatprep.subr.bf16.mxu0 0
  %750 = vmatpush1.bf16.msra.mxu0 %v625
  %751 = vmatprep.mubr.bf16.mxu0 %v359
  %752 = vmatmul.mubr.bf16.gmra.mrb[0].mxu0 %v358
  %v753 = vpop.f32.mrb[0].mxu0
  %v754 = vadd.f32 %v164, %v753
  %v755 = vpop.f32.mrb[0].mxu0
  %v756 = vpop.f32.mrb[0].mxu0
  %v757 = vadd.f32 %v164, %v756
  %v758 = vpop.f32.mrb[0].mxu0
  %759 = vmatprep.mubr.bf16.mxu0 %v364
  %760 = vmatmul.mubr.bf16.gmra.mrb[0].mxu0 %v363
  %v761 = vpop.f32.mrb[0].mxu0
  %v762 = vadd.f32 %v164, %v761
  %v763 = vpop.f32.mrb[0].mxu0
  %v764 = vpop.f32.mrb[0].mxu0
  %v765 = vadd.f32 %v164, %v764
  %v766 = vpop.f32.mrb[0].mxu0
  %767 = vmatprep.mubr.bf16.mxu0 %v369
  %768 = vmatmul.mubr.bf16.gmra.mrb[0].mxu0 %v368
  %v769 = vpop.f32.mrb[0].mxu0
  %v770 = vadd.f32 %v164, %v769
  %v771 = vpop.f32.mrb[0].mxu0
  %v772 = vpop.f32.mrb[0].mxu0
  %v773 = vadd.f32 %v164, %v772
  %v774 = vpop.f32.mrb[0].mxu0
  %775 = vmatprep.mubr.bf16.mxu0 %v374
  %776 = vmatmul.mubr.bf16.gmra.mrb[0].mxu0 %v373
  %v777 = vpop.f32.mrb[0].mxu0
  %v778 = vadd.f32 %v164, %v777
  %v779 = vpop.f32.mrb[0].mxu0
  %v780 = vpop.f32.mrb[0].mxu0
  %v781 = vadd.f32 %v164, %v780
  %v782 = vpop.f32.mrb[0].mxu0
  %783 = vmatprep.mubr.bf16.mxu0 %v379
  %784 = vmatmul.mubr.bf16.gmra.mrb[0].mxu0 %v378
  %v785 = vpop.f32.mrb[0].mxu0
  %v786 = vadd.f32 %v164, %v785
  %v787 = vpop.f32.mrb[0].mxu0
  %v788 = vpop.f32.mrb[0].mxu0
  %v789 = vadd.f32 %v164, %v788
  %v790 = vpop.f32.mrb[0].mxu0
  %791 = vmatprep.mubr.bf16.mxu0 %v384
  %792 = vmatmul.mubr.bf16.gmra.mrb[0].mxu0 %v383
  %v793 = vpop.f32.mrb[0].mxu0
  %v794 = vadd.f32 %v164, %v793
  %v795 = vpop.f32.mrb[0].mxu0
  %v796 = vpop.f32.mrb[0].mxu0
  %v797 = vadd.f32 %v164, %v796
  %v798 = vpop.f32.mrb[0].mxu0
  %799 = vmatprep.mubr.bf16.mxu0 %v389
  %800 = vmatmul.mubr.bf16.gmra.mrb[0].mxu0 %v388
  %v801 = vpop.f32.mrb[0].mxu0
  %v802 = vadd.f32 %v164, %v801
  %v803 = vpop.f32.mrb[0].mxu0
  %v804 = vpop.f32.mrb[0].mxu0
  %v805 = vadd.f32 %v164, %v804
  %v806 = vpop.f32.mrb[0].mxu0
  %807 = vmatprep.mubr.bf16.mxu0 %v394
  %808 = vmatmul.mubr.bf16.gmra.mrb[0].mxu0 %v393
  %v809 = vpop.f32.mrb[0].mxu0
  %v810 = vadd.f32 %v164, %v809
  %v811 = vpop.f32.mrb[0].mxu0
  %v812 = vpop.f32.mrb[0].mxu0
  %v813 = vadd.f32 %v164, %v812
  %v814 = vpop.f32.mrb[0].mxu0
  %815 = vmatprep.mubr.bf16.mxu0 %v399
  %816 = vmatmul.mubr.bf16.gmra.mrb[0].mxu0 %v398
  %v817 = vpop.f32.mrb[0].mxu0
  %v818 = vadd.f32 %v164, %v817
  %v819 = vpop.f32.mrb[0].mxu0
  %v820 = vpop.f32.mrb[0].mxu0
  %v821 = vadd.f32 %v164, %v820
  %v822 = vpop.f32.mrb[0].mxu0
  %823 = vmatprep.mubr.bf16.mxu0 %v404
  %824 = vmatmul.mubr.bf16.gmra.mrb[0].mxu0 %v403
  %v825 = vpop.f32.mrb[0].mxu0
  %v826 = vadd.f32 %v164, %v825
  %v827 = vpop.f32.mrb[0].mxu0
  %v828 = vpop.f32.mrb[0].mxu0
  %v829 = vadd.f32 %v164, %v828
  %v830 = vpop.f32.mrb[0].mxu0
  %831 = vmatprep.mubr.bf16.mxu0 %v409
  %832 = vmatmul.mubr.bf16.gmra.mrb[0].mxu0 %v408
  %v833 = vpop.f32.mrb[0].mxu0
  %v834 = vadd.f32 %v164, %v833
  %v835 = vpop.f32.mrb[0].mxu0
  %v836 = vpop.f32.mrb[0].mxu0
  %v837 = vadd.f32 %v164, %v836
  %v838 = vpop.f32.mrb[0].mxu0
  %839 = vmatprep.mubr.bf16.mxu0 %v414
  %840 = vmatmul.mubr.bf16.gmra.mrb[0].mxu0 %v413
  %v841 = vpop.f32.mrb[0].mxu0
  %v842 = vadd.f32 %v164, %v841
  %v843 = vpop.f32.mrb[0].mxu0
  %v844 = vpop.f32.mrb[0].mxu0
  %v845 = vadd.f32 %v164, %v844
  %v846 = vpop.f32.mrb[0].mxu0
  %847 = vdwg.mxu0
  %848 = vmatprep.subr.bf16.mxu0 0
  %849 = vmatpush1.bf16.msra.mxu0 %v626
  %850 = vmatprep.subr.bf16.mxu0 0
  %851 = vmatpush1.bf16.msra.mxu0 %v627
  %852 = vmatprep.subr.bf16.mxu0 0
  %853 = vmatpush1.bf16.msra.mxu0 %v628
  %854 = vmatprep.subr.bf16.mxu0 0
  %855 = vmatpush1.bf16.msra.mxu0 %v629
  %856 = vmatprep.subr.bf16.mxu0 0
  %857 = vmatpush1.bf16.msra.mxu0 %v630
  %858 = vmatprep.subr.bf16.mxu0 0
  %859 = vmatpush1.bf16.msra.mxu0 %v631
  %860 = vmatprep.subr.bf16.mxu0 0
  %861 = vmatpush1.bf16.msra.mxu0 %v632
  %862 = vmatprep.subr.bf16.mxu0 0
  %863 = vmatpush1.bf16.msra.mxu0 %v633
  %864 = vmatprep.subr.bf16.mxu0 0
  %865 = vmatpush1.bf16.msra.mxu0 %v634
  %866 = vmatprep.subr.bf16.mxu0 0
  %867 = vmatpush1.bf16.msra.mxu0 %v635
  %868 = vmatprep.subr.bf16.mxu0 0
  %869 = vmatpush1.bf16.msra.mxu0 %v636
  %870 = vmatprep.subr.bf16.mxu0 0
  %871 = vmatpush1.bf16.msra.mxu0 %v637
  %872 = vmatprep.subr.bf16.mxu0 0
  %873 = vmatpush1.bf16.msra.mxu0 %v638
  %874 = vmatprep.subr.bf16.mxu0 0
  %875 = vmatpush1.bf16.msra.mxu0 %v639
  %876 = vmatprep.subr.bf16.mxu0 0
  %877 = vmatpush1.bf16.msra.mxu0 %v640
  %878 = vmatprep.subr.bf16.mxu0 0
  %879 = vmatpush1.bf16.msra.mxu0 %v641
  %880 = vmatprep.mubr.bf16.mxu0 %v361
  %881 = vmatmul.mubr.bf16.gmra.mrb[0].mxu0 %v360
  %v882 = vpop.f32.mrb[0].mxu0
  %v883 = vadd.f32 %v754, %v882
  %v884 = vpop.f32.mrb[0].mxu0
  %v885 = vpop.f32.mrb[0].mxu0
  %v886 = vadd.f32 %v757, %v885
  %v887 = vpop.f32.mrb[0].mxu0
  %888 = vmatprep.mubr.bf16.mxu0 %v366
  %889 = vmatmul.mubr.bf16.gmra.mrb[0].mxu0 %v365
  %v890 = vpop.f32.mrb[0].mxu0
  %v891 = vadd.f32 %v762, %v890
  %v892 = vpop.f32.mrb[0].mxu0
  %v893 = vpop.f32.mrb[0].mxu0
  %v894 = vadd.f32 %v765, %v893
  %v895 = vpop.f32.mrb[0].mxu0
  %896 = vmatprep.mubr.bf16.mxu0 %v371
  %897 = vmatmul.mubr.bf16.gmra.mrb[0].mxu0 %v370
  %v898 = vpop.f32.mrb[0].mxu0
  %v899 = vadd.f32 %v770, %v898
  %v900 = vpop.f32.mrb[0].mxu0
  %v901 = vpop.f32.mrb[0].mxu0
  %v902 = vadd.f32 %v773, %v901
  %v903 = vpop.f32.mrb[0].mxu0
  %904 = vmatprep.mubr.bf16.mxu0 %v376
  %905 = vmatmul.mubr.bf16.gmra.mrb[0].mxu0 %v375
  %v906 = vpop.f32.mrb[0].mxu0
  %v907 = vadd.f32 %v778, %v906
  %v908 = vpop.f32.mrb[0].mxu0
  %v909 = vpop.f32.mrb[0].mxu0
  %v910 = vadd.f32 %v781, %v909
  %v911 = vpop.f32.mrb[0].mxu0
  %912 = vmatprep.mubr.bf16.mxu0 %v381
  %913 = vmatmul.mubr.bf16.gmra.mrb[0].mxu0 %v380
  %v914 = vpop.f32.mrb[0].mxu0
  %v915 = vadd.f32 %v786, %v914
  %v916 = vpop.f32.mrb[0].mxu0
  %v917 = vpop.f32.mrb[0].mxu0
  %v918 = vadd.f32 %v789, %v917
  %v919 = vpop.f32.mrb[0].mxu0
  %920 = vmatprep.mubr.bf16.mxu0 %v386
  %921 = vmatmul.mubr.bf16.gmra.mrb[0].mxu0 %v385
  %v922 = vpop.f32.mrb[0].mxu0
  %v923 = vadd.f32 %v794, %v922
  %v924 = vpop.f32.mrb[0].mxu0
  %v925 = vpop.f32.mrb[0].mxu0
  %v926 = vadd.f32 %v797, %v925
  %v927 = vpop.f32.mrb[0].mxu0
  %928 = vmatprep.mubr.bf16.mxu0 %v391
  %929 = vmatmul.mubr.bf16.gmra.mrb[0].mxu0 %v390
  %v930 = vpop.f32.mrb[0].mxu0
  %v931 = vadd.f32 %v802, %v930
  %v932 = vpop.f32.mrb[0].mxu0
  %v933 = vpop.f32.mrb[0].mxu0
  %v934 = vadd.f32 %v805, %v933
  %v935 = vpop.f32.mrb[0].mxu0
  %936 = vmatprep.mubr.bf16.mxu0 %v396
  %937 = vmatmul.mubr.bf16.gmra.mrb[0].mxu0 %v395
  %v938 = vpop.f32.mrb[0].mxu0
  %v939 = vadd.f32 %v810, %v938
  %v940 = vpop.f32.mrb[0].mxu0
  %v941 = vpop.f32.mrb[0].mxu0
  %v942 = vadd.f32 %v813, %v941
  %v943 = vpop.f32.mrb[0].mxu0
  %944 = vmatprep.mubr.bf16.mxu0 %v401
  %945 = vmatmul.mubr.bf16.gmra.mrb[0].mxu0 %v400
  %v946 = vpop.f32.mrb[0].mxu0
  %v947 = vadd.f32 %v818, %v946
  %v948 = vpop.f32.mrb[0].mxu0
  %v949 = vpop.f32.mrb[0].mxu0
  %v950 = vadd.f32 %v821, %v949
  %v951 = vpop.f32.mrb[0].mxu0
  %952 = vmatprep.mubr.bf16.mxu0 %v406
  %953 = vmatmul.mubr.bf16.gmra.mrb[0].mxu0 %v405
  %v954 = vpop.f32.mrb[0].mxu0
  %v955 = vadd.f32 %v826, %v954
  %v956 = vpop.f32.mrb[0].mxu0
  %v957 = vpop.f32.mrb[0].mxu0
  %v958 = vadd.f32 %v829, %v957
  %v959 = vpop.f32.mrb[0].mxu0
  %960 = vmatprep.mubr.bf16.mxu0 %v411
  %961 = vmatmul.mubr.bf16.gmra.mrb[0].mxu0 %v410
  %v962 = vpop.f32.mrb[0].mxu0
  %v963 = vadd.f32 %v834, %v962
  %v964 = vpop.f32.mrb[0].mxu0
  %v965 = vpop.f32.mrb[0].mxu0
  %v966 = vadd.f32 %v837, %v965
  %v967 = vpop.f32.mrb[0].mxu0
  %968 = vmatprep.mubr.bf16.mxu0 %v416
  %969 = vmatmul.mubr.bf16.gmra.mrb[0].mxu0 %v415
  %v970 = vpop.f32.mrb[0].mxu0
  %v971 = vadd.f32 %v842, %v970
  %v972 = vpop.f32.mrb[0].mxu0
  %v973 = vpop.f32.mrb[0].mxu0
  %v974 = vadd.f32 %v845, %v973
  %v975 = vpop.f32.mrb[0].mxu0
  %976 = vdwg.mxu0
  %977 = vmatprep.subr.bf16.mxu0 0
  %978 = vmatpush1.bf16.msra.mxu0 %v642
  %979 = vmatprep.subr.bf16.mxu0 0
  %980 = vmatpush1.bf16.msra.mxu0 %v643
  %981 = vmatprep.subr.bf16.mxu0 0
  %982 = vmatpush1.bf16.msra.mxu0 %v644
  %983 = vmatprep.subr.bf16.mxu0 0
  %984 = vmatpush1.bf16.msra.mxu0 %v645
  %985 = vmatprep.subr.bf16.mxu0 0
  %986 = vmatpush1.bf16.msra.mxu0 0
  %987 = vmatprep.subr.bf16.mxu0 0
  %988 = vmatpush1.bf16.msra.mxu0 0
  %989 = vmatprep.subr.bf16.mxu0 0
  %990 = vmatpush1.bf16.msra.mxu0 0
  %991 = vmatprep.subr.bf16.mxu0 0
  %992 = vmatpush1.bf16.msra.mxu0 0
  %993 = vmatprep.subr.bf16.mxu0 0
  %994 = vmatpush1.bf16.msra.mxu0 0
  %995 = vmatprep.subr.bf16.mxu0 0
  %996 = vmatpush1.bf16.msra.mxu0 0
  %997 = vmatprep.subr.bf16.mxu0 0
  %998 = vmatpush1.bf16.msra.mxu0 0
  %999 = vmatprep.subr.bf16.mxu0 0
  %1000 = vmatpush1.bf16.msra.mxu0 0
  %1001 = vmatprep.subr.bf16.mxu0 0
  %1002 = vmatpush1.bf16.msra.mxu0 0
  %1003 = vmatprep.subr.bf16.mxu0 0
  %1004 = vmatpush1.bf16.msra.mxu0 0
  %1005 = vmatprep.subr.bf16.mxu0 0
  %1006 = vmatpush1.bf16.msra.mxu0 0
  %1007 = vmatprep.subr.bf16.mxu0 0
  %1008 = vmatpush1.bf16.msra.mxu0 0
  %1009 = vmatprep.mubr.bf16.mxu0 0
  %1010 = vmatmul.mubr.bf16.gmra.mrb[0].mxu0 %v684
  %v1011 = vpop.f32.mrb[0].mxu0
  %v1012 = vadd.f32 %v883, %v1011
  %v1013 = vpop.f32.mrb[0].mxu0
  %v1014 = vpop.f32.mrb[0].mxu0
  %v1015 = vadd.f32 %v886, %v1014
  %v1016 = vpop.f32.mrb[0].mxu0
  %1017 = vmatprep.mubr.bf16.mxu0 0
  %1018 = vmatmul.mubr.bf16.gmra.mrb[0].mxu0 %v687
  %v1019 = vpop.f32.mrb[0].mxu0
  %v1020 = vadd.f32 %v891, %v1019
  %v1021 = vpop.f32.mrb[0].mxu0
  %v1022 = vpop.f32.mrb[0].mxu0
  %v1023 = vadd.f32 %v894, %v1022
  %v1024 = vpop.f32.mrb[0].mxu0
  %1025 = vmatprep.mubr.bf16.mxu0 0
  %1026 = vmatmul.mubr.bf16.gmra.mrb[0].mxu0 %v690
  %v1027 = vpop.f32.mrb[0].mxu0
  %v1028 = vadd.f32 %v899, %v1027
  %v1029 = vpop.f32.mrb[0].mxu0
  %v1030 = vpop.f32.mrb[0].mxu0
  %v1031 = vadd.f32 %v902, %v1030
  %v1032 = vpop.f32.mrb[0].mxu0
  %1033 = vmatprep.mubr.bf16.mxu0 0
  %1034 = vmatmul.mubr.bf16.gmra.mrb[0].mxu0 %v693
  %v1035 = vpop.f32.mrb[0].mxu0
  %v1036 = vadd.f32 %v907, %v1035
  %v1037 = vpop.f32.mrb[0].mxu0
  %v1038 = vpop.f32.mrb[0].mxu0
  %v1039 = vadd.f32 %v910, %v1038
  %v1040 = vpop.f32.mrb[0].mxu0
  %1041 = vmatprep.mubr.bf16.mxu0 0
  %1042 = vmatmul.mubr.bf16.gmra.mrb[0].mxu0 %v696
  %v1043 = vpop.f32.mrb[0].mxu0
  %v1044 = vadd.f32 %v915, %v1043
  %v1045 = vpop.f32.mrb[0].mxu0
  %v1046 = vpop.f32.mrb[0].mxu0
  %v1047 = vadd.f32 %v918, %v1046
  %v1048 = vpop.f32.mrb[0].mxu0
  %1049 = vmatprep.mubr.bf16.mxu0 0
  %1050 = vmatmul.mubr.bf16.gmra.mrb[0].mxu0 %v699
  %v1051 = vpop.f32.mrb[0].mxu0
  %v1052 = vadd.f32 %v923, %v1051
  %v1053 = vpop.f32.mrb[0].mxu0
  %v1054 = vpop.f32.mrb[0].mxu0
  %v1055 = vadd.f32 %v926, %v1054
  %v1056 = vpop.f32.mrb[0].mxu0
  %1057 = vmatprep.mubr.bf16.mxu0 0
  %1058 = vmatmul.mubr.bf16.gmra.mrb[0].mxu0 %v702
  %v1059 = vpop.f32.mrb[0].mxu0
  %v1060 = vadd.f32 %v931, %v1059
  %v1061 = vpop.f32.mrb[0].mxu0
  %v1062 = vpop.f32.mrb[0].mxu0
  %v1063 = vadd.f32 %v934, %v1062
  %v1064 = vpop.f32.mrb[0].mxu0
  %1065 = vmatprep.mubr.bf16.mxu0 0
  %1066 = vmatmul.mubr.bf16.gmra.mrb[0].mxu0 %v705
  %v1067 = vpop.f32.mrb[0].mxu0
  %v1068 = vadd.f32 %v939, %v1067
  %v1069 = vpop.f32.mrb[0].mxu0
  %v1070 = vpop.f32.mrb[0].mxu0
  %v1071 = vadd.f32 %v942, %v1070
  %v1072 = vpop.f32.mrb[0].mxu0
  %1073 = vmatprep.mubr.bf16.mxu0 0
  %1074 = vmatmul.mubr.bf16.gmra.mrb[0].mxu0 %v708
  %v1075 = vpop.f32.mrb[0].mxu0
  %v1076 = vadd.f32 %v947, %v1075
  %v1077 = vpop.f32.mrb[0].mxu0
  %v1078 = vpop.f32.mrb[0].mxu0
  %v1079 = vadd.f32 %v950, %v1078
  %v1080 = vpop.f32.mrb[0].mxu0
  %1081 = vmatprep.mubr.bf16.mxu0 0
  %1082 = vmatmul.mubr.bf16.gmra.mrb[0].mxu0 %v711
  %v1083 = vpop.f32.mrb[0].mxu0
  %v1084 = vadd.f32 %v955, %v1083
  %v1085 = vpop.f32.mrb[0].mxu0
  %v1086 = vpop.f32.mrb[0].mxu0
  %v1087 = vadd.f32 %v958, %v1086
  %v1088 = vpop.f32.mrb[0].mxu0
  %1089 = vmatprep.mubr.bf16.mxu0 0
  %1090 = vmatmul.mubr.bf16.gmra.mrb[0].mxu0 %v714
  %v1091 = vpop.f32.mrb[0].mxu0
  %v1092 = vadd.f32 %v963, %v1091
  %v1093 = vpop.f32.mrb[0].mxu0
  %v1094 = vpop.f32.mrb[0].mxu0
  %v1095 = vadd.f32 %v966, %v1094
  %v1096 = vpop.f32.mrb[0].mxu0
  %1097 = vmatprep.mubr.bf16.mxu0 0
  %1098 = vmatmul.mubr.bf16.gmra.mrb[0].mxu0 %v717
  %v1099 = vpop.f32.mrb[0].mxu0
  %v1100 = vadd.f32 %v971, %v1099
  %v1101 = vpop.f32.mrb[0].mxu0
  %v1102 = vpop.f32.mrb[0].mxu0
  %v1103 = vadd.f32 %v974, %v1102
  %v1104 = vpop.f32.mrb[0].mxu0
  %1105 = vdwg.mxu0
  %v1106 = vmax.f32 %v1012, 0.0
  %v1107 = vmax.f32 %v1015, 0.0
  %v1108 = vmax.f32 %v1020, 0.0
  %v1109 = vmax.f32 %v1023, 0.0
  %v1110 = vmax.f32 %v1028, 0.0
  %v1111 = vmax.f32 %v1031, 0.0
  %v1112 = vmax.f32 %v1036, 0.0
  %v1113 = vmax.f32 %v1039, 0.0
  %v1114 = vmax.f32 %v1044, 0.0
  %v1115 = vmax.f32 %v1047, 0.0
  %v1116 = vmax.f32 %v1052, 0.0
  %v1117 = vmax.f32 %v1055, 0.0
  %v1118 = vmax.f32 %v1060, 0.0
  %v1119 = vmax.f32 %v1063, 0.0
  %v1120 = vmax.f32 %v1068, 0.0
  %v1121 = vmax.f32 %v1071, 0.0
  %v1122 = vmax.f32 %v1076, 0.0
  %v1123 = vmax.f32 %v1079, 0.0
  %v1124 = vmax.f32 %v1084, 0.0
  %v1125 = vmax.f32 %v1087, 0.0
  %v1126 = vmax.f32 %v1092, 0.0
  %v1127 = vmax.f32 %v1095, 0.0
  %v1128 = vmax.f32 %v1100, 0.0
  %v1129 = vmax.f32 %v1103, 0.0
  %v1130 = vpack.c.bf16 %v1107, %v1106
  %v1131 = vpack.c.bf16 %v1109, %v1108
  %v1132 = vpack.c.bf16 %v1111, %v1110
  %v1133 = vpack.c.bf16 %v1113, %v1112
  %v1134 = vpack.c.bf16 %v1115, %v1114
  %v1135 = vpack.c.bf16 %v1117, %v1116
  %v1136 = vpack.c.bf16 %v1119, %v1118
  %v1137 = vpack.c.bf16 %v1121, %v1120
  %v1138 = vpack.c.bf16 %v1123, %v1122
  %v1139 = vpack.c.bf16 %v1125, %v1124
  %v1140 = vpack.c.bf16 %v1127, %v1126
  %v1141 = vpack.c.bf16 %v1129, %v1128
  %v1154 = vunpack.c.l.b16 %v1130
  %v1155 = vunpack.c.h.b16 %v1130
  %v1156 = vunpack.c.l.b16 %v1131
  %v1157 = vunpack.c.h.b16 %v1131
  %v1158 = vunpack.c.l.b16 %v1132
  %v1159 = vunpack.c.h.b16 %v1132
  %v1160 = vunpack.c.l.b16 %v1133
  %v1161 = vunpack.c.h.b16 %v1133
  %v1162 = vunpack.c.l.b16 %v1134
  %v1163 = vunpack.c.h.b16 %v1134
  %v1164 = vunpack.c.l.b16 %v1135
  %v1165 = vunpack.c.h.b16 %v1135
  %v1166 = vunpack.c.l.b16 %v1136
  %v1167 = vunpack.c.h.b16 %v1136
  %v1168 = vunpack.c.l.b16 %v1137
  %v1169 = vunpack.c.h.b16 %v1137
  %v1170 = vunpack.c.l.b16 %v1138
  %v1171 = vunpack.c.h.b16 %v1138
  %v1172 = vunpack.c.l.b16 %v1139
  %v1173 = vunpack.c.h.b16 %v1139
  %v1174 = vunpack.c.l.b16 %v1140
  %v1175 = vunpack.c.h.b16 %v1140
  %v1176 = vunpack.c.l.b16 %v1141
  %v1177 = vunpack.c.h.b16 %v1141
  %v1178 = vpack.c.b16 %v1154, %v1154
  %v1179 = vpack.c.b16 %v1155, %v1155
  %v1180 = vpack.c.b16 %v1156, %v1156
  %v1181 = vpack.c.b16 %v1157, %v1157
  %v1182 = vpack.c.b16 %v1158, %v1158
  %v1183 = vpack.c.b16 %v1159, %v1159
  %v1184 = vpack.c.b16 %v1160, %v1160
  %v1185 = vpack.c.b16 %v1161, %v1161
  %v1186 = vpack.c.b16 %v1162, %v1162
  %v1187 = vpack.c.b16 %v1163, %v1163
  %v1188 = vpack.c.b16 %v1164, %v1164
  %v1189 = vpack.c.b16 %v1165, %v1165
  %v1190 = vpack.c.b16 %v1166, %v1166
  %v1191 = vpack.c.b16 %v1167, %v1167
  %v1192 = vpack.c.b16 %v1168, %v1168
  %v1193 = vpack.c.b16 %v1169, %v1169
  %v1194 = vpack.c.b16 %v1170, %v1170
  %v1195 = vpack.c.b16 %v1171, %v1171
  %v1196 = vpack.c.b16 %v1172, %v1172
  %v1197 = vpack.c.b16 %v1173, %v1173
  %v1198 = vpack.c.b16 %v1174, %v1174
  %v1199 = vpack.c.b16 %v1175, %v1175
  %v1200 = vpack.c.b16 %v1176, %v1176
  %v1201 = vpack.c.b16 %v1177, %v1177
  %vm1226 = vcmask 257024
  %1227 = vst.msk [vmem:[%s3] sm:$0xf] %vm1226, %v1178
  %1228 = vst.msk [vmem:[%s3 + $0x4] sm:$0xf] %vm1226, %v1179
  %1229 = vst.msk [vmem:[%s3 + $0x8] sm:$0xf] %vm1226, %v1180
  %1230 = vst.msk [vmem:[%s3 + $0xc] sm:$0xf] %vm1226, %v1181
  %1231 = vst.msk [vmem:[%s3 + $0x10] sm:$0xf] %vm1226, %v1182
  %1232 = vst.msk [vmem:[%s3 + $0x14] sm:$0xf] %vm1226, %v1183
  %1233 = vst.msk [vmem:[%s3 + $0x18] sm:$0xf] %vm1226, %v1184
  %1234 = vst.msk [vmem:[%s3 + $0x1c] sm:$0xf] %vm1226, %v1185
  %1235 = vst.msk [vmem:[%s3 + $0x20] sm:$0xf] %vm1226, %v1186
  %1236 = vst.msk [vmem:[%s3 + $0x24] sm:$0xf] %vm1226, %v1187
  %1237 = vst.msk [vmem:[%s3 + $0x28] sm:$0xf] %vm1226, %v1188
  %1238 = vst.msk [vmem:[%s3 + $0x2c] sm:$0xf] %vm1226, %v1189
  %1239 = vst.msk [vmem:[%s3 + $0x30] sm:$0xf] %vm1226, %v1190
  %1240 = vst.msk [vmem:[%s3 + $0x34] sm:$0xf] %vm1226, %v1191
  %1241 = vst.msk [vmem:[%s3 + $0x38] sm:$0xf] %vm1226, %v1192
  %1242 = vst.msk [vmem:[%s3 + $0x3c] sm:$0xf] %vm1226, %v1193
  %1243 = vst.msk [vmem:[%s3 + $0x40] sm:$0xf] %vm1226, %v1194
  %1244 = vst.msk [vmem:[%s3 + $0x44] sm:$0xf] %vm1226, %v1195
  %1245 = vst.msk [vmem:[%s3 + $0x48] sm:$0xf] %vm1226, %v1196
  %1246 = vst.msk [vmem:[%s3 + $0x4c] sm:$0xf] %vm1226, %v1197
  %1247 = vst.msk [vmem:[%s3 + $0x50] sm:$0xf] %vm1226, %v1198
  %1248 = vst.msk [vmem:[%s3 + $0x54] sm:$0xf] %vm1226, %v1199
  %1249 = vst.msk [vmem:[%s3 + $0x58] sm:$0xf] %vm1226, %v1200
  %1250 = vst.msk [vmem:[%s3 + $0x5c] sm:$0xf] %vm1226, %v1201
  // Predicated region
  $region14: #{vae_forward.12} parent=0 // pred_check
    _
  $region15: #{vae_forward.12} parent=0 // pred_check_branch
    %1252 = sbr.rel (0) target = $region17
  $region16: #{vae_forward.12} parent=0 // pred_region
    _
  $region17: #{vae_forward.12} parent=0 // pred_fallthru
    _
  // Predicated region
  $region18: #{vae_forward.12} parent=0 // pred_check
    _
  $region19: #{vae_forward.12} parent=0 // pred_check_branch
    %1254 = sbr.rel (0) target = $region21
  $region20: #{vae_forward.12} parent=0 // pred_region
    _
  $region21: #{vae_forward.12} parent=0 // pred_fallthru
    _

// kernel: vae_forward.13
$region0: #{vae_forward.13}
  #allocation0 [shape = 'u32[]', space=smem, size = 0x4, offset = 0x4, fixed_abs, tag = 'smem constant byte address 0x4 - core index']
  #allocation1 [shape = 'u32[144,128]{1,0:T(1,128)}', space=vmem, size = 0x12000, scoped, tag = 'internal scratch']
  #allocation2 [shape = 'f32[1,1]{1,0:T(1,128)S(1)}', space=vmem, size = 0x200, scoped, tag = 'scoped memory for vae_forward.13']
  %s0 = inlined_call_operand.vmem [shape: bf16[48,8192], index: 0, kind: input, shape index: {}]
  %s1 = inlined_call_operand.vmem [shape: bf16[8192,16], index: 1, kind: input, shape index: {}]
  %s2 = inlined_call_operand.<no memory space> [shape: f32[1,1], index: 2, kind: input, shape index: {}]
  %s3 = inlined_call_operand.vmem [shape: bf16[16,20], index: 3, kind: input, shape index: {}]
  %s4 = inlined_call_operand.vmem [shape: bf16[28,24], index: 4, kind: input, shape index: {}]
  %s5 = inlined_call_operand.vmem [shape: f32[2,28,20], index: 5, kind: output, shape index: {}]
  %s6 = sld [smem:[#allocation0]]
  $region30: #{vae_forward.13} parent=0
    _
  %s8 = ssub.s32 1, %s6
  %s9 = scalar_select 0, %s8, %s6
  %v10 = vstv %s2
  %11 = vst [vmem:[#allocation2] sm:$0x1] %v10
  // Predicated region
  $region2: #{vae_forward.13} parent=0 // pred_check
    _
  $region3: #{vae_forward.13} parent=0 // pred_check_branch
    %13 = sbr.rel (0) target = $region5
  $region4: #{vae_forward.13} parent=0 // pred_region
    _
  $region5: #{vae_forward.13} parent=0 // pred_fallthru
    _
  // Predicated region
  $region6: #{vae_forward.13} parent=0 // pred_check
    _
  $region7: #{vae_forward.13} parent=0 // pred_check_branch
    %15 = sbr.rel (0) target = $region9
  $region8: #{vae_forward.13} parent=0 // pred_region
    _
  $region9: #{vae_forward.13} parent=0 // pred_fallthru
    _
  // Predicated region
  $region10: #{vae_forward.13} parent=0 // pred_check
    _
  $region11: #{vae_forward.13} parent=0 // pred_check_branch
    %17 = sbr.rel (0) target = $region13
  $region12: #{vae_forward.13} parent=0 // pred_region
    _
  $region13: #{vae_forward.13} parent=0 // pred_fallthru
    _
  // Predicated region
  $region14: #{vae_forward.13} parent=0 // pred_check
    _
  $region15: #{vae_forward.13} parent=0 // pred_check_branch
    %19 = sbr.rel (0) target = $region17
  $region16: #{vae_forward.13} parent=0 // pred_region
    _
  $region17: #{vae_forward.13} parent=0 // pred_fallthru
    _
  // Predicated region
  $region18: #{vae_forward.13} parent=0 // pred_check
    _
  $region19: #{vae_forward.13} parent=0 // pred_check_branch
    %21 = sbr.rel (0) target = $region21
  $region20: #{vae_forward.13} parent=0 // pred_region
    _
  $region21: #{vae_forward.13} parent=0 // pred_fallthru
    _
  %v23 = vld [vmem:[%s0] sm:$0xff]
  %v24 = vld [vmem:[%s0 + $0x8] sm:$0xff]
  %v25 = vld [vmem:[%s0 + $0x10] sm:$0xff]
  %v26 = vld [vmem:[%s0 + $0x18] sm:$0xff]
  %v27 = vld [vmem:[%s0 + $0x20] sm:$0xff]
  %v28 = vld [vmem:[%s0 + $0x28] sm:$0xff]
  %v29 = vld [vmem:[%s0 + $0x30] sm:$0xff]
  %v30 = vld [vmem:[%s0 + $0x38] sm:$0xff]
  %v31 = vld [vmem:[%s0 + $0x40] sm:$0xff]
  %v32 = vld [vmem:[%s0 + $0x48] sm:$0xff]
  %v33 = vld [vmem:[%s0 + $0x50] sm:$0xff]
  %v34 = vld [vmem:[%s0 + $0x58] sm:$0xff]
  %v35 = vld [vmem:[%s0 + $0x60] sm:$0xff]
  %v36 = vld [vmem:[%s0 + $0x68] sm:$0xff]
  %v37 = vld [vmem:[%s0 + $0x70] sm:$0xff]
  %v38 = vld [vmem:[%s0 + $0x78] sm:$0xff]
  %v39 = vld [vmem:[%s0 + $0x80] sm:$0xff]
  %v40 = vld [vmem:[%s0 + $0x88] sm:$0xff]
  %v41 = vld [vmem:[%s0 + $0x90] sm:$0xff]
  %v42 = vld [vmem:[%s0 + $0x98] sm:$0xff]
  %v43 = vld [vmem:[%s0 + $0xa0] sm:$0xff]
  %v44 = vld [vmem:[%s0 + $0xa8] sm:$0xff]
  %v45 = vld [vmem:[%s0 + $0xb0] sm:$0xff]
  %v46 = vld [vmem:[%s0 + $0xb8] sm:$0xff]
  %v47 = vld [vmem:[%s0 + $0xc0] sm:$0xff]
  %v48 = vld [vmem:[%s0 + $0xc8] sm:$0xff]
  %v49 = vld [vmem:[%s0 + $0xd0] sm:$0xff]
  %v50 = vld [vmem:[%s0 + $0xd8] sm:$0xff]
  %v51 = vld [vmem:[%s0 + $0xe0] sm:$0xff]
  %v52 = vld [vmem:[%s0 + $0xe8] sm:$0xff]
  %v53 = vld [vmem:[%s0 + $0xf0] sm:$0xff]
  %v54 = vld [vmem:[%s0 + $0xf8] sm:$0xff]
  %v55 = vld [vmem:[%s0 + $0x100] sm:$0xff]
  %v56 = vld [vmem:[%s0 + $0x108] sm:$0xff]
  %v57 = vld [vmem:[%s0 + $0x110] sm:$0xff]
  %v58 = vld [vmem:[%s0 + $0x118] sm:$0xff]
  %v59 = vld [vmem:[%s0 + $0x120] sm:$0xff]
  %v60 = vld [vmem:[%s0 + $0x128] sm:$0xff]
  %v61 = vld [vmem:[%s0 + $0x130] sm:$0xff]
  %v62 = vld [vmem:[%s0 + $0x138] sm:$0xff]
  %v63 = vld [vmem:[%s0 + $0x140] sm:$0xff]
  %v64 = vld [vmem:[%s0 + $0x148] sm:$0xff]
  %v65 = vld [vmem:[%s0 + $0x150] sm:$0xff]
  %v66 = vld [vmem:[%s0 + $0x158] sm:$0xff]
  %v67 = vld [vmem:[%s0 + $0x160] sm:$0xff]
  %v68 = vld [vmem:[%s0 + $0x168] sm:$0xff]
  %v69 = vld [vmem:[%s0 + $0x170] sm:$0xff]
  %v70 = vld [vmem:[%s0 + $0x178] sm:$0xff]
  %v71 = vld [vmem:[%s0 + $0x180] sm:$0xff]
  %v72 = vld [vmem:[%s0 + $0x188] sm:$0xff]
  %v73 = vld [vmem:[%s0 + $0x190] sm:$0xff]
  %v74 = vld [vmem:[%s0 + $0x198] sm:$0xff]
  %v75 = vld [vmem:[%s0 + $0x1a0] sm:$0xff]
  %v76 = vld [vmem:[%s0 + $0x1a8] sm:$0xff]
  %v77 = vld [vmem:[%s0 + $0x1b0] sm:$0xff]
  %v78 = vld [vmem:[%s0 + $0x1b8] sm:$0xff]
  %v79 = vld [vmem:[%s0 + $0x1c0] sm:$0xff]
  %v80 = vld [vmem:[%s0 + $0x1c8] sm:$0xff]
  %v81 = vld [vmem:[%s0 + $0x1d0] sm:$0xff]
  %v82 = vld [vmem:[%s0 + $0x1d8] sm:$0xff]
  %v83 = vld [vmem:[%s0 + $0x1e0] sm:$0xff]
  %v84 = vld [vmem:[%s0 + $0x1e8] sm:$0xff]
  %v85 = vld [vmem:[%s0 + $0x1f0] sm:$0xff]
  %v86 = vld [vmem:[%s0 + $0x1f8] sm:$0xff]
  %v87 = vld [vmem:[%s0 + $0x200] sm:$0xff]
  %v88 = vld [vmem:[%s0 + $0x208] sm:$0xff]
  %v89 = vld [vmem:[%s0 + $0x210] sm:$0xff]
  %v90 = vld [vmem:[%s0 + $0x218] sm:$0xff]
  %v91 = vld [vmem:[%s0 + $0x220] sm:$0xff]
  %v92 = vld [vmem:[%s0 + $0x228] sm:$0xff]
  %v93 = vld [vmem:[%s0 + $0x230] sm:$0xff]
  %v94 = vld [vmem:[%s0 + $0x238] sm:$0xff]
  %v95 = vld [vmem:[%s0 + $0x240] sm:$0xff]
  %v96 = vld [vmem:[%s0 + $0x248] sm:$0xff]
  %v97 = vld [vmem:[%s0 + $0x250] sm:$0xff]
  %v98 = vld [vmem:[%s0 + $0x258] sm:$0xff]
  %v99 = vld [vmem:[%s0 + $0x260] sm:$0xff]
  %v100 = vld [vmem:[%s0 + $0x268] sm:$0xff]
  %v101 = vld [vmem:[%s0 + $0x270] sm:$0xff]
  %v102 = vld [vmem:[%s0 + $0x278] sm:$0xff]
  %v103 = vld [vmem:[%s0 + $0x280] sm:$0xff]
  %v104 = vld [vmem:[%s0 + $0x288] sm:$0xff]
  %v105 = vld [vmem:[%s0 + $0x290] sm:$0xff]
  %v106 = vld [vmem:[%s0 + $0x298] sm:$0xff]
  %v107 = vld [vmem:[%s0 + $0x2a0] sm:$0xff]
  %v108 = vld [vmem:[%s0 + $0x2a8] sm:$0xff]
  %v109 = vld [vmem:[%s0 + $0x2b0] sm:$0xff]
  %v110 = vld [vmem:[%s0 + $0x2b8] sm:$0xff]
  %v111 = vld [vmem:[%s0 + $0x2c0] sm:$0xff]
  %v112 = vld [vmem:[%s0 + $0x2c8] sm:$0xff]
  %v113 = vld [vmem:[%s0 + $0x2d0] sm:$0xff]
  %v114 = vld [vmem:[%s0 + $0x2d8] sm:$0xff]
  %v115 = vld [vmem:[%s0 + $0x2e0] sm:$0xff]
  %v116 = vld [vmem:[%s0 + $0x2e8] sm:$0xff]
  %v117 = vld [vmem:[%s0 + $0x2f0] sm:$0xff]
  %v118 = vld [vmem:[%s0 + $0x2f8] sm:$0xff]
  %v119 = vld [vmem:[%s0 + $0x300] sm:$0xff]
  %v120 = vld [vmem:[%s0 + $0x308] sm:$0xff]
  %v121 = vld [vmem:[%s0 + $0x310] sm:$0xff]
  %v122 = vld [vmem:[%s0 + $0x318] sm:$0xff]
  %v123 = vld [vmem:[%s0 + $0x320] sm:$0xff]
  %v124 = vld [vmem:[%s0 + $0x328] sm:$0xff]
  %v125 = vld [vmem:[%s0 + $0x330] sm:$0xff]
  %v126 = vld [vmem:[%s0 + $0x338] sm:$0xff]
  %v127 = vld [vmem:[%s0 + $0x340] sm:$0xff]
  %v128 = vld [vmem:[%s0 + $0x348] sm:$0xff]
  %v129 = vld [vmem:[%s0 + $0x350] sm:$0xff]
  %v130 = vld [vmem:[%s0 + $0x358] sm:$0xff]
  %v131 = vld [vmem:[%s0 + $0x360] sm:$0xff]
  %v132 = vld [vmem:[%s0 + $0x368] sm:$0xff]
  %v133 = vld [vmem:[%s0 + $0x370] sm:$0xff]
  %v134 = vld [vmem:[%s0 + $0x378] sm:$0xff]
  %v135 = vld [vmem:[%s0 + $0x380] sm:$0xff]
  %v136 = vld [vmem:[%s0 + $0x388] sm:$0xff]
  %v137 = vld [vmem:[%s0 + $0x390] sm:$0xff]
  %v138 = vld [vmem:[%s0 + $0x398] sm:$0xff]
  %v139 = vld [vmem:[%s0 + $0x3a0] sm:$0xff]
  %v140 = vld [vmem:[%s0 + $0x3a8] sm:$0xff]
  %v141 = vld [vmem:[%s0 + $0x3b0] sm:$0xff]
  %v142 = vld [vmem:[%s0 + $0x3b8] sm:$0xff]
  %v143 = vld [vmem:[%s0 + $0x3c0] sm:$0xff]
  %v144 = vld [vmem:[%s0 + $0x3c8] sm:$0xff]
  %v145 = vld [vmem:[%s0 + $0x3d0] sm:$0xff]
  %v146 = vld [vmem:[%s0 + $0x3d8] sm:$0xff]
  %v147 = vld [vmem:[%s0 + $0x3e0] sm:$0xff]
  %v148 = vld [vmem:[%s0 + $0x3e8] sm:$0xff]
  %v149 = vld [vmem:[%s0 + $0x3f0] sm:$0xff]
  %v150 = vld [vmem:[%s0 + $0x3f8] sm:$0xff]
  %v151 = vld [vmem:[%s0 + $0x400] sm:$0xff]
  %v152 = vld [vmem:[%s0 + $0x408] sm:$0xff]
  %v153 = vld [vmem:[%s0 + $0x410] sm:$0xff]
  %v154 = vld [vmem:[%s0 + $0x418] sm:$0xff]
  %v155 = vld [vmem:[%s0 + $0x420] sm:$0xff]
  %v156 = vld [vmem:[%s0 + $0x428] sm:$0xff]
  %v157 = vld [vmem:[%s0 + $0x430] sm:$0xff]
  %v158 = vld [vmem:[%s0 + $0x438] sm:$0xff]
  %v159 = vld [vmem:[%s0 + $0x440] sm:$0xff]
  %v160 = vld [vmem:[%s0 + $0x448] sm:$0xff]
  %v161 = vld [vmem:[%s0 + $0x450] sm:$0xff]
  %v162 = vld [vmem:[%s0 + $0x458] sm:$0xff]
  %v163 = vld [vmem:[%s0 + $0x460] sm:$0xff]
  %v164 = vld [vmem:[%s0 + $0x468] sm:$0xff]
  %v165 = vld [vmem:[%s0 + $0x470] sm:$0xff]
  %v166 = vld [vmem:[%s0 + $0x478] sm:$0xff]
  %v167 = vld [vmem:[%s0 + $0x480] sm:$0xff]
  %v168 = vld [vmem:[%s0 + $0x488] sm:$0xff]
  %v169 = vld [vmem:[%s0 + $0x490] sm:$0xff]
  %v170 = vld [vmem:[%s0 + $0x498] sm:$0xff]
  %v171 = vld [vmem:[%s0 + $0x4a0] sm:$0xff]
  %v172 = vld [vmem:[%s0 + $0x4a8] sm:$0xff]
  %v173 = vld [vmem:[%s0 + $0x4b0] sm:$0xff]
  %v174 = vld [vmem:[%s0 + $0x4b8] sm:$0xff]
  %v175 = vld [vmem:[%s0 + $0x4c0] sm:$0xff]
  %v176 = vld [vmem:[%s0 + $0x4c8] sm:$0xff]
  %v177 = vld [vmem:[%s0 + $0x4d0] sm:$0xff]
  %v178 = vld [vmem:[%s0 + $0x4d8] sm:$0xff]
  %v179 = vld [vmem:[%s0 + $0x4e0] sm:$0xff]
  %v180 = vld [vmem:[%s0 + $0x4e8] sm:$0xff]
  %v181 = vld [vmem:[%s0 + $0x4f0] sm:$0xff]
  %v182 = vld [vmem:[%s0 + $0x4f8] sm:$0xff]
  %v183 = vld [vmem:[%s0 + $0x500] sm:$0xff]
  %v184 = vld [vmem:[%s0 + $0x508] sm:$0xff]
  %v185 = vld [vmem:[%s0 + $0x510] sm:$0xff]
  %v186 = vld [vmem:[%s0 + $0x518] sm:$0xff]
  %v187 = vld [vmem:[%s0 + $0x520] sm:$0xff]
  %v188 = vld [vmem:[%s0 + $0x528] sm:$0xff]
  %v189 = vld [vmem:[%s0 + $0x530] sm:$0xff]
  %v190 = vld [vmem:[%s0 + $0x538] sm:$0xff]
  %v191 = vld [vmem:[%s0 + $0x540] sm:$0xff]
  %v192 = vld [vmem:[%s0 + $0x548] sm:$0xff]
  %v193 = vld [vmem:[%s0 + $0x550] sm:$0xff]
  %v194 = vld [vmem:[%s0 + $0x558] sm:$0xff]
  %v195 = vld [vmem:[%s0 + $0x560] sm:$0xff]
  %v196 = vld [vmem:[%s0 + $0x568] sm:$0xff]
  %v197 = vld [vmem:[%s0 + $0x570] sm:$0xff]
  %v198 = vld [vmem:[%s0 + $0x578] sm:$0xff]
  %v199 = vld [vmem:[%s0 + $0x580] sm:$0xff]
  %v200 = vld [vmem:[%s0 + $0x588] sm:$0xff]
  %v201 = vld [vmem:[%s0 + $0x590] sm:$0xff]
  %v202 = vld [vmem:[%s0 + $0x598] sm:$0xff]
  %v203 = vld [vmem:[%s0 + $0x5a0] sm:$0xff]
  %v204 = vld [vmem:[%s0 + $0x5a8] sm:$0xff]
  %v205 = vld [vmem:[%s0 + $0x5b0] sm:$0xff]
  %v206 = vld [vmem:[%s0 + $0x5b8] sm:$0xff]
  %v207 = vld [vmem:[%s0 + $0x5c0] sm:$0xff]
  %v208 = vld [vmem:[%s0 + $0x5c8] sm:$0xff]
  %v209 = vld [vmem:[%s0 + $0x5d0] sm:$0xff]
  %v210 = vld [vmem:[%s0 + $0x5d8] sm:$0xff]
  %v211 = vld [vmem:[%s0 + $0x5e0] sm:$0xff]
  %v212 = vld [vmem:[%s0 + $0x5e8] sm:$0xff]
  %v213 = vld [vmem:[%s0 + $0x5f0] sm:$0xff]
  %v214 = vld [vmem:[%s0 + $0x5f8] sm:$0xff]
  %v215 = vld [vmem:[%s1] sm:$0xf]
  %v216 = vld [vmem:[%s1 + $0x4] sm:$0xf]
  %v217 = vld [vmem:[%s1 + $0x8] sm:$0xf]
  %v218 = vld [vmem:[%s1 + $0xc] sm:$0xf]
  %v219 = vld [vmem:[%s1 + $0x10] sm:$0xf]
  %v220 = vld [vmem:[%s1 + $0x14] sm:$0xf]
  %v221 = vld [vmem:[%s1 + $0x18] sm:$0xf]
  %v222 = vld [vmem:[%s1 + $0x1c] sm:$0xf]
  %v223 = vld [vmem:[%s1 + $0x20] sm:$0xf]
  %v224 = vld [vmem:[%s1 + $0x24] sm:$0xf]
  %v225 = vld [vmem:[%s1 + $0x28] sm:$0xf]
  %v226 = vld [vmem:[%s1 + $0x2c] sm:$0xf]
  %v227 = vld [vmem:[%s1 + $0x30] sm:$0xf]
  %v228 = vld [vmem:[%s1 + $0x34] sm:$0xf]
  %v229 = vld [vmem:[%s1 + $0x38] sm:$0xf]
  %v230 = vld [vmem:[%s1 + $0x3c] sm:$0xf]
  %v231 = vld [vmem:[%s1 + $0x40] sm:$0xf]
  %v232 = vld [vmem:[%s1 + $0x44] sm:$0xf]
  %v233 = vld [vmem:[%s1 + $0x48] sm:$0xf]
  %v234 = vld [vmem:[%s1 + $0x4c] sm:$0xf]
  %v235 = vld [vmem:[%s1 + $0x50] sm:$0xf]
  %v236 = vld [vmem:[%s1 + $0x54] sm:$0xf]
  %v237 = vld [vmem:[%s1 + $0x58] sm:$0xf]
  %v238 = vld [vmem:[%s1 + $0x5c] sm:$0xf]
  %v239 = vld [vmem:[%s1 + $0x60] sm:$0xf]
  %v240 = vld [vmem:[%s1 + $0x64] sm:$0xf]
  %v241 = vld [vmem:[%s1 + $0x68] sm:$0xf]
  %v242 = vld [vmem:[%s1 + $0x6c] sm:$0xf]
  %v243 = vld [vmem:[%s1 + $0x70] sm:$0xf]
  %v244 = vld [vmem:[%s1 + $0x74] sm:$0xf]
  %v245 = vld [vmem:[%s1 + $0x78] sm:$0xf]
  %v246 = vld [vmem:[%s1 + $0x7c] sm:$0xf]
  %v247 = vld [vmem:[%s1 + $0x80] sm:$0xf]
  %v248 = vld [vmem:[%s1 + $0x84] sm:$0xf]
  %v249 = vld [vmem:[%s1 + $0x88] sm:$0xf]
  %v250 = vld [vmem:[%s1 + $0x8c] sm:$0xf]
  %v251 = vld [vmem:[%s1 + $0x90] sm:$0xf]
  %v252 = vld [vmem:[%s1 + $0x94] sm:$0xf]
  %v253 = vld [vmem:[%s1 + $0x98] sm:$0xf]
  %v254 = vld [vmem:[%s1 + $0x9c] sm:$0xf]
  %v255 = vld [vmem:[%s1 + $0xa0] sm:$0xf]
  %v256 = vld [vmem:[%s1 + $0xa4] sm:$0xf]
  %v257 = vld [vmem:[%s1 + $0xa8] sm:$0xf]
  %v258 = vld [vmem:[%s1 + $0xac] sm:$0xf]
  %v259 = vld [vmem:[%s1 + $0xb0] sm:$0xf]
  %v260 = vld [vmem:[%s1 + $0xb4] sm:$0xf]
  %v261 = vld [vmem:[%s1 + $0xb8] sm:$0xf]
  %v262 = vld [vmem:[%s1 + $0xbc] sm:$0xf]
  %v263 = vld [vmem:[%s1 + $0xc0] sm:$0xf]
  %v264 = vld [vmem:[%s1 + $0xc4] sm:$0xf]
  %v265 = vld [vmem:[%s1 + $0xc8] sm:$0xf]
  %v266 = vld [vmem:[%s1 + $0xcc] sm:$0xf]
  %v267 = vld [vmem:[%s1 + $0xd0] sm:$0xf]
  %v268 = vld [vmem:[%s1 + $0xd4] sm:$0xf]
  %v269 = vld [vmem:[%s1 + $0xd8] sm:$0xf]
  %v270 = vld [vmem:[%s1 + $0xdc] sm:$0xf]
  %v271 = vld [vmem:[%s1 + $0xe0] sm:$0xf]
  %v272 = vld [vmem:[%s1 + $0xe4] sm:$0xf]
  %v273 = vld [vmem:[%s1 + $0xe8] sm:$0xf]
  %v274 = vld [vmem:[%s1 + $0xec] sm:$0xf]
  %v275 = vld [vmem:[%s1 + $0xf0] sm:$0xf]
  %v276 = vld [vmem:[%s1 + $0xf4] sm:$0xf]
  %v277 = vld [vmem:[%s1 + $0xf8] sm:$0xf]
  %v278 = vld [vmem:[%s1 + $0xfc] sm:$0xf]
  %v279 = vld [vmem:[%s1 + $0x100] sm:$0xf]
  %v280 = vld [vmem:[%s1 + $0x104] sm:$0xf]
  %v281 = vld [vmem:[%s1 + $0x108] sm:$0xf]
  %v282 = vld [vmem:[%s1 + $0x10c] sm:$0xf]
  %v283 = vld [vmem:[%s1 + $0x110] sm:$0xf]
  %v284 = vld [vmem:[%s1 + $0x114] sm:$0xf]
  %v285 = vld [vmem:[%s1 + $0x118] sm:$0xf]
  %v286 = vld [vmem:[%s1 + $0x11c] sm:$0xf]
  %v287 = vld [vmem:[%s1 + $0x120] sm:$0xf]
  %v288 = vld [vmem:[%s1 + $0x124] sm:$0xf]
  %v289 = vld [vmem:[%s1 + $0x128] sm:$0xf]
  %v290 = vld [vmem:[%s1 + $0x12c] sm:$0xf]
  %v291 = vld [vmem:[%s1 + $0x130] sm:$0xf]
  %v292 = vld [vmem:[%s1 + $0x134] sm:$0xf]
  %v293 = vld [vmem:[%s1 + $0x138] sm:$0xf]
  %v294 = vld [vmem:[%s1 + $0x13c] sm:$0xf]
  %v295 = vld [vmem:[%s1 + $0x140] sm:$0xf]
  %v296 = vld [vmem:[%s1 + $0x144] sm:$0xf]
  %v297 = vld [vmem:[%s1 + $0x148] sm:$0xf]
  %v298 = vld [vmem:[%s1 + $0x14c] sm:$0xf]
  %v299 = vld [vmem:[%s1 + $0x150] sm:$0xf]
  %v300 = vld [vmem:[%s1 + $0x154] sm:$0xf]
  %v301 = vld [vmem:[%s1 + $0x158] sm:$0xf]
  %v302 = vld [vmem:[%s1 + $0x15c] sm:$0xf]
  %v303 = vld [vmem:[%s1 + $0x160] sm:$0xf]
  %v304 = vld [vmem:[%s1 + $0x164] sm:$0xf]
  %v305 = vld [vmem:[%s1 + $0x168] sm:$0xf]
  %v306 = vld [vmem:[%s1 + $0x16c] sm:$0xf]
  %v307 = vld [vmem:[%s1 + $0x170] sm:$0xf]
  %v308 = vld [vmem:[%s1 + $0x174] sm:$0xf]
  %v309 = vld [vmem:[%s1 + $0x178] sm:$0xf]
  %v310 = vld [vmem:[%s1 + $0x17c] sm:$0xf]
  %v311 = vld [vmem:[%s1 + $0x180] sm:$0xf]
  %v312 = vld [vmem:[%s1 + $0x184] sm:$0xf]
  %v313 = vld [vmem:[%s1 + $0x188] sm:$0xf]
  %v314 = vld [vmem:[%s1 + $0x18c] sm:$0xf]
  %v315 = vld [vmem:[%s1 + $0x190] sm:$0xf]
  %v316 = vld [vmem:[%s1 + $0x194] sm:$0xf]
  %v317 = vld [vmem:[%s1 + $0x198] sm:$0xf]
  %v318 = vld [vmem:[%s1 + $0x19c] sm:$0xf]
  %v319 = vld [vmem:[%s1 + $0x1a0] sm:$0xf]
  %v320 = vld [vmem:[%s1 + $0x1a4] sm:$0xf]
  %v321 = vld [vmem:[%s1 + $0x1a8] sm:$0xf]
  %v322 = vld [vmem:[%s1 + $0x1ac] sm:$0xf]
  %v323 = vld [vmem:[%s1 + $0x1b0] sm:$0xf]
  %v324 = vld [vmem:[%s1 + $0x1b4] sm:$0xf]
  %v325 = vld [vmem:[%s1 + $0x1b8] sm:$0xf]
  %v326 = vld [vmem:[%s1 + $0x1bc] sm:$0xf]
  %v327 = vld [vmem:[%s1 + $0x1c0] sm:$0xf]
  %v328 = vld [vmem:[%s1 + $0x1c4] sm:$0xf]
  %v329 = vld [vmem:[%s1 + $0x1c8] sm:$0xf]
  %v330 = vld [vmem:[%s1 + $0x1cc] sm:$0xf]
  %v331 = vld [vmem:[%s1 + $0x1d0] sm:$0xf]
  %v332 = vld [vmem:[%s1 + $0x1d4] sm:$0xf]
  %v333 = vld [vmem:[%s1 + $0x1d8] sm:$0xf]
  %v334 = vld [vmem:[%s1 + $0x1dc] sm:$0xf]
  %v335 = vld [vmem:[%s1 + $0x1e0] sm:$0xf]
  %v336 = vld [vmem:[%s1 + $0x1e4] sm:$0xf]
  %v337 = vld [vmem:[%s1 + $0x1e8] sm:$0xf]
  %v338 = vld [vmem:[%s1 + $0x1ec] sm:$0xf]
  %v339 = vld [vmem:[%s1 + $0x1f0] sm:$0xf]
  %v340 = vld [vmem:[%s1 + $0x1f4] sm:$0xf]
  %v341 = vld [vmem:[%s1 + $0x1f8] sm:$0xf]
  %v342 = vld [vmem:[%s1 + $0x1fc] sm:$0xf]
  %v343 = vld [vmem:[%s1 + $0x200] sm:$0xf]
  %v344 = vld [vmem:[%s1 + $0x204] sm:$0xf]
  %v345 = vld [vmem:[%s1 + $0x208] sm:$0xf]
  %v346 = vld [vmem:[%s1 + $0x20c] sm:$0xf]
  %v347 = vld [vmem:[%s1 + $0x210] sm:$0xf]
  %v348 = vld [vmem:[%s1 + $0x214] sm:$0xf]
  %v349 = vld [vmem:[%s1 + $0x218] sm:$0xf]
  %v350 = vld [vmem:[%s1 + $0x21c] sm:$0xf]
  %v351 = vld [vmem:[%s1 + $0x220] sm:$0xf]
  %v352 = vld [vmem:[%s1 + $0x224] sm:$0xf]
  %v353 = vld [vmem:[%s1 + $0x228] sm:$0xf]
  %v354 = vld [vmem:[%s1 + $0x22c] sm:$0xf]
  %v355 = vld [vmem:[%s1 + $0x230] sm:$0xf]
  %v356 = vld [vmem:[%s1 + $0x234] sm:$0xf]
  %v357 = vld [vmem:[%s1 + $0x238] sm:$0xf]
  %v358 = vld [vmem:[%s1 + $0x23c] sm:$0xf]
  %v359 = vld [vmem:[%s1 + $0x240] sm:$0xf]
  %v360 = vld [vmem:[%s1 + $0x244] sm:$0xf]
  %v361 = vld [vmem:[%s1 + $0x248] sm:$0xf]
  %v362 = vld [vmem:[%s1 + $0x24c] sm:$0xf]
  %v363 = vld [vmem:[%s1 + $0x250] sm:$0xf]
  %v364 = vld [vmem:[%s1 + $0x254] sm:$0xf]
  %v365 = vld [vmem:[%s1 + $0x258] sm:$0xf]
  %v366 = vld [vmem:[%s1 + $0x25c] sm:$0xf]
  %v367 = vld [vmem:[%s1 + $0x260] sm:$0xf]
  %v368 = vld [vmem:[%s1 + $0x264] sm:$0xf]
  %v369 = vld [vmem:[%s1 + $0x268] sm:$0xf]
  %v370 = vld [vmem:[%s1 + $0x26c] sm:$0xf]
  %v371 = vld [vmem:[%s1 + $0x270] sm:$0xf]
  %v372 = vld [vmem:[%s1 + $0x274] sm:$0xf]
  %v373 = vld [vmem:[%s1 + $0x278] sm:$0xf]
  %v374 = vld [vmem:[%s1 + $0x27c] sm:$0xf]
  %v375 = vld [vmem:[%s1 + $0x280] sm:$0xf]
  %v376 = vld [vmem:[%s1 + $0x284] sm:$0xf]
  %v377 = vld [vmem:[%s1 + $0x288] sm:$0xf]
  %v378 = vld [vmem:[%s1 + $0x28c] sm:$0xf]
  %v379 = vld [vmem:[%s1 + $0x290] sm:$0xf]
  %v380 = vld [vmem:[%s1 + $0x294] sm:$0xf]
  %v381 = vld [vmem:[%s1 + $0x298] sm:$0xf]
  %v382 = vld [vmem:[%s1 + $0x29c] sm:$0xf]
  %v383 = vld [vmem:[%s1 + $0x2a0] sm:$0xf]
  %v384 = vld [vmem:[%s1 + $0x2a4] sm:$0xf]
  %v385 = vld [vmem:[%s1 + $0x2a8] sm:$0xf]
  %v386 = vld [vmem:[%s1 + $0x2ac] sm:$0xf]
  %v387 = vld [vmem:[%s1 + $0x2b0] sm:$0xf]
  %v388 = vld [vmem:[%s1 + $0x2b4] sm:$0xf]
  %v389 = vld [vmem:[%s1 + $0x2b8] sm:$0xf]
  %v390 = vld [vmem:[%s1 + $0x2bc] sm:$0xf]
  %v391 = vld [vmem:[%s1 + $0x2c0] sm:$0xf]
  %v392 = vld [vmem:[%s1 + $0x2c4] sm:$0xf]
  %v393 = vld [vmem:[%s1 + $0x2c8] sm:$0xf]
  %v394 = vld [vmem:[%s1 + $0x2cc] sm:$0xf]
  %v395 = vld [vmem:[%s1 + $0x2d0] sm:$0xf]
  %v396 = vld [vmem:[%s1 + $0x2d4] sm:$0xf]
  %v397 = vld [vmem:[%s1 + $0x2d8] sm:$0xf]
  %v398 = vld [vmem:[%s1 + $0x2dc] sm:$0xf]
  %v399 = vld [vmem:[%s1 + $0x2e0] sm:$0xf]
  %v400 = vld [vmem:[%s1 + $0x2e4] sm:$0xf]
  %v401 = vld [vmem:[%s1 + $0x2e8] sm:$0xf]
  %v402 = vld [vmem:[%s1 + $0x2ec] sm:$0xf]
  %v403 = vld [vmem:[%s1 + $0x2f0] sm:$0xf]
  %v404 = vld [vmem:[%s1 + $0x2f4] sm:$0xf]
  %v405 = vld [vmem:[%s1 + $0x2f8] sm:$0xf]
  %v406 = vld [vmem:[%s1 + $0x2fc] sm:$0xf]
  %v407 = vld [vmem:[%s1 + $0x300] sm:$0xf]
  %v408 = vld [vmem:[%s1 + $0x304] sm:$0xf]
  %v409 = vld [vmem:[%s1 + $0x308] sm:$0xf]
  %v410 = vld [vmem:[%s1 + $0x30c] sm:$0xf]
  %v411 = vld [vmem:[%s1 + $0x310] sm:$0xf]
  %v412 = vld [vmem:[%s1 + $0x314] sm:$0xf]
  %v413 = vld [vmem:[%s1 + $0x318] sm:$0xf]
  %v414 = vld [vmem:[%s1 + $0x31c] sm:$0xf]
  %v415 = vld [vmem:[%s1 + $0x320] sm:$0xf]
  %v416 = vld [vmem:[%s1 + $0x324] sm:$0xf]
  %v417 = vld [vmem:[%s1 + $0x328] sm:$0xf]
  %v418 = vld [vmem:[%s1 + $0x32c] sm:$0xf]
  %v419 = vld [vmem:[%s1 + $0x330] sm:$0xf]
  %v420 = vld [vmem:[%s1 + $0x334] sm:$0xf]
  %v421 = vld [vmem:[%s1 + $0x338] sm:$0xf]
  %v422 = vld [vmem:[%s1 + $0x33c] sm:$0xf]
  %v423 = vld [vmem:[%s1 + $0x340] sm:$0xf]
  %v424 = vld [vmem:[%s1 + $0x344] sm:$0xf]
  %v425 = vld [vmem:[%s1 + $0x348] sm:$0xf]
  %v426 = vld [vmem:[%s1 + $0x34c] sm:$0xf]
  %v427 = vld [vmem:[%s1 + $0x350] sm:$0xf]
  %v428 = vld [vmem:[%s1 + $0x354] sm:$0xf]
  %v429 = vld [vmem:[%s1 + $0x358] sm:$0xf]
  %v430 = vld [vmem:[%s1 + $0x35c] sm:$0xf]
  %v431 = vld [vmem:[%s1 + $0x360] sm:$0xf]
  %v432 = vld [vmem:[%s1 + $0x364] sm:$0xf]
  %v433 = vld [vmem:[%s1 + $0x368] sm:$0xf]
  %v434 = vld [vmem:[%s1 + $0x36c] sm:$0xf]
  %v435 = vld [vmem:[%s1 + $0x370] sm:$0xf]
  %v436 = vld [vmem:[%s1 + $0x374] sm:$0xf]
  %v437 = vld [vmem:[%s1 + $0x378] sm:$0xf]
  %v438 = vld [vmem:[%s1 + $0x37c] sm:$0xf]
  %v439 = vld [vmem:[%s1 + $0x380] sm:$0xf]
  %v440 = vld [vmem:[%s1 + $0x384] sm:$0xf]
  %v441 = vld [vmem:[%s1 + $0x388] sm:$0xf]
  %v442 = vld [vmem:[%s1 + $0x38c] sm:$0xf]
  %v443 = vld [vmem:[%s1 + $0x390] sm:$0xf]
  %v444 = vld [vmem:[%s1 + $0x394] sm:$0xf]
  %v445 = vld [vmem:[%s1 + $0x398] sm:$0xf]
  %v446 = vld [vmem:[%s1 + $0x39c] sm:$0xf]
  %v447 = vld [vmem:[%s1 + $0x3a0] sm:$0xf]
  %v448 = vld [vmem:[%s1 + $0x3a4] sm:$0xf]
  %v449 = vld [vmem:[%s1 + $0x3a8] sm:$0xf]
  %v450 = vld [vmem:[%s1 + $0x3ac] sm:$0xf]
  %v451 = vld [vmem:[%s1 + $0x3b0] sm:$0xf]
  %v452 = vld [vmem:[%s1 + $0x3b4] sm:$0xf]
  %v453 = vld [vmem:[%s1 + $0x3b8] sm:$0xf]
  %v454 = vld [vmem:[%s1 + $0x3bc] sm:$0xf]
  %v455 = vld [vmem:[%s1 + $0x3c0] sm:$0xf]
  %v456 = vld [vmem:[%s1 + $0x3c4] sm:$0xf]
  %v457 = vld [vmem:[%s1 + $0x3c8] sm:$0xf]
  %v458 = vld [vmem:[%s1 + $0x3cc] sm:$0xf]
  %v459 = vld [vmem:[%s1 + $0x3d0] sm:$0xf]
  %v460 = vld [vmem:[%s1 + $0x3d4] sm:$0xf]
  %v461 = vld [vmem:[%s1 + $0x3d8] sm:$0xf]
  %v462 = vld [vmem:[%s1 + $0x3dc] sm:$0xf]
  %v463 = vld [vmem:[%s1 + $0x3e0] sm:$0xf]
  %v464 = vld [vmem:[%s1 + $0x3e4] sm:$0xf]
  %v465 = vld [vmem:[%s1 + $0x3e8] sm:$0xf]
  %v466 = vld [vmem:[%s1 + $0x3ec] sm:$0xf]
  %v467 = vld [vmem:[%s1 + $0x3f0] sm:$0xf]
  %v468 = vld [vmem:[%s1 + $0x3f4] sm:$0xf]
  %v469 = vld [vmem:[%s1 + $0x3f8] sm:$0xf]
  %v470 = vld [vmem:[%s1 + $0x3fc] sm:$0xf]
  %v471 = vld [vmem:[%s1 + $0x400] sm:$0xf]
  %v472 = vld [vmem:[%s1 + $0x404] sm:$0xf]
  %v473 = vld [vmem:[%s1 + $0x408] sm:$0xf]
  %v474 = vld [vmem:[%s1 + $0x40c] sm:$0xf]
  %v475 = vld [vmem:[%s1 + $0x410] sm:$0xf]
  %v476 = vld [vmem:[%s1 + $0x414] sm:$0xf]
  %v477 = vld [vmem:[%s1 + $0x418] sm:$0xf]
  %v478 = vld [vmem:[%s1 + $0x41c] sm:$0xf]
  %v479 = vld [vmem:[%s1 + $0x420] sm:$0xf]
  %v480 = vld [vmem:[%s1 + $0x424] sm:$0xf]
  %v481 = vld [vmem:[%s1 + $0x428] sm:$0xf]
  %v482 = vld [vmem:[%s1 + $0x42c] sm:$0xf]
  %v483 = vld [vmem:[%s1 + $0x430] sm:$0xf]
  %v484 = vld [vmem:[%s1 + $0x434] sm:$0xf]
  %v485 = vld [vmem:[%s1 + $0x438] sm:$0xf]
  %v486 = vld [vmem:[%s1 + $0x43c] sm:$0xf]
  %v487 = vld [vmem:[%s1 + $0x440] sm:$0xf]
  %v488 = vld [vmem:[%s1 + $0x444] sm:$0xf]
  %v489 = vld [vmem:[%s1 + $0x448] sm:$0xf]
  %v490 = vld [vmem:[%s1 + $0x44c] sm:$0xf]
  %v491 = vld [vmem:[%s1 + $0x450] sm:$0xf]
  %v492 = vld [vmem:[%s1 + $0x454] sm:$0xf]
  %v493 = vld [vmem:[%s1 + $0x458] sm:$0xf]
  %v494 = vld [vmem:[%s1 + $0x45c] sm:$0xf]
  %v495 = vld [vmem:[%s1 + $0x460] sm:$0xf]
  %v496 = vld [vmem:[%s1 + $0x464] sm:$0xf]
  %v497 = vld [vmem:[%s1 + $0x468] sm:$0xf]
  %v498 = vld [vmem:[%s1 + $0x46c] sm:$0xf]
  %v499 = vld [vmem:[%s1 + $0x470] sm:$0xf]
  %v500 = vld [vmem:[%s1 + $0x474] sm:$0xf]
  %v501 = vld [vmem:[%s1 + $0x478] sm:$0xf]
  %v502 = vld [vmem:[%s1 + $0x47c] sm:$0xf]
  %v503 = vld [vmem:[%s1 + $0x480] sm:$0xf]
  %v504 = vld [vmem:[%s1 + $0x484] sm:$0xf]
  %v505 = vld [vmem:[%s1 + $0x488] sm:$0xf]
  %v506 = vld [vmem:[%s1 + $0x48c] sm:$0xf]
  %v507 = vld [vmem:[%s1 + $0x490] sm:$0xf]
  %v508 = vld [vmem:[%s1 + $0x494] sm:$0xf]
  %v509 = vld [vmem:[%s1 + $0x498] sm:$0xf]
  %v510 = vld [vmem:[%s1 + $0x49c] sm:$0xf]
  %v511 = vld [vmem:[%s1 + $0x4a0] sm:$0xf]
  %v512 = vld [vmem:[%s1 + $0x4a4] sm:$0xf]
  %v513 = vld [vmem:[%s1 + $0x4a8] sm:$0xf]
  %v514 = vld [vmem:[%s1 + $0x4ac] sm:$0xf]
  %v515 = vld [vmem:[%s1 + $0x4b0] sm:$0xf]
  %v516 = vld [vmem:[%s1 + $0x4b4] sm:$0xf]
  %v517 = vld [vmem:[%s1 + $0x4b8] sm:$0xf]
  %v518 = vld [vmem:[%s1 + $0x4bc] sm:$0xf]
  %v519 = vld [vmem:[%s1 + $0x4c0] sm:$0xf]
  %v520 = vld [vmem:[%s1 + $0x4c4] sm:$0xf]
  %v521 = vld [vmem:[%s1 + $0x4c8] sm:$0xf]
  %v522 = vld [vmem:[%s1 + $0x4cc] sm:$0xf]
  %v523 = vld [vmem:[%s1 + $0x4d0] sm:$0xf]
  %v524 = vld [vmem:[%s1 + $0x4d4] sm:$0xf]
  %v525 = vld [vmem:[%s1 + $0x4d8] sm:$0xf]
  %v526 = vld [vmem:[%s1 + $0x4dc] sm:$0xf]
  %v527 = vld [vmem:[%s1 + $0x4e0] sm:$0xf]
  %v528 = vld [vmem:[%s1 + $0x4e4] sm:$0xf]
  %v529 = vld [vmem:[%s1 + $0x4e8] sm:$0xf]
  %v530 = vld [vmem:[%s1 + $0x4ec] sm:$0xf]
  %v531 = vld [vmem:[%s1 + $0x4f0] sm:$0xf]
  %v532 = vld [vmem:[%s1 + $0x4f4] sm:$0xf]
  %v533 = vld [vmem:[%s1 + $0x4f8] sm:$0xf]
  %v534 = vld [vmem:[%s1 + $0x4fc] sm:$0xf]
  %v535 = vld [vmem:[%s1 + $0x500] sm:$0xf]
  %v536 = vld [vmem:[%s1 + $0x504] sm:$0xf]
  %v537 = vld [vmem:[%s1 + $0x508] sm:$0xf]
  %v538 = vld [vmem:[%s1 + $0x50c] sm:$0xf]
  %v539 = vld [vmem:[%s1 + $0x510] sm:$0xf]
  %v540 = vld [vmem:[%s1 + $0x514] sm:$0xf]
  %v541 = vld [vmem:[%s1 + $0x518] sm:$0xf]
  %v542 = vld [vmem:[%s1 + $0x51c] sm:$0xf]
  %v543 = vld [vmem:[%s1 + $0x520] sm:$0xf]
  %v544 = vld [vmem:[%s1 + $0x524] sm:$0xf]
  %v545 = vld [vmem:[%s1 + $0x528] sm:$0xf]
  %v546 = vld [vmem:[%s1 + $0x52c] sm:$0xf]
  %v547 = vld [vmem:[%s1 + $0x530] sm:$0xf]
  %v548 = vld [vmem:[%s1 + $0x534] sm:$0xf]
  %v549 = vld [vmem:[%s1 + $0x538] sm:$0xf]
  %v550 = vld [vmem:[%s1 + $0x53c] sm:$0xf]
  %v551 = vld [vmem:[%s1 + $0x540] sm:$0xf]
  %v552 = vld [vmem:[%s1 + $0x544] sm:$0xf]
  %v553 = vld [vmem:[%s1 + $0x548] sm:$0xf]
  %v554 = vld [vmem:[%s1 + $0x54c] sm:$0xf]
  %v555 = vld [vmem:[%s1 + $0x550] sm:$0xf]
  %v556 = vld [vmem:[%s1 + $0x554] sm:$0xf]
  %v557 = vld [vmem:[%s1 + $0x558] sm:$0xf]
  %v558 = vld [vmem:[%s1 + $0x55c] sm:$0xf]
  %v559 = vld [vmem:[%s1 + $0x560] sm:$0xf]
  %v560 = vld [vmem:[%s1 + $0x564] sm:$0xf]
  %v561 = vld [vmem:[%s1 + $0x568] sm:$0xf]
  %v562 = vld [vmem:[%s1 + $0x56c] sm:$0xf]
  %v563 = vld [vmem:[%s1 + $0x570] sm:$0xf]
  %v564 = vld [vmem:[%s1 + $0x574] sm:$0xf]
  %v565 = vld [vmem:[%s1 + $0x578] sm:$0xf]
  %v566 = vld [vmem:[%s1 + $0x57c] sm:$0xf]
  %v567 = vld [vmem:[%s1 + $0x580] sm:$0xf]
  %v568 = vld [vmem:[%s1 + $0x584] sm:$0xf]
  %v569 = vld [vmem:[%s1 + $0x588] sm:$0xf]
  %v570 = vld [vmem:[%s1 + $0x58c] sm:$0xf]
  %v571 = vld [vmem:[%s1 + $0x590] sm:$0xf]
  %v572 = vld [vmem:[%s1 + $0x594] sm:$0xf]
  %v573 = vld [vmem:[%s1 + $0x598] sm:$0xf]
  %v574 = vld [vmem:[%s1 + $0x59c] sm:$0xf]
  %v575 = vld [vmem:[%s1 + $0x5a0] sm:$0xf]
  %v576 = vld [vmem:[%s1 + $0x5a4] sm:$0xf]
  %v577 = vld [vmem:[%s1 + $0x5a8] sm:$0xf]
  %v578 = vld [vmem:[%s1 + $0x5ac] sm:$0xf]
  %v579 = vld [vmem:[%s1 + $0x5b0] sm:$0xf]
  %v580 = vld [vmem:[%s1 + $0x5b4] sm:$0xf]
  %v581 = vld [vmem:[%s1 + $0x5b8] sm:$0xf]
  %v582 = vld [vmem:[%s1 + $0x5bc] sm:$0xf]
  %v583 = vld [vmem:[%s1 + $0x5c0] sm:$0xf]
  %v584 = vld [vmem:[%s1 + $0x5c4] sm:$0xf]
  %v585 = vld [vmem:[%s1 + $0x5c8] sm:$0xf]
  %v586 = vld [vmem:[%s1 + $0x5cc] sm:$0xf]
  %v587 = vld [vmem:[%s1 + $0x5d0] sm:$0xf]
  %v588 = vld [vmem:[%s1 + $0x5d4] sm:$0xf]
  %v589 = vld [vmem:[%s1 + $0x5d8] sm:$0xf]
  %v590 = vld [vmem:[%s1 + $0x5dc] sm:$0xf]
  %v591 = vld [vmem:[%s1 + $0x5e0] sm:$0xf]
  %v592 = vld [vmem:[%s1 + $0x5e4] sm:$0xf]
  %v593 = vld [vmem:[%s1 + $0x5e8] sm:$0xf]
  %v594 = vld [vmem:[%s1 + $0x5ec] sm:$0xf]
  %v595 = vld [vmem:[%s1 + $0x5f0] sm:$0xf]
  %v596 = vld [vmem:[%s1 + $0x5f4] sm:$0xf]
  %v597 = vld [vmem:[%s1 + $0x5f8] sm:$0xf]
  %v598 = vld [vmem:[%s1 + $0x5fc] sm:$0xf]
  %v599 = vld [vmem:[%s1 + $0x600] sm:$0xf]
  %v600 = vld [vmem:[%s1 + $0x604] sm:$0xf]
  %v601 = vld [vmem:[%s1 + $0x608] sm:$0xf]
  %v602 = vld [vmem:[%s1 + $0x60c] sm:$0xf]
  %v603 = vld [vmem:[%s1 + $0x610] sm:$0xf]
  %v604 = vld [vmem:[%s1 + $0x614] sm:$0xf]
  %v605 = vld [vmem:[%s1 + $0x618] sm:$0xf]
  %v606 = vld [vmem:[%s1 + $0x61c] sm:$0xf]
  %v607 = vld [vmem:[%s1 + $0x620] sm:$0xf]
  %v608 = vld [vmem:[%s1 + $0x624] sm:$0xf]
  %v609 = vld [vmem:[%s1 + $0x628] sm:$0xf]
  %v610 = vld [vmem:[%s1 + $0x62c] sm:$0xf]
  %v611 = vld [vmem:[%s1 + $0x630] sm:$0xf]
  %v612 = vld [vmem:[%s1 + $0x634] sm:$0xf]
  %v613 = vld [vmem:[%s1 + $0x638] sm:$0xf]
  %v614 = vld [vmem:[%s1 + $0x63c] sm:$0xf]
  %v615 = vld [vmem:[%s1 + $0x640] sm:$0xf]
  %v616 = vld [vmem:[%s1 + $0x644] sm:$0xf]
  %v617 = vld [vmem:[%s1 + $0x648] sm:$0xf]
  %v618 = vld [vmem:[%s1 + $0x64c] sm:$0xf]
  %v619 = vld [vmem:[%s1 + $0x650] sm:$0xf]
  %v620 = vld [vmem:[%s1 + $0x654] sm:$0xf]
  %v621 = vld [vmem:[%s1 + $0x658] sm:$0xf]
  %v622 = vld [vmem:[%s1 + $0x65c] sm:$0xf]
  %v623 = vld [vmem:[%s1 + $0x660] sm:$0xf]
  %v624 = vld [vmem:[%s1 + $0x664] sm:$0xf]
  %v625 = vld [vmem:[%s1 + $0x668] sm:$0xf]
  %v626 = vld [vmem:[%s1 + $0x66c] sm:$0xf]
  %v627 = vld [vmem:[%s1 + $0x670] sm:$0xf]
  %v628 = vld [vmem:[%s1 + $0x674] sm:$0xf]
  %v629 = vld [vmem:[%s1 + $0x678] sm:$0xf]
  %v630 = vld [vmem:[%s1 + $0x67c] sm:$0xf]
  %v631 = vld [vmem:[%s1 + $0x680] sm:$0xf]
  %v632 = vld [vmem:[%s1 + $0x684] sm:$0xf]
  %v633 = vld [vmem:[%s1 + $0x688] sm:$0xf]
  %v634 = vld [vmem:[%s1 + $0x68c] sm:$0xf]
  %v635 = vld [vmem:[%s1 + $0x690] sm:$0xf]
  %v636 = vld [vmem:[%s1 + $0x694] sm:$0xf]
  %v637 = vld [vmem:[%s1 + $0x698] sm:$0xf]
  %v638 = vld [vmem:[%s1 + $0x69c] sm:$0xf]
  %v639 = vld [vmem:[%s1 + $0x6a0] sm:$0xf]
  %v640 = vld [vmem:[%s1 + $0x6a4] sm:$0xf]
  %v641 = vld [vmem:[%s1 + $0x6a8] sm:$0xf]
  %v642 = vld [vmem:[%s1 + $0x6ac] sm:$0xf]
  %v643 = vld [vmem:[%s1 + $0x6b0] sm:$0xf]
  %v644 = vld [vmem:[%s1 + $0x6b4] sm:$0xf]
  %v645 = vld [vmem:[%s1 + $0x6b8] sm:$0xf]
  %v646 = vld [vmem:[%s1 + $0x6bc] sm:$0xf]
  %v647 = vld [vmem:[%s1 + $0x6c0] sm:$0xf]
  %v648 = vld [vmem:[%s1 + $0x6c4] sm:$0xf]
  %v649 = vld [vmem:[%s1 + $0x6c8] sm:$0xf]
  %v650 = vld [vmem:[%s1 + $0x6cc] sm:$0xf]
  %v651 = vld [vmem:[%s1 + $0x6d0] sm:$0xf]
  %v652 = vld [vmem:[%s1 + $0x6d4] sm:$0xf]
  %v653 = vld [vmem:[%s1 + $0x6d8] sm:$0xf]
  %v654 = vld [vmem:[%s1 + $0x6dc] sm:$0xf]
  %v655 = vld [vmem:[%s1 + $0x6e0] sm:$0xf]
  %v656 = vld [vmem:[%s1 + $0x6e4] sm:$0xf]
  %v657 = vld [vmem:[%s1 + $0x6e8] sm:$0xf]
  %v658 = vld [vmem:[%s1 + $0x6ec] sm:$0xf]
  %v659 = vld [vmem:[%s1 + $0x6f0] sm:$0xf]
  %v660 = vld [vmem:[%s1 + $0x6f4] sm:$0xf]
  %v661 = vld [vmem:[%s1 + $0x6f8] sm:$0xf]
  %v662 = vld [vmem:[%s1 + $0x6fc] sm:$0xf]
  %v663 = vld [vmem:[%s1 + $0x700] sm:$0xf]
  %v664 = vld [vmem:[%s1 + $0x704] sm:$0xf]
  %v665 = vld [vmem:[%s1 + $0x708] sm:$0xf]
  %v666 = vld [vmem:[%s1 + $0x70c] sm:$0xf]
  %v667 = vld [vmem:[%s1 + $0x710] sm:$0xf]
  %v668 = vld [vmem:[%s1 + $0x714] sm:$0xf]
  %v669 = vld [vmem:[%s1 + $0x718] sm:$0xf]
  %v670 = vld [vmem:[%s1 + $0x71c] sm:$0xf]
  %v671 = vld [vmem:[%s1 + $0x720] sm:$0xf]
  %v672 = vld [vmem:[%s1 + $0x724] sm:$0xf]
  %v673 = vld [vmem:[%s1 + $0x728] sm:$0xf]
  %v674 = vld [vmem:[%s1 + $0x72c] sm:$0xf]
  %v675 = vld [vmem:[%s1 + $0x730] sm:$0xf]
  %v676 = vld [vmem:[%s1 + $0x734] sm:$0xf]
  %v677 = vld [vmem:[%s1 + $0x738] sm:$0xf]
  %v678 = vld [vmem:[%s1 + $0x73c] sm:$0xf]
  %v679 = vld [vmem:[%s1 + $0x740] sm:$0xf]
  %v680 = vld [vmem:[%s1 + $0x744] sm:$0xf]
  %v681 = vld [vmem:[%s1 + $0x748] sm:$0xf]
  %v682 = vld [vmem:[%s1 + $0x74c] sm:$0xf]
  %v683 = vld [vmem:[%s1 + $0x750] sm:$0xf]
  %v684 = vld [vmem:[%s1 + $0x754] sm:$0xf]
  %v685 = vld [vmem:[%s1 + $0x758] sm:$0xf]
  %v686 = vld [vmem:[%s1 + $0x75c] sm:$0xf]
  %v687 = vld [vmem:[%s1 + $0x760] sm:$0xf]
  %v688 = vld [vmem:[%s1 + $0x764] sm:$0xf]
  %v689 = vld [vmem:[%s1 + $0x768] sm:$0xf]
  %v690 = vld [vmem:[%s1 + $0x76c] sm:$0xf]
  %v691 = vld [vmem:[%s1 + $0x770] sm:$0xf]
  %v692 = vld [vmem:[%s1 + $0x774] sm:$0xf]
  %v693 = vld [vmem:[%s1 + $0x778] sm:$0xf]
  %v694 = vld [vmem:[%s1 + $0x77c] sm:$0xf]
  %v695 = vld [vmem:[%s1 + $0x780] sm:$0xf]
  %v696 = vld [vmem:[%s1 + $0x784] sm:$0xf]
  %v697 = vld [vmem:[%s1 + $0x788] sm:$0xf]
  %v698 = vld [vmem:[%s1 + $0x78c] sm:$0xf]
  %v699 = vld [vmem:[%s1 + $0x790] sm:$0xf]
  %v700 = vld [vmem:[%s1 + $0x794] sm:$0xf]
  %v701 = vld [vmem:[%s1 + $0x798] sm:$0xf]
  %v702 = vld [vmem:[%s1 + $0x79c] sm:$0xf]
  %v703 = vld [vmem:[%s1 + $0x7a0] sm:$0xf]
  %v704 = vld [vmem:[%s1 + $0x7a4] sm:$0xf]
  %v705 = vld [vmem:[%s1 + $0x7a8] sm:$0xf]
  %v706 = vld [vmem:[%s1 + $0x7ac] sm:$0xf]
  %v707 = vld [vmem:[%s1 + $0x7b0] sm:$0xf]
  %v708 = vld [vmem:[%s1 + $0x7b4] sm:$0xf]
  %v709 = vld [vmem:[%s1 + $0x7b8] sm:$0xf]
  %v710 = vld [vmem:[%s1 + $0x7bc] sm:$0xf]
  %v711 = vld [vmem:[%s1 + $0x7c0] sm:$0xf]
  %v712 = vld [vmem:[%s1 + $0x7c4] sm:$0xf]
  %v713 = vld [vmem:[%s1 + $0x7c8] sm:$0xf]
  %v714 = vld [vmem:[%s1 + $0x7cc] sm:$0xf]
  %v715 = vld [vmem:[%s1 + $0x7d0] sm:$0xf]
  %v716 = vld [vmem:[%s1 + $0x7d4] sm:$0xf]
  %v717 = vld [vmem:[%s1 + $0x7d8] sm:$0xf]
  %v718 = vld [vmem:[%s1 + $0x7dc] sm:$0xf]
  %v719 = vld [vmem:[%s1 + $0x7e0] sm:$0xf]
  %v720 = vld [vmem:[%s1 + $0x7e4] sm:$0xf]
  %v721 = vld [vmem:[%s1 + $0x7e8] sm:$0xf]
  %v722 = vld [vmem:[%s1 + $0x7ec] sm:$0xf]
  %v723 = vld [vmem:[%s1 + $0x7f0] sm:$0xf]
  %v724 = vld [vmem:[%s1 + $0x7f4] sm:$0xf]
  %v725 = vld [vmem:[%s1 + $0x7f8] sm:$0xf]
  %v726 = vld [vmem:[%s1 + $0x7fc] sm:$0xf]
  %v727 = vld [vmem:[%s1 + $0x800] sm:$0xf]
  %v728 = vld [vmem:[%s1 + $0x804] sm:$0xf]
  %v729 = vld [vmem:[%s1 + $0x808] sm:$0xf]
  %v730 = vld [vmem:[%s1 + $0x80c] sm:$0xf]
  %v731 = vld [vmem:[%s1 + $0x810] sm:$0xf]
  %v732 = vld [vmem:[%s1 + $0x814] sm:$0xf]
  %v733 = vld [vmem:[%s1 + $0x818] sm:$0xf]
  %v734 = vld [vmem:[%s1 + $0x81c] sm:$0xf]
  %v735 = vld [vmem:[%s1 + $0x820] sm:$0xf]
  %v736 = vld [vmem:[%s1 + $0x824] sm:$0xf]
  %v737 = vld [vmem:[%s1 + $0x828] sm:$0xf]
  %v738 = vld [vmem:[%s1 + $0x82c] sm:$0xf]
  %v739 = vld [vmem:[%s1 + $0x830] sm:$0xf]
  %v740 = vld [vmem:[%s1 + $0x834] sm:$0xf]
  %v741 = vld [vmem:[%s1 + $0x838] sm:$0xf]
  %v742 = vld [vmem:[%s1 + $0x83c] sm:$0xf]
  %v743 = vld [vmem:[%s1 + $0x840] sm:$0xf]
  %v744 = vld [vmem:[%s1 + $0x844] sm:$0xf]
  %v745 = vld [vmem:[%s1 + $0x848] sm:$0xf]
  %v746 = vld [vmem:[%s1 + $0x84c] sm:$0xf]
  %v747 = vld [vmem:[%s1 + $0x850] sm:$0xf]
  %v748 = vld [vmem:[%s1 + $0x854] sm:$0xf]
  %v749 = vld [vmem:[%s1 + $0x858] sm:$0xf]
  %v750 = vld [vmem:[%s1 + $0x85c] sm:$0xf]
  %v751 = vld [vmem:[%s1 + $0x860] sm:$0xf]
  %v752 = vld [vmem:[%s1 + $0x864] sm:$0xf]
  %v753 = vld [vmem:[%s1 + $0x868] sm:$0xf]
  %v754 = vld [vmem:[%s1 + $0x86c] sm:$0xf]
  %v755 = vld [vmem:[%s1 + $0x870] sm:$0xf]
  %v756 = vld [vmem:[%s1 + $0x874] sm:$0xf]
  %v757 = vld [vmem:[%s1 + $0x878] sm:$0xf]
  %v758 = vld [vmem:[%s1 + $0x87c] sm:$0xf]
  %v759 = vld [vmem:[%s1 + $0x880] sm:$0xf]
  %v760 = vld [vmem:[%s1 + $0x884] sm:$0xf]
  %v761 = vld [vmem:[%s1 + $0x888] sm:$0xf]
  %v762 = vld [vmem:[%s1 + $0x88c] sm:$0xf]
  %v763 = vld [vmem:[%s1 + $0x890] sm:$0xf]
  %v764 = vld [vmem:[%s1 + $0x894] sm:$0xf]
  %v765 = vld [vmem:[%s1 + $0x898] sm:$0xf]
  %v766 = vld [vmem:[%s1 + $0x89c] sm:$0xf]
  %v767 = vld [vmem:[%s1 + $0x8a0] sm:$0xf]
  %v768 = vld [vmem:[%s1 + $0x8a4] sm:$0xf]
  %v769 = vld [vmem:[%s1 + $0x8a8] sm:$0xf]
  %v770 = vld [vmem:[%s1 + $0x8ac] sm:$0xf]
  %v771 = vld [vmem:[%s1 + $0x8b0] sm:$0xf]
  %v772 = vld [vmem:[%s1 + $0x8b4] sm:$0xf]
  %v773 = vld [vmem:[%s1 + $0x8b8] sm:$0xf]
  %v774 = vld [vmem:[%s1 + $0x8bc] sm:$0xf]
  %v775 = vld [vmem:[%s1 + $0x8c0] sm:$0xf]
  %v776 = vld [vmem:[%s1 + $0x8c4] sm:$0xf]
  %v777 = vld [vmem:[%s1 + $0x8c8] sm:$0xf]
  %v778 = vld [vmem:[%s1 + $0x8cc] sm:$0xf]
  %v779 = vld [vmem:[%s1 + $0x8d0] sm:$0xf]
  %v780 = vld [vmem:[%s1 + $0x8d4] sm:$0xf]
  %v781 = vld [vmem:[%s1 + $0x8d8] sm:$0xf]
  %v782 = vld [vmem:[%s1 + $0x8dc] sm:$0xf]
  %v783 = vld [vmem:[%s1 + $0x8e0] sm:$0xf]
  %v784 = vld [vmem:[%s1 + $0x8e4] sm:$0xf]
  %v785 = vld [vmem:[%s1 + $0x8e8] sm:$0xf]
  %v786 = vld [vmem:[%s1 + $0x8ec] sm:$0xf]
  %v787 = vld [vmem:[%s1 + $0x8f0] sm:$0xf]
  %v788 = vld [vmem:[%s1 + $0x8f4] sm:$0xf]
  %v789 = vld [vmem:[%s1 + $0x8f8] sm:$0xf]
  %v790 = vld [vmem:[%s1 + $0x8fc] sm:$0xf]
  %v791 = vld [vmem:[%s1 + $0x900] sm:$0xf]
  %v792 = vld [vmem:[%s1 + $0x904] sm:$0xf]
  %v793 = vld [vmem:[%s1 + $0x908] sm:$0xf]
  %v794 = vld [vmem:[%s1 + $0x90c] sm:$0xf]
  %v795 = vld [vmem:[%s1 + $0x910] sm:$0xf]
  %v796 = vld [vmem:[%s1 + $0x914] sm:$0xf]
  %v797 = vld [vmem:[%s1 + $0x918] sm:$0xf]
  %v798 = vld [vmem:[%s1 + $0x91c] sm:$0xf]
  %v799 = vld [vmem:[%s1 + $0x920] sm:$0xf]
  %v800 = vld [vmem:[%s1 + $0x924] sm:$0xf]
  %v801 = vld [vmem:[%s1 + $0x928] sm:$0xf]
  %v802 = vld [vmem:[%s1 + $0x92c] sm:$0xf]
  %v803 = vld [vmem:[%s1 + $0x930] sm:$0xf]
  %v804 = vld [vmem:[%s1 + $0x934] sm:$0xf]
  %v805 = vld [vmem:[%s1 + $0x938] sm:$0xf]
  %v806 = vld [vmem:[%s1 + $0x93c] sm:$0xf]
  %v807 = vld [vmem:[%s1 + $0x940] sm:$0xf]
  %v808 = vld [vmem:[%s1 + $0x944] sm:$0xf]
  %v809 = vld [vmem:[%s1 + $0x948] sm:$0xf]
  %v810 = vld [vmem:[%s1 + $0x94c] sm:$0xf]
  %v811 = vld [vmem:[%s1 + $0x950] sm:$0xf]
  %v812 = vld [vmem:[%s1 + $0x954] sm:$0xf]
  %v813 = vld [vmem:[%s1 + $0x958] sm:$0xf]
  %v814 = vld [vmem:[%s1 + $0x95c] sm:$0xf]
  %v815 = vld [vmem:[%s1 + $0x960] sm:$0xf]
  %v816 = vld [vmem:[%s1 + $0x964] sm:$0xf]
  %v817 = vld [vmem:[%s1 + $0x968] sm:$0xf]
  %v818 = vld [vmem:[%s1 + $0x96c] sm:$0xf]
  %v819 = vld [vmem:[%s1 + $0x970] sm:$0xf]
  %v820 = vld [vmem:[%s1 + $0x974] sm:$0xf]
  %v821 = vld [vmem:[%s1 + $0x978] sm:$0xf]
  %v822 = vld [vmem:[%s1 + $0x97c] sm:$0xf]
  %v823 = vld [vmem:[%s1 + $0x980] sm:$0xf]
  %v824 = vld [vmem:[%s1 + $0x984] sm:$0xf]
  %v825 = vld [vmem:[%s1 + $0x988] sm:$0xf]
  %v826 = vld [vmem:[%s1 + $0x98c] sm:$0xf]
  %v827 = vld [vmem:[%s1 + $0x990] sm:$0xf]
  %v828 = vld [vmem:[%s1 + $0x994] sm:$0xf]
  %v829 = vld [vmem:[%s1 + $0x998] sm:$0xf]
  %v830 = vld [vmem:[%s1 + $0x99c] sm:$0xf]
  %v831 = vld [vmem:[%s1 + $0x9a0] sm:$0xf]
  %v832 = vld [vmem:[%s1 + $0x9a4] sm:$0xf]
  %v833 = vld [vmem:[%s1 + $0x9a8] sm:$0xf]
  %v834 = vld [vmem:[%s1 + $0x9ac] sm:$0xf]
  %v835 = vld [vmem:[%s1 + $0x9b0] sm:$0xf]
  %v836 = vld [vmem:[%s1 + $0x9b4] sm:$0xf]
  %v837 = vld [vmem:[%s1 + $0x9b8] sm:$0xf]
  %v838 = vld [vmem:[%s1 + $0x9bc] sm:$0xf]
  %v839 = vld [vmem:[%s1 + $0x9c0] sm:$0xf]
  %v840 = vld [vmem:[%s1 + $0x9c4] sm:$0xf]
  %v841 = vld [vmem:[%s1 + $0x9c8] sm:$0xf]
  %v842 = vld [vmem:[%s1 + $0x9cc] sm:$0xf]
  %v843 = vld [vmem:[%s1 + $0x9d0] sm:$0xf]
  %v844 = vld [vmem:[%s1 + $0x9d4] sm:$0xf]
  %v845 = vld [vmem:[%s1 + $0x9d8] sm:$0xf]
  %v846 = vld [vmem:[%s1 + $0x9dc] sm:$0xf]
  %v847 = vld [vmem:[%s1 + $0x9e0] sm:$0xf]
  %v848 = vld [vmem:[%s1 + $0x9e4] sm:$0xf]
  %v849 = vld [vmem:[%s1 + $0x9e8] sm:$0xf]
  %v850 = vld [vmem:[%s1 + $0x9ec] sm:$0xf]
  %v851 = vld [vmem:[%s1 + $0x9f0] sm:$0xf]
  %v852 = vld [vmem:[%s1 + $0x9f4] sm:$0xf]
  %v853 = vld [vmem:[%s1 + $0x9f8] sm:$0xf]
  %v854 = vld [vmem:[%s1 + $0x9fc] sm:$0xf]
  %v855 = vld [vmem:[%s1 + $0xa00] sm:$0xf]
  %v856 = vld [vmem:[%s1 + $0xa04] sm:$0xf]
  %v857 = vld [vmem:[%s1 + $0xa08] sm:$0xf]
  %v858 = vld [vmem:[%s1 + $0xa0c] sm:$0xf]
  %v859 = vld [vmem:[%s1 + $0xa10] sm:$0xf]
  %v860 = vld [vmem:[%s1 + $0xa14] sm:$0xf]
  %v861 = vld [vmem:[%s1 + $0xa18] sm:$0xf]
  %v862 = vld [vmem:[%s1 + $0xa1c] sm:$0xf]
  %v863 = vld [vmem:[%s1 + $0xa20] sm:$0xf]
  %v864 = vld [vmem:[%s1 + $0xa24] sm:$0xf]
  %v865 = vld [vmem:[%s1 + $0xa28] sm:$0xf]
  %v866 = vld [vmem:[%s1 + $0xa2c] sm:$0xf]
  %v867 = vld [vmem:[%s1 + $0xa30] sm:$0xf]
  %v868 = vld [vmem:[%s1 + $0xa34] sm:$0xf]
  %v869 = vld [vmem:[%s1 + $0xa38] sm:$0xf]
  %v870 = vld [vmem:[%s1 + $0xa3c] sm:$0xf]
  %v871 = vld [vmem:[%s1 + $0xa40] sm:$0xf]
  %v872 = vld [vmem:[%s1 + $0xa44] sm:$0xf]
  %v873 = vld [vmem:[%s1 + $0xa48] sm:$0xf]
  %v874 = vld [vmem:[%s1 + $0xa4c] sm:$0xf]
  %v875 = vld [vmem:[%s1 + $0xa50] sm:$0xf]
  %v876 = vld [vmem:[%s1 + $0xa54] sm:$0xf]
  %v877 = vld [vmem:[%s1 + $0xa58] sm:$0xf]
  %v878 = vld [vmem:[%s1 + $0xa5c] sm:$0xf]
  %v879 = vld [vmem:[%s1 + $0xa60] sm:$0xf]
  %v880 = vld [vmem:[%s1 + $0xa64] sm:$0xf]
  %v881 = vld [vmem:[%s1 + $0xa68] sm:$0xf]
  %v882 = vld [vmem:[%s1 + $0xa6c] sm:$0xf]
  %v883 = vld [vmem:[%s1 + $0xa70] sm:$0xf]
  %v884 = vld [vmem:[%s1 + $0xa74] sm:$0xf]
  %v885 = vld [vmem:[%s1 + $0xa78] sm:$0xf]
  %v886 = vld [vmem:[%s1 + $0xa7c] sm:$0xf]
  %v887 = vld [vmem:[%s1 + $0xa80] sm:$0xf]
  %v888 = vld [vmem:[%s1 + $0xa84] sm:$0xf]
  %v889 = vld [vmem:[%s1 + $0xa88] sm:$0xf]
  %v890 = vld [vmem:[%s1 + $0xa8c] sm:$0xf]
  %v891 = vld [vmem:[%s1 + $0xa90] sm:$0xf]
  %v892 = vld [vmem:[%s1 + $0xa94] sm:$0xf]
  %v893 = vld [vmem:[%s1 + $0xa98] sm:$0xf]
  %v894 = vld [vmem:[%s1 + $0xa9c] sm:$0xf]
  %v895 = vld [vmem:[%s1 + $0xaa0] sm:$0xf]
  %v896 = vld [vmem:[%s1 + $0xaa4] sm:$0xf]
  %v897 = vld [vmem:[%s1 + $0xaa8] sm:$0xf]
  %v898 = vld [vmem:[%s1 + $0xaac] sm:$0xf]
  %v899 = vld [vmem:[%s1 + $0xab0] sm:$0xf]
  %v900 = vld [vmem:[%s1 + $0xab4] sm:$0xf]
  %v901 = vld [vmem:[%s1 + $0xab8] sm:$0xf]
  %v902 = vld [vmem:[%s1 + $0xabc] sm:$0xf]
  %v903 = vld [vmem:[%s1 + $0xac0] sm:$0xf]
  %v904 = vld [vmem:[%s1 + $0xac4] sm:$0xf]
  %v905 = vld [vmem:[%s1 + $0xac8] sm:$0xf]
  %v906 = vld [vmem:[%s1 + $0xacc] sm:$0xf]
  %v907 = vld [vmem:[%s1 + $0xad0] sm:$0xf]
  %v908 = vld [vmem:[%s1 + $0xad4] sm:$0xf]
  %v909 = vld [vmem:[%s1 + $0xad8] sm:$0xf]
  %v910 = vld [vmem:[%s1 + $0xadc] sm:$0xf]
  %v911 = vld [vmem:[%s1 + $0xae0] sm:$0xf]
  %v912 = vld [vmem:[%s1 + $0xae4] sm:$0xf]
  %v913 = vld [vmem:[%s1 + $0xae8] sm:$0xf]
  %v914 = vld [vmem:[%s1 + $0xaec] sm:$0xf]
  %v915 = vld [vmem:[%s1 + $0xaf0] sm:$0xf]
  %v916 = vld [vmem:[%s1 + $0xaf4] sm:$0xf]
  %v917 = vld [vmem:[%s1 + $0xaf8] sm:$0xf]
  %v918 = vld [vmem:[%s1 + $0xafc] sm:$0xf]
  %v919 = vld [vmem:[%s1 + $0xb00] sm:$0xf]
  %v920 = vld [vmem:[%s1 + $0xb04] sm:$0xf]
  %v921 = vld [vmem:[%s1 + $0xb08] sm:$0xf]
  %v922 = vld [vmem:[%s1 + $0xb0c] sm:$0xf]
  %v923 = vld [vmem:[%s1 + $0xb10] sm:$0xf]
  %v924 = vld [vmem:[%s1 + $0xb14] sm:$0xf]
  %v925 = vld [vmem:[%s1 + $0xb18] sm:$0xf]
  %v926 = vld [vmem:[%s1 + $0xb1c] sm:$0xf]
  %v927 = vld [vmem:[%s1 + $0xb20] sm:$0xf]
  %v928 = vld [vmem:[%s1 + $0xb24] sm:$0xf]
  %v929 = vld [vmem:[%s1 + $0xb28] sm:$0xf]
  %v930 = vld [vmem:[%s1 + $0xb2c] sm:$0xf]
  %v931 = vld [vmem:[%s1 + $0xb30] sm:$0xf]
  %v932 = vld [vmem:[%s1 + $0xb34] sm:$0xf]
  %v933 = vld [vmem:[%s1 + $0xb38] sm:$0xf]
  %v934 = vld [vmem:[%s1 + $0xb3c] sm:$0xf]
  %v935 = vld [vmem:[%s1 + $0xb40] sm:$0xf]
  %v936 = vld [vmem:[%s1 + $0xb44] sm:$0xf]
  %v937 = vld [vmem:[%s1 + $0xb48] sm:$0xf]
  %v938 = vld [vmem:[%s1 + $0xb4c] sm:$0xf]
  %v939 = vld [vmem:[%s1 + $0xb50] sm:$0xf]
  %v940 = vld [vmem:[%s1 + $0xb54] sm:$0xf]
  %v941 = vld [vmem:[%s1 + $0xb58] sm:$0xf]
  %v942 = vld [vmem:[%s1 + $0xb5c] sm:$0xf]
  %v943 = vld [vmem:[%s1 + $0xb60] sm:$0xf]
  %v944 = vld [vmem:[%s1 + $0xb64] sm:$0xf]
  %v945 = vld [vmem:[%s1 + $0xb68] sm:$0xf]
  %v946 = vld [vmem:[%s1 + $0xb6c] sm:$0xf]
  %v947 = vld [vmem:[%s1 + $0xb70] sm:$0xf]
  %v948 = vld [vmem:[%s1 + $0xb74] sm:$0xf]
  %v949 = vld [vmem:[%s1 + $0xb78] sm:$0xf]
  %v950 = vld [vmem:[%s1 + $0xb7c] sm:$0xf]
  %v951 = vld [vmem:[%s1 + $0xb80] sm:$0xf]
  %v952 = vld [vmem:[%s1 + $0xb84] sm:$0xf]
  %v953 = vld [vmem:[%s1 + $0xb88] sm:$0xf]
  %v954 = vld [vmem:[%s1 + $0xb8c] sm:$0xf]
  %v955 = vld [vmem:[%s1 + $0xb90] sm:$0xf]
  %v956 = vld [vmem:[%s1 + $0xb94] sm:$0xf]
  %v957 = vld [vmem:[%s1 + $0xb98] sm:$0xf]
  %v958 = vld [vmem:[%s1 + $0xb9c] sm:$0xf]
  %v959 = vld [vmem:[%s1 + $0xba0] sm:$0xf]
  %v960 = vld [vmem:[%s1 + $0xba4] sm:$0xf]
  %v961 = vld [vmem:[%s1 + $0xba8] sm:$0xf]
  %v962 = vld [vmem:[%s1 + $0xbac] sm:$0xf]
  %v963 = vld [vmem:[%s1 + $0xbb0] sm:$0xf]
  %v964 = vld [vmem:[%s1 + $0xbb4] sm:$0xf]
  %v965 = vld [vmem:[%s1 + $0xbb8] sm:$0xf]
  %v966 = vld [vmem:[%s1 + $0xbbc] sm:$0xf]
  %v967 = vld [vmem:[%s1 + $0xbc0] sm:$0xf]
  %v968 = vld [vmem:[%s1 + $0xbc4] sm:$0xf]
  %v969 = vld [vmem:[%s1 + $0xbc8] sm:$0xf]
  %v970 = vld [vmem:[%s1 + $0xbcc] sm:$0xf]
  %v971 = vld [vmem:[%s1 + $0xbd0] sm:$0xf]
  %v972 = vld [vmem:[%s1 + $0xbd4] sm:$0xf]
  %v973 = vld [vmem:[%s1 + $0xbd8] sm:$0xf]
  %v974 = vld [vmem:[%s1 + $0xbdc] sm:$0xf]
  %v975 = vld [vmem:[%s1 + $0xbe0] sm:$0xf]
  %v976 = vld [vmem:[%s1 + $0xbe4] sm:$0xf]
  %v977 = vld [vmem:[%s1 + $0xbe8] sm:$0xf]
  %v978 = vld [vmem:[%s1 + $0xbec] sm:$0xf]
  %v979 = vld [vmem:[%s1 + $0xbf0] sm:$0xf]
  %v980 = vld [vmem:[%s1 + $0xbf4] sm:$0xf]
  %v981 = vld [vmem:[%s1 + $0xbf8] sm:$0xf]
  %v982 = vld [vmem:[%s1 + $0xbfc] sm:$0xf]
  %v983 = vld [vmem:[%s1 + $0xc00] sm:$0xf]
  %v984 = vld [vmem:[%s1 + $0xc04] sm:$0xf]
  %v985 = vld [vmem:[%s1 + $0xc08] sm:$0xf]
  %v986 = vld [vmem:[%s1 + $0xc0c] sm:$0xf]
  %v987 = vld [vmem:[%s1 + $0xc10] sm:$0xf]
  %v988 = vld [vmem:[%s1 + $0xc14] sm:$0xf]
  %v989 = vld [vmem:[%s1 + $0xc18] sm:$0xf]
  %v990 = vld [vmem:[%s1 + $0xc1c] sm:$0xf]
  %v991 = vld [vmem:[%s1 + $0xc20] sm:$0xf]
  %v992 = vld [vmem:[%s1 + $0xc24] sm:$0xf]
  %v993 = vld [vmem:[%s1 + $0xc28] sm:$0xf]
  %v994 = vld [vmem:[%s1 + $0xc2c] sm:$0xf]
  %v995 = vld [vmem:[%s1 + $0xc30] sm:$0xf]
  %v996 = vld [vmem:[%s1 + $0xc34] sm:$0xf]
  %v997 = vld [vmem:[%s1 + $0xc38] sm:$0xf]
  %v998 = vld [vmem:[%s1 + $0xc3c] sm:$0xf]
  %v999 = vld [vmem:[%s1 + $0xc40] sm:$0xf]
  %v1000 = vld [vmem:[%s1 + $0xc44] sm:$0xf]
  %v1001 = vld [vmem:[%s1 + $0xc48] sm:$0xf]
  %v1002 = vld [vmem:[%s1 + $0xc4c] sm:$0xf]
  %v1003 = vld [vmem:[%s1 + $0xc50] sm:$0xf]
  %v1004 = vld [vmem:[%s1 + $0xc54] sm:$0xf]
  %v1005 = vld [vmem:[%s1 + $0xc58] sm:$0xf]
  %v1006 = vld [vmem:[%s1 + $0xc5c] sm:$0xf]
  %v1007 = vld [vmem:[%s1 + $0xc60] sm:$0xf]
  %v1008 = vld [vmem:[%s1 + $0xc64] sm:$0xf]
  %v1009 = vld [vmem:[%s1 + $0xc68] sm:$0xf]
  %v1010 = vld [vmem:[%s1 + $0xc6c] sm:$0xf]
  %v1011 = vld [vmem:[%s1 + $0xc70] sm:$0xf]
  %v1012 = vld [vmem:[%s1 + $0xc74] sm:$0xf]
  %v1013 = vld [vmem:[%s1 + $0xc78] sm:$0xf]
  %v1014 = vld [vmem:[%s1 + $0xc7c] sm:$0xf]
  %v1015 = vld [vmem:[%s1 + $0xc80] sm:$0xf]
  %v1016 = vld [vmem:[%s1 + $0xc84] sm:$0xf]
  %v1017 = vld [vmem:[%s1 + $0xc88] sm:$0xf]
  %v1018 = vld [vmem:[%s1 + $0xc8c] sm:$0xf]
  %v1019 = vld [vmem:[%s1 + $0xc90] sm:$0xf]
  %v1020 = vld [vmem:[%s1 + $0xc94] sm:$0xf]
  %v1021 = vld [vmem:[%s1 + $0xc98] sm:$0xf]
  %v1022 = vld [vmem:[%s1 + $0xc9c] sm:$0xf]
  %v1023 = vld [vmem:[%s1 + $0xca0] sm:$0xf]
  %v1024 = vld [vmem:[%s1 + $0xca4] sm:$0xf]
  %v1025 = vld [vmem:[%s1 + $0xca8] sm:$0xf]
  %v1026 = vld [vmem:[%s1 + $0xcac] sm:$0xf]
  %v1027 = vld [vmem:[%s1 + $0xcb0] sm:$0xf]
  %v1028 = vld [vmem:[%s1 + $0xcb4] sm:$0xf]
  %v1029 = vld [vmem:[%s1 + $0xcb8] sm:$0xf]
  %v1030 = vld [vmem:[%s1 + $0xcbc] sm:$0xf]
  %v1031 = vld [vmem:[%s1 + $0xcc0] sm:$0xf]
  %v1032 = vld [vmem:[%s1 + $0xcc4] sm:$0xf]
  %v1033 = vld [vmem:[%s1 + $0xcc8] sm:$0xf]
  %v1034 = vld [vmem:[%s1 + $0xccc] sm:$0xf]
  %v1035 = vld [vmem:[%s1 + $0xcd0] sm:$0xf]
  %v1036 = vld [vmem:[%s1 + $0xcd4] sm:$0xf]
  %v1037 = vld [vmem:[%s1 + $0xcd8] sm:$0xf]
  %v1038 = vld [vmem:[%s1 + $0xcdc] sm:$0xf]
  %v1039 = vld [vmem:[%s1 + $0xce0] sm:$0xf]
  %v1040 = vld [vmem:[%s1 + $0xce4] sm:$0xf]
  %v1041 = vld [vmem:[%s1 + $0xce8] sm:$0xf]
  %v1042 = vld [vmem:[%s1 + $0xcec] sm:$0xf]
  %v1043 = vld [vmem:[%s1 + $0xcf0] sm:$0xf]
  %v1044 = vld [vmem:[%s1 + $0xcf4] sm:$0xf]
  %v1045 = vld [vmem:[%s1 + $0xcf8] sm:$0xf]
  %v1046 = vld [vmem:[%s1 + $0xcfc] sm:$0xf]
  %v1047 = vld [vmem:[%s1 + $0xd00] sm:$0xf]
  %v1048 = vld [vmem:[%s1 + $0xd04] sm:$0xf]
  %v1049 = vld [vmem:[%s1 + $0xd08] sm:$0xf]
  %v1050 = vld [vmem:[%s1 + $0xd0c] sm:$0xf]
  %v1051 = vld [vmem:[%s1 + $0xd10] sm:$0xf]
  %v1052 = vld [vmem:[%s1 + $0xd14] sm:$0xf]
  %v1053 = vld [vmem:[%s1 + $0xd18] sm:$0xf]
  %v1054 = vld [vmem:[%s1 + $0xd1c] sm:$0xf]
  %v1055 = vld [vmem:[%s1 + $0xd20] sm:$0xf]
  %v1056 = vld [vmem:[%s1 + $0xd24] sm:$0xf]
  %v1057 = vld [vmem:[%s1 + $0xd28] sm:$0xf]
  %v1058 = vld [vmem:[%s1 + $0xd2c] sm:$0xf]
  %v1059 = vld [vmem:[%s1 + $0xd30] sm:$0xf]
  %v1060 = vld [vmem:[%s1 + $0xd34] sm:$0xf]
  %v1061 = vld [vmem:[%s1 + $0xd38] sm:$0xf]
  %v1062 = vld [vmem:[%s1 + $0xd3c] sm:$0xf]
  %v1063 = vld [vmem:[%s1 + $0xd40] sm:$0xf]
  %v1064 = vld [vmem:[%s1 + $0xd44] sm:$0xf]
  %v1065 = vld [vmem:[%s1 + $0xd48] sm:$0xf]
  %v1066 = vld [vmem:[%s1 + $0xd4c] sm:$0xf]
  %v1067 = vld [vmem:[%s1 + $0xd50] sm:$0xf]
  %v1068 = vld [vmem:[%s1 + $0xd54] sm:$0xf]
  %v1069 = vld [vmem:[%s1 + $0xd58] sm:$0xf]
  %v1070 = vld [vmem:[%s1 + $0xd5c] sm:$0xf]
  %v1071 = vld [vmem:[%s1 + $0xd60] sm:$0xf]
  %v1072 = vld [vmem:[%s1 + $0xd64] sm:$0xf]
  %v1073 = vld [vmem:[%s1 + $0xd68] sm:$0xf]
  %v1074 = vld [vmem:[%s1 + $0xd6c] sm:$0xf]
  %v1075 = vld [vmem:[%s1 + $0xd70] sm:$0xf]
  %v1076 = vld [vmem:[%s1 + $0xd74] sm:$0xf]
  %v1077 = vld [vmem:[%s1 + $0xd78] sm:$0xf]
  %v1078 = vld [vmem:[%s1 + $0xd7c] sm:$0xf]
  %v1079 = vld [vmem:[%s1 + $0xd80] sm:$0xf]
  %v1080 = vld [vmem:[%s1 + $0xd84] sm:$0xf]
  %v1081 = vld [vmem:[%s1 + $0xd88] sm:$0xf]
  %v1082 = vld [vmem:[%s1 + $0xd8c] sm:$0xf]
  %v1083 = vld [vmem:[%s1 + $0xd90] sm:$0xf]
  %v1084 = vld [vmem:[%s1 + $0xd94] sm:$0xf]
  %v1085 = vld [vmem:[%s1 + $0xd98] sm:$0xf]
  %v1086 = vld [vmem:[%s1 + $0xd9c] sm:$0xf]
  %v1087 = vld [vmem:[%s1 + $0xda0] sm:$0xf]
  %v1088 = vld [vmem:[%s1 + $0xda4] sm:$0xf]
  %v1089 = vld [vmem:[%s1 + $0xda8] sm:$0xf]
  %v1090 = vld [vmem:[%s1 + $0xdac] sm:$0xf]
  %v1091 = vld [vmem:[%s1 + $0xdb0] sm:$0xf]
  %v1092 = vld [vmem:[%s1 + $0xdb4] sm:$0xf]
  %v1093 = vld [vmem:[%s1 + $0xdb8] sm:$0xf]
  %v1094 = vld [vmem:[%s1 + $0xdbc] sm:$0xf]
  %v1095 = vld [vmem:[%s1 + $0xdc0] sm:$0xf]
  %v1096 = vld [vmem:[%s1 + $0xdc4] sm:$0xf]
  %v1097 = vld [vmem:[%s1 + $0xdc8] sm:$0xf]
  %v1098 = vld [vmem:[%s1 + $0xdcc] sm:$0xf]
  %v1099 = vld [vmem:[%s1 + $0xdd0] sm:$0xf]
  %v1100 = vld [vmem:[%s1 + $0xdd4] sm:$0xf]
  %v1101 = vld [vmem:[%s1 + $0xdd8] sm:$0xf]
  %v1102 = vld [vmem:[%s1 + $0xddc] sm:$0xf]
  %v1103 = vld [vmem:[%s1 + $0xde0] sm:$0xf]
  %v1104 = vld [vmem:[%s1 + $0xde4] sm:$0xf]
  %v1105 = vld [vmem:[%s1 + $0xde8] sm:$0xf]
  %v1106 = vld [vmem:[%s1 + $0xdec] sm:$0xf]
  %v1107 = vld [vmem:[%s1 + $0xdf0] sm:$0xf]
  %v1108 = vld [vmem:[%s1 + $0xdf4] sm:$0xf]
  %v1109 = vld [vmem:[%s1 + $0xdf8] sm:$0xf]
  %v1110 = vld [vmem:[%s1 + $0xdfc] sm:$0xf]
  %v1111 = vld [vmem:[%s1 + $0xe00] sm:$0xf]
  %v1112 = vld [vmem:[%s1 + $0xe04] sm:$0xf]
  %v1113 = vld [vmem:[%s1 + $0xe08] sm:$0xf]
  %v1114 = vld [vmem:[%s1 + $0xe0c] sm:$0xf]
  %v1115 = vld [vmem:[%s1 + $0xe10] sm:$0xf]
  %v1116 = vld [vmem:[%s1 + $0xe14] sm:$0xf]
  %v1117 = vld [vmem:[%s1 + $0xe18] sm:$0xf]
  %v1118 = vld [vmem:[%s1 + $0xe1c] sm:$0xf]
  %v1119 = vld [vmem:[%s1 + $0xe20] sm:$0xf]
  %v1120 = vld [vmem:[%s1 + $0xe24] sm:$0xf]
  %v1121 = vld [vmem:[%s1 + $0xe28] sm:$0xf]
  %v1122 = vld [vmem:[%s1 + $0xe2c] sm:$0xf]
  %v1123 = vld [vmem:[%s1 + $0xe30] sm:$0xf]
  %v1124 = vld [vmem:[%s1 + $0xe34] sm:$0xf]
  %v1125 = vld [vmem:[%s1 + $0xe38] sm:$0xf]
  %v1126 = vld [vmem:[%s1 + $0xe3c] sm:$0xf]
  %v1127 = vld [vmem:[%s1 + $0xe40] sm:$0xf]
  %v1128 = vld [vmem:[%s1 + $0xe44] sm:$0xf]
  %v1129 = vld [vmem:[%s1 + $0xe48] sm:$0xf]
  %v1130 = vld [vmem:[%s1 + $0xe4c] sm:$0xf]
  %v1131 = vld [vmem:[%s1 + $0xe50] sm:$0xf]
  %v1132 = vld [vmem:[%s1 + $0xe54] sm:$0xf]
  %v1133 = vld [vmem:[%s1 + $0xe58] sm:$0xf]
  %v1134 = vld [vmem:[%s1 + $0xe5c] sm:$0xf]
  %v1135 = vld [vmem:[%s1 + $0xe60] sm:$0xf]
  %v1136 = vld [vmem:[%s1 + $0xe64] sm:$0xf]
  %v1137 = vld [vmem:[%s1 + $0xe68] sm:$0xf]
  %v1138 = vld [vmem:[%s1 + $0xe6c] sm:$0xf]
  %v1139 = vld [vmem:[%s1 + $0xe70] sm:$0xf]
  %v1140 = vld [vmem:[%s1 + $0xe74] sm:$0xf]
  %v1141 = vld [vmem:[%s1 + $0xe78] sm:$0xf]
  %v1142 = vld [vmem:[%s1 + $0xe7c] sm:$0xf]
  %v1143 = vld [vmem:[%s1 + $0xe80] sm:$0xf]
  %v1144 = vld [vmem:[%s1 + $0xe84] sm:$0xf]
  %v1145 = vld [vmem:[%s1 + $0xe88] sm:$0xf]
  %v1146 = vld [vmem:[%s1 + $0xe8c] sm:$0xf]
  %v1147 = vld [vmem:[%s1 + $0xe90] sm:$0xf]
  %v1148 = vld [vmem:[%s1 + $0xe94] sm:$0xf]
  %v1149 = vld [vmem:[%s1 + $0xe98] sm:$0xf]
  %v1150 = vld [vmem:[%s1 + $0xe9c] sm:$0xf]
  %v1151 = vld [vmem:[%s1 + $0xea0] sm:$0xf]
  %v1152 = vld [vmem:[%s1 + $0xea4] sm:$0xf]
  %v1153 = vld [vmem:[%s1 + $0xea8] sm:$0xf]
  %v1154 = vld [vmem:[%s1 + $0xeac] sm:$0xf]
  %v1155 = vld [vmem:[%s1 + $0xeb0] sm:$0xf]
  %v1156 = vld [vmem:[%s1 + $0xeb4] sm:$0xf]
  %v1157 = vld [vmem:[%s1 + $0xeb8] sm:$0xf]
  %v1158 = vld [vmem:[%s1 + $0xebc] sm:$0xf]
  %v1159 = vld [vmem:[%s1 + $0xec0] sm:$0xf]
  %v1160 = vld [vmem:[%s1 + $0xec4] sm:$0xf]
  %v1161 = vld [vmem:[%s1 + $0xec8] sm:$0xf]
  %v1162 = vld [vmem:[%s1 + $0xecc] sm:$0xf]
  %v1163 = vld [vmem:[%s1 + $0xed0] sm:$0xf]
  %v1164 = vld [vmem:[%s1 + $0xed4] sm:$0xf]
  %v1165 = vld [vmem:[%s1 + $0xed8] sm:$0xf]
  %v1166 = vld [vmem:[%s1 + $0xedc] sm:$0xf]
  %v1167 = vld [vmem:[%s1 + $0xee0] sm:$0xf]
  %v1168 = vld [vmem:[%s1 + $0xee4] sm:$0xf]
  %v1169 = vld [vmem:[%s1 + $0xee8] sm:$0xf]
  %v1170 = vld [vmem:[%s1 + $0xeec] sm:$0xf]
  %v1171 = vld [vmem:[%s1 + $0xef0] sm:$0xf]
  %v1172 = vld [vmem:[%s1 + $0xef4] sm:$0xf]
  %v1173 = vld [vmem:[%s1 + $0xef8] sm:$0xf]
  %v1174 = vld [vmem:[%s1 + $0xefc] sm:$0xf]
  %v1175 = vld [vmem:[%s1 + $0xf00] sm:$0xf]
  %v1176 = vld [vmem:[%s1 + $0xf04] sm:$0xf]
  %v1177 = vld [vmem:[%s1 + $0xf08] sm:$0xf]
  %v1178 = vld [vmem:[%s1 + $0xf0c] sm:$0xf]
  %v1179 = vld [vmem:[%s1 + $0xf10] sm:$0xf]
  %v1180 = vld [vmem:[%s1 + $0xf14] sm:$0xf]
  %v1181 = vld [vmem:[%s1 + $0xf18] sm:$0xf]
  %v1182 = vld [vmem:[%s1 + $0xf1c] sm:$0xf]
  %v1183 = vld [vmem:[%s1 + $0xf20] sm:$0xf]
  %v1184 = vld [vmem:[%s1 + $0xf24] sm:$0xf]
  %v1185 = vld [vmem:[%s1 + $0xf28] sm:$0xf]
  %v1186 = vld [vmem:[%s1 + $0xf2c] sm:$0xf]
  %v1187 = vld [vmem:[%s1 + $0xf30] sm:$0xf]
  %v1188 = vld [vmem:[%s1 + $0xf34] sm:$0xf]
  %v1189 = vld [vmem:[%s1 + $0xf38] sm:$0xf]
  %v1190 = vld [vmem:[%s1 + $0xf3c] sm:$0xf]
  %v1191 = vld [vmem:[%s1 + $0xf40] sm:$0xf]
  %v1192 = vld [vmem:[%s1 + $0xf44] sm:$0xf]
  %v1193 = vld [vmem:[%s1 + $0xf48] sm:$0xf]
  %v1194 = vld [vmem:[%s1 + $0xf4c] sm:$0xf]
  %v1195 = vld [vmem:[%s1 + $0xf50] sm:$0xf]
  %v1196 = vld [vmem:[%s1 + $0xf54] sm:$0xf]
  %v1197 = vld [vmem:[%s1 + $0xf58] sm:$0xf]
  %v1198 = vld [vmem:[%s1 + $0xf5c] sm:$0xf]
  %v1199 = vld [vmem:[%s1 + $0xf60] sm:$0xf]
  %v1200 = vld [vmem:[%s1 + $0xf64] sm:$0xf]
  %v1201 = vld [vmem:[%s1 + $0xf68] sm:$0xf]
  %v1202 = vld [vmem:[%s1 + $0xf6c] sm:$0xf]
  %v1203 = vld [vmem:[%s1 + $0xf70] sm:$0xf]
  %v1204 = vld [vmem:[%s1 + $0xf74] sm:$0xf]
  %v1205 = vld [vmem:[%s1 + $0xf78] sm:$0xf]
  %v1206 = vld [vmem:[%s1 + $0xf7c] sm:$0xf]
  %v1207 = vld [vmem:[%s1 + $0xf80] sm:$0xf]
  %v1208 = vld [vmem:[%s1 + $0xf84] sm:$0xf]
  %v1209 = vld [vmem:[%s1 + $0xf88] sm:$0xf]
  %v1210 = vld [vmem:[%s1 + $0xf8c] sm:$0xf]
  %v1211 = vld [vmem:[%s1 + $0xf90] sm:$0xf]
  %v1212 = vld [vmem:[%s1 + $0xf94] sm:$0xf]
  %v1213 = vld [vmem:[%s1 + $0xf98] sm:$0xf]
  %v1214 = vld [vmem:[%s1 + $0xf9c] sm:$0xf]
  %v1215 = vld [vmem:[%s1 + $0xfa0] sm:$0xf]
  %v1216 = vld [vmem:[%s1 + $0xfa4] sm:$0xf]
  %v1217 = vld [vmem:[%s1 + $0xfa8] sm:$0xf]
  %v1218 = vld [vmem:[%s1 + $0xfac] sm:$0xf]
  %v1219 = vld [vmem:[%s1 + $0xfb0] sm:$0xf]
  %v1220 = vld [vmem:[%s1 + $0xfb4] sm:$0xf]
  %v1221 = vld [vmem:[%s1 + $0xfb8] sm:$0xf]
  %v1222 = vld [vmem:[%s1 + $0xfbc] sm:$0xf]
  %v1223 = vld [vmem:[%s1 + $0xfc0] sm:$0xf]
  %v1224 = vld [vmem:[%s1 + $0xfc4] sm:$0xf]
  %v1225 = vld [vmem:[%s1 + $0xfc8] sm:$0xf]
  %v1226 = vld [vmem:[%s1 + $0xfcc] sm:$0xf]
  %v1227 = vld [vmem:[%s1 + $0xfd0] sm:$0xf]
  %v1228 = vld [vmem:[%s1 + $0xfd4] sm:$0xf]
  %v1229 = vld [vmem:[%s1 + $0xfd8] sm:$0xf]
  %v1230 = vld [vmem:[%s1 + $0xfdc] sm:$0xf]
  %v1231 = vld [vmem:[%s1 + $0xfe0] sm:$0xf]
  %v1232 = vld [vmem:[%s1 + $0xfe4] sm:$0xf]
  %v1233 = vld [vmem:[%s1 + $0xfe8] sm:$0xf]
  %v1234 = vld [vmem:[%s1 + $0xfec] sm:$0xf]
  %v1235 = vld [vmem:[%s1 + $0xff0] sm:$0xf]
  %v1236 = vld [vmem:[%s1 + $0xff4] sm:$0xf]
  %v1237 = vld [vmem:[%s1 + $0xff8] sm:$0xf]
  %v1238 = vld [vmem:[%s1 + $0xffc] sm:$0xf]
  %v1239 = vld [vmem:[#allocation2] sm:$0x1]
  %v1241 = vlaneseq
  %v1242 = vshrl.u32 %v1241, 7
  %v1243 = vsub.s32 0, %v1242
  %v1244 = vrot.slane %v1239, %v1243
  %1245 = vset.pattern.permute.xlu0 0
  %1246 = vperm.xlu0 %1245, %v1244
  %v1247 = vpop.permute.xlu0 %1246
  %v1441 = vunpack.c.l.b16 %v23
  %v1442 = vunpack.c.h.b16 %v23
  %v1443 = vunpack.c.l.b16 %v24
  %v1444 = vunpack.c.h.b16 %v24
  %v1445 = vunpack.c.l.b16 %v25
  %v1446 = vunpack.c.h.b16 %v25
  %v1447 = vunpack.c.l.b16 %v26
  %v1448 = vunpack.c.h.b16 %v26
  %v1449 = vunpack.c.l.b16 %v27
  %v1450 = vunpack.c.h.b16 %v27
  %v1451 = vunpack.c.l.b16 %v28
  %v1452 = vunpack.c.h.b16 %v28
  %v1453 = vunpack.c.l.b16 %v29
  %v1454 = vunpack.c.h.b16 %v29
  %v1455 = vunpack.c.l.b16 %v30
  %v1456 = vunpack.c.h.b16 %v30
  %v1457 = vunpack.c.l.b16 %v31
  %v1458 = vunpack.c.h.b16 %v31
  %v1459 = vunpack.c.l.b16 %v32
  %v1460 = vunpack.c.h.b16 %v32
  %v1461 = vunpack.c.l.b16 %v33
  %v1462 = vunpack.c.h.b16 %v33
  %v1463 = vunpack.c.l.b16 %v34
  %v1464 = vunpack.c.h.b16 %v34
  %v1465 = vunpack.c.l.b16 %v35
  %v1466 = vunpack.c.h.b16 %v35
  %v1467 = vunpack.c.l.b16 %v36
  %v1468 = vunpack.c.h.b16 %v36
  %v1469 = vunpack.c.l.b16 %v37
  %v1470 = vunpack.c.h.b16 %v37
  %v1471 = vunpack.c.l.b16 %v38
  %v1472 = vunpack.c.h.b16 %v38
  %v1473 = vunpack.c.l.b16 %v39
  %v1474 = vunpack.c.h.b16 %v39
  %v1475 = vunpack.c.l.b16 %v40
  %v1476 = vunpack.c.h.b16 %v40
  %v1477 = vunpack.c.l.b16 %v41
  %v1478 = vunpack.c.h.b16 %v41
  %v1479 = vunpack.c.l.b16 %v42
  %v1480 = vunpack.c.h.b16 %v42
  %v1481 = vunpack.c.l.b16 %v43
  %v1482 = vunpack.c.h.b16 %v43
  %v1483 = vunpack.c.l.b16 %v44
  %v1484 = vunpack.c.h.b16 %v44
  %v1485 = vunpack.c.l.b16 %v45
  %v1486 = vunpack.c.h.b16 %v45
  %v1487 = vunpack.c.l.b16 %v46
  %v1488 = vunpack.c.h.b16 %v46
  %v1489 = vunpack.c.l.b16 %v47
  %v1490 = vunpack.c.h.b16 %v47
  %v1491 = vunpack.c.l.b16 %v48
  %v1492 = vunpack.c.h.b16 %v48
  %v1493 = vunpack.c.l.b16 %v49
  %v1494 = vunpack.c.h.b16 %v49
  %v1495 = vunpack.c.l.b16 %v50
  %v1496 = vunpack.c.h.b16 %v50
  %v1497 = vunpack.c.l.b16 %v51
  %v1498 = vunpack.c.h.b16 %v51
  %v1499 = vunpack.c.l.b16 %v52
  %v1500 = vunpack.c.h.b16 %v52
  %v1501 = vunpack.c.l.b16 %v53
  %v1502 = vunpack.c.h.b16 %v53
  %v1503 = vunpack.c.l.b16 %v54
  %v1504 = vunpack.c.h.b16 %v54
  %v1505 = vunpack.c.l.b16 %v55
  %v1506 = vunpack.c.h.b16 %v55
  %v1507 = vunpack.c.l.b16 %v56
  %v1508 = vunpack.c.h.b16 %v56
  %v1509 = vunpack.c.l.b16 %v57
  %v1510 = vunpack.c.h.b16 %v57
  %v1511 = vunpack.c.l.b16 %v58
  %v1512 = vunpack.c.h.b16 %v58
  %v1513 = vunpack.c.l.b16 %v59
  %v1514 = vunpack.c.h.b16 %v59
  %v1515 = vunpack.c.l.b16 %v60
  %v1516 = vunpack.c.h.b16 %v60
  %v1517 = vunpack.c.l.b16 %v61
  %v1518 = vunpack.c.h.b16 %v61
  %v1519 = vunpack.c.l.b16 %v62
  %v1520 = vunpack.c.h.b16 %v62
  %v1521 = vunpack.c.l.b16 %v63
  %v1522 = vunpack.c.h.b16 %v63
  %v1523 = vunpack.c.l.b16 %v64
  %v1524 = vunpack.c.h.b16 %v64
  %v1525 = vunpack.c.l.b16 %v65
  %v1526 = vunpack.c.h.b16 %v65
  %v1527 = vunpack.c.l.b16 %v66
  %v1528 = vunpack.c.h.b16 %v66
  %v1529 = vunpack.c.l.b16 %v67
  %v1530 = vunpack.c.h.b16 %v67
  %v1531 = vunpack.c.l.b16 %v68
  %v1532 = vunpack.c.h.b16 %v68
  %v1533 = vunpack.c.l.b16 %v69
  %v1534 = vunpack.c.h.b16 %v69
  %v1535 = vunpack.c.l.b16 %v70
  %v1536 = vunpack.c.h.b16 %v70
  %v1537 = vunpack.c.l.b16 %v71
  %v1538 = vunpack.c.h.b16 %v71
  %v1539 = vunpack.c.l.b16 %v72
  %v1540 = vunpack.c.h.b16 %v72
  %v1541 = vunpack.c.l.b16 %v73
  %v1542 = vunpack.c.h.b16 %v73
  %v1543 = vunpack.c.l.b16 %v74
  %v1544 = vunpack.c.h.b16 %v74
  %v1545 = vunpack.c.l.b16 %v75
  %v1546 = vunpack.c.h.b16 %v75
  %v1547 = vunpack.c.l.b16 %v76
  %v1548 = vunpack.c.h.b16 %v76
  %v1549 = vunpack.c.l.b16 %v77
  %v1550 = vunpack.c.h.b16 %v77
  %v1551 = vunpack.c.l.b16 %v78
  %v1552 = vunpack.c.h.b16 %v78
  %v1553 = vunpack.c.l.b16 %v79
  %v1554 = vunpack.c.h.b16 %v79
  %v1555 = vunpack.c.l.b16 %v80
  %v1556 = vunpack.c.h.b16 %v80
  %v1557 = vunpack.c.l.b16 %v81
  %v1558 = vunpack.c.h.b16 %v81
  %v1559 = vunpack.c.l.b16 %v82
  %v1560 = vunpack.c.h.b16 %v82
  %v1561 = vunpack.c.l.b16 %v83
  %v1562 = vunpack.c.h.b16 %v83
  %v1563 = vunpack.c.l.b16 %v84
  %v1564 = vunpack.c.h.b16 %v84
  %v1565 = vunpack.c.l.b16 %v85
  %v1566 = vunpack.c.h.b16 %v85
  %v1567 = vunpack.c.l.b16 %v86
  %v1568 = vunpack.c.h.b16 %v86
  %v1569 = vunpack.c.l.b16 %v87
  %v1570 = vunpack.c.h.b16 %v87
  %v1571 = vunpack.c.l.b16 %v88
  %v1572 = vunpack.c.h.b16 %v88
  %v1573 = vunpack.c.l.b16 %v89
  %v1574 = vunpack.c.h.b16 %v89
  %v1575 = vunpack.c.l.b16 %v90
  %v1576 = vunpack.c.h.b16 %v90
  %v1577 = vunpack.c.l.b16 %v91
  %v1578 = vunpack.c.h.b16 %v91
  %v1579 = vunpack.c.l.b16 %v92
  %v1580 = vunpack.c.h.b16 %v92
  %v1581 = vunpack.c.l.b16 %v93
  %v1582 = vunpack.c.h.b16 %v93
  %v1583 = vunpack.c.l.b16 %v94
  %v1584 = vunpack.c.h.b16 %v94
  %v1585 = vunpack.c.l.b16 %v95
  %v1586 = vunpack.c.h.b16 %v95
  %v1587 = vunpack.c.l.b16 %v96
  %v1588 = vunpack.c.h.b16 %v96
  %v1589 = vunpack.c.l.b16 %v97
  %v1590 = vunpack.c.h.b16 %v97
  %v1591 = vunpack.c.l.b16 %v98
  %v1592 = vunpack.c.h.b16 %v98
  %v1593 = vunpack.c.l.b16 %v99
  %v1594 = vunpack.c.h.b16 %v99
  %v1595 = vunpack.c.l.b16 %v100
  %v1596 = vunpack.c.h.b16 %v100
  %v1597 = vunpack.c.l.b16 %v101
  %v1598 = vunpack.c.h.b16 %v101
  %v1599 = vunpack.c.l.b16 %v102
  %v1600 = vunpack.c.h.b16 %v102
  %v1601 = vunpack.c.l.b16 %v103
  %v1602 = vunpack.c.h.b16 %v103
  %v1603 = vunpack.c.l.b16 %v104
  %v1604 = vunpack.c.h.b16 %v104
  %v1605 = vunpack.c.l.b16 %v105
  %v1606 = vunpack.c.h.b16 %v105
  %v1607 = vunpack.c.l.b16 %v106
  %v1608 = vunpack.c.h.b16 %v106
  %v1609 = vunpack.c.l.b16 %v107
  %v1610 = vunpack.c.h.b16 %v107
  %v1611 = vunpack.c.l.b16 %v108
  %v1612 = vunpack.c.h.b16 %v108
  %v1613 = vunpack.c.l.b16 %v109
  %v1614 = vunpack.c.h.b16 %v109
  %v1615 = vunpack.c.l.b16 %v110
  %v1616 = vunpack.c.h.b16 %v110
  %v1617 = vunpack.c.l.b16 %v111
  %v1618 = vunpack.c.h.b16 %v111
  %v1619 = vunpack.c.l.b16 %v112
  %v1620 = vunpack.c.h.b16 %v112
  %v1621 = vunpack.c.l.b16 %v113
  %v1622 = vunpack.c.h.b16 %v113
  %v1623 = vunpack.c.l.b16 %v114
  %v1624 = vunpack.c.h.b16 %v114
  %v1625 = vunpack.c.l.b16 %v115
  %v1626 = vunpack.c.h.b16 %v115
  %v1627 = vunpack.c.l.b16 %v116
  %v1628 = vunpack.c.h.b16 %v116
  %v1629 = vunpack.c.l.b16 %v117
  %v1630 = vunpack.c.h.b16 %v117
  %v1631 = vunpack.c.l.b16 %v118
  %v1632 = vunpack.c.h.b16 %v118
  %v1633 = vunpack.c.l.b16 %v119
  %v1634 = vunpack.c.h.b16 %v119
  %v1635 = vunpack.c.l.b16 %v120
  %v1636 = vunpack.c.h.b16 %v120
  %v1637 = vunpack.c.l.b16 %v121
  %v1638 = vunpack.c.h.b16 %v121
  %v1639 = vunpack.c.l.b16 %v122
  %v1640 = vunpack.c.h.b16 %v122
  %v1641 = vunpack.c.l.b16 %v123
  %v1642 = vunpack.c.h.b16 %v123
  %v1643 = vunpack.c.l.b16 %v124
  %v1644 = vunpack.c.h.b16 %v124
  %v1645 = vunpack.c.l.b16 %v125
  %v1646 = vunpack.c.h.b16 %v125
  %v1647 = vunpack.c.l.b16 %v126
  %v1648 = vunpack.c.h.b16 %v126
  %v1649 = vunpack.c.l.b16 %v127
  %v1650 = vunpack.c.h.b16 %v127
  %v1651 = vunpack.c.l.b16 %v128
  %v1652 = vunpack.c.h.b16 %v128
  %v1653 = vunpack.c.l.b16 %v129
  %v1654 = vunpack.c.h.b16 %v129
  %v1655 = vunpack.c.l.b16 %v130
  %v1656 = vunpack.c.h.b16 %v130
  %v1657 = vunpack.c.l.b16 %v131
  %v1658 = vunpack.c.h.b16 %v131
  %v1659 = vunpack.c.l.b16 %v132
  %v1660 = vunpack.c.h.b16 %v132
  %v1661 = vunpack.c.l.b16 %v133
  %v1662 = vunpack.c.h.b16 %v133
  %v1663 = vunpack.c.l.b16 %v134
  %v1664 = vunpack.c.h.b16 %v134
  %v1665 = vunpack.c.l.b16 %v135
  %v1666 = vunpack.c.h.b16 %v135
  %v1667 = vunpack.c.l.b16 %v136
  %v1668 = vunpack.c.h.b16 %v136
  %v1669 = vunpack.c.l.b16 %v137
  %v1670 = vunpack.c.h.b16 %v137
  %v1671 = vunpack.c.l.b16 %v138
  %v1672 = vunpack.c.h.b16 %v138
  %v1673 = vunpack.c.l.b16 %v139
  %v1674 = vunpack.c.h.b16 %v139
  %v1675 = vunpack.c.l.b16 %v140
  %v1676 = vunpack.c.h.b16 %v140
  %v1677 = vunpack.c.l.b16 %v141
  %v1678 = vunpack.c.h.b16 %v141
  %v1679 = vunpack.c.l.b16 %v142
  %v1680 = vunpack.c.h.b16 %v142
  %v1681 = vunpack.c.l.b16 %v143
  %v1682 = vunpack.c.h.b16 %v143
  %v1683 = vunpack.c.l.b16 %v144
  %v1684 = vunpack.c.h.b16 %v144
  %v1685 = vunpack.c.l.b16 %v145
  %v1686 = vunpack.c.h.b16 %v145
  %v1687 = vunpack.c.l.b16 %v146
  %v1688 = vunpack.c.h.b16 %v146
  %v1689 = vunpack.c.l.b16 %v147
  %v1690 = vunpack.c.h.b16 %v147
  %v1691 = vunpack.c.l.b16 %v148
  %v1692 = vunpack.c.h.b16 %v148
  %v1693 = vunpack.c.l.b16 %v149
  %v1694 = vunpack.c.h.b16 %v149
  %v1695 = vunpack.c.l.b16 %v150
  %v1696 = vunpack.c.h.b16 %v150
  %v1697 = vunpack.c.l.b16 %v151
  %v1698 = vunpack.c.h.b16 %v151
  %v1699 = vunpack.c.l.b16 %v152
  %v1700 = vunpack.c.h.b16 %v152
  %v1701 = vunpack.c.l.b16 %v153
  %v1702 = vunpack.c.h.b16 %v153
  %v1703 = vunpack.c.l.b16 %v154
  %v1704 = vunpack.c.h.b16 %v154
  %v1705 = vunpack.c.l.b16 %v155
  %v1706 = vunpack.c.h.b16 %v155
  %v1707 = vunpack.c.l.b16 %v156
  %v1708 = vunpack.c.h.b16 %v156
  %v1709 = vunpack.c.l.b16 %v157
  %v1710 = vunpack.c.h.b16 %v157
  %v1711 = vunpack.c.l.b16 %v158
  %v1712 = vunpack.c.h.b16 %v158
  %v1713 = vunpack.c.l.b16 %v159
  %v1714 = vunpack.c.h.b16 %v159
  %v1715 = vunpack.c.l.b16 %v160
  %v1716 = vunpack.c.h.b16 %v160
  %v1717 = vunpack.c.l.b16 %v161
  %v1718 = vunpack.c.h.b16 %v161
  %v1719 = vunpack.c.l.b16 %v162
  %v1720 = vunpack.c.h.b16 %v162
  %v1721 = vunpack.c.l.b16 %v163
  %v1722 = vunpack.c.h.b16 %v163
  %v1723 = vunpack.c.l.b16 %v164
  %v1724 = vunpack.c.h.b16 %v164
  %v1725 = vunpack.c.l.b16 %v165
  %v1726 = vunpack.c.h.b16 %v165
  %v1727 = vunpack.c.l.b16 %v166
  %v1728 = vunpack.c.h.b16 %v166
  %v1729 = vunpack.c.l.b16 %v167
  %v1730 = vunpack.c.h.b16 %v167
  %v1731 = vunpack.c.l.b16 %v168
  %v1732 = vunpack.c.h.b16 %v168
  %v1733 = vunpack.c.l.b16 %v169
  %v1734 = vunpack.c.h.b16 %v169
  %v1735 = vunpack.c.l.b16 %v170
  %v1736 = vunpack.c.h.b16 %v170
  %v1737 = vunpack.c.l.b16 %v171
  %v1738 = vunpack.c.h.b16 %v171
  %v1739 = vunpack.c.l.b16 %v172
  %v1740 = vunpack.c.h.b16 %v172
  %v1741 = vunpack.c.l.b16 %v173
  %v1742 = vunpack.c.h.b16 %v173
  %v1743 = vunpack.c.l.b16 %v174
  %v1744 = vunpack.c.h.b16 %v174
  %v1745 = vunpack.c.l.b16 %v175
  %v1746 = vunpack.c.h.b16 %v175
  %v1747 = vunpack.c.l.b16 %v176
  %v1748 = vunpack.c.h.b16 %v176
  %v1749 = vunpack.c.l.b16 %v177
  %v1750 = vunpack.c.h.b16 %v177
  %v1751 = vunpack.c.l.b16 %v178
  %v1752 = vunpack.c.h.b16 %v178
  %v1753 = vunpack.c.l.b16 %v179
  %v1754 = vunpack.c.h.b16 %v179
  %v1755 = vunpack.c.l.b16 %v180
  %v1756 = vunpack.c.h.b16 %v180
  %v1757 = vunpack.c.l.b16 %v181
  %v1758 = vunpack.c.h.b16 %v181
  %v1759 = vunpack.c.l.b16 %v182
  %v1760 = vunpack.c.h.b16 %v182
  %v1761 = vunpack.c.l.b16 %v183
  %v1762 = vunpack.c.h.b16 %v183
  %v1763 = vunpack.c.l.b16 %v184
  %v1764 = vunpack.c.h.b16 %v184
  %v1765 = vunpack.c.l.b16 %v185
  %v1766 = vunpack.c.h.b16 %v185
  %v1767 = vunpack.c.l.b16 %v186
  %v1768 = vunpack.c.h.b16 %v186
  %v1769 = vunpack.c.l.b16 %v187
  %v1770 = vunpack.c.h.b16 %v187
  %v1771 = vunpack.c.l.b16 %v188
  %v1772 = vunpack.c.h.b16 %v188
  %v1773 = vunpack.c.l.b16 %v189
  %v1774 = vunpack.c.h.b16 %v189
  %v1775 = vunpack.c.l.b16 %v190
  %v1776 = vunpack.c.h.b16 %v190
  %v1777 = vunpack.c.l.b16 %v191
  %v1778 = vunpack.c.h.b16 %v191
  %v1779 = vunpack.c.l.b16 %v192
  %v1780 = vunpack.c.h.b16 %v192
  %v1781 = vunpack.c.l.b16 %v193
  %v1782 = vunpack.c.h.b16 %v193
  %v1783 = vunpack.c.l.b16 %v194
  %v1784 = vunpack.c.h.b16 %v194
  %v1785 = vunpack.c.l.b16 %v195
  %v1786 = vunpack.c.h.b16 %v195
  %v1787 = vunpack.c.l.b16 %v196
  %v1788 = vunpack.c.h.b16 %v196
  %v1789 = vunpack.c.l.b16 %v197
  %v1790 = vunpack.c.h.b16 %v197
  %v1791 = vunpack.c.l.b16 %v198
  %v1792 = vunpack.c.h.b16 %v198
  %v1793 = vunpack.c.l.b16 %v199
  %v1794 = vunpack.c.h.b16 %v199
  %v1795 = vunpack.c.l.b16 %v200
  %v1796 = vunpack.c.h.b16 %v200
  %v1797 = vunpack.c.l.b16 %v201
  %v1798 = vunpack.c.h.b16 %v201
  %v1799 = vunpack.c.l.b16 %v202
  %v1800 = vunpack.c.h.b16 %v202
  %v1801 = vunpack.c.l.b16 %v203
  %v1802 = vunpack.c.h.b16 %v203
  %v1803 = vunpack.c.l.b16 %v204
  %v1804 = vunpack.c.h.b16 %v204
  %v1805 = vunpack.c.l.b16 %v205
  %v1806 = vunpack.c.h.b16 %v205
  %v1807 = vunpack.c.l.b16 %v206
  %v1808 = vunpack.c.h.b16 %v206
  %v1809 = vunpack.c.l.b16 %v207
  %v1810 = vunpack.c.h.b16 %v207
  %v1811 = vunpack.c.l.b16 %v208
  %v1812 = vunpack.c.h.b16 %v208
  %v1813 = vunpack.c.l.b16 %v209
  %v1814 = vunpack.c.h.b16 %v209
  %v1815 = vunpack.c.l.b16 %v210
  %v1816 = vunpack.c.h.b16 %v210
  %v1817 = vunpack.c.l.b16 %v211
  %v1818 = vunpack.c.h.b16 %v211
  %v1819 = vunpack.c.l.b16 %v212
  %v1820 = vunpack.c.h.b16 %v212
  %v1821 = vunpack.c.l.b16 %v213
  %v1822 = vunpack.c.h.b16 %v213
  %v1823 = vunpack.c.l.b16 %v214
  %v1824 = vunpack.c.h.b16 %v214
  %v1825 = vpack.c.b16 %v1505, %v1441
  %v1826 = vpack.c.b16 %v1506, %v1442
  %v1827 = vpack.c.b16 %v1507, %v1443
  %v1828 = vpack.c.b16 %v1508, %v1444
  %v1829 = vpack.c.b16 %v1509, %v1445
  %v1830 = vpack.c.b16 %v1510, %v1446
  %v1831 = vpack.c.b16 %v1511, %v1447
  %v1832 = vpack.c.b16 %v1512, %v1448
  %v1833 = vpack.c.b16 %v1513, %v1449
  %v1834 = vpack.c.b16 %v1514, %v1450
  %v1835 = vpack.c.b16 %v1515, %v1451
  %v1836 = vpack.c.b16 %v1516, %v1452
  %v1837 = vpack.c.b16 %v1517, %v1453
  %v1838 = vpack.c.b16 %v1518, %v1454
  %v1839 = vpack.c.b16 %v1519, %v1455
  %v1840 = vpack.c.b16 %v1520, %v1456
  %v1841 = vpack.c.b16 %v1521, %v1457
  %v1842 = vpack.c.b16 %v1522, %v1458
  %v1843 = vpack.c.b16 %v1523, %v1459
  %v1844 = vpack.c.b16 %v1524, %v1460
  %v1845 = vpack.c.b16 %v1525, %v1461
  %v1846 = vpack.c.b16 %v1526, %v1462
  %v1847 = vpack.c.b16 %v1527, %v1463
  %v1848 = vpack.c.b16 %v1528, %v1464
  %v1849 = vpack.c.b16 %v1529, %v1465
  %v1850 = vpack.c.b16 %v1530, %v1466
  %v1851 = vpack.c.b16 %v1531, %v1467
  %v1852 = vpack.c.b16 %v1532, %v1468
  %v1853 = vpack.c.b16 %v1533, %v1469
  %v1854 = vpack.c.b16 %v1534, %v1470
  %v1855 = vpack.c.b16 %v1535, %v1471
  %v1856 = vpack.c.b16 %v1536, %v1472
  %v1857 = vpack.c.b16 %v1537, %v1473
  %v1858 = vpack.c.b16 %v1538, %v1474
  %v1859 = vpack.c.b16 %v1539, %v1475
  %v1860 = vpack.c.b16 %v1540, %v1476
  %v1861 = vpack.c.b16 %v1541, %v1477
  %v1862 = vpack.c.b16 %v1542, %v1478
  %v1863 = vpack.c.b16 %v1543, %v1479
  %v1864 = vpack.c.b16 %v1544, %v1480
  %v1865 = vpack.c.b16 %v1545, %v1481
  %v1866 = vpack.c.b16 %v1546, %v1482
  %v1867 = vpack.c.b16 %v1547, %v1483
  %v1868 = vpack.c.b16 %v1548, %v1484
  %v1869 = vpack.c.b16 %v1549, %v1485
  %v1870 = vpack.c.b16 %v1550, %v1486
  %v1871 = vpack.c.b16 %v1551, %v1487
  %v1872 = vpack.c.b16 %v1552, %v1488
  %v1873 = vpack.c.b16 %v1553, %v1489
  %v1874 = vpack.c.b16 %v1554, %v1490
  %v1875 = vpack.c.b16 %v1555, %v1491
  %v1876 = vpack.c.b16 %v1556, %v1492
  %v1877 = vpack.c.b16 %v1557, %v1493
  %v1878 = vpack.c.b16 %v1558, %v1494
  %v1879 = vpack.c.b16 %v1559, %v1495
  %v1880 = vpack.c.b16 %v1560, %v1496
  %v1881 = vpack.c.b16 %v1561, %v1497
  %v1882 = vpack.c.b16 %v1562, %v1498
  %v1883 = vpack.c.b16 %v1563, %v1499
  %v1884 = vpack.c.b16 %v1564, %v1500
  %v1885 = vpack.c.b16 %v1565, %v1501
  %v1886 = vpack.c.b16 %v1566, %v1502
  %v1887 = vpack.c.b16 %v1567, %v1503
  %v1888 = vpack.c.b16 %v1568, %v1504
  %v1889 = vpack.c.b16 %v1633, %v1569
  %v1890 = vpack.c.b16 %v1634, %v1570
  %v1891 = vpack.c.b16 %v1635, %v1571
  %v1892 = vpack.c.b16 %v1636, %v1572
  %v1893 = vpack.c.b16 %v1637, %v1573
  %v1894 = vpack.c.b16 %v1638, %v1574
  %v1895 = vpack.c.b16 %v1639, %v1575
  %v1896 = vpack.c.b16 %v1640, %v1576
  %v1897 = vpack.c.b16 %v1641, %v1577
  %v1898 = vpack.c.b16 %v1642, %v1578
  %v1899 = vpack.c.b16 %v1643, %v1579
  %v1900 = vpack.c.b16 %v1644, %v1580
  %v1901 = vpack.c.b16 %v1645, %v1581
  %v1902 = vpack.c.b16 %v1646, %v1582
  %v1903 = vpack.c.b16 %v1647, %v1583
  %v1904 = vpack.c.b16 %v1648, %v1584
  %v1905 = vpack.c.b16 %v1649, %v1585
  %v1906 = vpack.c.b16 %v1650, %v1586
  %v1907 = vpack.c.b16 %v1651, %v1587
  %v1908 = vpack.c.b16 %v1652, %v1588
  %v1909 = vpack.c.b16 %v1653, %v1589
  %v1910 = vpack.c.b16 %v1654, %v1590
  %v1911 = vpack.c.b16 %v1655, %v1591
  %v1912 = vpack.c.b16 %v1656, %v1592
  %v1913 = vpack.c.b16 %v1657, %v1593
  %v1914 = vpack.c.b16 %v1658, %v1594
  %v1915 = vpack.c.b16 %v1659, %v1595
  %v1916 = vpack.c.b16 %v1660, %v1596
  %v1917 = vpack.c.b16 %v1661, %v1597
  %v1918 = vpack.c.b16 %v1662, %v1598
  %v1919 = vpack.c.b16 %v1663, %v1599
  %v1920 = vpack.c.b16 %v1664, %v1600
  %v1921 = vpack.c.b16 %v1665, %v1601
  %v1922 = vpack.c.b16 %v1666, %v1602
  %v1923 = vpack.c.b16 %v1667, %v1603
  %v1924 = vpack.c.b16 %v1668, %v1604
  %v1925 = vpack.c.b16 %v1669, %v1605
  %v1926 = vpack.c.b16 %v1670, %v1606
  %v1927 = vpack.c.b16 %v1671, %v1607
  %v1928 = vpack.c.b16 %v1672, %v1608
  %v1929 = vpack.c.b16 %v1673, %v1609
  %v1930 = vpack.c.b16 %v1674, %v1610
  %v1931 = vpack.c.b16 %v1675, %v1611
  %v1932 = vpack.c.b16 %v1676, %v1612
  %v1933 = vpack.c.b16 %v1677, %v1613
  %v1934 = vpack.c.b16 %v1678, %v1614
  %v1935 = vpack.c.b16 %v1679, %v1615
  %v1936 = vpack.c.b16 %v1680, %v1616
  %v1937 = vpack.c.b16 %v1681, %v1617
  %v1938 = vpack.c.b16 %v1682, %v1618
  %v1939 = vpack.c.b16 %v1683, %v1619
  %v1940 = vpack.c.b16 %v1684, %v1620
  %v1941 = vpack.c.b16 %v1685, %v1621
  %v1942 = vpack.c.b16 %v1686, %v1622
  %v1943 = vpack.c.b16 %v1687, %v1623
  %v1944 = vpack.c.b16 %v1688, %v1624
  %v1945 = vpack.c.b16 %v1689, %v1625
  %v1946 = vpack.c.b16 %v1690, %v1626
  %v1947 = vpack.c.b16 %v1691, %v1627
  %v1948 = vpack.c.b16 %v1692, %v1628
  %v1949 = vpack.c.b16 %v1693, %v1629
  %v1950 = vpack.c.b16 %v1694, %v1630
  %v1951 = vpack.c.b16 %v1695, %v1631
  %v1952 = vpack.c.b16 %v1696, %v1632
  %v1953 = vpack.c.b16 %v1761, %v1697
  %v1954 = vpack.c.b16 %v1762, %v1698
  %v1955 = vpack.c.b16 %v1763, %v1699
  %v1956 = vpack.c.b16 %v1764, %v1700
  %v1957 = vpack.c.b16 %v1765, %v1701
  %v1958 = vpack.c.b16 %v1766, %v1702
  %v1959 = vpack.c.b16 %v1767, %v1703
  %v1960 = vpack.c.b16 %v1768, %v1704
  %v1961 = vpack.c.b16 %v1769, %v1705
  %v1962 = vpack.c.b16 %v1770, %v1706
  %v1963 = vpack.c.b16 %v1771, %v1707
  %v1964 = vpack.c.b16 %v1772, %v1708
  %v1965 = vpack.c.b16 %v1773, %v1709
  %v1966 = vpack.c.b16 %v1774, %v1710
  %v1967 = vpack.c.b16 %v1775, %v1711
  %v1968 = vpack.c.b16 %v1776, %v1712
  %v1969 = vpack.c.b16 %v1777, %v1713
  %v1970 = vpack.c.b16 %v1778, %v1714
  %v1971 = vpack.c.b16 %v1779, %v1715
  %v1972 = vpack.c.b16 %v1780, %v1716
  %v1973 = vpack.c.b16 %v1781, %v1717
  %v1974 = vpack.c.b16 %v1782, %v1718
  %v1975 = vpack.c.b16 %v1783, %v1719
  %v1976 = vpack.c.b16 %v1784, %v1720
  %v1977 = vpack.c.b16 %v1785, %v1721
  %v1978 = vpack.c.b16 %v1786, %v1722
  %v1979 = vpack.c.b16 %v1787, %v1723
  %v1980 = vpack.c.b16 %v1788, %v1724
  %v1981 = vpack.c.b16 %v1789, %v1725
  %v1982 = vpack.c.b16 %v1790, %v1726
  %v1983 = vpack.c.b16 %v1791, %v1727
  %v1984 = vpack.c.b16 %v1792, %v1728
  %v1985 = vpack.c.b16 %v1793, %v1729
  %v1986 = vpack.c.b16 %v1794, %v1730
  %v1987 = vpack.c.b16 %v1795, %v1731
  %v1988 = vpack.c.b16 %v1796, %v1732
  %v1989 = vpack.c.b16 %v1797, %v1733
  %v1990 = vpack.c.b16 %v1798, %v1734
  %v1991 = vpack.c.b16 %v1799, %v1735
  %v1992 = vpack.c.b16 %v1800, %v1736
  %v1993 = vpack.c.b16 %v1801, %v1737
  %v1994 = vpack.c.b16 %v1802, %v1738
  %v1995 = vpack.c.b16 %v1803, %v1739
  %v1996 = vpack.c.b16 %v1804, %v1740
  %v1997 = vpack.c.b16 %v1805, %v1741
  %v1998 = vpack.c.b16 %v1806, %v1742
  %v1999 = vpack.c.b16 %v1807, %v1743
  %v2000 = vpack.c.b16 %v1808, %v1744
  %v2001 = vpack.c.b16 %v1809, %v1745
  %v2002 = vpack.c.b16 %v1810, %v1746
  %v2003 = vpack.c.b16 %v1811, %v1747
  %v2004 = vpack.c.b16 %v1812, %v1748
  %v2005 = vpack.c.b16 %v1813, %v1749
  %v2006 = vpack.c.b16 %v1814, %v1750
  %v2007 = vpack.c.b16 %v1815, %v1751
  %v2008 = vpack.c.b16 %v1816, %v1752
  %v2009 = vpack.c.b16 %v1817, %v1753
  %v2010 = vpack.c.b16 %v1818, %v1754
  %v2011 = vpack.c.b16 %v1819, %v1755
  %v2012 = vpack.c.b16 %v1820, %v1756
  %v2013 = vpack.c.b16 %v1821, %v1757
  %v2014 = vpack.c.b16 %v1822, %v1758
  %v2015 = vpack.c.b16 %v1823, %v1759
  %v2016 = vpack.c.b16 %v1824, %v1760
  %v3233 = vunpack.c.l.b16 %v215
  %v3234 = vunpack.c.l.b16 %v216
  %v3235 = vunpack.c.l.b16 %v217
  %v3236 = vunpack.c.l.b16 %v218
  %v3237 = vunpack.c.l.b16 %v219
  %v3238 = vunpack.c.l.b16 %v220
  %v3239 = vunpack.c.l.b16 %v221
  %v3240 = vunpack.c.l.b16 %v222
  %v3241 = vunpack.c.l.b16 %v223
  %v3242 = vunpack.c.l.b16 %v224
  %v3243 = vunpack.c.l.b16 %v225
  %v3244 = vunpack.c.l.b16 %v226
  %v3245 = vunpack.c.l.b16 %v227
  %v3246 = vunpack.c.l.b16 %v228
  %v3247 = vunpack.c.l.b16 %v229
  %v3248 = vunpack.c.l.b16 %v230
  %v3249 = vunpack.c.l.b16 %v231
  %v3250 = vunpack.c.l.b16 %v232
  %v3251 = vunpack.c.l.b16 %v233
  %v3252 = vunpack.c.l.b16 %v234
  %v3253 = vunpack.c.l.b16 %v235
  %v3254 = vunpack.c.l.b16 %v236
  %v3255 = vunpack.c.l.b16 %v237
  %v3256 = vunpack.c.l.b16 %v238
  %v3257 = vunpack.c.l.b16 %v239
  %v3258 = vunpack.c.l.b16 %v240
  %v3259 = vunpack.c.l.b16 %v241
  %v3260 = vunpack.c.l.b16 %v242
  %v3261 = vunpack.c.l.b16 %v243
  %v3262 = vunpack.c.l.b16 %v244
  %v3263 = vunpack.c.l.b16 %v245
  %v3264 = vunpack.c.l.b16 %v246
  %v3265 = vunpack.c.l.b16 %v247
  %v3266 = vunpack.c.l.b16 %v248
  %v3267 = vunpack.c.l.b16 %v249
  %v3268 = vunpack.c.l.b16 %v250
  %v3269 = vunpack.c.l.b16 %v251
  %v3270 = vunpack.c.l.b16 %v252
  %v3271 = vunpack.c.l.b16 %v253
  %v3272 = vunpack.c.l.b16 %v254
  %v3273 = vunpack.c.l.b16 %v255
  %v3274 = vunpack.c.l.b16 %v256
  %v3275 = vunpack.c.l.b16 %v257
  %v3276 = vunpack.c.l.b16 %v258
  %v3277 = vunpack.c.l.b16 %v259
  %v3278 = vunpack.c.l.b16 %v260
  %v3279 = vunpack.c.l.b16 %v261
  %v3280 = vunpack.c.l.b16 %v262
  %v3281 = vunpack.c.l.b16 %v263
  %v3282 = vunpack.c.l.b16 %v264
  %v3283 = vunpack.c.l.b16 %v265
  %v3284 = vunpack.c.l.b16 %v266
  %v3285 = vunpack.c.l.b16 %v267
  %v3286 = vunpack.c.l.b16 %v268
  %v3287 = vunpack.c.l.b16 %v269
  %v3288 = vunpack.c.l.b16 %v270
  %v3289 = vunpack.c.l.b16 %v271
  %v3290 = vunpack.c.l.b16 %v272
  %v3291 = vunpack.c.l.b16 %v273
  %v3292 = vunpack.c.l.b16 %v274
  %v3293 = vunpack.c.l.b16 %v275
  %v3294 = vunpack.c.l.b16 %v276
  %v3295 = vunpack.c.l.b16 %v277
  %v3296 = vunpack.c.l.b16 %v278
  %v3297 = vunpack.c.l.b16 %v279
  %v3298 = vunpack.c.l.b16 %v280
  %v3299 = vunpack.c.l.b16 %v281
  %v3300 = vunpack.c.l.b16 %v282
  %v3301 = vunpack.c.l.b16 %v283
  %v3302 = vunpack.c.l.b16 %v284
  %v3303 = vunpack.c.l.b16 %v285
  %v3304 = vunpack.c.l.b16 %v286
  %v3305 = vunpack.c.l.b16 %v287
  %v3306 = vunpack.c.l.b16 %v288
  %v3307 = vunpack.c.l.b16 %v289
  %v3308 = vunpack.c.l.b16 %v290
  %v3309 = vunpack.c.l.b16 %v291
  %v3310 = vunpack.c.l.b16 %v292
  %v3311 = vunpack.c.l.b16 %v293
  %v3312 = vunpack.c.l.b16 %v294
  %v3313 = vunpack.c.l.b16 %v295
  %v3314 = vunpack.c.l.b16 %v296
  %v3315 = vunpack.c.l.b16 %v297
  %v3316 = vunpack.c.l.b16 %v298
  %v3317 = vunpack.c.l.b16 %v299
  %v3318 = vunpack.c.l.b16 %v300
  %v3319 = vunpack.c.l.b16 %v301
  %v3320 = vunpack.c.l.b16 %v302
  %v3321 = vunpack.c.l.b16 %v303
  %v3322 = vunpack.c.l.b16 %v304
  %v3323 = vunpack.c.l.b16 %v305
  %v3324 = vunpack.c.l.b16 %v306
  %v3325 = vunpack.c.l.b16 %v307
  %v3326 = vunpack.c.l.b16 %v308
  %v3327 = vunpack.c.l.b16 %v309
  %v3328 = vunpack.c.l.b16 %v310
  %v3329 = vunpack.c.l.b16 %v311
  %v3330 = vunpack.c.l.b16 %v312
  %v3331 = vunpack.c.l.b16 %v313
  %v3332 = vunpack.c.l.b16 %v314
  %v3333 = vunpack.c.l.b16 %v315
  %v3334 = vunpack.c.l.b16 %v316
  %v3335 = vunpack.c.l.b16 %v317
  %v3336 = vunpack.c.l.b16 %v318
  %v3337 = vunpack.c.l.b16 %v319
  %v3338 = vunpack.c.l.b16 %v320
  %v3339 = vunpack.c.l.b16 %v321
  %v3340 = vunpack.c.l.b16 %v322
  %v3341 = vunpack.c.l.b16 %v323
  %v3342 = vunpack.c.l.b16 %v324
  %v3343 = vunpack.c.l.b16 %v325
  %v3344 = vunpack.c.l.b16 %v326
  %v3345 = vunpack.c.l.b16 %v327
  %v3346 = vunpack.c.l.b16 %v328
  %v3347 = vunpack.c.l.b16 %v329
  %v3348 = vunpack.c.l.b16 %v330
  %v3349 = vunpack.c.l.b16 %v331
  %v3350 = vunpack.c.l.b16 %v332
  %v3351 = vunpack.c.l.b16 %v333
  %v3352 = vunpack.c.l.b16 %v334
  %v3353 = vunpack.c.l.b16 %v335
  %v3354 = vunpack.c.l.b16 %v336
  %v3355 = vunpack.c.l.b16 %v337
  %v3356 = vunpack.c.l.b16 %v338
  %v3357 = vunpack.c.l.b16 %v339
  %v3358 = vunpack.c.l.b16 %v340
  %v3359 = vunpack.c.l.b16 %v341
  %v3360 = vunpack.c.l.b16 %v342
  %v3361 = vunpack.c.l.b16 %v343
  %v3362 = vunpack.c.l.b16 %v344
  %v3363 = vunpack.c.l.b16 %v345
  %v3364 = vunpack.c.l.b16 %v346
  %v3365 = vunpack.c.l.b16 %v347
  %v3366 = vunpack.c.l.b16 %v348
  %v3367 = vunpack.c.l.b16 %v349
  %v3368 = vunpack.c.l.b16 %v350
  %v3369 = vunpack.c.l.b16 %v351
  %v3370 = vunpack.c.l.b16 %v352
  %v3371 = vunpack.c.l.b16 %v353
  %v3372 = vunpack.c.l.b16 %v354
  %v3373 = vunpack.c.l.b16 %v355
  %v3374 = vunpack.c.l.b16 %v356
  %v3375 = vunpack.c.l.b16 %v357
  %v3376 = vunpack.c.l.b16 %v358
  %v3377 = vunpack.c.l.b16 %v359
  %v3378 = vunpack.c.l.b16 %v360
  %v3379 = vunpack.c.l.b16 %v361
  %v3380 = vunpack.c.l.b16 %v362
  %v3381 = vunpack.c.l.b16 %v363
  %v3382 = vunpack.c.l.b16 %v364
  %v3383 = vunpack.c.l.b16 %v365
  %v3384 = vunpack.c.l.b16 %v366
  %v3385 = vunpack.c.l.b16 %v367
  %v3386 = vunpack.c.l.b16 %v368
  %v3387 = vunpack.c.l.b16 %v369
  %v3388 = vunpack.c.l.b16 %v370
  %v3389 = vunpack.c.l.b16 %v371
  %v3390 = vunpack.c.l.b16 %v372
  %v3391 = vunpack.c.l.b16 %v373
  %v3392 = vunpack.c.l.b16 %v374
  %v3393 = vunpack.c.l.b16 %v375
  %v3394 = vunpack.c.l.b16 %v376
  %v3395 = vunpack.c.l.b16 %v377
  %v3396 = vunpack.c.l.b16 %v378
  %v3397 = vunpack.c.l.b16 %v379
  %v3398 = vunpack.c.l.b16 %v380
  %v3399 = vunpack.c.l.b16 %v381
  %v3400 = vunpack.c.l.b16 %v382
  %v3401 = vunpack.c.l.b16 %v383
  %v3402 = vunpack.c.l.b16 %v384
  %v3403 = vunpack.c.l.b16 %v385
  %v3404 = vunpack.c.l.b16 %v386
  %v3405 = vunpack.c.l.b16 %v387
  %v3406 = vunpack.c.l.b16 %v388
  %v3407 = vunpack.c.l.b16 %v389
  %v3408 = vunpack.c.l.b16 %v390
  %v3409 = vunpack.c.l.b16 %v391
  %v3410 = vunpack.c.l.b16 %v392
  %v3411 = vunpack.c.l.b16 %v393
  %v3412 = vunpack.c.l.b16 %v394
  %v3413 = vunpack.c.l.b16 %v395
  %v3414 = vunpack.c.l.b16 %v396
  %v3415 = vunpack.c.l.b16 %v397
  %v3416 = vunpack.c.l.b16 %v398
  %v3417 = vunpack.c.l.b16 %v399
  %v3418 = vunpack.c.l.b16 %v400
  %v3419 = vunpack.c.l.b16 %v401
  %v3420 = vunpack.c.l.b16 %v402
  %v3421 = vunpack.c.l.b16 %v403
  %v3422 = vunpack.c.l.b16 %v404
  %v3423 = vunpack.c.l.b16 %v405
  %v3424 = vunpack.c.l.b16 %v406
  %v3425 = vunpack.c.l.b16 %v407
  %v3426 = vunpack.c.l.b16 %v408
  %v3427 = vunpack.c.l.b16 %v409
  %v3428 = vunpack.c.l.b16 %v410
  %v3429 = vunpack.c.l.b16 %v411
  %v3430 = vunpack.c.l.b16 %v412
  %v3431 = vunpack.c.l.b16 %v413
  %v3432 = vunpack.c.l.b16 %v414
  %v3433 = vunpack.c.l.b16 %v415
  %v3434 = vunpack.c.l.b16 %v416
  %v3435 = vunpack.c.l.b16 %v417
  %v3436 = vunpack.c.l.b16 %v418
  %v3437 = vunpack.c.l.b16 %v419
  %v3438 = vunpack.c.l.b16 %v420
  %v3439 = vunpack.c.l.b16 %v421
  %v3440 = vunpack.c.l.b16 %v422
  %v3441 = vunpack.c.l.b16 %v423
  %v3442 = vunpack.c.l.b16 %v424
  %v3443 = vunpack.c.l.b16 %v425
  %v3444 = vunpack.c.l.b16 %v426
  %v3445 = vunpack.c.l.b16 %v427
  %v3446 = vunpack.c.l.b16 %v428
  %v3447 = vunpack.c.l.b16 %v429
  %v3448 = vunpack.c.l.b16 %v430
  %v3449 = vunpack.c.l.b16 %v431
  %v3450 = vunpack.c.l.b16 %v432
  %v3451 = vunpack.c.l.b16 %v433
  %v3452 = vunpack.c.l.b16 %v434
  %v3453 = vunpack.c.l.b16 %v435
  %v3454 = vunpack.c.l.b16 %v436
  %v3455 = vunpack.c.l.b16 %v437
  %v3456 = vunpack.c.l.b16 %v438
  %v3457 = vunpack.c.l.b16 %v439
  %v3458 = vunpack.c.l.b16 %v440
  %v3459 = vunpack.c.l.b16 %v441
  %v3460 = vunpack.c.l.b16 %v442
  %v3461 = vunpack.c.l.b16 %v443
  %v3462 = vunpack.c.l.b16 %v444
  %v3463 = vunpack.c.l.b16 %v445
  %v3464 = vunpack.c.l.b16 %v446
  %v3465 = vunpack.c.l.b16 %v447
  %v3466 = vunpack.c.l.b16 %v448
  %v3467 = vunpack.c.l.b16 %v449
  %v3468 = vunpack.c.l.b16 %v450
  %v3469 = vunpack.c.l.b16 %v451
  %v3470 = vunpack.c.l.b16 %v452
  %v3471 = vunpack.c.l.b16 %v453
  %v3472 = vunpack.c.l.b16 %v454
  %v3473 = vunpack.c.l.b16 %v455
  %v3474 = vunpack.c.l.b16 %v456
  %v3475 = vunpack.c.l.b16 %v457
  %v3476 = vunpack.c.l.b16 %v458
  %v3477 = vunpack.c.l.b16 %v459
  %v3478 = vunpack.c.l.b16 %v460
  %v3479 = vunpack.c.l.b16 %v461
  %v3480 = vunpack.c.l.b16 %v462
  %v3481 = vunpack.c.l.b16 %v463
  %v3482 = vunpack.c.l.b16 %v464
  %v3483 = vunpack.c.l.b16 %v465
  %v3484 = vunpack.c.l.b16 %v466
  %v3485 = vunpack.c.l.b16 %v467
  %v3486 = vunpack.c.l.b16 %v468
  %v3487 = vunpack.c.l.b16 %v469
  %v3488 = vunpack.c.l.b16 %v470
  %v3489 = vunpack.c.l.b16 %v471
  %v3490 = vunpack.c.l.b16 %v472
  %v3491 = vunpack.c.l.b16 %v473
  %v3492 = vunpack.c.l.b16 %v474
  %v3493 = vunpack.c.l.b16 %v475
  %v3494 = vunpack.c.l.b16 %v476
  %v3495 = vunpack.c.l.b16 %v477
  %v3496 = vunpack.c.l.b16 %v478
  %v3497 = vunpack.c.l.b16 %v479
  %v3498 = vunpack.c.l.b16 %v480
  %v3499 = vunpack.c.l.b16 %v481
  %v3500 = vunpack.c.l.b16 %v482
  %v3501 = vunpack.c.l.b16 %v483
  %v3502 = vunpack.c.l.b16 %v484
  %v3503 = vunpack.c.l.b16 %v485
  %v3504 = vunpack.c.l.b16 %v486
  %v3505 = vunpack.c.l.b16 %v487
  %v3506 = vunpack.c.l.b16 %v488
  %v3507 = vunpack.c.l.b16 %v489
  %v3508 = vunpack.c.l.b16 %v490
  %v3509 = vunpack.c.l.b16 %v491
  %v3510 = vunpack.c.l.b16 %v492
  %v3511 = vunpack.c.l.b16 %v493
  %v3512 = vunpack.c.l.b16 %v494
  %v3513 = vunpack.c.l.b16 %v495
  %v3514 = vunpack.c.l.b16 %v496
  %v3515 = vunpack.c.l.b16 %v497
  %v3516 = vunpack.c.l.b16 %v498
  %v3517 = vunpack.c.l.b16 %v499
  %v3518 = vunpack.c.l.b16 %v500
  %v3519 = vunpack.c.l.b16 %v501
  %v3520 = vunpack.c.l.b16 %v502
  %v3521 = vunpack.c.l.b16 %v503
  %v3522 = vunpack.c.l.b16 %v504
  %v3523 = vunpack.c.l.b16 %v505
  %v3524 = vunpack.c.l.b16 %v506
  %v3525 = vunpack.c.l.b16 %v507
  %v3526 = vunpack.c.l.b16 %v508
  %v3527 = vunpack.c.l.b16 %v509
  %v3528 = vunpack.c.l.b16 %v510
  %v3529 = vunpack.c.l.b16 %v511
  %v3530 = vunpack.c.l.b16 %v512
  %v3531 = vunpack.c.l.b16 %v513
  %v3532 = vunpack.c.l.b16 %v514
  %v3533 = vunpack.c.l.b16 %v515
  %v3534 = vunpack.c.l.b16 %v516
  %v3535 = vunpack.c.l.b16 %v517
  %v3536 = vunpack.c.l.b16 %v518
  %v3537 = vunpack.c.l.b16 %v519
  %v3538 = vunpack.c.l.b16 %v520
  %v3539 = vunpack.c.l.b16 %v521
  %v3540 = vunpack.c.l.b16 %v522
  %v3541 = vunpack.c.l.b16 %v523
  %v3542 = vunpack.c.l.b16 %v524
  %v3543 = vunpack.c.l.b16 %v525
  %v3544 = vunpack.c.l.b16 %v526
  %v3545 = vunpack.c.l.b16 %v527
  %v3546 = vunpack.c.l.b16 %v528
  %v3547 = vunpack.c.l.b16 %v529
  %v3548 = vunpack.c.l.b16 %v530
  %v3549 = vunpack.c.l.b16 %v531
  %v3550 = vunpack.c.l.b16 %v532
  %v3551 = vunpack.c.l.b16 %v533
  %v3552 = vunpack.c.l.b16 %v534
  %v3553 = vunpack.c.l.b16 %v535
  %v3554 = vunpack.c.l.b16 %v536
  %v3555 = vunpack.c.l.b16 %v537
  %v3556 = vunpack.c.l.b16 %v538
  %v3557 = vunpack.c.l.b16 %v539
  %v3558 = vunpack.c.l.b16 %v540
  %v3559 = vunpack.c.l.b16 %v541
  %v3560 = vunpack.c.l.b16 %v542
  %v3561 = vunpack.c.l.b16 %v543
  %v3562 = vunpack.c.l.b16 %v544
  %v3563 = vunpack.c.l.b16 %v545
  %v3564 = vunpack.c.l.b16 %v546
  %v3565 = vunpack.c.l.b16 %v547
  %v3566 = vunpack.c.l.b16 %v548
  %v3567 = vunpack.c.l.b16 %v549
  %v3568 = vunpack.c.l.b16 %v550
  %v3569 = vunpack.c.l.b16 %v551
  %v3570 = vunpack.c.l.b16 %v552
  %v3571 = vunpack.c.l.b16 %v553
  %v3572 = vunpack.c.l.b16 %v554
  %v3573 = vunpack.c.l.b16 %v555
  %v3574 = vunpack.c.l.b16 %v556
  %v3575 = vunpack.c.l.b16 %v557
  %v3576 = vunpack.c.l.b16 %v558
  %v3577 = vunpack.c.l.b16 %v559
  %v3578 = vunpack.c.l.b16 %v560
  %v3579 = vunpack.c.l.b16 %v561
  %v3580 = vunpack.c.l.b16 %v562
  %v3581 = vunpack.c.l.b16 %v563
  %v3582 = vunpack.c.l.b16 %v564
  %v3583 = vunpack.c.l.b16 %v565
  %v3584 = vunpack.c.l.b16 %v566
  %v3585 = vunpack.c.l.b16 %v567
  %v3586 = vunpack.c.l.b16 %v568
  %v3587 = vunpack.c.l.b16 %v569
  %v3588 = vunpack.c.l.b16 %v570
  %v3589 = vunpack.c.l.b16 %v571
  %v3590 = vunpack.c.l.b16 %v572
  %v3591 = vunpack.c.l.b16 %v573
  %v3592 = vunpack.c.l.b16 %v574
  %v3593 = vunpack.c.l.b16 %v575
  %v3594 = vunpack.c.l.b16 %v576
  %v3595 = vunpack.c.l.b16 %v577
  %v3596 = vunpack.c.l.b16 %v578
  %v3597 = vunpack.c.l.b16 %v579
  %v3598 = vunpack.c.l.b16 %v580
  %v3599 = vunpack.c.l.b16 %v581
  %v3600 = vunpack.c.l.b16 %v582
  %v3601 = vunpack.c.l.b16 %v583
  %v3602 = vunpack.c.l.b16 %v584
  %v3603 = vunpack.c.l.b16 %v585
  %v3604 = vunpack.c.l.b16 %v586
  %v3605 = vunpack.c.l.b16 %v587
  %v3606 = vunpack.c.l.b16 %v588
  %v3607 = vunpack.c.l.b16 %v589
  %v3608 = vunpack.c.l.b16 %v590
  %v3609 = vunpack.c.l.b16 %v591
  %v3610 = vunpack.c.l.b16 %v592
  %v3611 = vunpack.c.l.b16 %v593
  %v3612 = vunpack.c.l.b16 %v594
  %v3613 = vunpack.c.l.b16 %v595
  %v3614 = vunpack.c.l.b16 %v596
  %v3615 = vunpack.c.l.b16 %v597
  %v3616 = vunpack.c.l.b16 %v598
  %v3617 = vunpack.c.l.b16 %v599
  %v3618 = vunpack.c.l.b16 %v600
  %v3619 = vunpack.c.l.b16 %v601
  %v3620 = vunpack.c.l.b16 %v602
  %v3621 = vunpack.c.l.b16 %v603
  %v3622 = vunpack.c.l.b16 %v604
  %v3623 = vunpack.c.l.b16 %v605
  %v3624 = vunpack.c.l.b16 %v606
  %v3625 = vunpack.c.l.b16 %v607
  %v3626 = vunpack.c.l.b16 %v608
  %v3627 = vunpack.c.l.b16 %v609
  %v3628 = vunpack.c.l.b16 %v610
  %v3629 = vunpack.c.l.b16 %v611
  %v3630 = vunpack.c.l.b16 %v612
  %v3631 = vunpack.c.l.b16 %v613
  %v3632 = vunpack.c.l.b16 %v614
  %v3633 = vunpack.c.l.b16 %v615
  %v3634 = vunpack.c.l.b16 %v616
  %v3635 = vunpack.c.l.b16 %v617
  %v3636 = vunpack.c.l.b16 %v618
  %v3637 = vunpack.c.l.b16 %v619
  %v3638 = vunpack.c.l.b16 %v620
  %v3639 = vunpack.c.l.b16 %v621
  %v3640 = vunpack.c.l.b16 %v622
  %v3641 = vunpack.c.l.b16 %v623
  %v3642 = vunpack.c.l.b16 %v624
  %v3643 = vunpack.c.l.b16 %v625
  %v3644 = vunpack.c.l.b16 %v626
  %v3645 = vunpack.c.l.b16 %v627
  %v3646 = vunpack.c.l.b16 %v628
  %v3647 = vunpack.c.l.b16 %v629
  %v3648 = vunpack.c.l.b16 %v630
  %v3649 = vunpack.c.l.b16 %v631
  %v3650 = vunpack.c.l.b16 %v632
  %v3651 = vunpack.c.l.b16 %v633
  %v3652 = vunpack.c.l.b16 %v634
  %v3653 = vunpack.c.l.b16 %v635
  %v3654 = vunpack.c.l.b16 %v636
  %v3655 = vunpack.c.l.b16 %v637
  %v3656 = vunpack.c.l.b16 %v638
  %v3657 = vunpack.c.l.b16 %v639
  %v3658 = vunpack.c.l.b16 %v640
  %v3659 = vunpack.c.l.b16 %v641
  %v3660 = vunpack.c.l.b16 %v642
  %v3661 = vunpack.c.l.b16 %v643
  %v3662 = vunpack.c.l.b16 %v644
  %v3663 = vunpack.c.l.b16 %v645
  %v3664 = vunpack.c.l.b16 %v646
  %v3665 = vunpack.c.l.b16 %v647
  %v3666 = vunpack.c.l.b16 %v648
  %v3667 = vunpack.c.l.b16 %v649
  %v3668 = vunpack.c.l.b16 %v650
  %v3669 = vunpack.c.l.b16 %v651
  %v3670 = vunpack.c.l.b16 %v652
  %v3671 = vunpack.c.l.b16 %v653
  %v3672 = vunpack.c.l.b16 %v654
  %v3673 = vunpack.c.l.b16 %v655
  %v3674 = vunpack.c.l.b16 %v656
  %v3675 = vunpack.c.l.b16 %v657
  %v3676 = vunpack.c.l.b16 %v658
  %v3677 = vunpack.c.l.b16 %v659
  %v3678 = vunpack.c.l.b16 %v660
  %v3679 = vunpack.c.l.b16 %v661
  %v3680 = vunpack.c.l.b16 %v662
  %v3681 = vunpack.c.l.b16 %v663
  %v3682 = vunpack.c.l.b16 %v664
  %v3683 = vunpack.c.l.b16 %v665
  %v3684 = vunpack.c.l.b16 %v666
  %v3685 = vunpack.c.l.b16 %v667
  %v3686 = vunpack.c.l.b16 %v668
  %v3687 = vunpack.c.l.b16 %v669
  %v3688 = vunpack.c.l.b16 %v670
  %v3689 = vunpack.c.l.b16 %v671
  %v3690 = vunpack.c.l.b16 %v672
  %v3691 = vunpack.c.l.b16 %v673
  %v3692 = vunpack.c.l.b16 %v674
  %v3693 = vunpack.c.l.b16 %v675
  %v3694 = vunpack.c.l.b16 %v676
  %v3695 = vunpack.c.l.b16 %v677
  %v3696 = vunpack.c.l.b16 %v678
  %v3697 = vunpack.c.l.b16 %v679
  %v3698 = vunpack.c.l.b16 %v680
  %v3699 = vunpack.c.l.b16 %v681
  %v3700 = vunpack.c.l.b16 %v682
  %v3701 = vunpack.c.l.b16 %v683
  %v3702 = vunpack.c.l.b16 %v684
  %v3703 = vunpack.c.l.b16 %v685
  %v3704 = vunpack.c.l.b16 %v686
  %v3705 = vunpack.c.l.b16 %v687
  %v3706 = vunpack.c.l.b16 %v688
  %v3707 = vunpack.c.l.b16 %v689
  %v3708 = vunpack.c.l.b16 %v690
  %v3709 = vunpack.c.l.b16 %v691
  %v3710 = vunpack.c.l.b16 %v692
  %v3711 = vunpack.c.l.b16 %v693
  %v3712 = vunpack.c.l.b16 %v694
  %v3713 = vunpack.c.l.b16 %v695
  %v3714 = vunpack.c.l.b16 %v696
  %v3715 = vunpack.c.l.b16 %v697
  %v3716 = vunpack.c.l.b16 %v698
  %v3717 = vunpack.c.l.b16 %v699
  %v3718 = vunpack.c.l.b16 %v700
  %v3719 = vunpack.c.l.b16 %v701
  %v3720 = vunpack.c.l.b16 %v702
  %v3721 = vunpack.c.l.b16 %v703
  %v3722 = vunpack.c.l.b16 %v704
  %v3723 = vunpack.c.l.b16 %v705
  %v3724 = vunpack.c.l.b16 %v706
  %v3725 = vunpack.c.l.b16 %v707
  %v3726 = vunpack.c.l.b16 %v708
  %v3727 = vunpack.c.l.b16 %v709
  %v3728 = vunpack.c.l.b16 %v710
  %v3729 = vunpack.c.l.b16 %v711
  %v3730 = vunpack.c.l.b16 %v712
  %v3731 = vunpack.c.l.b16 %v713
  %v3732 = vunpack.c.l.b16 %v714
  %v3733 = vunpack.c.l.b16 %v715
  %v3734 = vunpack.c.l.b16 %v716
  %v3735 = vunpack.c.l.b16 %v717
  %v3736 = vunpack.c.l.b16 %v718
  %v3737 = vunpack.c.l.b16 %v719
  %v3738 = vunpack.c.l.b16 %v720
  %v3739 = vunpack.c.l.b16 %v721
  %v3740 = vunpack.c.l.b16 %v722
  %v3741 = vunpack.c.l.b16 %v723
  %v3742 = vunpack.c.l.b16 %v724
  %v3743 = vunpack.c.l.b16 %v725
  %v3744 = vunpack.c.l.b16 %v726
  %v3745 = vunpack.c.l.b16 %v727
  %v3746 = vunpack.c.l.b16 %v728
  %v3747 = vunpack.c.l.b16 %v729
  %v3748 = vunpack.c.l.b16 %v730
  %v3749 = vunpack.c.l.b16 %v731
  %v3750 = vunpack.c.l.b16 %v732
  %v3751 = vunpack.c.l.b16 %v733
  %v3752 = vunpack.c.l.b16 %v734
  %v3753 = vunpack.c.l.b16 %v735
  %v3754 = vunpack.c.l.b16 %v736
  %v3755 = vunpack.c.l.b16 %v737
  %v3756 = vunpack.c.l.b16 %v738
  %v3757 = vunpack.c.l.b16 %v739
  %v3758 = vunpack.c.l.b16 %v740
  %v3759 = vunpack.c.l.b16 %v741
  %v3760 = vunpack.c.l.b16 %v742
  %v3761 = vunpack.c.l.b16 %v743
  %v3762 = vunpack.c.l.b16 %v744
  %v3763 = vunpack.c.l.b16 %v745
  %v3764 = vunpack.c.l.b16 %v746
  %v3765 = vunpack.c.l.b16 %v747
  %v3766 = vunpack.c.l.b16 %v748
  %v3767 = vunpack.c.l.b16 %v749
  %v3768 = vunpack.c.l.b16 %v750
  %v3769 = vunpack.c.l.b16 %v751
  %v3770 = vunpack.c.l.b16 %v752
  %v3771 = vunpack.c.l.b16 %v753
  %v3772 = vunpack.c.l.b16 %v754
  %v3773 = vunpack.c.l.b16 %v755
  %v3774 = vunpack.c.l.b16 %v756
  %v3775 = vunpack.c.l.b16 %v757
  %v3776 = vunpack.c.l.b16 %v758
  %v3777 = vunpack.c.l.b16 %v759
  %v3778 = vunpack.c.l.b16 %v760
  %v3779 = vunpack.c.l.b16 %v761
  %v3780 = vunpack.c.l.b16 %v762
  %v3781 = vunpack.c.l.b16 %v763
  %v3782 = vunpack.c.l.b16 %v764
  %v3783 = vunpack.c.l.b16 %v765
  %v3784 = vunpack.c.l.b16 %v766
  %v3785 = vunpack.c.l.b16 %v767
  %v3786 = vunpack.c.l.b16 %v768
  %v3787 = vunpack.c.l.b16 %v769
  %v3788 = vunpack.c.l.b16 %v770
  %v3789 = vunpack.c.l.b16 %v771
  %v3790 = vunpack.c.l.b16 %v772
  %v3791 = vunpack.c.l.b16 %v773
  %v3792 = vunpack.c.l.b16 %v774
  %v3793 = vunpack.c.l.b16 %v775
  %v3794 = vunpack.c.l.b16 %v776
  %v3795 = vunpack.c.l.b16 %v777
  %v3796 = vunpack.c.l.b16 %v778
  %v3797 = vunpack.c.l.b16 %v779
  %v3798 = vunpack.c.l.b16 %v780
  %v3799 = vunpack.c.l.b16 %v781
  %v3800 = vunpack.c.l.b16 %v782
  %v3801 = vunpack.c.l.b16 %v783
  %v3802 = vunpack.c.l.b16 %v784
  %v3803 = vunpack.c.l.b16 %v785
  %v3804 = vunpack.c.l.b16 %v786
  %v3805 = vunpack.c.l.b16 %v787
  %v3806 = vunpack.c.l.b16 %v788
  %v3807 = vunpack.c.l.b16 %v789
  %v3808 = vunpack.c.l.b16 %v790
  %v3809 = vunpack.c.l.b16 %v791
  %v3810 = vunpack.c.l.b16 %v792
  %v3811 = vunpack.c.l.b16 %v793
  %v3812 = vunpack.c.l.b16 %v794
  %v3813 = vunpack.c.l.b16 %v795
  %v3814 = vunpack.c.l.b16 %v796
  %v3815 = vunpack.c.l.b16 %v797
  %v3816 = vunpack.c.l.b16 %v798
  %v3817 = vunpack.c.l.b16 %v799
  %v3818 = vunpack.c.l.b16 %v800
  %v3819 = vunpack.c.l.b16 %v801
  %v3820 = vunpack.c.l.b16 %v802
  %v3821 = vunpack.c.l.b16 %v803
  %v3822 = vunpack.c.l.b16 %v804
  %v3823 = vunpack.c.l.b16 %v805
  %v3824 = vunpack.c.l.b16 %v806
  %v3825 = vunpack.c.l.b16 %v807
  %v3826 = vunpack.c.l.b16 %v808
  %v3827 = vunpack.c.l.b16 %v809
  %v3828 = vunpack.c.l.b16 %v810
  %v3829 = vunpack.c.l.b16 %v811
  %v3830 = vunpack.c.l.b16 %v812
  %v3831 = vunpack.c.l.b16 %v813
  %v3832 = vunpack.c.l.b16 %v814
  %v3833 = vunpack.c.l.b16 %v815
  %v3834 = vunpack.c.l.b16 %v816
  %v3835 = vunpack.c.l.b16 %v817
  %v3836 = vunpack.c.l.b16 %v818
  %v3837 = vunpack.c.l.b16 %v819
  %v3838 = vunpack.c.l.b16 %v820
  %v3839 = vunpack.c.l.b16 %v821
  %v3840 = vunpack.c.l.b16 %v822
  %v3841 = vunpack.c.l.b16 %v823
  %v3842 = vunpack.c.l.b16 %v824
  %v3843 = vunpack.c.l.b16 %v825
  %v3844 = vunpack.c.l.b16 %v826
  %v3845 = vunpack.c.l.b16 %v827
  %v3846 = vunpack.c.l.b16 %v828
  %v3847 = vunpack.c.l.b16 %v829
  %v3848 = vunpack.c.l.b16 %v830
  %v3849 = vunpack.c.l.b16 %v831
  %v3850 = vunpack.c.l.b16 %v832
  %v3851 = vunpack.c.l.b16 %v833
  %v3852 = vunpack.c.l.b16 %v834
  %v3853 = vunpack.c.l.b16 %v835
  %v3854 = vunpack.c.l.b16 %v836
  %v3855 = vunpack.c.l.b16 %v837
  %v3856 = vunpack.c.l.b16 %v838
  %v3857 = vunpack.c.l.b16 %v839
  %v3858 = vunpack.c.l.b16 %v840
  %v3859 = vunpack.c.l.b16 %v841
  %v3860 = vunpack.c.l.b16 %v842
  %v3861 = vunpack.c.l.b16 %v843
  %v3862 = vunpack.c.l.b16 %v844
  %v3863 = vunpack.c.l.b16 %v845
  %v3864 = vunpack.c.l.b16 %v846
  %v3865 = vunpack.c.l.b16 %v847
  %v3866 = vunpack.c.l.b16 %v848
  %v3867 = vunpack.c.l.b16 %v849
  %v3868 = vunpack.c.l.b16 %v850
  %v3869 = vunpack.c.l.b16 %v851
  %v3870 = vunpack.c.l.b16 %v852
  %v3871 = vunpack.c.l.b16 %v853
  %v3872 = vunpack.c.l.b16 %v854
  %v3873 = vunpack.c.l.b16 %v855
  %v3874 = vunpack.c.l.b16 %v856
  %v3875 = vunpack.c.l.b16 %v857
  %v3876 = vunpack.c.l.b16 %v858
  %v3877 = vunpack.c.l.b16 %v859
  %v3878 = vunpack.c.l.b16 %v860
  %v3879 = vunpack.c.l.b16 %v861
  %v3880 = vunpack.c.l.b16 %v862
  %v3881 = vunpack.c.l.b16 %v863
  %v3882 = vunpack.c.l.b16 %v864
  %v3883 = vunpack.c.l.b16 %v865
  %v3884 = vunpack.c.l.b16 %v866
  %v3885 = vunpack.c.l.b16 %v867
  %v3886 = vunpack.c.l.b16 %v868
  %v3887 = vunpack.c.l.b16 %v869
  %v3888 = vunpack.c.l.b16 %v870
  %v3889 = vunpack.c.l.b16 %v871
  %v3890 = vunpack.c.l.b16 %v872
  %v3891 = vunpack.c.l.b16 %v873
  %v3892 = vunpack.c.l.b16 %v874
  %v3893 = vunpack.c.l.b16 %v875
  %v3894 = vunpack.c.l.b16 %v876
  %v3895 = vunpack.c.l.b16 %v877
  %v3896 = vunpack.c.l.b16 %v878
  %v3897 = vunpack.c.l.b16 %v879
  %v3898 = vunpack.c.l.b16 %v880
  %v3899 = vunpack.c.l.b16 %v881
  %v3900 = vunpack.c.l.b16 %v882
  %v3901 = vunpack.c.l.b16 %v883
  %v3902 = vunpack.c.l.b16 %v884
  %v3903 = vunpack.c.l.b16 %v885
  %v3904 = vunpack.c.l.b16 %v886
  %v3905 = vunpack.c.l.b16 %v887
  %v3906 = vunpack.c.l.b16 %v888
  %v3907 = vunpack.c.l.b16 %v889
  %v3908 = vunpack.c.l.b16 %v890
  %v3909 = vunpack.c.l.b16 %v891
  %v3910 = vunpack.c.l.b16 %v892
  %v3911 = vunpack.c.l.b16 %v893
  %v3912 = vunpack.c.l.b16 %v894
  %v3913 = vunpack.c.l.b16 %v895
  %v3914 = vunpack.c.l.b16 %v896
  %v3915 = vunpack.c.l.b16 %v897
  %v3916 = vunpack.c.l.b16 %v898
  %v3917 = vunpack.c.l.b16 %v899
  %v3918 = vunpack.c.l.b16 %v900
  %v3919 = vunpack.c.l.b16 %v901
  %v3920 = vunpack.c.l.b16 %v902
  %v3921 = vunpack.c.l.b16 %v903
  %v3922 = vunpack.c.l.b16 %v904
  %v3923 = vunpack.c.l.b16 %v905
  %v3924 = vunpack.c.l.b16 %v906
  %v3925 = vunpack.c.l.b16 %v907
  %v3926 = vunpack.c.l.b16 %v908
  %v3927 = vunpack.c.l.b16 %v909
  %v3928 = vunpack.c.l.b16 %v910
  %v3929 = vunpack.c.l.b16 %v911
  %v3930 = vunpack.c.l.b16 %v912
  %v3931 = vunpack.c.l.b16 %v913
  %v3932 = vunpack.c.l.b16 %v914
  %v3933 = vunpack.c.l.b16 %v915
  %v3934 = vunpack.c.l.b16 %v916
  %v3935 = vunpack.c.l.b16 %v917
  %v3936 = vunpack.c.l.b16 %v918
  %v3937 = vunpack.c.l.b16 %v919
  %v3938 = vunpack.c.l.b16 %v920
  %v3939 = vunpack.c.l.b16 %v921
  %v3940 = vunpack.c.l.b16 %v922
  %v3941 = vunpack.c.l.b16 %v923
  %v3942 = vunpack.c.l.b16 %v924
  %v3943 = vunpack.c.l.b16 %v925
  %v3944 = vunpack.c.l.b16 %v926
  %v3945 = vunpack.c.l.b16 %v927
  %v3946 = vunpack.c.l.b16 %v928
  %v3947 = vunpack.c.l.b16 %v929
  %v3948 = vunpack.c.l.b16 %v930
  %v3949 = vunpack.c.l.b16 %v931
  %v3950 = vunpack.c.l.b16 %v932
  %v3951 = vunpack.c.l.b16 %v933
  %v3952 = vunpack.c.l.b16 %v934
  %v3953 = vunpack.c.l.b16 %v935
  %v3954 = vunpack.c.l.b16 %v936
  %v3955 = vunpack.c.l.b16 %v937
  %v3956 = vunpack.c.l.b16 %v938
  %v3957 = vunpack.c.l.b16 %v939
  %v3958 = vunpack.c.l.b16 %v940
  %v3959 = vunpack.c.l.b16 %v941
  %v3960 = vunpack.c.l.b16 %v942
  %v3961 = vunpack.c.l.b16 %v943
  %v3962 = vunpack.c.l.b16 %v944
  %v3963 = vunpack.c.l.b16 %v945
  %v3964 = vunpack.c.l.b16 %v946
  %v3965 = vunpack.c.l.b16 %v947
  %v3966 = vunpack.c.l.b16 %v948
  %v3967 = vunpack.c.l.b16 %v949
  %v3968 = vunpack.c.l.b16 %v950
  %v3969 = vunpack.c.l.b16 %v951
  %v3970 = vunpack.c.l.b16 %v952
  %v3971 = vunpack.c.l.b16 %v953
  %v3972 = vunpack.c.l.b16 %v954
  %v3973 = vunpack.c.l.b16 %v955
  %v3974 = vunpack.c.l.b16 %v956
  %v3975 = vunpack.c.l.b16 %v957
  %v3976 = vunpack.c.l.b16 %v958
  %v3977 = vunpack.c.l.b16 %v959
  %v3978 = vunpack.c.l.b16 %v960
  %v3979 = vunpack.c.l.b16 %v961
  %v3980 = vunpack.c.l.b16 %v962
  %v3981 = vunpack.c.l.b16 %v963
  %v3982 = vunpack.c.l.b16 %v964
  %v3983 = vunpack.c.l.b16 %v965
  %v3984 = vunpack.c.l.b16 %v966
  %v3985 = vunpack.c.l.b16 %v967
  %v3986 = vunpack.c.l.b16 %v968
  %v3987 = vunpack.c.l.b16 %v969
  %v3988 = vunpack.c.l.b16 %v970
  %v3989 = vunpack.c.l.b16 %v971
  %v3990 = vunpack.c.l.b16 %v972
  %v3991 = vunpack.c.l.b16 %v973
  %v3992 = vunpack.c.l.b16 %v974
  %v3993 = vunpack.c.l.b16 %v975
  %v3994 = vunpack.c.l.b16 %v976
  %v3995 = vunpack.c.l.b16 %v977
  %v3996 = vunpack.c.l.b16 %v978
  %v3997 = vunpack.c.l.b16 %v979
  %v3998 = vunpack.c.l.b16 %v980
  %v3999 = vunpack.c.l.b16 %v981
  %v4000 = vunpack.c.l.b16 %v982
  %v4001 = vunpack.c.l.b16 %v983
  %v4002 = vunpack.c.l.b16 %v984
  %v4003 = vunpack.c.l.b16 %v985
  %v4004 = vunpack.c.l.b16 %v986
  %v4005 = vunpack.c.l.b16 %v987
  %v4006 = vunpack.c.l.b16 %v988
  %v4007 = vunpack.c.l.b16 %v989
  %v4008 = vunpack.c.l.b16 %v990
  %v4009 = vunpack.c.l.b16 %v991
  %v4010 = vunpack.c.l.b16 %v992
  %v4011 = vunpack.c.l.b16 %v993
  %v4012 = vunpack.c.l.b16 %v994
  %v4013 = vunpack.c.l.b16 %v995
  %v4014 = vunpack.c.l.b16 %v996
  %v4015 = vunpack.c.l.b16 %v997
  %v4016 = vunpack.c.l.b16 %v998
  %v4017 = vunpack.c.l.b16 %v999
  %v4018 = vunpack.c.l.b16 %v1000
  %v4019 = vunpack.c.l.b16 %v1001
  %v4020 = vunpack.c.l.b16 %v1002
  %v4021 = vunpack.c.l.b16 %v1003
  %v4022 = vunpack.c.l.b16 %v1004
  %v4023 = vunpack.c.l.b16 %v1005
  %v4024 = vunpack.c.l.b16 %v1006
  %v4025 = vunpack.c.l.b16 %v1007
  %v4026 = vunpack.c.l.b16 %v1008
  %v4027 = vunpack.c.l.b16 %v1009
  %v4028 = vunpack.c.l.b16 %v1010
  %v4029 = vunpack.c.l.b16 %v1011
  %v4030 = vunpack.c.l.b16 %v1012
  %v4031 = vunpack.c.l.b16 %v1013
  %v4032 = vunpack.c.l.b16 %v1014
  %v4033 = vunpack.c.l.b16 %v1015
  %v4034 = vunpack.c.l.b16 %v1016
  %v4035 = vunpack.c.l.b16 %v1017
  %v4036 = vunpack.c.l.b16 %v1018
  %v4037 = vunpack.c.l.b16 %v1019
  %v4038 = vunpack.c.l.b16 %v1020
  %v4039 = vunpack.c.l.b16 %v1021
  %v4040 = vunpack.c.l.b16 %v1022
  %v4041 = vunpack.c.l.b16 %v1023
  %v4042 = vunpack.c.l.b16 %v1024
  %v4043 = vunpack.c.l.b16 %v1025
  %v4044 = vunpack.c.l.b16 %v1026
  %v4045 = vunpack.c.l.b16 %v1027
  %v4046 = vunpack.c.l.b16 %v1028
  %v4047 = vunpack.c.l.b16 %v1029
  %v4048 = vunpack.c.l.b16 %v1030
  %v4049 = vunpack.c.l.b16 %v1031
  %v4050 = vunpack.c.l.b16 %v1032
  %v4051 = vunpack.c.l.b16 %v1033
  %v4052 = vunpack.c.l.b16 %v1034
  %v4053 = vunpack.c.l.b16 %v1035
  %v4054 = vunpack.c.l.b16 %v1036
  %v4055 = vunpack.c.l.b16 %v1037
  %v4056 = vunpack.c.l.b16 %v1038
  %v4057 = vunpack.c.l.b16 %v1039
  %v4058 = vunpack.c.l.b16 %v1040
  %v4059 = vunpack.c.l.b16 %v1041
  %v4060 = vunpack.c.l.b16 %v1042
  %v4061 = vunpack.c.l.b16 %v1043
  %v4062 = vunpack.c.l.b16 %v1044
  %v4063 = vunpack.c.l.b16 %v1045
  %v4064 = vunpack.c.l.b16 %v1046
  %v4065 = vunpack.c.l.b16 %v1047
  %v4066 = vunpack.c.l.b16 %v1048
  %v4067 = vunpack.c.l.b16 %v1049
  %v4068 = vunpack.c.l.b16 %v1050
  %v4069 = vunpack.c.l.b16 %v1051
  %v4070 = vunpack.c.l.b16 %v1052
  %v4071 = vunpack.c.l.b16 %v1053
  %v4072 = vunpack.c.l.b16 %v1054
  %v4073 = vunpack.c.l.b16 %v1055
  %v4074 = vunpack.c.l.b16 %v1056
  %v4075 = vunpack.c.l.b16 %v1057
  %v4076 = vunpack.c.l.b16 %v1058
  %v4077 = vunpack.c.l.b16 %v1059
  %v4078 = vunpack.c.l.b16 %v1060
  %v4079 = vunpack.c.l.b16 %v1061
  %v4080 = vunpack.c.l.b16 %v1062
  %v4081 = vunpack.c.l.b16 %v1063
  %v4082 = vunpack.c.l.b16 %v1064
  %v4083 = vunpack.c.l.b16 %v1065
  %v4084 = vunpack.c.l.b16 %v1066
  %v4085 = vunpack.c.l.b16 %v1067
  %v4086 = vunpack.c.l.b16 %v1068
  %v4087 = vunpack.c.l.b16 %v1069
  %v4088 = vunpack.c.l.b16 %v1070
  %v4089 = vunpack.c.l.b16 %v1071
  %v4090 = vunpack.c.l.b16 %v1072
  %v4091 = vunpack.c.l.b16 %v1073
  %v4092 = vunpack.c.l.b16 %v1074
  %v4093 = vunpack.c.l.b16 %v1075
  %v4094 = vunpack.c.l.b16 %v1076
  %v4095 = vunpack.c.l.b16 %v1077
  %v4096 = vunpack.c.l.b16 %v1078
  %v4097 = vunpack.c.l.b16 %v1079
  %v4098 = vunpack.c.l.b16 %v1080
  %v4099 = vunpack.c.l.b16 %v1081
  %v4100 = vunpack.c.l.b16 %v1082
  %v4101 = vunpack.c.l.b16 %v1083
  %v4102 = vunpack.c.l.b16 %v1084
  %v4103 = vunpack.c.l.b16 %v1085
  %v4104 = vunpack.c.l.b16 %v1086
  %v4105 = vunpack.c.l.b16 %v1087
  %v4106 = vunpack.c.l.b16 %v1088
  %v4107 = vunpack.c.l.b16 %v1089
  %v4108 = vunpack.c.l.b16 %v1090
  %v4109 = vunpack.c.l.b16 %v1091
  %v4110 = vunpack.c.l.b16 %v1092
  %v4111 = vunpack.c.l.b16 %v1093
  %v4112 = vunpack.c.l.b16 %v1094
  %v4113 = vunpack.c.l.b16 %v1095
  %v4114 = vunpack.c.l.b16 %v1096
  %v4115 = vunpack.c.l.b16 %v1097
  %v4116 = vunpack.c.l.b16 %v1098
  %v4117 = vunpack.c.l.b16 %v1099
  %v4118 = vunpack.c.l.b16 %v1100
  %v4119 = vunpack.c.l.b16 %v1101
  %v4120 = vunpack.c.l.b16 %v1102
  %v4121 = vunpack.c.l.b16 %v1103
  %v4122 = vunpack.c.l.b16 %v1104
  %v4123 = vunpack.c.l.b16 %v1105
  %v4124 = vunpack.c.l.b16 %v1106
  %v4125 = vunpack.c.l.b16 %v1107
  %v4126 = vunpack.c.l.b16 %v1108
  %v4127 = vunpack.c.l.b16 %v1109
  %v4128 = vunpack.c.l.b16 %v1110
  %v4129 = vunpack.c.l.b16 %v1111
  %v4130 = vunpack.c.l.b16 %v1112
  %v4131 = vunpack.c.l.b16 %v1113
  %v4132 = vunpack.c.l.b16 %v1114
  %v4133 = vunpack.c.l.b16 %v1115
  %v4134 = vunpack.c.l.b16 %v1116
  %v4135 = vunpack.c.l.b16 %v1117
  %v4136 = vunpack.c.l.b16 %v1118
  %v4137 = vunpack.c.l.b16 %v1119
  %v4138 = vunpack.c.l.b16 %v1120
  %v4139 = vunpack.c.l.b16 %v1121
  %v4140 = vunpack.c.l.b16 %v1122
  %v4141 = vunpack.c.l.b16 %v1123
  %v4142 = vunpack.c.l.b16 %v1124
  %v4143 = vunpack.c.l.b16 %v1125
  %v4144 = vunpack.c.l.b16 %v1126
  %v4145 = vunpack.c.l.b16 %v1127
  %v4146 = vunpack.c.l.b16 %v1128
  %v4147 = vunpack.c.l.b16 %v1129
  %v4148 = vunpack.c.l.b16 %v1130
  %v4149 = vunpack.c.l.b16 %v1131
  %v4150 = vunpack.c.l.b16 %v1132
  %v4151 = vunpack.c.l.b16 %v1133
  %v4152 = vunpack.c.l.b16 %v1134
  %v4153 = vunpack.c.l.b16 %v1135
  %v4154 = vunpack.c.l.b16 %v1136
  %v4155 = vunpack.c.l.b16 %v1137
  %v4156 = vunpack.c.l.b16 %v1138
  %v4157 = vunpack.c.l.b16 %v1139
  %v4158 = vunpack.c.l.b16 %v1140
  %v4159 = vunpack.c.l.b16 %v1141
  %v4160 = vunpack.c.l.b16 %v1142
  %v4161 = vunpack.c.l.b16 %v1143
  %v4162 = vunpack.c.l.b16 %v1144
  %v4163 = vunpack.c.l.b16 %v1145
  %v4164 = vunpack.c.l.b16 %v1146
  %v4165 = vunpack.c.l.b16 %v1147
  %v4166 = vunpack.c.l.b16 %v1148
  %v4167 = vunpack.c.l.b16 %v1149
  %v4168 = vunpack.c.l.b16 %v1150
  %v4169 = vunpack.c.l.b16 %v1151
  %v4170 = vunpack.c.l.b16 %v1152
  %v4171 = vunpack.c.l.b16 %v1153
  %v4172 = vunpack.c.l.b16 %v1154
  %v4173 = vunpack.c.l.b16 %v1155
  %v4174 = vunpack.c.l.b16 %v1156
  %v4175 = vunpack.c.l.b16 %v1157
  %v4176 = vunpack.c.l.b16 %v1158
  %v4177 = vunpack.c.l.b16 %v1159
  %v4178 = vunpack.c.l.b16 %v1160
  %v4179 = vunpack.c.l.b16 %v1161
  %v4180 = vunpack.c.l.b16 %v1162
  %v4181 = vunpack.c.l.b16 %v1163
  %v4182 = vunpack.c.l.b16 %v1164
  %v4183 = vunpack.c.l.b16 %v1165
  %v4184 = vunpack.c.l.b16 %v1166
  %v4185 = vunpack.c.l.b16 %v1167
  %v4186 = vunpack.c.l.b16 %v1168
  %v4187 = vunpack.c.l.b16 %v1169
  %v4188 = vunpack.c.l.b16 %v1170
  %v4189 = vunpack.c.l.b16 %v1171
  %v4190 = vunpack.c.l.b16 %v1172
  %v4191 = vunpack.c.l.b16 %v1173
  %v4192 = vunpack.c.l.b16 %v1174
  %v4193 = vunpack.c.l.b16 %v1175
  %v4194 = vunpack.c.l.b16 %v1176
  %v4195 = vunpack.c.l.b16 %v1177
  %v4196 = vunpack.c.l.b16 %v1178
  %v4197 = vunpack.c.l.b16 %v1179
  %v4198 = vunpack.c.l.b16 %v1180
  %v4199 = vunpack.c.l.b16 %v1181
  %v4200 = vunpack.c.l.b16 %v1182
  %v4201 = vunpack.c.l.b16 %v1183
  %v4202 = vunpack.c.l.b16 %v1184
  %v4203 = vunpack.c.l.b16 %v1185
  %v4204 = vunpack.c.l.b16 %v1186
  %v4205 = vunpack.c.l.b16 %v1187
  %v4206 = vunpack.c.l.b16 %v1188
  %v4207 = vunpack.c.l.b16 %v1189
  %v4208 = vunpack.c.l.b16 %v1190
  %v4209 = vunpack.c.l.b16 %v1191
  %v4210 = vunpack.c.l.b16 %v1192
  %v4211 = vunpack.c.l.b16 %v1193
  %v4212 = vunpack.c.l.b16 %v1194
  %v4213 = vunpack.c.l.b16 %v1195
  %v4214 = vunpack.c.l.b16 %v1196
  %v4215 = vunpack.c.l.b16 %v1197
  %v4216 = vunpack.c.l.b16 %v1198
  %v4217 = vunpack.c.l.b16 %v1199
  %v4218 = vunpack.c.l.b16 %v1200
  %v4219 = vunpack.c.l.b16 %v1201
  %v4220 = vunpack.c.l.b16 %v1202
  %v4221 = vunpack.c.l.b16 %v1203
  %v4222 = vunpack.c.l.b16 %v1204
  %v4223 = vunpack.c.l.b16 %v1205
  %v4224 = vunpack.c.l.b16 %v1206
  %v4225 = vunpack.c.l.b16 %v1207
  %v4226 = vunpack.c.l.b16 %v1208
  %v4227 = vunpack.c.l.b16 %v1209
  %v4228 = vunpack.c.l.b16 %v1210
  %v4229 = vunpack.c.l.b16 %v1211
  %v4230 = vunpack.c.l.b16 %v1212
  %v4231 = vunpack.c.l.b16 %v1213
  %v4232 = vunpack.c.l.b16 %v1214
  %v4233 = vunpack.c.l.b16 %v1215
  %v4234 = vunpack.c.l.b16 %v1216
  %v4235 = vunpack.c.l.b16 %v1217
  %v4236 = vunpack.c.l.b16 %v1218
  %v4237 = vunpack.c.l.b16 %v1219
  %v4238 = vunpack.c.l.b16 %v1220
  %v4239 = vunpack.c.l.b16 %v1221
  %v4240 = vunpack.c.l.b16 %v1222
  %v4241 = vunpack.c.l.b16 %v1223
  %v4242 = vunpack.c.l.b16 %v1224
  %v4243 = vunpack.c.l.b16 %v1225
  %v4244 = vunpack.c.l.b16 %v1226
  %v4245 = vunpack.c.l.b16 %v1227
  %v4246 = vunpack.c.l.b16 %v1228
  %v4247 = vunpack.c.l.b16 %v1229
  %v4248 = vunpack.c.l.b16 %v1230
  %v4249 = vunpack.c.l.b16 %v1231
  %v4250 = vunpack.c.l.b16 %v1232
  %v4251 = vunpack.c.l.b16 %v1233
  %v4252 = vunpack.c.l.b16 %v1234
  %v4253 = vunpack.c.l.b16 %v1235
  %v4254 = vunpack.c.l.b16 %v1236
  %v4255 = vunpack.c.l.b16 %v1237
  %v4256 = vunpack.c.l.b16 %v1238
  %v4257 = vpack.c.b16 %v3234, %v3233
  %v4258 = vpack.c.b16 %v3236, %v3235
  %v4259 = vpack.c.b16 %v3238, %v3237
  %v4260 = vpack.c.b16 %v3240, %v3239
  %v4261 = vpack.c.b16 %v3242, %v3241
  %v4262 = vpack.c.b16 %v3244, %v3243
  %v4263 = vpack.c.b16 %v3246, %v3245
  %v4264 = vpack.c.b16 %v3248, %v3247
  %v4265 = vpack.c.b16 %v3250, %v3249
  %v4266 = vpack.c.b16 %v3252, %v3251
  %v4267 = vpack.c.b16 %v3254, %v3253
  %v4268 = vpack.c.b16 %v3256, %v3255
  %v4269 = vpack.c.b16 %v3258, %v3257
  %v4270 = vpack.c.b16 %v3260, %v3259
  %v4271 = vpack.c.b16 %v3262, %v3261
  %v4272 = vpack.c.b16 %v3264, %v3263
  %v4273 = vpack.c.b16 %v3266, %v3265
  %v4274 = vpack.c.b16 %v3268, %v3267
  %v4275 = vpack.c.b16 %v3270, %v3269
  %v4276 = vpack.c.b16 %v3272, %v3271
  %v4277 = vpack.c.b16 %v3274, %v3273
  %v4278 = vpack.c.b16 %v3276, %v3275
  %v4279 = vpack.c.b16 %v3278, %v3277
  %v4280 = vpack.c.b16 %v3280, %v3279
  %v4281 = vpack.c.b16 %v3282, %v3281
  %v4282 = vpack.c.b16 %v3284, %v3283
  %v4283 = vpack.c.b16 %v3286, %v3285
  %v4284 = vpack.c.b16 %v3288, %v3287
  %v4285 = vpack.c.b16 %v3290, %v3289
  %v4286 = vpack.c.b16 %v3292, %v3291
  %v4287 = vpack.c.b16 %v3294, %v3293
  %v4288 = vpack.c.b16 %v3296, %v3295
  %v4289 = vpack.c.b16 %v3298, %v3297
  %v4290 = vpack.c.b16 %v3300, %v3299
  %v4291 = vpack.c.b16 %v3302, %v3301
  %v4292 = vpack.c.b16 %v3304, %v3303
  %v4293 = vpack.c.b16 %v3306, %v3305
  %v4294 = vpack.c.b16 %v3308, %v3307
  %v4295 = vpack.c.b16 %v3310, %v3309
  %v4296 = vpack.c.b16 %v3312, %v3311
  %v4297 = vpack.c.b16 %v3314, %v3313
  %v4298 = vpack.c.b16 %v3316, %v3315
  %v4299 = vpack.c.b16 %v3318, %v3317
  %v4300 = vpack.c.b16 %v3320, %v3319
  %v4301 = vpack.c.b16 %v3322, %v3321
  %v4302 = vpack.c.b16 %v3324, %v3323
  %v4303 = vpack.c.b16 %v3326, %v3325
  %v4304 = vpack.c.b16 %v3328, %v3327
  %v4305 = vpack.c.b16 %v3330, %v3329
  %v4306 = vpack.c.b16 %v3332, %v3331
  %v4307 = vpack.c.b16 %v3334, %v3333
  %v4308 = vpack.c.b16 %v3336, %v3335
  %v4309 = vpack.c.b16 %v3338, %v3337
  %v4310 = vpack.c.b16 %v3340, %v3339
  %v4311 = vpack.c.b16 %v3342, %v3341
  %v4312 = vpack.c.b16 %v3344, %v3343
  %v4313 = vpack.c.b16 %v3346, %v3345
  %v4314 = vpack.c.b16 %v3348, %v3347
  %v4315 = vpack.c.b16 %v3350, %v3349
  %v4316 = vpack.c.b16 %v3352, %v3351
  %v4317 = vpack.c.b16 %v3354, %v3353
  %v4318 = vpack.c.b16 %v3356, %v3355
  %v4319 = vpack.c.b16 %v3358, %v3357
  %v4320 = vpack.c.b16 %v3360, %v3359
  %v4321 = vpack.c.b16 %v3362, %v3361
  %v4322 = vpack.c.b16 %v3364, %v3363
  %v4323 = vpack.c.b16 %v3366, %v3365
  %v4324 = vpack.c.b16 %v3368, %v3367
  %v4325 = vpack.c.b16 %v3370, %v3369
  %v4326 = vpack.c.b16 %v3372, %v3371
  %v4327 = vpack.c.b16 %v3374, %v3373
  %v4328 = vpack.c.b16 %v3376, %v3375
  %v4329 = vpack.c.b16 %v3378, %v3377
  %v4330 = vpack.c.b16 %v3380, %v3379
  %v4331 = vpack.c.b16 %v3382, %v3381
  %v4332 = vpack.c.b16 %v3384, %v3383
  %v4333 = vpack.c.b16 %v3386, %v3385
  %v4334 = vpack.c.b16 %v3388, %v3387
  %v4335 = vpack.c.b16 %v3390, %v3389
  %v4336 = vpack.c.b16 %v3392, %v3391
  %v4337 = vpack.c.b16 %v3394, %v3393
  %v4338 = vpack.c.b16 %v3396, %v3395
  %v4339 = vpack.c.b16 %v3398, %v3397
  %v4340 = vpack.c.b16 %v3400, %v3399
  %v4341 = vpack.c.b16 %v3402, %v3401
  %v4342 = vpack.c.b16 %v3404, %v3403
  %v4343 = vpack.c.b16 %v3406, %v3405
  %v4344 = vpack.c.b16 %v3408, %v3407
  %v4345 = vpack.c.b16 %v3410, %v3409
  %v4346 = vpack.c.b16 %v3412, %v3411
  %v4347 = vpack.c.b16 %v3414, %v3413
  %v4348 = vpack.c.b16 %v3416, %v3415
  %v4349 = vpack.c.b16 %v3418, %v3417
  %v4350 = vpack.c.b16 %v3420, %v3419
  %v4351 = vpack.c.b16 %v3422, %v3421
  %v4352 = vpack.c.b16 %v3424, %v3423
  %v4353 = vpack.c.b16 %v3426, %v3425
  %v4354 = vpack.c.b16 %v3428, %v3427
  %v4355 = vpack.c.b16 %v3430, %v3429
  %v4356 = vpack.c.b16 %v3432, %v3431
  %v4357 = vpack.c.b16 %v3434, %v3433
  %v4358 = vpack.c.b16 %v3436, %v3435
  %v4359 = vpack.c.b16 %v3438, %v3437
  %v4360 = vpack.c.b16 %v3440, %v3439
  %v4361 = vpack.c.b16 %v3442, %v3441
  %v4362 = vpack.c.b16 %v3444, %v3443
  %v4363 = vpack.c.b16 %v3446, %v3445
  %v4364 = vpack.c.b16 %v3448, %v3447
  %v4365 = vpack.c.b16 %v3450, %v3449
  %v4366 = vpack.c.b16 %v3452, %v3451
  %v4367 = vpack.c.b16 %v3454, %v3453
  %v4368 = vpack.c.b16 %v3456, %v3455
  %v4369 = vpack.c.b16 %v3458, %v3457
  %v4370 = vpack.c.b16 %v3460, %v3459
  %v4371 = vpack.c.b16 %v3462, %v3461
  %v4372 = vpack.c.b16 %v3464, %v3463
  %v4373 = vpack.c.b16 %v3466, %v3465
  %v4374 = vpack.c.b16 %v3468, %v3467
  %v4375 = vpack.c.b16 %v3470, %v3469
  %v4376 = vpack.c.b16 %v3472, %v3471
  %v4377 = vpack.c.b16 %v3474, %v3473
  %v4378 = vpack.c.b16 %v3476, %v3475
  %v4379 = vpack.c.b16 %v3478, %v3477
  %v4380 = vpack.c.b16 %v3480, %v3479
  %v4381 = vpack.c.b16 %v3482, %v3481
  %v4382 = vpack.c.b16 %v3484, %v3483
  %v4383 = vpack.c.b16 %v3486, %v3485
  %v4384 = vpack.c.b16 %v3488, %v3487
  %v4385 = vpack.c.b16 %v3490, %v3489
  %v4386 = vpack.c.b16 %v3492, %v3491
  %v4387 = vpack.c.b16 %v3494, %v3493
  %v4388 = vpack.c.b16 %v3496, %v3495
  %v4389 = vpack.c.b16 %v3498, %v3497
  %v4390 = vpack.c.b16 %v3500, %v3499
  %v4391 = vpack.c.b16 %v3502, %v3501
  %v4392 = vpack.c.b16 %v3504, %v3503
  %v4393 = vpack.c.b16 %v3506, %v3505
  %v4394 = vpack.c.b16 %v3508, %v3507
  %v4395 = vpack.c.b16 %v3510, %v3509
  %v4396 = vpack.c.b16 %v3512, %v3511
  %v4397 = vpack.c.b16 %v3514, %v3513
  %v4398 = vpack.c.b16 %v3516, %v3515
  %v4399 = vpack.c.b16 %v3518, %v3517
  %v4400 = vpack.c.b16 %v3520, %v3519
  %v4401 = vpack.c.b16 %v3522, %v3521
  %v4402 = vpack.c.b16 %v3524, %v3523
  %v4403 = vpack.c.b16 %v3526, %v3525
  %v4404 = vpack.c.b16 %v3528, %v3527
  %v4405 = vpack.c.b16 %v3530, %v3529
  %v4406 = vpack.c.b16 %v3532, %v3531
  %v4407 = vpack.c.b16 %v3534, %v3533
  %v4408 = vpack.c.b16 %v3536, %v3535
  %v4409 = vpack.c.b16 %v3538, %v3537
  %v4410 = vpack.c.b16 %v3540, %v3539
  %v4411 = vpack.c.b16 %v3542, %v3541
  %v4412 = vpack.c.b16 %v3544, %v3543
  %v4413 = vpack.c.b16 %v3546, %v3545
  %v4414 = vpack.c.b16 %v3548, %v3547
  %v4415 = vpack.c.b16 %v3550, %v3549
  %v4416 = vpack.c.b16 %v3552, %v3551
  %v4417 = vpack.c.b16 %v3554, %v3553
  %v4418 = vpack.c.b16 %v3556, %v3555
  %v4419 = vpack.c.b16 %v3558, %v3557
  %v4420 = vpack.c.b16 %v3560, %v3559
  %v4421 = vpack.c.b16 %v3562, %v3561
  %v4422 = vpack.c.b16 %v3564, %v3563
  %v4423 = vpack.c.b16 %v3566, %v3565
  %v4424 = vpack.c.b16 %v3568, %v3567
  %v4425 = vpack.c.b16 %v3570, %v3569
  %v4426 = vpack.c.b16 %v3572, %v3571
  %v4427 = vpack.c.b16 %v3574, %v3573
  %v4428 = vpack.c.b16 %v3576, %v3575
  %v4429 = vpack.c.b16 %v3578, %v3577
  %v4430 = vpack.c.b16 %v3580, %v3579
  %v4431 = vpack.c.b16 %v3582, %v3581
  %v4432 = vpack.c.b16 %v3584, %v3583
  %v4433 = vpack.c.b16 %v3586, %v3585
  %v4434 = vpack.c.b16 %v3588, %v3587
  %v4435 = vpack.c.b16 %v3590, %v3589
  %v4436 = vpack.c.b16 %v3592, %v3591
  %v4437 = vpack.c.b16 %v3594, %v3593
  %v4438 = vpack.c.b16 %v3596, %v3595
  %v4439 = vpack.c.b16 %v3598, %v3597
  %v4440 = vpack.c.b16 %v3600, %v3599
  %v4441 = vpack.c.b16 %v3602, %v3601
  %v4442 = vpack.c.b16 %v3604, %v3603
  %v4443 = vpack.c.b16 %v3606, %v3605
  %v4444 = vpack.c.b16 %v3608, %v3607
  %v4445 = vpack.c.b16 %v3610, %v3609
  %v4446 = vpack.c.b16 %v3612, %v3611
  %v4447 = vpack.c.b16 %v3614, %v3613
  %v4448 = vpack.c.b16 %v3616, %v3615
  %v4449 = vpack.c.b16 %v3618, %v3617
  %v4450 = vpack.c.b16 %v3620, %v3619
  %v4451 = vpack.c.b16 %v3622, %v3621
  %v4452 = vpack.c.b16 %v3624, %v3623
  %v4453 = vpack.c.b16 %v3626, %v3625
  %v4454 = vpack.c.b16 %v3628, %v3627
  %v4455 = vpack.c.b16 %v3630, %v3629
  %v4456 = vpack.c.b16 %v3632, %v3631
  %v4457 = vpack.c.b16 %v3634, %v3633
  %v4458 = vpack.c.b16 %v3636, %v3635
  %v4459 = vpack.c.b16 %v3638, %v3637
  %v4460 = vpack.c.b16 %v3640, %v3639
  %v4461 = vpack.c.b16 %v3642, %v3641
  %v4462 = vpack.c.b16 %v3644, %v3643
  %v4463 = vpack.c.b16 %v3646, %v3645
  %v4464 = vpack.c.b16 %v3648, %v3647
  %v4465 = vpack.c.b16 %v3650, %v3649
  %v4466 = vpack.c.b16 %v3652, %v3651
  %v4467 = vpack.c.b16 %v3654, %v3653
  %v4468 = vpack.c.b16 %v3656, %v3655
  %v4469 = vpack.c.b16 %v3658, %v3657
  %v4470 = vpack.c.b16 %v3660, %v3659
  %v4471 = vpack.c.b16 %v3662, %v3661
  %v4472 = vpack.c.b16 %v3664, %v3663
  %v4473 = vpack.c.b16 %v3666, %v3665
  %v4474 = vpack.c.b16 %v3668, %v3667
  %v4475 = vpack.c.b16 %v3670, %v3669
  %v4476 = vpack.c.b16 %v3672, %v3671
  %v4477 = vpack.c.b16 %v3674, %v3673
  %v4478 = vpack.c.b16 %v3676, %v3675
  %v4479 = vpack.c.b16 %v3678, %v3677
  %v4480 = vpack.c.b16 %v3680, %v3679
  %v4481 = vpack.c.b16 %v3682, %v3681
  %v4482 = vpack.c.b16 %v3684, %v3683
  %v4483 = vpack.c.b16 %v3686, %v3685
  %v4484 = vpack.c.b16 %v3688, %v3687
  %v4485 = vpack.c.b16 %v3690, %v3689
  %v4486 = vpack.c.b16 %v3692, %v3691
  %v4487 = vpack.c.b16 %v3694, %v3693
  %v4488 = vpack.c.b16 %v3696, %v3695
  %v4489 = vpack.c.b16 %v3698, %v3697
  %v4490 = vpack.c.b16 %v3700, %v3699
  %v4491 = vpack.c.b16 %v3702, %v3701
  %v4492 = vpack.c.b16 %v3704, %v3703
  %v4493 = vpack.c.b16 %v3706, %v3705
  %v4494 = vpack.c.b16 %v3708, %v3707
  %v4495 = vpack.c.b16 %v3710, %v3709
  %v4496 = vpack.c.b16 %v3712, %v3711
  %v4497 = vpack.c.b16 %v3714, %v3713
  %v4498 = vpack.c.b16 %v3716, %v3715
  %v4499 = vpack.c.b16 %v3718, %v3717
  %v4500 = vpack.c.b16 %v3720, %v3719
  %v4501 = vpack.c.b16 %v3722, %v3721
  %v4502 = vpack.c.b16 %v3724, %v3723
  %v4503 = vpack.c.b16 %v3726, %v3725
  %v4504 = vpack.c.b16 %v3728, %v3727
  %v4505 = vpack.c.b16 %v3730, %v3729
  %v4506 = vpack.c.b16 %v3732, %v3731
  %v4507 = vpack.c.b16 %v3734, %v3733
  %v4508 = vpack.c.b16 %v3736, %v3735
  %v4509 = vpack.c.b16 %v3738, %v3737
  %v4510 = vpack.c.b16 %v3740, %v3739
  %v4511 = vpack.c.b16 %v3742, %v3741
  %v4512 = vpack.c.b16 %v3744, %v3743
  %v4513 = vpack.c.b16 %v3746, %v3745
  %v4514 = vpack.c.b16 %v3748, %v3747
  %v4515 = vpack.c.b16 %v3750, %v3749
  %v4516 = vpack.c.b16 %v3752, %v3751
  %v4517 = vpack.c.b16 %v3754, %v3753
  %v4518 = vpack.c.b16 %v3756, %v3755
  %v4519 = vpack.c.b16 %v3758, %v3757
  %v4520 = vpack.c.b16 %v3760, %v3759
  %v4521 = vpack.c.b16 %v3762, %v3761
  %v4522 = vpack.c.b16 %v3764, %v3763
  %v4523 = vpack.c.b16 %v3766, %v3765
  %v4524 = vpack.c.b16 %v3768, %v3767
  %v4525 = vpack.c.b16 %v3770, %v3769
  %v4526 = vpack.c.b16 %v3772, %v3771
  %v4527 = vpack.c.b16 %v3774, %v3773
  %v4528 = vpack.c.b16 %v3776, %v3775
  %v4529 = vpack.c.b16 %v3778, %v3777
  %v4530 = vpack.c.b16 %v3780, %v3779
  %v4531 = vpack.c.b16 %v3782, %v3781
  %v4532 = vpack.c.b16 %v3784, %v3783
  %v4533 = vpack.c.b16 %v3786, %v3785
  %v4534 = vpack.c.b16 %v3788, %v3787
  %v4535 = vpack.c.b16 %v3790, %v3789
  %v4536 = vpack.c.b16 %v3792, %v3791
  %v4537 = vpack.c.b16 %v3794, %v3793
  %v4538 = vpack.c.b16 %v3796, %v3795
  %v4539 = vpack.c.b16 %v3798, %v3797
  %v4540 = vpack.c.b16 %v3800, %v3799
  %v4541 = vpack.c.b16 %v3802, %v3801
  %v4542 = vpack.c.b16 %v3804, %v3803
  %v4543 = vpack.c.b16 %v3806, %v3805
  %v4544 = vpack.c.b16 %v3808, %v3807
  %v4545 = vpack.c.b16 %v3810, %v3809
  %v4546 = vpack.c.b16 %v3812, %v3811
  %v4547 = vpack.c.b16 %v3814, %v3813
  %v4548 = vpack.c.b16 %v3816, %v3815
  %v4549 = vpack.c.b16 %v3818, %v3817
  %v4550 = vpack.c.b16 %v3820, %v3819
  %v4551 = vpack.c.b16 %v3822, %v3821
  %v4552 = vpack.c.b16 %v3824, %v3823
  %v4553 = vpack.c.b16 %v3826, %v3825
  %v4554 = vpack.c.b16 %v3828, %v3827
  %v4555 = vpack.c.b16 %v3830, %v3829
  %v4556 = vpack.c.b16 %v3832, %v3831
  %v4557 = vpack.c.b16 %v3834, %v3833
  %v4558 = vpack.c.b16 %v3836, %v3835
  %v4559 = vpack.c.b16 %v3838, %v3837
  %v4560 = vpack.c.b16 %v3840, %v3839
  %v4561 = vpack.c.b16 %v3842, %v3841
  %v4562 = vpack.c.b16 %v3844, %v3843
  %v4563 = vpack.c.b16 %v3846, %v3845
  %v4564 = vpack.c.b16 %v3848, %v3847
  %v4565 = vpack.c.b16 %v3850, %v3849
  %v4566 = vpack.c.b16 %v3852, %v3851
  %v4567 = vpack.c.b16 %v3854, %v3853
  %v4568 = vpack.c.b16 %v3856, %v3855
  %v4569 = vpack.c.b16 %v3858, %v3857
  %v4570 = vpack.c.b16 %v3860, %v3859
  %v4571 = vpack.c.b16 %v3862, %v3861
  %v4572 = vpack.c.b16 %v3864, %v3863
  %v4573 = vpack.c.b16 %v3866, %v3865
  %v4574 = vpack.c.b16 %v3868, %v3867
  %v4575 = vpack.c.b16 %v3870, %v3869
  %v4576 = vpack.c.b16 %v3872, %v3871
  %v4577 = vpack.c.b16 %v3874, %v3873
  %v4578 = vpack.c.b16 %v3876, %v3875
  %v4579 = vpack.c.b16 %v3878, %v3877
  %v4580 = vpack.c.b16 %v3880, %v3879
  %v4581 = vpack.c.b16 %v3882, %v3881
  %v4582 = vpack.c.b16 %v3884, %v3883
  %v4583 = vpack.c.b16 %v3886, %v3885
  %v4584 = vpack.c.b16 %v3888, %v3887
  %v4585 = vpack.c.b16 %v3890, %v3889
  %v4586 = vpack.c.b16 %v3892, %v3891
  %v4587 = vpack.c.b16 %v3894, %v3893
  %v4588 = vpack.c.b16 %v3896, %v3895
  %v4589 = vpack.c.b16 %v3898, %v3897
  %v4590 = vpack.c.b16 %v3900, %v3899
  %v4591 = vpack.c.b16 %v3902, %v3901
  %v4592 = vpack.c.b16 %v3904, %v3903
  %v4593 = vpack.c.b16 %v3906, %v3905
  %v4594 = vpack.c.b16 %v3908, %v3907
  %v4595 = vpack.c.b16 %v3910, %v3909
  %v4596 = vpack.c.b16 %v3912, %v3911
  %v4597 = vpack.c.b16 %v3914, %v3913
  %v4598 = vpack.c.b16 %v3916, %v3915
  %v4599 = vpack.c.b16 %v3918, %v3917
  %v4600 = vpack.c.b16 %v3920, %v3919
  %v4601 = vpack.c.b16 %v3922, %v3921
  %v4602 = vpack.c.b16 %v3924, %v3923
  %v4603 = vpack.c.b16 %v3926, %v3925
  %v4604 = vpack.c.b16 %v3928, %v3927
  %v4605 = vpack.c.b16 %v3930, %v3929
  %v4606 = vpack.c.b16 %v3932, %v3931
  %v4607 = vpack.c.b16 %v3934, %v3933
  %v4608 = vpack.c.b16 %v3936, %v3935
  %v4609 = vpack.c.b16 %v3938, %v3937
  %v4610 = vpack.c.b16 %v3940, %v3939
  %v4611 = vpack.c.b16 %v3942, %v3941
  %v4612 = vpack.c.b16 %v3944, %v3943
  %v4613 = vpack.c.b16 %v3946, %v3945
  %v4614 = vpack.c.b16 %v3948, %v3947
  %v4615 = vpack.c.b16 %v3950, %v3949
  %v4616 = vpack.c.b16 %v3952, %v3951
  %v4617 = vpack.c.b16 %v3954, %v3953
  %v4618 = vpack.c.b16 %v3956, %v3955
  %v4619 = vpack.c.b16 %v3958, %v3957
  %v4620 = vpack.c.b16 %v3960, %v3959
  %v4621 = vpack.c.b16 %v3962, %v3961
  %v4622 = vpack.c.b16 %v3964, %v3963
  %v4623 = vpack.c.b16 %v3966, %v3965
  %v4624 = vpack.c.b16 %v3968, %v3967
  %v4625 = vpack.c.b16 %v3970, %v3969
  %v4626 = vpack.c.b16 %v3972, %v3971
  %v4627 = vpack.c.b16 %v3974, %v3973
  %v4628 = vpack.c.b16 %v3976, %v3975
  %v4629 = vpack.c.b16 %v3978, %v3977
  %v4630 = vpack.c.b16 %v3980, %v3979
  %v4631 = vpack.c.b16 %v3982, %v3981
  %v4632 = vpack.c.b16 %v3984, %v3983
  %v4633 = vpack.c.b16 %v3986, %v3985
  %v4634 = vpack.c.b16 %v3988, %v3987
  %v4635 = vpack.c.b16 %v3990, %v3989
  %v4636 = vpack.c.b16 %v3992, %v3991
  %v4637 = vpack.c.b16 %v3994, %v3993
  %v4638 = vpack.c.b16 %v3996, %v3995
  %v4639 = vpack.c.b16 %v3998, %v3997
  %v4640 = vpack.c.b16 %v4000, %v3999
  %v4641 = vpack.c.b16 %v4002, %v4001
  %v4642 = vpack.c.b16 %v4004, %v4003
  %v4643 = vpack.c.b16 %v4006, %v4005
  %v4644 = vpack.c.b16 %v4008, %v4007
  %v4645 = vpack.c.b16 %v4010, %v4009
  %v4646 = vpack.c.b16 %v4012, %v4011
  %v4647 = vpack.c.b16 %v4014, %v4013
  %v4648 = vpack.c.b16 %v4016, %v4015
  %v4649 = vpack.c.b16 %v4018, %v4017
  %v4650 = vpack.c.b16 %v4020, %v4019
  %v4651 = vpack.c.b16 %v4022, %v4021
  %v4652 = vpack.c.b16 %v4024, %v4023
  %v4653 = vpack.c.b16 %v4026, %v4025
  %v4654 = vpack.c.b16 %v4028, %v4027
  %v4655 = vpack.c.b16 %v4030, %v4029
  %v4656 = vpack.c.b16 %v4032, %v4031
  %v4657 = vpack.c.b16 %v4034, %v4033
  %v4658 = vpack.c.b16 %v4036, %v4035
  %v4659 = vpack.c.b16 %v4038, %v4037
  %v4660 = vpack.c.b16 %v4040, %v4039
  %v4661 = vpack.c.b16 %v4042, %v4041
  %v4662 = vpack.c.b16 %v4044, %v4043
  %v4663 = vpack.c.b16 %v4046, %v4045
  %v4664 = vpack.c.b16 %v4048, %v4047
  %v4665 = vpack.c.b16 %v4050, %v4049
  %v4666 = vpack.c.b16 %v4052, %v4051
  %v4667 = vpack.c.b16 %v4054, %v4053
  %v4668 = vpack.c.b16 %v4056, %v4055
  %v4669 = vpack.c.b16 %v4058, %v4057
  %v4670 = vpack.c.b16 %v4060, %v4059
  %v4671 = vpack.c.b16 %v4062, %v4061
  %v4672 = vpack.c.b16 %v4064, %v4063
  %v4673 = vpack.c.b16 %v4066, %v4065
  %v4674 = vpack.c.b16 %v4068, %v4067
  %v4675 = vpack.c.b16 %v4070, %v4069
  %v4676 = vpack.c.b16 %v4072, %v4071
  %v4677 = vpack.c.b16 %v4074, %v4073
  %v4678 = vpack.c.b16 %v4076, %v4075
  %v4679 = vpack.c.b16 %v4078, %v4077
  %v4680 = vpack.c.b16 %v4080, %v4079
  %v4681 = vpack.c.b16 %v4082, %v4081
  %v4682 = vpack.c.b16 %v4084, %v4083
  %v4683 = vpack.c.b16 %v4086, %v4085
  %v4684 = vpack.c.b16 %v4088, %v4087
  %v4685 = vpack.c.b16 %v4090, %v4089
  %v4686 = vpack.c.b16 %v4092, %v4091
  %v4687 = vpack.c.b16 %v4094, %v4093
  %v4688 = vpack.c.b16 %v4096, %v4095
  %v4689 = vpack.c.b16 %v4098, %v4097
  %v4690 = vpack.c.b16 %v4100, %v4099
  %v4691 = vpack.c.b16 %v4102, %v4101
  %v4692 = vpack.c.b16 %v4104, %v4103
  %v4693 = vpack.c.b16 %v4106, %v4105
  %v4694 = vpack.c.b16 %v4108, %v4107
  %v4695 = vpack.c.b16 %v4110, %v4109
  %v4696 = vpack.c.b16 %v4112, %v4111
  %v4697 = vpack.c.b16 %v4114, %v4113
  %v4698 = vpack.c.b16 %v4116, %v4115
  %v4699 = vpack.c.b16 %v4118, %v4117
  %v4700 = vpack.c.b16 %v4120, %v4119
  %v4701 = vpack.c.b16 %v4122, %v4121
  %v4702 = vpack.c.b16 %v4124, %v4123
  %v4703 = vpack.c.b16 %v4126, %v4125
  %v4704 = vpack.c.b16 %v4128, %v4127
  %v4705 = vpack.c.b16 %v4130, %v4129
  %v4706 = vpack.c.b16 %v4132, %v4131
  %v4707 = vpack.c.b16 %v4134, %v4133
  %v4708 = vpack.c.b16 %v4136, %v4135
  %v4709 = vpack.c.b16 %v4138, %v4137
  %v4710 = vpack.c.b16 %v4140, %v4139
  %v4711 = vpack.c.b16 %v4142, %v4141
  %v4712 = vpack.c.b16 %v4144, %v4143
  %v4713 = vpack.c.b16 %v4146, %v4145
  %v4714 = vpack.c.b16 %v4148, %v4147
  %v4715 = vpack.c.b16 %v4150, %v4149
  %v4716 = vpack.c.b16 %v4152, %v4151
  %v4717 = vpack.c.b16 %v4154, %v4153
  %v4718 = vpack.c.b16 %v4156, %v4155
  %v4719 = vpack.c.b16 %v4158, %v4157
  %v4720 = vpack.c.b16 %v4160, %v4159
  %v4721 = vpack.c.b16 %v4162, %v4161
  %v4722 = vpack.c.b16 %v4164, %v4163
  %v4723 = vpack.c.b16 %v4166, %v4165
  %v4724 = vpack.c.b16 %v4168, %v4167
  %v4725 = vpack.c.b16 %v4170, %v4169
  %v4726 = vpack.c.b16 %v4172, %v4171
  %v4727 = vpack.c.b16 %v4174, %v4173
  %v4728 = vpack.c.b16 %v4176, %v4175
  %v4729 = vpack.c.b16 %v4178, %v4177
  %v4730 = vpack.c.b16 %v4180, %v4179
  %v4731 = vpack.c.b16 %v4182, %v4181
  %v4732 = vpack.c.b16 %v4184, %v4183
  %v4733 = vpack.c.b16 %v4186, %v4185
  %v4734 = vpack.c.b16 %v4188, %v4187
  %v4735 = vpack.c.b16 %v4190, %v4189
  %v4736 = vpack.c.b16 %v4192, %v4191
  %v4737 = vpack.c.b16 %v4194, %v4193
  %v4738 = vpack.c.b16 %v4196, %v4195
  %v4739 = vpack.c.b16 %v4198, %v4197
  %v4740 = vpack.c.b16 %v4200, %v4199
  %v4741 = vpack.c.b16 %v4202, %v4201
  %v4742 = vpack.c.b16 %v4204, %v4203
  %v4743 = vpack.c.b16 %v4206, %v4205
  %v4744 = vpack.c.b16 %v4208, %v4207
  %v4745 = vpack.c.b16 %v4210, %v4209
  %v4746 = vpack.c.b16 %v4212, %v4211
  %v4747 = vpack.c.b16 %v4214, %v4213
  %v4748 = vpack.c.b16 %v4216, %v4215
  %v4749 = vpack.c.b16 %v4218, %v4217
  %v4750 = vpack.c.b16 %v4220, %v4219
  %v4751 = vpack.c.b16 %v4222, %v4221
  %v4752 = vpack.c.b16 %v4224, %v4223
  %v4753 = vpack.c.b16 %v4226, %v4225
  %v4754 = vpack.c.b16 %v4228, %v4227
  %v4755 = vpack.c.b16 %v4230, %v4229
  %v4756 = vpack.c.b16 %v4232, %v4231
  %v4757 = vpack.c.b16 %v4234, %v4233
  %v4758 = vpack.c.b16 %v4236, %v4235
  %v4759 = vpack.c.b16 %v4238, %v4237
  %v4760 = vpack.c.b16 %v4240, %v4239
  %v4761 = vpack.c.b16 %v4242, %v4241
  %v4762 = vpack.c.b16 %v4244, %v4243
  %v4763 = vpack.c.b16 %v4246, %v4245
  %v4764 = vpack.c.b16 %v4248, %v4247
  %v4765 = vpack.c.b16 %v4250, %v4249
  %v4766 = vpack.c.b16 %v4252, %v4251
  %v4767 = vpack.c.b16 %v4254, %v4253
  %v4768 = vpack.c.b16 %v4256, %v4255
  %5281 = vmatprep.subr.bf16.mxu0 0
  %5282 = vmatpush1.bf16.msra.mxu0 %v4257
  %5283 = vmatprep.subr.bf16.mxu0 0
  %5284 = vmatpush1.bf16.msra.mxu0 %v4258
  %5285 = vmatprep.subr.bf16.mxu0 0
  %5286 = vmatpush1.bf16.msra.mxu0 %v4259
  %5287 = vmatprep.subr.bf16.mxu0 0
  %5288 = vmatpush1.bf16.msra.mxu0 %v4260
  %5289 = vmatprep.subr.bf16.mxu0 0
  %5290 = vmatpush1.bf16.msra.mxu0 %v4261
  %5291 = vmatprep.subr.bf16.mxu0 0
  %5292 = vmatpush1.bf16.msra.mxu0 %v4262
  %5293 = vmatprep.subr.bf16.mxu0 0
  %5294 = vmatpush1.bf16.msra.mxu0 %v4263
  %5295 = vmatprep.subr.bf16.mxu0 0
  %5296 = vmatpush1.bf16.msra.mxu0 %v4264
  %5297 = vmatprep.subr.bf16.mxu0 0
  %5298 = vmatpush1.bf16.msra.mxu0 %v4265
  %5299 = vmatprep.subr.bf16.mxu0 0
  %5300 = vmatpush1.bf16.msra.mxu0 %v4266
  %5301 = vmatprep.subr.bf16.mxu0 0
  %5302 = vmatpush1.bf16.msra.mxu0 %v4267
  %5303 = vmatprep.subr.bf16.mxu0 0
  %5304 = vmatpush1.bf16.msra.mxu0 %v4268
  %5305 = vmatprep.subr.bf16.mxu0 0
  %5306 = vmatpush1.bf16.msra.mxu0 %v4269
  %5307 = vmatprep.subr.bf16.mxu0 0
  %5308 = vmatpush1.bf16.msra.mxu0 %v4270
  %5309 = vmatprep.subr.bf16.mxu0 0
  %5310 = vmatpush1.bf16.msra.mxu0 %v4271
  %5311 = vmatprep.subr.bf16.mxu0 0
  %5312 = vmatpush1.bf16.msra.mxu0 %v4272
  %5313 = vmatprep.mubr.bf16.mxu0 %v1826
  %5314 = vmatmul.mubr.bf16.gmra.mrb[0].mxu0 %v1825
  %v5315 = vpop.f32.mrb[0].mxu0
  %v5316 = vadd.f32 %v1247, %v5315
  %v5317 = vpop.f32.mrb[0].mxu0
  %v5318 = vpop.f32.mrb[0].mxu0
  %v5319 = vadd.f32 %v1247, %v5318
  %v5320 = vpop.f32.mrb[0].mxu0
  %5321 = vmatprep.mubr.bf16.mxu0 %v1890
  %5322 = vmatmul.mubr.bf16.gmra.mrb[0].mxu0 %v1889
  %v5323 = vpop.f32.mrb[0].mxu0
  %v5324 = vadd.f32 %v1247, %v5323
  %v5325 = vpop.f32.mrb[0].mxu0
  %v5326 = vpop.f32.mrb[0].mxu0
  %v5327 = vadd.f32 %v1247, %v5326
  %v5328 = vpop.f32.mrb[0].mxu0
  %5329 = vmatprep.mubr.bf16.mxu0 %v1954
  %5330 = vmatmul.mubr.bf16.gmra.mrb[0].mxu0 %v1953
  %v5331 = vpop.f32.mrb[0].mxu0
  %v5332 = vadd.f32 %v1247, %v5331
  %v5333 = vpop.f32.mrb[0].mxu0
  %v5334 = vpop.f32.mrb[0].mxu0
  %v5335 = vadd.f32 %v1247, %v5334
  %v5336 = vpop.f32.mrb[0].mxu0
  %5337 = vdwg.mxu0
  %5338 = vmatprep.subr.bf16.mxu0 0
  %5339 = vmatpush1.bf16.msra.mxu0 %v4273
  %5340 = vmatprep.subr.bf16.mxu0 0
  %5341 = vmatpush1.bf16.msra.mxu0 %v4274
  %5342 = vmatprep.subr.bf16.mxu0 0
  %5343 = vmatpush1.bf16.msra.mxu0 %v4275
  %5344 = vmatprep.subr.bf16.mxu0 0
  %5345 = vmatpush1.bf16.msra.mxu0 %v4276
  %5346 = vmatprep.subr.bf16.mxu0 0
  %5347 = vmatpush1.bf16.msra.mxu0 %v4277
  %5348 = vmatprep.subr.bf16.mxu0 0
  %5349 = vmatpush1.bf16.msra.mxu0 %v4278
  %5350 = vmatprep.subr.bf16.mxu0 0
  %5351 = vmatpush1.bf16.msra.mxu0 %v4279
  %5352 = vmatprep.subr.bf16.mxu0 0
  %5353 = vmatpush1.bf16.msra.mxu0 %v4280
  %5354 = vmatprep.subr.bf16.mxu0 0
  %5355 = vmatpush1.bf16.msra.mxu0 %v4281
  %5356 = vmatprep.subr.bf16.mxu0 0
  %5357 = vmatpush1.bf16.msra.mxu0 %v4282
  %5358 = vmatprep.subr.bf16.mxu0 0
  %5359 = vmatpush1.bf16.msra.mxu0 %v4283
  %5360 = vmatprep.subr.bf16.mxu0 0
  %5361 = vmatpush1.bf16.msra.mxu0 %v4284
  %5362 = vmatprep.subr.bf16.mxu0 0
  %5363 = vmatpush1.bf16.msra.mxu0 %v4285
  %5364 = vmatprep.subr.bf16.mxu0 0
  %5365 = vmatpush1.bf16.msra.mxu0 %v4286
  %5366 = vmatprep.subr.bf16.mxu0 0
  %5367 = vmatpush1.bf16.msra.mxu0 %v4287
  %5368 = vmatprep.subr.bf16.mxu0 0
  %5369 = vmatpush1.bf16.msra.mxu0 %v4288
  %5370 = vmatprep.mubr.bf16.mxu0 %v1828
  %5371 = vmatmul.mubr.bf16.gmra.mrb[0].mxu0 %v1827
  %v5372 = vpop.f32.mrb[0].mxu0
  %v5373 = vadd.f32 %v5316, %v5372
  %v5374 = vpop.f32.mrb[0].mxu0
  %v5375 = vpop.f32.mrb[0].mxu0
  %v5376 = vadd.f32 %v5319, %v5375
  %v5377 = vpop.f32.mrb[0].mxu0
  %5378 = vmatprep.mubr.bf16.mxu0 %v1892
  %5379 = vmatmul.mubr.bf16.gmra.mrb[0].mxu0 %v1891
  %v5380 = vpop.f32.mrb[0].mxu0
  %v5381 = vadd.f32 %v5324, %v5380
  %v5382 = vpop.f32.mrb[0].mxu0
  %v5383 = vpop.f32.mrb[0].mxu0
  %v5384 = vadd.f32 %v5327, %v5383
  %v5385 = vpop.f32.mrb[0].mxu0
  %5386 = vmatprep.mubr.bf16.mxu0 %v1956
  %5387 = vmatmul.mubr.bf16.gmra.mrb[0].mxu0 %v1955
  %v5388 = vpop.f32.mrb[0].mxu0
  %v5389 = vadd.f32 %v5332, %v5388
  %v5390 = vpop.f32.mrb[0].mxu0
  %v5391 = vpop.f32.mrb[0].mxu0
  %v5392 = vadd.f32 %v5335, %v5391
  %v5393 = vpop.f32.mrb[0].mxu0
  %5394 = vdwg.mxu0
  %5395 = vmatprep.subr.bf16.mxu0 0
  %5396 = vmatpush1.bf16.msra.mxu0 %v4289
  %5397 = vmatprep.subr.bf16.mxu0 0
  %5398 = vmatpush1.bf16.msra.mxu0 %v4290
  %5399 = vmatprep.subr.bf16.mxu0 0
  %5400 = vmatpush1.bf16.msra.mxu0 %v4291
  %5401 = vmatprep.subr.bf16.mxu0 0
  %5402 = vmatpush1.bf16.msra.mxu0 %v4292
  %5403 = vmatprep.subr.bf16.mxu0 0
  %5404 = vmatpush1.bf16.msra.mxu0 %v4293
  %5405 = vmatprep.subr.bf16.mxu0 0
  %5406 = vmatpush1.bf16.msra.mxu0 %v4294
  %5407 = vmatprep.subr.bf16.mxu0 0
  %5408 = vmatpush1.bf16.msra.mxu0 %v4295
  %5409 = vmatprep.subr.bf16.mxu0 0
  %5410 = vmatpush1.bf16.msra.mxu0 %v4296
  %5411 = vmatprep.subr.bf16.mxu0 0
  %5412 = vmatpush1.bf16.msra.mxu0 %v4297
  %5413 = vmatprep.subr.bf16.mxu0 0
  %5414 = vmatpush1.bf16.msra.mxu0 %v4298
  %5415 = vmatprep.subr.bf16.mxu0 0
  %5416 = vmatpush1.bf16.msra.mxu0 %v4299
  %5417 = vmatprep.subr.bf16.mxu0 0
  %5418 = vmatpush1.bf16.msra.mxu0 %v4300
  %5419 = vmatprep.subr.bf16.mxu0 0
  %5420 = vmatpush1.bf16.msra.mxu0 %v4301
  %5421 = vmatprep.subr.bf16.mxu0 0
  %5422 = vmatpush1.bf16.msra.mxu0 %v4302
  %5423 = vmatprep.subr.bf16.mxu0 0
  %5424 = vmatpush1.bf16.msra.mxu0 %v4303
  %5425 = vmatprep.subr.bf16.mxu0 0
  %5426 = vmatpush1.bf16.msra.mxu0 %v4304
  %5427 = vmatprep.mubr.bf16.mxu0 %v1830
  %5428 = vmatmul.mubr.bf16.gmra.mrb[0].mxu0 %v1829
  %v5429 = vpop.f32.mrb[0].mxu0
  %v5430 = vadd.f32 %v5373, %v5429
  %v5431 = vpop.f32.mrb[0].mxu0
  %v5432 = vpop.f32.mrb[0].mxu0
  %v5433 = vadd.f32 %v5376, %v5432
  %v5434 = vpop.f32.mrb[0].mxu0
  %5435 = vmatprep.mubr.bf16.mxu0 %v1894
  %5436 = vmatmul.mubr.bf16.gmra.mrb[0].mxu0 %v1893
  %v5437 = vpop.f32.mrb[0].mxu0
  %v5438 = vadd.f32 %v5381, %v5437
  %v5439 = vpop.f32.mrb[0].mxu0
  %v5440 = vpop.f32.mrb[0].mxu0
  %v5441 = vadd.f32 %v5384, %v5440
  %v5442 = vpop.f32.mrb[0].mxu0
  %5443 = vmatprep.mubr.bf16.mxu0 %v1958
  %5444 = vmatmul.mubr.bf16.gmra.mrb[0].mxu0 %v1957
  %v5445 = vpop.f32.mrb[0].mxu0
  %v5446 = vadd.f32 %v5389, %v5445
  %v5447 = vpop.f32.mrb[0].mxu0
  %v5448 = vpop.f32.mrb[0].mxu0
  %v5449 = vadd.f32 %v5392, %v5448
  %v5450 = vpop.f32.mrb[0].mxu0
  %5451 = vdwg.mxu0
  %5452 = vmatprep.subr.bf16.mxu0 0
  %5453 = vmatpush1.bf16.msra.mxu0 %v4305
  %5454 = vmatprep.subr.bf16.mxu0 0
  %5455 = vmatpush1.bf16.msra.mxu0 %v4306
  %5456 = vmatprep.subr.bf16.mxu0 0
  %5457 = vmatpush1.bf16.msra.mxu0 %v4307
  %5458 = vmatprep.subr.bf16.mxu0 0
  %5459 = vmatpush1.bf16.msra.mxu0 %v4308
  %5460 = vmatprep.subr.bf16.mxu0 0
  %5461 = vmatpush1.bf16.msra.mxu0 %v4309
  %5462 = vmatprep.subr.bf16.mxu0 0
  %5463 = vmatpush1.bf16.msra.mxu0 %v4310
  %5464 = vmatprep.subr.bf16.mxu0 0
  %5465 = vmatpush1.bf16.msra.mxu0 %v4311
  %5466 = vmatprep.subr.bf16.mxu0 0
  %5467 = vmatpush1.bf16.msra.mxu0 %v4312
  %5468 = vmatprep.subr.bf16.mxu0 0
  %5469 = vmatpush1.bf16.msra.mxu0 %v4313
  %5470 = vmatprep.subr.bf16.mxu0 0
  %5471 = vmatpush1.bf16.msra.mxu0 %v4314
  %5472 = vmatprep.subr.bf16.mxu0 0
  %5473 = vmatpush1.bf16.msra.mxu0 %v4315
  %5474 = vmatprep.subr.bf16.mxu0 0
  %5475 = vmatpush1.bf16.msra.mxu0 %v4316
  %5476 = vmatprep.subr.bf16.mxu0 0
  %5477 = vmatpush1.bf16.msra.mxu0 %v4317
  %5478 = vmatprep.subr.bf16.mxu0 0
  %5479 = vmatpush1.bf16.msra.mxu0 %v4318
  %5480 = vmatprep.subr.bf16.mxu0 0
  %5481 = vmatpush1.bf16.msra.mxu0 %v4319
  %5482 = vmatprep.subr.bf16.mxu0 0
  %5483 = vmatpush1.bf16.msra.mxu0 %v4320
  %5484 = vmatprep.mubr.bf16.mxu0 %v1832
  %5485 = vmatmul.mubr.bf16.gmra.mrb[0].mxu0 %v1831
  %v5486 = vpop.f32.mrb[0].mxu0
  %v5487 = vadd.f32 %v5430, %v5486
  %v5488 = vpop.f32.mrb[0].mxu0
  %v5489 = vpop.f32.mrb[0].mxu0
  %v5490 = vadd.f32 %v5433, %v5489
  %v5491 = vpop.f32.mrb[0].mxu0
  %5492 = vmatprep.mubr.bf16.mxu0 %v1896
  %5493 = vmatmul.mubr.bf16.gmra.mrb[0].mxu0 %v1895
  %v5494 = vpop.f32.mrb[0].mxu0
  %v5495 = vadd.f32 %v5438, %v5494
  %v5496 = vpop.f32.mrb[0].mxu0
  %v5497 = vpop.f32.mrb[0].mxu0
  %v5498 = vadd.f32 %v5441, %v5497
  %v5499 = vpop.f32.mrb[0].mxu0
  %5500 = vmatprep.mubr.bf16.mxu0 %v1960
  %5501 = vmatmul.mubr.bf16.gmra.mrb[0].mxu0 %v1959
  %v5502 = vpop.f32.mrb[0].mxu0
  %v5503 = vadd.f32 %v5446, %v5502
  %v5504 = vpop.f32.mrb[0].mxu0
  %v5505 = vpop.f32.mrb[0].mxu0
  %v5506 = vadd.f32 %v5449, %v5505
  %v5507 = vpop.f32.mrb[0].mxu0
  %5508 = vdwg.mxu0
  %5509 = vmatprep.subr.bf16.mxu0 0
  %5510 = vmatpush1.bf16.msra.mxu0 %v4321
  %5511 = vmatprep.subr.bf16.mxu0 0
  %5512 = vmatpush1.bf16.msra.mxu0 %v4322
  %5513 = vmatprep.subr.bf16.mxu0 0
  %5514 = vmatpush1.bf16.msra.mxu0 %v4323
  %5515 = vmatprep.subr.bf16.mxu0 0
  %5516 = vmatpush1.bf16.msra.mxu0 %v4324
  %5517 = vmatprep.subr.bf16.mxu0 0
  %5518 = vmatpush1.bf16.msra.mxu0 %v4325
  %5519 = vmatprep.subr.bf16.mxu0 0
  %5520 = vmatpush1.bf16.msra.mxu0 %v4326
  %5521 = vmatprep.subr.bf16.mxu0 0
  %5522 = vmatpush1.bf16.msra.mxu0 %v4327
  %5523 = vmatprep.subr.bf16.mxu0 0
  %5524 = vmatpush1.bf16.msra.mxu0 %v4328
  %5525 = vmatprep.subr.bf16.mxu0 0
  %5526 = vmatpush1.bf16.msra.mxu0 %v4329
  %5527 = vmatprep.subr.bf16.mxu0 0
  %5528 = vmatpush1.bf16.msra.mxu0 %v4330
  %5529 = vmatprep.subr.bf16.mxu0 0
  %5530 = vmatpush1.bf16.msra.mxu0 %v4331
  %5531 = vmatprep.subr.bf16.mxu0 0
  %5532 = vmatpush1.bf16.msra.mxu0 %v4332
  %5533 = vmatprep.subr.bf16.mxu0 0
  %5534 = vmatpush1.bf16.msra.mxu0 %v4333
  %5535 = vmatprep.subr.bf16.mxu0 0
  %5536 = vmatpush1.bf16.msra.mxu0 %v4334
  %5537 = vmatprep.subr.bf16.mxu0 0
  %5538 = vmatpush1.bf16.msra.mxu0 %v4335
  %5539 = vmatprep.subr.bf16.mxu0 0
  %5540 = vmatpush1.bf16.msra.mxu0 %v4336
  %5541 = vmatprep.mubr.bf16.mxu0 %v1834
  %5542 = vmatmul.mubr.bf16.gmra.mrb[0].mxu0 %v1833
  %v5543 = vpop.f32.mrb[0].mxu0
  %v5544 = vadd.f32 %v5487, %v5543
  %v5545 = vpop.f32.mrb[0].mxu0
  %v5546 = vpop.f32.mrb[0].mxu0
  %v5547 = vadd.f32 %v5490, %v5546
  %v5548 = vpop.f32.mrb[0].mxu0
  %5549 = vmatprep.mubr.bf16.mxu0 %v1898
  %5550 = vmatmul.mubr.bf16.gmra.mrb[0].mxu0 %v1897
  %v5551 = vpop.f32.mrb[0].mxu0
  %v5552 = vadd.f32 %v5495, %v5551
  %v5553 = vpop.f32.mrb[0].mxu0
  %v5554 = vpop.f32.mrb[0].mxu0
  %v5555 = vadd.f32 %v5498, %v5554
  %v5556 = vpop.f32.mrb[0].mxu0
  %5557 = vmatprep.mubr.bf16.mxu0 %v1962
  %5558 = vmatmul.mubr.bf16.gmra.mrb[0].mxu0 %v1961
  %v5559 = vpop.f32.mrb[0].mxu0
  %v5560 = vadd.f32 %v5503, %v5559
  %v5561 = vpop.f32.mrb[0].mxu0
  %v5562 = vpop.f32.mrb[0].mxu0
  %v5563 = vadd.f32 %v5506, %v5562
  %v5564 = vpop.f32.mrb[0].mxu0
  %5565 = vdwg.mxu0
  %5566 = vmatprep.subr.bf16.mxu0 0
  %5567 = vmatpush1.bf16.msra.mxu0 %v4337
  %5568 = vmatprep.subr.bf16.mxu0 0
  %5569 = vmatpush1.bf16.msra.mxu0 %v4338
  %5570 = vmatprep.subr.bf16.mxu0 0
  %5571 = vmatpush1.bf16.msra.mxu0 %v4339
  %5572 = vmatprep.subr.bf16.mxu0 0
  %5573 = vmatpush1.bf16.msra.mxu0 %v4340
  %5574 = vmatprep.subr.bf16.mxu0 0
  %5575 = vmatpush1.bf16.msra.mxu0 %v4341
  %5576 = vmatprep.subr.bf16.mxu0 0
  %5577 = vmatpush1.bf16.msra.mxu0 %v4342
  %5578 = vmatprep.subr.bf16.mxu0 0
  %5579 = vmatpush1.bf16.msra.mxu0 %v4343
  %5580 = vmatprep.subr.bf16.mxu0 0
  %5581 = vmatpush1.bf16.msra.mxu0 %v4344
  %5582 = vmatprep.subr.bf16.mxu0 0
  %5583 = vmatpush1.bf16.msra.mxu0 %v4345
  %5584 = vmatprep.subr.bf16.mxu0 0
  %5585 = vmatpush1.bf16.msra.mxu0 %v4346
  %5586 = vmatprep.subr.bf16.mxu0 0
  %5587 = vmatpush1.bf16.msra.mxu0 %v4347
  %5588 = vmatprep.subr.bf16.mxu0 0
  %5589 = vmatpush1.bf16.msra.mxu0 %v4348
  %5590 = vmatprep.subr.bf16.mxu0 0
  %5591 = vmatpush1.bf16.msra.mxu0 %v4349
  %5592 = vmatprep.subr.bf16.mxu0 0
  %5593 = vmatpush1.bf16.msra.mxu0 %v4350
  %5594 = vmatprep.subr.bf16.mxu0 0
  %5595 = vmatpush1.bf16.msra.mxu0 %v4351
  %5596 = vmatprep.subr.bf16.mxu0 0
  %5597 = vmatpush1.bf16.msra.mxu0 %v4352
  %5598 = vmatprep.mubr.bf16.mxu0 %v1836
  %5599 = vmatmul.mubr.bf16.gmra.mrb[0].mxu0 %v1835
  %v5600 = vpop.f32.mrb[0].mxu0
  %v5601 = vadd.f32 %v5544, %v5600
  %v5602 = vpop.f32.mrb[0].mxu0
  %v5603 = vpop.f32.mrb[0].mxu0
  %v5604 = vadd.f32 %v5547, %v5603
  %v5605 = vpop.f32.mrb[0].mxu0
  %5606 = vmatprep.mubr.bf16.mxu0 %v1900
  %5607 = vmatmul.mubr.bf16.gmra.mrb[0].mxu0 %v1899
  %v5608 = vpop.f32.mrb[0].mxu0
  %v5609 = vadd.f32 %v5552, %v5608
  %v5610 = vpop.f32.mrb[0].mxu0
  %v5611 = vpop.f32.mrb[0].mxu0
  %v5612 = vadd.f32 %v5555, %v5611
  %v5613 = vpop.f32.mrb[0].mxu0
  %5614 = vmatprep.mubr.bf16.mxu0 %v1964
  %5615 = vmatmul.mubr.bf16.gmra.mrb[0].mxu0 %v1963
  %v5616 = vpop.f32.mrb[0].mxu0
  %v5617 = vadd.f32 %v5560, %v5616
  %v5618 = vpop.f32.mrb[0].mxu0
  %v5619 = vpop.f32.mrb[0].mxu0
  %v5620 = vadd.f32 %v5563, %v5619
  %v5621 = vpop.f32.mrb[0].mxu0
  %5622 = vdwg.mxu0
  %5623 = vmatprep.subr.bf16.mxu0 0
  %5624 = vmatpush1.bf16.msra.mxu0 %v4353
  %5625 = vmatprep.subr.bf16.mxu0 0
  %5626 = vmatpush1.bf16.msra.mxu0 %v4354
  %5627 = vmatprep.subr.bf16.mxu0 0
  %5628 = vmatpush1.bf16.msra.mxu0 %v4355
  %5629 = vmatprep.subr.bf16.mxu0 0
  %5630 = vmatpush1.bf16.msra.mxu0 %v4356
  %5631 = vmatprep.subr.bf16.mxu0 0
  %5632 = vmatpush1.bf16.msra.mxu0 %v4357
  %5633 = vmatprep.subr.bf16.mxu0 0
  %5634 = vmatpush1.bf16.msra.mxu0 %v4358
  %5635 = vmatprep.subr.bf16.mxu0 0
  %5636 = vmatpush1.bf16.msra.mxu0 %v4359
  %5637 = vmatprep.subr.bf16.mxu0 0
  %5638 = vmatpush1.bf16.msra.mxu0 %v4360
  %5639 = vmatprep.subr.bf16.mxu0 0
  %5640 = vmatpush1.bf16.msra.mxu0 %v4361
  %5641 = vmatprep.subr.bf16.mxu0 0
  %5642 = vmatpush1.bf16.msra.mxu0 %v4362
  %5643 = vmatprep.subr.bf16.mxu0 0
  %5644 = vmatpush1.bf16.msra.mxu0 %v4363
  %5645 = vmatprep.subr.bf16.mxu0 0
  %5646 = vmatpush1.bf16.msra.mxu0 %v4364
  %5647 = vmatprep.subr.bf16.mxu0 0
  %5648 = vmatpush1.bf16.msra.mxu0 %v4365
  %5649 = vmatprep.subr.bf16.mxu0 0
  %5650 = vmatpush1.bf16.msra.mxu0 %v4366
  %5651 = vmatprep.subr.bf16.mxu0 0
  %5652 = vmatpush1.bf16.msra.mxu0 %v4367
  %5653 = vmatprep.subr.bf16.mxu0 0
  %5654 = vmatpush1.bf16.msra.mxu0 %v4368
  %5655 = vmatprep.mubr.bf16.mxu0 %v1838
  %5656 = vmatmul.mubr.bf16.gmra.mrb[0].mxu0 %v1837
  %v5657 = vpop.f32.mrb[0].mxu0
  %v5658 = vadd.f32 %v5601, %v5657
  %v5659 = vpop.f32.mrb[0].mxu0
  %v5660 = vpop.f32.mrb[0].mxu0
  %v5661 = vadd.f32 %v5604, %v5660
  %v5662 = vpop.f32.mrb[0].mxu0
  %5663 = vmatprep.mubr.bf16.mxu0 %v1902
  %5664 = vmatmul.mubr.bf16.gmra.mrb[0].mxu0 %v1901
  %v5665 = vpop.f32.mrb[0].mxu0
  %v5666 = vadd.f32 %v5609, %v5665
  %v5667 = vpop.f32.mrb[0].mxu0
  %v5668 = vpop.f32.mrb[0].mxu0
  %v5669 = vadd.f32 %v5612, %v5668
  %v5670 = vpop.f32.mrb[0].mxu0
  %5671 = vmatprep.mubr.bf16.mxu0 %v1966
  %5672 = vmatmul.mubr.bf16.gmra.mrb[0].mxu0 %v1965
  %v5673 = vpop.f32.mrb[0].mxu0
  %v5674 = vadd.f32 %v5617, %v5673
  %v5675 = vpop.f32.mrb[0].mxu0
  %v5676 = vpop.f32.mrb[0].mxu0
  %v5677 = vadd.f32 %v5620, %v5676
  %v5678 = vpop.f32.mrb[0].mxu0
  %5679 = vdwg.mxu0
  %5680 = vmatprep.subr.bf16.mxu0 0
  %5681 = vmatpush1.bf16.msra.mxu0 %v4369
  %5682 = vmatprep.subr.bf16.mxu0 0
  %5683 = vmatpush1.bf16.msra.mxu0 %v4370
  %5684 = vmatprep.subr.bf16.mxu0 0
  %5685 = vmatpush1.bf16.msra.mxu0 %v4371
  %5686 = vmatprep.subr.bf16.mxu0 0
  %5687 = vmatpush1.bf16.msra.mxu0 %v4372
  %5688 = vmatprep.subr.bf16.mxu0 0
  %5689 = vmatpush1.bf16.msra.mxu0 %v4373
  %5690 = vmatprep.subr.bf16.mxu0 0
  %5691 = vmatpush1.bf16.msra.mxu0 %v4374
  %5692 = vmatprep.subr.bf16.mxu0 0
  %5693 = vmatpush1.bf16.msra.mxu0 %v4375
  %5694 = vmatprep.subr.bf16.mxu0 0
  %5695 = vmatpush1.bf16.msra.mxu0 %v4376
  %5696 = vmatprep.subr.bf16.mxu0 0
  %5697 = vmatpush1.bf16.msra.mxu0 %v4377
  %5698 = vmatprep.subr.bf16.mxu0 0
  %5699 = vmatpush1.bf16.msra.mxu0 %v4378
  %5700 = vmatprep.subr.bf16.mxu0 0
  %5701 = vmatpush1.bf16.msra.mxu0 %v4379
  %5702 = vmatprep.subr.bf16.mxu0 0
  %5703 = vmatpush1.bf16.msra.mxu0 %v4380
  %5704 = vmatprep.subr.bf16.mxu0 0
  %5705 = vmatpush1.bf16.msra.mxu0 %v4381
  %5706 = vmatprep.subr.bf16.mxu0 0
  %5707 = vmatpush1.bf16.msra.mxu0 %v4382
  %5708 = vmatprep.subr.bf16.mxu0 0
  %5709 = vmatpush1.bf16.msra.mxu0 %v4383
  %5710 = vmatprep.subr.bf16.mxu0 0
  %5711 = vmatpush1.bf16.msra.mxu0 %v4384
  %5712 = vmatprep.mubr.bf16.mxu0 %v1840
  %5713 = vmatmul.mubr.bf16.gmra.mrb[0].mxu0 %v1839
  %v5714 = vpop.f32.mrb[0].mxu0
  %v5715 = vadd.f32 %v5658, %v5714
  %v5716 = vpop.f32.mrb[0].mxu0
  %v5717 = vpop.f32.mrb[0].mxu0
  %v5718 = vadd.f32 %v5661, %v5717
  %v5719 = vpop.f32.mrb[0].mxu0
  %5720 = vmatprep.mubr.bf16.mxu0 %v1904
  %5721 = vmatmul.mubr.bf16.gmra.mrb[0].mxu0 %v1903
  %v5722 = vpop.f32.mrb[0].mxu0
  %v5723 = vadd.f32 %v5666, %v5722
  %v5724 = vpop.f32.mrb[0].mxu0
  %v5725 = vpop.f32.mrb[0].mxu0
  %v5726 = vadd.f32 %v5669, %v5725
  %v5727 = vpop.f32.mrb[0].mxu0
  %5728 = vmatprep.mubr.bf16.mxu0 %v1968
  %5729 = vmatmul.mubr.bf16.gmra.mrb[0].mxu0 %v1967
  %v5730 = vpop.f32.mrb[0].mxu0
  %v5731 = vadd.f32 %v5674, %v5730
  %v5732 = vpop.f32.mrb[0].mxu0
  %v5733 = vpop.f32.mrb[0].mxu0
  %v5734 = vadd.f32 %v5677, %v5733
  %v5735 = vpop.f32.mrb[0].mxu0
  %5736 = vdwg.mxu0
  %5737 = vmatprep.subr.bf16.mxu0 0
  %5738 = vmatpush1.bf16.msra.mxu0 %v4385
  %5739 = vmatprep.subr.bf16.mxu0 0
  %5740 = vmatpush1.bf16.msra.mxu0 %v4386
  %5741 = vmatprep.subr.bf16.mxu0 0
  %5742 = vmatpush1.bf16.msra.mxu0 %v4387
  %5743 = vmatprep.subr.bf16.mxu0 0
  %5744 = vmatpush1.bf16.msra.mxu0 %v4388
  %5745 = vmatprep.subr.bf16.mxu0 0
  %5746 = vmatpush1.bf16.msra.mxu0 %v4389
  %5747 = vmatprep.subr.bf16.mxu0 0
  %5748 = vmatpush1.bf16.msra.mxu0 %v4390
  %5749 = vmatprep.subr.bf16.mxu0 0
  %5750 = vmatpush1.bf16.msra.mxu0 %v4391
  %5751 = vmatprep.subr.bf16.mxu0 0
  %5752 = vmatpush1.bf16.msra.mxu0 %v4392
  %5753 = vmatprep.subr.bf16.mxu0 0
  %5754 = vmatpush1.bf16.msra.mxu0 %v4393
  %5755 = vmatprep.subr.bf16.mxu0 0
  %5756 = vmatpush1.bf16.msra.mxu0 %v4394
  %5757 = vmatprep.subr.bf16.mxu0 0
  %5758 = vmatpush1.bf16.msra.mxu0 %v4395
  %5759 = vmatprep.subr.bf16.mxu0 0
  %5760 = vmatpush1.bf16.msra.mxu0 %v4396
  %5761 = vmatprep.subr.bf16.mxu0 0
  %5762 = vmatpush1.bf16.msra.mxu0 %v4397
  %5763 = vmatprep.subr.bf16.mxu0 0
  %5764 = vmatpush1.bf16.msra.mxu0 %v4398
  %5765 = vmatprep.subr.bf16.mxu0 0
  %5766 = vmatpush1.bf16.msra.mxu0 %v4399
  %5767 = vmatprep.subr.bf16.mxu0 0
  %5768 = vmatpush1.bf16.msra.mxu0 %v4400
  %5769 = vmatprep.mubr.bf16.mxu0 %v1842
  %5770 = vmatmul.mubr.bf16.gmra.mrb[0].mxu0 %v1841
  %v5771 = vpop.f32.mrb[0].mxu0
  %v5772 = vadd.f32 %v5715, %v5771
  %v5773 = vpop.f32.mrb[0].mxu0
  %v5774 = vpop.f32.mrb[0].mxu0
  %v5775 = vadd.f32 %v5718, %v5774
  %v5776 = vpop.f32.mrb[0].mxu0
  %5777 = vmatprep.mubr.bf16.mxu0 %v1906
  %5778 = vmatmul.mubr.bf16.gmra.mrb[0].mxu0 %v1905
  %v5779 = vpop.f32.mrb[0].mxu0
  %v5780 = vadd.f32 %v5723, %v5779
  %v5781 = vpop.f32.mrb[0].mxu0
  %v5782 = vpop.f32.mrb[0].mxu0
  %v5783 = vadd.f32 %v5726, %v5782
  %v5784 = vpop.f32.mrb[0].mxu0
  %5785 = vmatprep.mubr.bf16.mxu0 %v1970
  %5786 = vmatmul.mubr.bf16.gmra.mrb[0].mxu0 %v1969
  %v5787 = vpop.f32.mrb[0].mxu0
  %v5788 = vadd.f32 %v5731, %v5787
  %v5789 = vpop.f32.mrb[0].mxu0
  %v5790 = vpop.f32.mrb[0].mxu0
  %v5791 = vadd.f32 %v5734, %v5790
  %v5792 = vpop.f32.mrb[0].mxu0
  %5793 = vdwg.mxu0
  %5794 = vmatprep.subr.bf16.mxu0 0
  %5795 = vmatpush1.bf16.msra.mxu0 %v4401
  %5796 = vmatprep.subr.bf16.mxu0 0
  %5797 = vmatpush1.bf16.msra.mxu0 %v4402
  %5798 = vmatprep.subr.bf16.mxu0 0
  %5799 = vmatpush1.bf16.msra.mxu0 %v4403
  %5800 = vmatprep.subr.bf16.mxu0 0
  %5801 = vmatpush1.bf16.msra.mxu0 %v4404
  %5802 = vmatprep.subr.bf16.mxu0 0
  %5803 = vmatpush1.bf16.msra.mxu0 %v4405
  %5804 = vmatprep.subr.bf16.mxu0 0
  %5805 = vmatpush1.bf16.msra.mxu0 %v4406
  %5806 = vmatprep.subr.bf16.mxu0 0
  %5807 = vmatpush1.bf16.msra.mxu0 %v4407
  %5808 = vmatprep.subr.bf16.mxu0 0
  %5809 = vmatpush1.bf16.msra.mxu0 %v4408
  %5810 = vmatprep.subr.bf16.mxu0 0
  %5811 = vmatpush1.bf16.msra.mxu0 %v4409
  %5812 = vmatprep.subr.bf16.mxu0 0
  %5813 = vmatpush1.bf16.msra.mxu0 %v4410
  %5814 = vmatprep.subr.bf16.mxu0 0
  %5815 = vmatpush1.bf16.msra.mxu0 %v4411
  %5816 = vmatprep.subr.bf16.mxu0 0
  %5817 = vmatpush1.bf16.msra.mxu0 %v4412
  %5818 = vmatprep.subr.bf16.mxu0 0
  %5819 = vmatpush1.bf16.msra.mxu0 %v4413
  %5820 = vmatprep.subr.bf16.mxu0 0
  %5821 = vmatpush1.bf16.msra.mxu0 %v4414
  %5822 = vmatprep.subr.bf16.mxu0 0
  %5823 = vmatpush1.bf16.msra.mxu0 %v4415
  %5824 = vmatprep.subr.bf16.mxu0 0
  %5825 = vmatpush1.bf16.msra.mxu0 %v4416
  %5826 = vmatprep.mubr.bf16.mxu0 %v1844
  %5827 = vmatmul.mubr.bf16.gmra.mrb[0].mxu0 %v1843
  %v5828 = vpop.f32.mrb[0].mxu0
  %v5829 = vadd.f32 %v5772, %v5828
  %v5830 = vpop.f32.mrb[0].mxu0
  %v5831 = vpop.f32.mrb[0].mxu0
  %v5832 = vadd.f32 %v5775, %v5831
  %v5833 = vpop.f32.mrb[0].mxu0
  %5834 = vmatprep.mubr.bf16.mxu0 %v1908
  %5835 = vmatmul.mubr.bf16.gmra.mrb[0].mxu0 %v1907
  %v5836 = vpop.f32.mrb[0].mxu0
  %v5837 = vadd.f32 %v5780, %v5836
  %v5838 = vpop.f32.mrb[0].mxu0
  %v5839 = vpop.f32.mrb[0].mxu0
  %v5840 = vadd.f32 %v5783, %v5839
  %v5841 = vpop.f32.mrb[0].mxu0
  %5842 = vmatprep.mubr.bf16.mxu0 %v1972
  %5843 = vmatmul.mubr.bf16.gmra.mrb[0].mxu0 %v1971
  %v5844 = vpop.f32.mrb[0].mxu0
  %v5845 = vadd.f32 %v5788, %v5844
  %v5846 = vpop.f32.mrb[0].mxu0
  %v5847 = vpop.f32.mrb[0].mxu0
  %v5848 = vadd.f32 %v5791, %v5847
  %v5849 = vpop.f32.mrb[0].mxu0
  %5850 = vdwg.mxu0
  %5851 = vmatprep.subr.bf16.mxu0 0
  %5852 = vmatpush1.bf16.msra.mxu0 %v4417
  %5853 = vmatprep.subr.bf16.mxu0 0
  %5854 = vmatpush1.bf16.msra.mxu0 %v4418
  %5855 = vmatprep.subr.bf16.mxu0 0
  %5856 = vmatpush1.bf16.msra.mxu0 %v4419
  %5857 = vmatprep.subr.bf16.mxu0 0
  %5858 = vmatpush1.bf16.msra.mxu0 %v4420
  %5859 = vmatprep.subr.bf16.mxu0 0
  %5860 = vmatpush1.bf16.msra.mxu0 %v4421
  %5861 = vmatprep.subr.bf16.mxu0 0
  %5862 = vmatpush1.bf16.msra.mxu0 %v4422
  %5863 = vmatprep.subr.bf16.mxu0 0
  %5864 = vmatpush1.bf16.msra.mxu0 %v4423
  %5865 = vmatprep.subr.bf16.mxu0 0
  %5866 = vmatpush1.bf16.msra.mxu0 %v4424
  %5867 = vmatprep.subr.bf16.mxu0 0
  %5868 = vmatpush1.bf16.msra.mxu0 %v4425
  %5869 = vmatprep.subr.bf16.mxu0 0
  %5870 = vmatpush1.bf16.msra.mxu0 %v4426
  %5871 = vmatprep.subr.bf16.mxu0 0
  %5872 = vmatpush1.bf16.msra.mxu0 %v4427
  %5873 = vmatprep.subr.bf16.mxu0 0
  %5874 = vmatpush1.bf16.msra.mxu0 %v4428
  %5875 = vmatprep.subr.bf16.mxu0 0
  %5876 = vmatpush1.bf16.msra.mxu0 %v4429
  %5877 = vmatprep.subr.bf16.mxu0 0
  %5878 = vmatpush1.bf16.msra.mxu0 %v4430
  %5879 = vmatprep.subr.bf16.mxu0 0
  %5880 = vmatpush1.bf16.msra.mxu0 %v4431
  %5881 = vmatprep.subr.bf16.mxu0 0
  %5882 = vmatpush1.bf16.msra.mxu0 %v4432
  %5883 = vmatprep.mubr.bf16.mxu0 %v1846
  %5884 = vmatmul.mubr.bf16.gmra.mrb[0].mxu0 %v1845
  %v5885 = vpop.f32.mrb[0].mxu0
  %v5886 = vadd.f32 %v5829, %v5885
  %v5887 = vpop.f32.mrb[0].mxu0
  %v5888 = vpop.f32.mrb[0].mxu0
  %v5889 = vadd.f32 %v5832, %v5888
  %v5890 = vpop.f32.mrb[0].mxu0
  %5891 = vmatprep.mubr.bf16.mxu0 %v1910
  %5892 = vmatmul.mubr.bf16.gmra.mrb[0].mxu0 %v1909
  %v5893 = vpop.f32.mrb[0].mxu0
  %v5894 = vadd.f32 %v5837, %v5893
  %v5895 = vpop.f32.mrb[0].mxu0
  %v5896 = vpop.f32.mrb[0].mxu0
  %v5897 = vadd.f32 %v5840, %v5896
  %v5898 = vpop.f32.mrb[0].mxu0
  %5899 = vmatprep.mubr.bf16.mxu0 %v1974
  %5900 = vmatmul.mubr.bf16.gmra.mrb[0].mxu0 %v1973
  %v5901 = vpop.f32.mrb[0].mxu0
  %v5902 = vadd.f32 %v5845, %v5901
  %v5903 = vpop.f32.mrb[0].mxu0
  %v5904 = vpop.f32.mrb[0].mxu0
  %v5905 = vadd.f32 %v5848, %v5904
  %v5906 = vpop.f32.mrb[0].mxu0
  %5907 = vdwg.mxu0
  %5908 = vmatprep.subr.bf16.mxu0 0
  %5909 = vmatpush1.bf16.msra.mxu0 %v4433
  %5910 = vmatprep.subr.bf16.mxu0 0
  %5911 = vmatpush1.bf16.msra.mxu0 %v4434
  %5912 = vmatprep.subr.bf16.mxu0 0
  %5913 = vmatpush1.bf16.msra.mxu0 %v4435
  %5914 = vmatprep.subr.bf16.mxu0 0
  %5915 = vmatpush1.bf16.msra.mxu0 %v4436
  %5916 = vmatprep.subr.bf16.mxu0 0
  %5917 = vmatpush1.bf16.msra.mxu0 %v4437
  %5918 = vmatprep.subr.bf16.mxu0 0
  %5919 = vmatpush1.bf16.msra.mxu0 %v4438
  %5920 = vmatprep.subr.bf16.mxu0 0
  %5921 = vmatpush1.bf16.msra.mxu0 %v4439
  %5922 = vmatprep.subr.bf16.mxu0 0
  %5923 = vmatpush1.bf16.msra.mxu0 %v4440
  %5924 = vmatprep.subr.bf16.mxu0 0
  %5925 = vmatpush1.bf16.msra.mxu0 %v4441
  %5926 = vmatprep.subr.bf16.mxu0 0
  %5927 = vmatpush1.bf16.msra.mxu0 %v4442
  %5928 = vmatprep.subr.bf16.mxu0 0
  %5929 = vmatpush1.bf16.msra.mxu0 %v4443
  %5930 = vmatprep.subr.bf16.mxu0 0
  %5931 = vmatpush1.bf16.msra.mxu0 %v4444
  %5932 = vmatprep.subr.bf16.mxu0 0
  %5933 = vmatpush1.bf16.msra.mxu0 %v4445
  %5934 = vmatprep.subr.bf16.mxu0 0
  %5935 = vmatpush1.bf16.msra.mxu0 %v4446
  %5936 = vmatprep.subr.bf16.mxu0 0
  %5937 = vmatpush1.bf16.msra.mxu0 %v4447
  %5938 = vmatprep.subr.bf16.mxu0 0
  %5939 = vmatpush1.bf16.msra.mxu0 %v4448
  %5940 = vmatprep.mubr.bf16.mxu0 %v1848
  %5941 = vmatmul.mubr.bf16.gmra.mrb[0].mxu0 %v1847
  %v5942 = vpop.f32.mrb[0].mxu0
  %v5943 = vadd.f32 %v5886, %v5942
  %v5944 = vpop.f32.mrb[0].mxu0
  %v5945 = vpop.f32.mrb[0].mxu0
  %v5946 = vadd.f32 %v5889, %v5945
  %v5947 = vpop.f32.mrb[0].mxu0
  %5948 = vmatprep.mubr.bf16.mxu0 %v1912
  %5949 = vmatmul.mubr.bf16.gmra.mrb[0].mxu0 %v1911
  %v5950 = vpop.f32.mrb[0].mxu0
  %v5951 = vadd.f32 %v5894, %v5950
  %v5952 = vpop.f32.mrb[0].mxu0
  %v5953 = vpop.f32.mrb[0].mxu0
  %v5954 = vadd.f32 %v5897, %v5953
  %v5955 = vpop.f32.mrb[0].mxu0
  %5956 = vmatprep.mubr.bf16.mxu0 %v1976
  %5957 = vmatmul.mubr.bf16.gmra.mrb[0].mxu0 %v1975
  %v5958 = vpop.f32.mrb[0].mxu0
  %v5959 = vadd.f32 %v5902, %v5958
  %v5960 = vpop.f32.mrb[0].mxu0
  %v5961 = vpop.f32.mrb[0].mxu0
  %v5962 = vadd.f32 %v5905, %v5961
  %v5963 = vpop.f32.mrb[0].mxu0
  %5964 = vdwg.mxu0
  %5965 = vmatprep.subr.bf16.mxu0 0
  %5966 = vmatpush1.bf16.msra.mxu0 %v4449
  %5967 = vmatprep.subr.bf16.mxu0 0
  %5968 = vmatpush1.bf16.msra.mxu0 %v4450
  %5969 = vmatprep.subr.bf16.mxu0 0
  %5970 = vmatpush1.bf16.msra.mxu0 %v4451
  %5971 = vmatprep.subr.bf16.mxu0 0
  %5972 = vmatpush1.bf16.msra.mxu0 %v4452
  %5973 = vmatprep.subr.bf16.mxu0 0
  %5974 = vmatpush1.bf16.msra.mxu0 %v4453
  %5975 = vmatprep.subr.bf16.mxu0 0
  %5976 = vmatpush1.bf16.msra.mxu0 %v4454
  %5977 = vmatprep.subr.bf16.mxu0 0
  %5978 = vmatpush1.bf16.msra.mxu0 %v4455
  %5979 = vmatprep.subr.bf16.mxu0 0
  %5980 = vmatpush1.bf16.msra.mxu0 %v4456
  %5981 = vmatprep.subr.bf16.mxu0 0
  %5982 = vmatpush1.bf16.msra.mxu0 %v4457
  %5983 = vmatprep.subr.bf16.mxu0 0
  %5984 = vmatpush1.bf16.msra.mxu0 %v4458
  %5985 = vmatprep.subr.bf16.mxu0 0
  %5986 = vmatpush1.bf16.msra.mxu0 %v4459
  %5987 = vmatprep.subr.bf16.mxu0 0
  %5988 = vmatpush1.bf16.msra.mxu0 %v4460
  %5989 = vmatprep.subr.bf16.mxu0 0
  %5990 = vmatpush1.bf16.msra.mxu0 %v4461
  %5991 = vmatprep.subr.bf16.mxu0 0
  %5992 = vmatpush1.bf16.msra.mxu0 %v4462
  %5993 = vmatprep.subr.bf16.mxu0 0
  %5994 = vmatpush1.bf16.msra.mxu0 %v4463
  %5995 = vmatprep.subr.bf16.mxu0 0
  %5996 = vmatpush1.bf16.msra.mxu0 %v4464
  %5997 = vmatprep.mubr.bf16.mxu0 %v1850
  %5998 = vmatmul.mubr.bf16.gmra.mrb[0].mxu0 %v1849
  %v5999 = vpop.f32.mrb[0].mxu0
  %v6000 = vadd.f32 %v5943, %v5999
  %v6001 = vpop.f32.mrb[0].mxu0
  %v6002 = vpop.f32.mrb[0].mxu0
  %v6003 = vadd.f32 %v5946, %v6002
  %v6004 = vpop.f32.mrb[0].mxu0
  %6005 = vmatprep.mubr.bf16.mxu0 %v1914
  %6006 = vmatmul.mubr.bf16.gmra.mrb[0].mxu0 %v1913
  %v6007 = vpop.f32.mrb[0].mxu0
  %v6008 = vadd.f32 %v5951, %v6007
  %v6009 = vpop.f32.mrb[0].mxu0
  %v6010 = vpop.f32.mrb[0].mxu0
  %v6011 = vadd.f32 %v5954, %v6010
  %v6012 = vpop.f32.mrb[0].mxu0
  %6013 = vmatprep.mubr.bf16.mxu0 %v1978
  %6014 = vmatmul.mubr.bf16.gmra.mrb[0].mxu0 %v1977
  %v6015 = vpop.f32.mrb[0].mxu0
  %v6016 = vadd.f32 %v5959, %v6015
  %v6017 = vpop.f32.mrb[0].mxu0
  %v6018 = vpop.f32.mrb[0].mxu0
  %v6019 = vadd.f32 %v5962, %v6018
  %v6020 = vpop.f32.mrb[0].mxu0
  %6021 = vdwg.mxu0
  %6022 = vmatprep.subr.bf16.mxu0 0
  %6023 = vmatpush1.bf16.msra.mxu0 %v4465
  %6024 = vmatprep.subr.bf16.mxu0 0
  %6025 = vmatpush1.bf16.msra.mxu0 %v4466
  %6026 = vmatprep.subr.bf16.mxu0 0
  %6027 = vmatpush1.bf16.msra.mxu0 %v4467
  %6028 = vmatprep.subr.bf16.mxu0 0
  %6029 = vmatpush1.bf16.msra.mxu0 %v4468
  %6030 = vmatprep.subr.bf16.mxu0 0
  %6031 = vmatpush1.bf16.msra.mxu0 %v4469
  %6032 = vmatprep.subr.bf16.mxu0 0
  %6033 = vmatpush1.bf16.msra.mxu0 %v4470
  %6034 = vmatprep.subr.bf16.mxu0 0
  %6035 = vmatpush1.bf16.msra.mxu0 %v4471
  %6036 = vmatprep.subr.bf16.mxu0 0
  %6037 = vmatpush1.bf16.msra.mxu0 %v4472
  %6038 = vmatprep.subr.bf16.mxu0 0
  %6039 = vmatpush1.bf16.msra.mxu0 %v4473
  %6040 = vmatprep.subr.bf16.mxu0 0
  %6041 = vmatpush1.bf16.msra.mxu0 %v4474
  %6042 = vmatprep.subr.bf16.mxu0 0
  %6043 = vmatpush1.bf16.msra.mxu0 %v4475
  %6044 = vmatprep.subr.bf16.mxu0 0
  %6045 = vmatpush1.bf16.msra.mxu0 %v4476
  %6046 = vmatprep.subr.bf16.mxu0 0
  %6047 = vmatpush1.bf16.msra.mxu0 %v4477
  %6048 = vmatprep.subr.bf16.mxu0 0
  %6049 = vmatpush1.bf16.msra.mxu0 %v4478
  %6050 = vmatprep.subr.bf16.mxu0 0
  %6051 = vmatpush1.bf16.msra.mxu0 %v4479
  %6052 = vmatprep.subr.bf16.mxu0 0
  %6053 = vmatpush1.bf16.msra.mxu0 %v4480
  %6054 = vmatprep.mubr.bf16.mxu0 %v1852
  %6055 = vmatmul.mubr.bf16.gmra.mrb[0].mxu0 %v1851
  %v6056 = vpop.f32.mrb[0].mxu0
  %v6057 = vadd.f32 %v6000, %v6056
  %v6058 = vpop.f32.mrb[0].mxu0
  %v6059 = vpop.f32.mrb[0].mxu0
  %v6060 = vadd.f32 %v6003, %v6059
  %v6061 = vpop.f32.mrb[0].mxu0
  %6062 = vmatprep.mubr.bf16.mxu0 %v1916
  %6063 = vmatmul.mubr.bf16.gmra.mrb[0].mxu0 %v1915
  %v6064 = vpop.f32.mrb[0].mxu0
  %v6065 = vadd.f32 %v6008, %v6064
  %v6066 = vpop.f32.mrb[0].mxu0
  %v6067 = vpop.f32.mrb[0].mxu0
  %v6068 = vadd.f32 %v6011, %v6067
  %v6069 = vpop.f32.mrb[0].mxu0
  %6070 = vmatprep.mubr.bf16.mxu0 %v1980
  %6071 = vmatmul.mubr.bf16.gmra.mrb[0].mxu0 %v1979
  %v6072 = vpop.f32.mrb[0].mxu0
  %v6073 = vadd.f32 %v6016, %v6072
  %v6074 = vpop.f32.mrb[0].mxu0
  %v6075 = vpop.f32.mrb[0].mxu0
  %v6076 = vadd.f32 %v6019, %v6075
  %v6077 = vpop.f32.mrb[0].mxu0
  %6078 = vdwg.mxu0
  %6079 = vmatprep.subr.bf16.mxu0 0
  %6080 = vmatpush1.bf16.msra.mxu0 %v4481
  %6081 = vmatprep.subr.bf16.mxu0 0
  %6082 = vmatpush1.bf16.msra.mxu0 %v4482
  %6083 = vmatprep.subr.bf16.mxu0 0
  %6084 = vmatpush1.bf16.msra.mxu0 %v4483
  %6085 = vmatprep.subr.bf16.mxu0 0
  %6086 = vmatpush1.bf16.msra.mxu0 %v4484
  %6087 = vmatprep.subr.bf16.mxu0 0
  %6088 = vmatpush1.bf16.msra.mxu0 %v4485
  %6089 = vmatprep.subr.bf16.mxu0 0
  %6090 = vmatpush1.bf16.msra.mxu0 %v4486
  %6091 = vmatprep.subr.bf16.mxu0 0
  %6092 = vmatpush1.bf16.msra.mxu0 %v4487
  %6093 = vmatprep.subr.bf16.mxu0 0
  %6094 = vmatpush1.bf16.msra.mxu0 %v4488
  %6095 = vmatprep.subr.bf16.mxu0 0
  %6096 = vmatpush1.bf16.msra.mxu0 %v4489
  %6097 = vmatprep.subr.bf16.mxu0 0
  %6098 = vmatpush1.bf16.msra.mxu0 %v4490
  %6099 = vmatprep.subr.bf16.mxu0 0
  %6100 = vmatpush1.bf16.msra.mxu0 %v4491
  %6101 = vmatprep.subr.bf16.mxu0 0
  %6102 = vmatpush1.bf16.msra.mxu0 %v4492
  %6103 = vmatprep.subr.bf16.mxu0 0
  %6104 = vmatpush1.bf16.msra.mxu0 %v4493
  %6105 = vmatprep.subr.bf16.mxu0 0
  %6106 = vmatpush1.bf16.msra.mxu0 %v4494
  %6107 = vmatprep.subr.bf16.mxu0 0
  %6108 = vmatpush1.bf16.msra.mxu0 %v4495
  %6109 = vmatprep.subr.bf16.mxu0 0
  %6110 = vmatpush1.bf16.msra.mxu0 %v4496
  %6111 = vmatprep.mubr.bf16.mxu0 %v1854
  %6112 = vmatmul.mubr.bf16.gmra.mrb[0].mxu0 %v1853
  %v6113 = vpop.f32.mrb[0].mxu0
  %v6114 = vadd.f32 %v6057, %v6113
  %v6115 = vpop.f32.mrb[0].mxu0
  %v6116 = vpop.f32.mrb[0].mxu0
  %v6117 = vadd.f32 %v6060, %v6116
  %v6118 = vpop.f32.mrb[0].mxu0
  %6119 = vmatprep.mubr.bf16.mxu0 %v1918
  %6120 = vmatmul.mubr.bf16.gmra.mrb[0].mxu0 %v1917
  %v6121 = vpop.f32.mrb[0].mxu0
  %v6122 = vadd.f32 %v6065, %v6121
  %v6123 = vpop.f32.mrb[0].mxu0
  %v6124 = vpop.f32.mrb[0].mxu0
  %v6125 = vadd.f32 %v6068, %v6124
  %v6126 = vpop.f32.mrb[0].mxu0
  %6127 = vmatprep.mubr.bf16.mxu0 %v1982
  %6128 = vmatmul.mubr.bf16.gmra.mrb[0].mxu0 %v1981
  %v6129 = vpop.f32.mrb[0].mxu0
  %v6130 = vadd.f32 %v6073, %v6129
  %v6131 = vpop.f32.mrb[0].mxu0
  %v6132 = vpop.f32.mrb[0].mxu0
  %v6133 = vadd.f32 %v6076, %v6132
  %v6134 = vpop.f32.mrb[0].mxu0
  %6135 = vdwg.mxu0
  %6136 = vmatprep.subr.bf16.mxu0 0
  %6137 = vmatpush1.bf16.msra.mxu0 %v4497
  %6138 = vmatprep.subr.bf16.mxu0 0
  %6139 = vmatpush1.bf16.msra.mxu0 %v4498
  %6140 = vmatprep.subr.bf16.mxu0 0
  %6141 = vmatpush1.bf16.msra.mxu0 %v4499
  %6142 = vmatprep.subr.bf16.mxu0 0
  %6143 = vmatpush1.bf16.msra.mxu0 %v4500
  %6144 = vmatprep.subr.bf16.mxu0 0
  %6145 = vmatpush1.bf16.msra.mxu0 %v4501
  %6146 = vmatprep.subr.bf16.mxu0 0
  %6147 = vmatpush1.bf16.msra.mxu0 %v4502
  %6148 = vmatprep.subr.bf16.mxu0 0
  %6149 = vmatpush1.bf16.msra.mxu0 %v4503
  %6150 = vmatprep.subr.bf16.mxu0 0
  %6151 = vmatpush1.bf16.msra.mxu0 %v4504
  %6152 = vmatprep.subr.bf16.mxu0 0
  %6153 = vmatpush1.bf16.msra.mxu0 %v4505
  %6154 = vmatprep.subr.bf16.mxu0 0
  %6155 = vmatpush1.bf16.msra.mxu0 %v4506
  %6156 = vmatprep.subr.bf16.mxu0 0
  %6157 = vmatpush1.bf16.msra.mxu0 %v4507
  %6158 = vmatprep.subr.bf16.mxu0 0
  %6159 = vmatpush1.bf16.msra.mxu0 %v4508
  %6160 = vmatprep.subr.bf16.mxu0 0
  %6161 = vmatpush1.bf16.msra.mxu0 %v4509
  %6162 = vmatprep.subr.bf16.mxu0 0
  %6163 = vmatpush1.bf16.msra.mxu0 %v4510
  %6164 = vmatprep.subr.bf16.mxu0 0
  %6165 = vmatpush1.bf16.msra.mxu0 %v4511
  %6166 = vmatprep.subr.bf16.mxu0 0
  %6167 = vmatpush1.bf16.msra.mxu0 %v4512
  %6168 = vmatprep.mubr.bf16.mxu0 %v1856
  %6169 = vmatmul.mubr.bf16.gmra.mrb[0].mxu0 %v1855
  %v6170 = vpop.f32.mrb[0].mxu0
  %v6171 = vadd.f32 %v6114, %v6170
  %v6172 = vpop.f32.mrb[0].mxu0
  %v6173 = vpop.f32.mrb[0].mxu0
  %v6174 = vadd.f32 %v6117, %v6173
  %v6175 = vpop.f32.mrb[0].mxu0
  %6176 = vmatprep.mubr.bf16.mxu0 %v1920
  %6177 = vmatmul.mubr.bf16.gmra.mrb[0].mxu0 %v1919
  %v6178 = vpop.f32.mrb[0].mxu0
  %v6179 = vadd.f32 %v6122, %v6178
  %v6180 = vpop.f32.mrb[0].mxu0
  %v6181 = vpop.f32.mrb[0].mxu0
  %v6182 = vadd.f32 %v6125, %v6181
  %v6183 = vpop.f32.mrb[0].mxu0
  %6184 = vmatprep.mubr.bf16.mxu0 %v1984
  %6185 = vmatmul.mubr.bf16.gmra.mrb[0].mxu0 %v1983
  %v6186 = vpop.f32.mrb[0].mxu0
  %v6187 = vadd.f32 %v6130, %v6186
  %v6188 = vpop.f32.mrb[0].mxu0
  %v6189 = vpop.f32.mrb[0].mxu0
  %v6190 = vadd.f32 %v6133, %v6189
  %v6191 = vpop.f32.mrb[0].mxu0
  %6192 = vdwg.mxu0
  %6193 = vmatprep.subr.bf16.mxu0 0
  %6194 = vmatpush1.bf16.msra.mxu0 %v4513
  %6195 = vmatprep.subr.bf16.mxu0 0
  %6196 = vmatpush1.bf16.msra.mxu0 %v4514
  %6197 = vmatprep.subr.bf16.mxu0 0
  %6198 = vmatpush1.bf16.msra.mxu0 %v4515
  %6199 = vmatprep.subr.bf16.mxu0 0
  %6200 = vmatpush1.bf16.msra.mxu0 %v4516
  %6201 = vmatprep.subr.bf16.mxu0 0
  %6202 = vmatpush1.bf16.msra.mxu0 %v4517
  %6203 = vmatprep.subr.bf16.mxu0 0
  %6204 = vmatpush1.bf16.msra.mxu0 %v4518
  %6205 = vmatprep.subr.bf16.mxu0 0
  %6206 = vmatpush1.bf16.msra.mxu0 %v4519
  %6207 = vmatprep.subr.bf16.mxu0 0
  %6208 = vmatpush1.bf16.msra.mxu0 %v4520
  %6209 = vmatprep.subr.bf16.mxu0 0
  %6210 = vmatpush1.bf16.msra.mxu0 %v4521
  %6211 = vmatprep.subr.bf16.mxu0 0
  %6212 = vmatpush1.bf16.msra.mxu0 %v4522
  %6213 = vmatprep.subr.bf16.mxu0 0
  %6214 = vmatpush1.bf16.msra.mxu0 %v4523
  %6215 = vmatprep.subr.bf16.mxu0 0
  %6216 = vmatpush1.bf16.msra.mxu0 %v4524
  %6217 = vmatprep.subr.bf16.mxu0 0
  %6218 = vmatpush1.bf16.msra.mxu0 %v4525
  %6219 = vmatprep.subr.bf16.mxu0 0
  %6220 = vmatpush1.bf16.msra.mxu0 %v4526
  %6221 = vmatprep.subr.bf16.mxu0 0
  %6222 = vmatpush1.bf16.msra.mxu0 %v4527
  %6223 = vmatprep.subr.bf16.mxu0 0
  %6224 = vmatpush1.bf16.msra.mxu0 %v4528
  %6225 = vmatprep.mubr.bf16.mxu0 %v1858
  %6226 = vmatmul.mubr.bf16.gmra.mrb[0].mxu0 %v1857
  %v6227 = vpop.f32.mrb[0].mxu0
  %v6228 = vadd.f32 %v6171, %v6227
  %v6229 = vpop.f32.mrb[0].mxu0
  %v6230 = vpop.f32.mrb[0].mxu0
  %v6231 = vadd.f32 %v6174, %v6230
  %v6232 = vpop.f32.mrb[0].mxu0
  %6233 = vmatprep.mubr.bf16.mxu0 %v1922
  %6234 = vmatmul.mubr.bf16.gmra.mrb[0].mxu0 %v1921
  %v6235 = vpop.f32.mrb[0].mxu0
  %v6236 = vadd.f32 %v6179, %v6235
  %v6237 = vpop.f32.mrb[0].mxu0
  %v6238 = vpop.f32.mrb[0].mxu0
  %v6239 = vadd.f32 %v6182, %v6238
  %v6240 = vpop.f32.mrb[0].mxu0
  %6241 = vmatprep.mubr.bf16.mxu0 %v1986
  %6242 = vmatmul.mubr.bf16.gmra.mrb[0].mxu0 %v1985
  %v6243 = vpop.f32.mrb[0].mxu0
  %v6244 = vadd.f32 %v6187, %v6243
  %v6245 = vpop.f32.mrb[0].mxu0
  %v6246 = vpop.f32.mrb[0].mxu0
  %v6247 = vadd.f32 %v6190, %v6246
  %v6248 = vpop.f32.mrb[0].mxu0
  %6249 = vdwg.mxu0
  %6250 = vmatprep.subr.bf16.mxu0 0
  %6251 = vmatpush1.bf16.msra.mxu0 %v4529
  %6252 = vmatprep.subr.bf16.mxu0 0
  %6253 = vmatpush1.bf16.msra.mxu0 %v4530
  %6254 = vmatprep.subr.bf16.mxu0 0
  %6255 = vmatpush1.bf16.msra.mxu0 %v4531
  %6256 = vmatprep.subr.bf16.mxu0 0
  %6257 = vmatpush1.bf16.msra.mxu0 %v4532
  %6258 = vmatprep.subr.bf16.mxu0 0
  %6259 = vmatpush1.bf16.msra.mxu0 %v4533
  %6260 = vmatprep.subr.bf16.mxu0 0
  %6261 = vmatpush1.bf16.msra.mxu0 %v4534
  %6262 = vmatprep.subr.bf16.mxu0 0
  %6263 = vmatpush1.bf16.msra.mxu0 %v4535
  %6264 = vmatprep.subr.bf16.mxu0 0
  %6265 = vmatpush1.bf16.msra.mxu0 %v4536
  %6266 = vmatprep.subr.bf16.mxu0 0
  %6267 = vmatpush1.bf16.msra.mxu0 %v4537
  %6268 = vmatprep.subr.bf16.mxu0 0
  %6269 = vmatpush1.bf16.msra.mxu0 %v4538
  %6270 = vmatprep.subr.bf16.mxu0 0
  %6271 = vmatpush1.bf16.msra.mxu0 %v4539
  %6272 = vmatprep.subr.bf16.mxu0 0
  %6273 = vmatpush1.bf16.msra.mxu0 %v4540
  %6274 = vmatprep.subr.bf16.mxu0 0
  %6275 = vmatpush1.bf16.msra.mxu0 %v4541
  %6276 = vmatprep.subr.bf16.mxu0 0
  %6277 = vmatpush1.bf16.msra.mxu0 %v4542
  %6278 = vmatprep.subr.bf16.mxu0 0
  %6279 = vmatpush1.bf16.msra.mxu0 %v4543
  %6280 = vmatprep.subr.bf16.mxu0 0
  %6281 = vmatpush1.bf16.msra.mxu0 %v4544
  %6282 = vmatprep.mubr.bf16.mxu0 %v1860
  %6283 = vmatmul.mubr.bf16.gmra.mrb[0].mxu0 %v1859
  %v6284 = vpop.f32.mrb[0].mxu0
  %v6285 = vadd.f32 %v6228, %v6284
  %v6286 = vpop.f32.mrb[0].mxu0
  %v6287 = vpop.f32.mrb[0].mxu0
  %v6288 = vadd.f32 %v6231, %v6287
  %v6289 = vpop.f32.mrb[0].mxu0
  %6290 = vmatprep.mubr.bf16.mxu0 %v1924
  %6291 = vmatmul.mubr.bf16.gmra.mrb[0].mxu0 %v1923
  %v6292 = vpop.f32.mrb[0].mxu0
  %v6293 = vadd.f32 %v6236, %v6292
  %v6294 = vpop.f32.mrb[0].mxu0
  %v6295 = vpop.f32.mrb[0].mxu0
  %v6296 = vadd.f32 %v6239, %v6295
  %v6297 = vpop.f32.mrb[0].mxu0
  %6298 = vmatprep.mubr.bf16.mxu0 %v1988
  %6299 = vmatmul.mubr.bf16.gmra.mrb[0].mxu0 %v1987
  %v6300 = vpop.f32.mrb[0].mxu0
  %v6301 = vadd.f32 %v6244, %v6300
  %v6302 = vpop.f32.mrb[0].mxu0
  %v6303 = vpop.f32.mrb[0].mxu0
  %v6304 = vadd.f32 %v6247, %v6303
  %v6305 = vpop.f32.mrb[0].mxu0
  %6306 = vdwg.mxu0
  %6307 = vmatprep.subr.bf16.mxu0 0
  %6308 = vmatpush1.bf16.msra.mxu0 %v4545
  %6309 = vmatprep.subr.bf16.mxu0 0
  %6310 = vmatpush1.bf16.msra.mxu0 %v4546
  %6311 = vmatprep.subr.bf16.mxu0 0
  %6312 = vmatpush1.bf16.msra.mxu0 %v4547
  %6313 = vmatprep.subr.bf16.mxu0 0
  %6314 = vmatpush1.bf16.msra.mxu0 %v4548
  %6315 = vmatprep.subr.bf16.mxu0 0
  %6316 = vmatpush1.bf16.msra.mxu0 %v4549
  %6317 = vmatprep.subr.bf16.mxu0 0
  %6318 = vmatpush1.bf16.msra.mxu0 %v4550
  %6319 = vmatprep.subr.bf16.mxu0 0
  %6320 = vmatpush1.bf16.msra.mxu0 %v4551
  %6321 = vmatprep.subr.bf16.mxu0 0
  %6322 = vmatpush1.bf16.msra.mxu0 %v4552
  %6323 = vmatprep.subr.bf16.mxu0 0
  %6324 = vmatpush1.bf16.msra.mxu0 %v4553
  %6325 = vmatprep.subr.bf16.mxu0 0
  %6326 = vmatpush1.bf16.msra.mxu0 %v4554
  %6327 = vmatprep.subr.bf16.mxu0 0
  %6328 = vmatpush1.bf16.msra.mxu0 %v4555
  %6329 = vmatprep.subr.bf16.mxu0 0
  %6330 = vmatpush1.bf16.msra.mxu0 %v4556
  %6331 = vmatprep.subr.bf16.mxu0 0
  %6332 = vmatpush1.bf16.msra.mxu0 %v4557
  %6333 = vmatprep.subr.bf16.mxu0 0
  %6334 = vmatpush1.bf16.msra.mxu0 %v4558
  %6335 = vmatprep.subr.bf16.mxu0 0
  %6336 = vmatpush1.bf16.msra.mxu0 %v4559
  %6337 = vmatprep.subr.bf16.mxu0 0
  %6338 = vmatpush1.bf16.msra.mxu0 %v4560
  %6339 = vmatprep.mubr.bf16.mxu0 %v1862
  %6340 = vmatmul.mubr.bf16.gmra.mrb[0].mxu0 %v1861
  %v6341 = vpop.f32.mrb[0].mxu0
  %v6342 = vadd.f32 %v6285, %v6341
  %v6343 = vpop.f32.mrb[0].mxu0
  %v6344 = vpop.f32.mrb[0].mxu0
  %v6345 = vadd.f32 %v6288, %v6344
  %v6346 = vpop.f32.mrb[0].mxu0
  %6347 = vmatprep.mubr.bf16.mxu0 %v1926
  %6348 = vmatmul.mubr.bf16.gmra.mrb[0].mxu0 %v1925
  %v6349 = vpop.f32.mrb[0].mxu0
  %v6350 = vadd.f32 %v6293, %v6349
  %v6351 = vpop.f32.mrb[0].mxu0
  %v6352 = vpop.f32.mrb[0].mxu0
  %v6353 = vadd.f32 %v6296, %v6352
  %v6354 = vpop.f32.mrb[0].mxu0
  %6355 = vmatprep.mubr.bf16.mxu0 %v1990
  %6356 = vmatmul.mubr.bf16.gmra.mrb[0].mxu0 %v1989
  %v6357 = vpop.f32.mrb[0].mxu0
  %v6358 = vadd.f32 %v6301, %v6357
  %v6359 = vpop.f32.mrb[0].mxu0
  %v6360 = vpop.f32.mrb[0].mxu0
  %v6361 = vadd.f32 %v6304, %v6360
  %v6362 = vpop.f32.mrb[0].mxu0
  %6363 = vdwg.mxu0
  %6364 = vmatprep.subr.bf16.mxu0 0
  %6365 = vmatpush1.bf16.msra.mxu0 %v4561
  %6366 = vmatprep.subr.bf16.mxu0 0
  %6367 = vmatpush1.bf16.msra.mxu0 %v4562
  %6368 = vmatprep.subr.bf16.mxu0 0
  %6369 = vmatpush1.bf16.msra.mxu0 %v4563
  %6370 = vmatprep.subr.bf16.mxu0 0
  %6371 = vmatpush1.bf16.msra.mxu0 %v4564
  %6372 = vmatprep.subr.bf16.mxu0 0
  %6373 = vmatpush1.bf16.msra.mxu0 %v4565
  %6374 = vmatprep.subr.bf16.mxu0 0
  %6375 = vmatpush1.bf16.msra.mxu0 %v4566
  %6376 = vmatprep.subr.bf16.mxu0 0
  %6377 = vmatpush1.bf16.msra.mxu0 %v4567
  %6378 = vmatprep.subr.bf16.mxu0 0
  %6379 = vmatpush1.bf16.msra.mxu0 %v4568
  %6380 = vmatprep.subr.bf16.mxu0 0
  %6381 = vmatpush1.bf16.msra.mxu0 %v4569
  %6382 = vmatprep.subr.bf16.mxu0 0
  %6383 = vmatpush1.bf16.msra.mxu0 %v4570
  %6384 = vmatprep.subr.bf16.mxu0 0
  %6385 = vmatpush1.bf16.msra.mxu0 %v4571
  %6386 = vmatprep.subr.bf16.mxu0 0
  %6387 = vmatpush1.bf16.msra.mxu0 %v4572
  %6388 = vmatprep.subr.bf16.mxu0 0
  %6389 = vmatpush1.bf16.msra.mxu0 %v4573
  %6390 = vmatprep.subr.bf16.mxu0 0
  %6391 = vmatpush1.bf16.msra.mxu0 %v4574
  %6392 = vmatprep.subr.bf16.mxu0 0
  %6393 = vmatpush1.bf16.msra.mxu0 %v4575
  %6394 = vmatprep.subr.bf16.mxu0 0
  %6395 = vmatpush1.bf16.msra.mxu0 %v4576
  %6396 = vmatprep.mubr.bf16.mxu0 %v1864
  %6397 = vmatmul.mubr.bf16.gmra.mrb[0].mxu0 %v1863
  %v6398 = vpop.f32.mrb[0].mxu0
  %v6399 = vadd.f32 %v6342, %v6398
  %v6400 = vpop.f32.mrb[0].mxu0
  %v6401 = vpop.f32.mrb[0].mxu0
  %v6402 = vadd.f32 %v6345, %v6401
  %v6403 = vpop.f32.mrb[0].mxu0
  %6404 = vmatprep.mubr.bf16.mxu0 %v1928
  %6405 = vmatmul.mubr.bf16.gmra.mrb[0].mxu0 %v1927
  %v6406 = vpop.f32.mrb[0].mxu0
  %v6407 = vadd.f32 %v6350, %v6406
  %v6408 = vpop.f32.mrb[0].mxu0
  %v6409 = vpop.f32.mrb[0].mxu0
  %v6410 = vadd.f32 %v6353, %v6409
  %v6411 = vpop.f32.mrb[0].mxu0
  %6412 = vmatprep.mubr.bf16.mxu0 %v1992
  %6413 = vmatmul.mubr.bf16.gmra.mrb[0].mxu0 %v1991
  %v6414 = vpop.f32.mrb[0].mxu0
  %v6415 = vadd.f32 %v6358, %v6414
  %v6416 = vpop.f32.mrb[0].mxu0
  %v6417 = vpop.f32.mrb[0].mxu0
  %v6418 = vadd.f32 %v6361, %v6417
  %v6419 = vpop.f32.mrb[0].mxu0
  %6420 = vdwg.mxu0
  %6421 = vmatprep.subr.bf16.mxu0 0
  %6422 = vmatpush1.bf16.msra.mxu0 %v4577
  %6423 = vmatprep.subr.bf16.mxu0 0
  %6424 = vmatpush1.bf16.msra.mxu0 %v4578
  %6425 = vmatprep.subr.bf16.mxu0 0
  %6426 = vmatpush1.bf16.msra.mxu0 %v4579
  %6427 = vmatprep.subr.bf16.mxu0 0
  %6428 = vmatpush1.bf16.msra.mxu0 %v4580
  %6429 = vmatprep.subr.bf16.mxu0 0
  %6430 = vmatpush1.bf16.msra.mxu0 %v4581
  %6431 = vmatprep.subr.bf16.mxu0 0
  %6432 = vmatpush1.bf16.msra.mxu0 %v4582
  %6433 = vmatprep.subr.bf16.mxu0 0
  %6434 = vmatpush1.bf16.msra.mxu0 %v4583
  %6435 = vmatprep.subr.bf16.mxu0 0
  %6436 = vmatpush1.bf16.msra.mxu0 %v4584
  %6437 = vmatprep.subr.bf16.mxu0 0
  %6438 = vmatpush1.bf16.msra.mxu0 %v4585
  %6439 = vmatprep.subr.bf16.mxu0 0
  %6440 = vmatpush1.bf16.msra.mxu0 %v4586
  %6441 = vmatprep.subr.bf16.mxu0 0
  %6442 = vmatpush1.bf16.msra.mxu0 %v4587
  %6443 = vmatprep.subr.bf16.mxu0 0
  %6444 = vmatpush1.bf16.msra.mxu0 %v4588
  %6445 = vmatprep.subr.bf16.mxu0 0
  %6446 = vmatpush1.bf16.msra.mxu0 %v4589
  %6447 = vmatprep.subr.bf16.mxu0 0
  %6448 = vmatpush1.bf16.msra.mxu0 %v4590
  %6449 = vmatprep.subr.bf16.mxu0 0
  %6450 = vmatpush1.bf16.msra.mxu0 %v4591
  %6451 = vmatprep.subr.bf16.mxu0 0
  %6452 = vmatpush1.bf16.msra.mxu0 %v4592
  %6453 = vmatprep.mubr.bf16.mxu0 %v1866
  %6454 = vmatmul.mubr.bf16.gmra.mrb[0].mxu0 %v1865
  %v6455 = vpop.f32.mrb[0].mxu0
  %v6456 = vadd.f32 %v6399, %v6455
  %v6457 = vpop.f32.mrb[0].mxu0
  %v6458 = vpop.f32.mrb[0].mxu0
  %v6459 = vadd.f32 %v6402, %v6458
  %v6460 = vpop.f32.mrb[0].mxu0
  %6461 = vmatprep.mubr.bf16.mxu0 %v1930
  %6462 = vmatmul.mubr.bf16.gmra.mrb[0].mxu0 %v1929
  %v6463 = vpop.f32.mrb[0].mxu0
  %v6464 = vadd.f32 %v6407, %v6463
  %v6465 = vpop.f32.mrb[0].mxu0
  %v6466 = vpop.f32.mrb[0].mxu0
  %v6467 = vadd.f32 %v6410, %v6466
  %v6468 = vpop.f32.mrb[0].mxu0
  %6469 = vmatprep.mubr.bf16.mxu0 %v1994
  %6470 = vmatmul.mubr.bf16.gmra.mrb[0].mxu0 %v1993
  %v6471 = vpop.f32.mrb[0].mxu0
  %v6472 = vadd.f32 %v6415, %v6471
  %v6473 = vpop.f32.mrb[0].mxu0
  %v6474 = vpop.f32.mrb[0].mxu0
  %v6475 = vadd.f32 %v6418, %v6474
  %v6476 = vpop.f32.mrb[0].mxu0
  %6477 = vdwg.mxu0
  %6478 = vmatprep.subr.bf16.mxu0 0
  %6479 = vmatpush1.bf16.msra.mxu0 %v4593
  %6480 = vmatprep.subr.bf16.mxu0 0
  %6481 = vmatpush1.bf16.msra.mxu0 %v4594
  %6482 = vmatprep.subr.bf16.mxu0 0
  %6483 = vmatpush1.bf16.msra.mxu0 %v4595
  %6484 = vmatprep.subr.bf16.mxu0 0
  %6485 = vmatpush1.bf16.msra.mxu0 %v4596
  %6486 = vmatprep.subr.bf16.mxu0 0
  %6487 = vmatpush1.bf16.msra.mxu0 %v4597
  %6488 = vmatprep.subr.bf16.mxu0 0
  %6489 = vmatpush1.bf16.msra.mxu0 %v4598
  %6490 = vmatprep.subr.bf16.mxu0 0
  %6491 = vmatpush1.bf16.msra.mxu0 %v4599
  %6492 = vmatprep.subr.bf16.mxu0 0
  %6493 = vmatpush1.bf16.msra.mxu0 %v4600
  %6494 = vmatprep.subr.bf16.mxu0 0
  %6495 = vmatpush1.bf16.msra.mxu0 %v4601
  %6496 = vmatprep.subr.bf16.mxu0 0
  %6497 = vmatpush1.bf16.msra.mxu0 %v4602
  %6498 = vmatprep.subr.bf16.mxu0 0
  %6499 = vmatpush1.bf16.msra.mxu0 %v4603
  %6500 = vmatprep.subr.bf16.mxu0 0
  %6501 = vmatpush1.bf16.msra.mxu0 %v4604
  %6502 = vmatprep.subr.bf16.mxu0 0
  %6503 = vmatpush1.bf16.msra.mxu0 %v4605
  %6504 = vmatprep.subr.bf16.mxu0 0
  %6505 = vmatpush1.bf16.msra.mxu0 %v4606
  %6506 = vmatprep.subr.bf16.mxu0 0
  %6507 = vmatpush1.bf16.msra.mxu0 %v4607
  %6508 = vmatprep.subr.bf16.mxu0 0
  %6509 = vmatpush1.bf16.msra.mxu0 %v4608
  %6510 = vmatprep.mubr.bf16.mxu0 %v1868
  %6511 = vmatmul.mubr.bf16.gmra.mrb[0].mxu0 %v1867
  %v6512 = vpop.f32.mrb[0].mxu0
  %v6513 = vadd.f32 %v6456, %v6512
  %v6514 = vpop.f32.mrb[0].mxu0
  %v6515 = vpop.f32.mrb[0].mxu0
  %v6516 = vadd.f32 %v6459, %v6515
  %v6517 = vpop.f32.mrb[0].mxu0
  %6518 = vmatprep.mubr.bf16.mxu0 %v1932
  %6519 = vmatmul.mubr.bf16.gmra.mrb[0].mxu0 %v1931
  %v6520 = vpop.f32.mrb[0].mxu0
  %v6521 = vadd.f32 %v6464, %v6520
  %v6522 = vpop.f32.mrb[0].mxu0
  %v6523 = vpop.f32.mrb[0].mxu0
  %v6524 = vadd.f32 %v6467, %v6523
  %v6525 = vpop.f32.mrb[0].mxu0
  %6526 = vmatprep.mubr.bf16.mxu0 %v1996
  %6527 = vmatmul.mubr.bf16.gmra.mrb[0].mxu0 %v1995
  %v6528 = vpop.f32.mrb[0].mxu0
  %v6529 = vadd.f32 %v6472, %v6528
  %v6530 = vpop.f32.mrb[0].mxu0
  %v6531 = vpop.f32.mrb[0].mxu0
  %v6532 = vadd.f32 %v6475, %v6531
  %v6533 = vpop.f32.mrb[0].mxu0
  %6534 = vdwg.mxu0
  %6535 = vmatprep.subr.bf16.mxu0 0
  %6536 = vmatpush1.bf16.msra.mxu0 %v4609
  %6537 = vmatprep.subr.bf16.mxu0 0
  %6538 = vmatpush1.bf16.msra.mxu0 %v4610
  %6539 = vmatprep.subr.bf16.mxu0 0
  %6540 = vmatpush1.bf16.msra.mxu0 %v4611
  %6541 = vmatprep.subr.bf16.mxu0 0
  %6542 = vmatpush1.bf16.msra.mxu0 %v4612
  %6543 = vmatprep.subr.bf16.mxu0 0
  %6544 = vmatpush1.bf16.msra.mxu0 %v4613
  %6545 = vmatprep.subr.bf16.mxu0 0
  %6546 = vmatpush1.bf16.msra.mxu0 %v4614
  %6547 = vmatprep.subr.bf16.mxu0 0
  %6548 = vmatpush1.bf16.msra.mxu0 %v4615
  %6549 = vmatprep.subr.bf16.mxu0 0
  %6550 = vmatpush1.bf16.msra.mxu0 %v4616
  %6551 = vmatprep.subr.bf16.mxu0 0
  %6552 = vmatpush1.bf16.msra.mxu0 %v4617
  %6553 = vmatprep.subr.bf16.mxu0 0
  %6554 = vmatpush1.bf16.msra.mxu0 %v4618
  %6555 = vmatprep.subr.bf16.mxu0 0
  %6556 = vmatpush1.bf16.msra.mxu0 %v4619
  %6557 = vmatprep.subr.bf16.mxu0 0
  %6558 = vmatpush1.bf16.msra.mxu0 %v4620
  %6559 = vmatprep.subr.bf16.mxu0 0
  %6560 = vmatpush1.bf16.msra.mxu0 %v4621
  %6561 = vmatprep.subr.bf16.mxu0 0
  %6562 = vmatpush1.bf16.msra.mxu0 %v4622
  %6563 = vmatprep.subr.bf16.mxu0 0
  %6564 = vmatpush1.bf16.msra.mxu0 %v4623
  %6565 = vmatprep.subr.bf16.mxu0 0
  %6566 = vmatpush1.bf16.msra.mxu0 %v4624
  %6567 = vmatprep.mubr.bf16.mxu0 %v1870
  %6568 = vmatmul.mubr.bf16.gmra.mrb[0].mxu0 %v1869
  %v6569 = vpop.f32.mrb[0].mxu0
  %v6570 = vadd.f32 %v6513, %v6569
  %v6571 = vpop.f32.mrb[0].mxu0
  %v6572 = vpop.f32.mrb[0].mxu0
  %v6573 = vadd.f32 %v6516, %v6572
  %v6574 = vpop.f32.mrb[0].mxu0
  %6575 = vmatprep.mubr.bf16.mxu0 %v1934
  %6576 = vmatmul.mubr.bf16.gmra.mrb[0].mxu0 %v1933
  %v6577 = vpop.f32.mrb[0].mxu0
  %v6578 = vadd.f32 %v6521, %v6577
  %v6579 = vpop.f32.mrb[0].mxu0
  %v6580 = vpop.f32.mrb[0].mxu0
  %v6581 = vadd.f32 %v6524, %v6580
  %v6582 = vpop.f32.mrb[0].mxu0
  %6583 = vmatprep.mubr.bf16.mxu0 %v1998
  %6584 = vmatmul.mubr.bf16.gmra.mrb[0].mxu0 %v1997
  %v6585 = vpop.f32.mrb[0].mxu0
  %v6586 = vadd.f32 %v6529, %v6585
  %v6587 = vpop.f32.mrb[0].mxu0
  %v6588 = vpop.f32.mrb[0].mxu0
  %v6589 = vadd.f32 %v6532, %v6588
  %v6590 = vpop.f32.mrb[0].mxu0
  %6591 = vdwg.mxu0
  %6592 = vmatprep.subr.bf16.mxu0 0
  %6593 = vmatpush1.bf16.msra.mxu0 %v4625
  %6594 = vmatprep.subr.bf16.mxu0 0
  %6595 = vmatpush1.bf16.msra.mxu0 %v4626
  %6596 = vmatprep.subr.bf16.mxu0 0
  %6597 = vmatpush1.bf16.msra.mxu0 %v4627
  %6598 = vmatprep.subr.bf16.mxu0 0
  %6599 = vmatpush1.bf16.msra.mxu0 %v4628
  %6600 = vmatprep.subr.bf16.mxu0 0
  %6601 = vmatpush1.bf16.msra.mxu0 %v4629
  %6602 = vmatprep.subr.bf16.mxu0 0
  %6603 = vmatpush1.bf16.msra.mxu0 %v4630
  %6604 = vmatprep.subr.bf16.mxu0 0
  %6605 = vmatpush1.bf16.msra.mxu0 %v4631
  %6606 = vmatprep.subr.bf16.mxu0 0
  %6607 = vmatpush1.bf16.msra.mxu0 %v4632
  %6608 = vmatprep.subr.bf16.mxu0 0
  %6609 = vmatpush1.bf16.msra.mxu0 %v4633
  %6610 = vmatprep.subr.bf16.mxu0 0
  %6611 = vmatpush1.bf16.msra.mxu0 %v4634
  %6612 = vmatprep.subr.bf16.mxu0 0
  %6613 = vmatpush1.bf16.msra.mxu0 %v4635
  %6614 = vmatprep.subr.bf16.mxu0 0
  %6615 = vmatpush1.bf16.msra.mxu0 %v4636
  %6616 = vmatprep.subr.bf16.mxu0 0
  %6617 = vmatpush1.bf16.msra.mxu0 %v4637
  %6618 = vmatprep.subr.bf16.mxu0 0
  %6619 = vmatpush1.bf16.msra.mxu0 %v4638
  %6620 = vmatprep.subr.bf16.mxu0 0
  %6621 = vmatpush1.bf16.msra.mxu0 %v4639
  %6622 = vmatprep.subr.bf16.mxu0 0
  %6623 = vmatpush1.bf16.msra.mxu0 %v4640
  %6624 = vmatprep.mubr.bf16.mxu0 %v1872
  %6625 = vmatmul.mubr.bf16.gmra.mrb[0].mxu0 %v1871
  %v6626 = vpop.f32.mrb[0].mxu0
  %v6627 = vadd.f32 %v6570, %v6626
  %v6628 = vpop.f32.mrb[0].mxu0
  %v6629 = vpop.f32.mrb[0].mxu0
  %v6630 = vadd.f32 %v6573, %v6629
  %v6631 = vpop.f32.mrb[0].mxu0
  %6632 = vmatprep.mubr.bf16.mxu0 %v1936
  %6633 = vmatmul.mubr.bf16.gmra.mrb[0].mxu0 %v1935
  %v6634 = vpop.f32.mrb[0].mxu0
  %v6635 = vadd.f32 %v6578, %v6634
  %v6636 = vpop.f32.mrb[0].mxu0
  %v6637 = vpop.f32.mrb[0].mxu0
  %v6638 = vadd.f32 %v6581, %v6637
  %v6639 = vpop.f32.mrb[0].mxu0
  %6640 = vmatprep.mubr.bf16.mxu0 %v2000
  %6641 = vmatmul.mubr.bf16.gmra.mrb[0].mxu0 %v1999
  %v6642 = vpop.f32.mrb[0].mxu0
  %v6643 = vadd.f32 %v6586, %v6642
  %v6644 = vpop.f32.mrb[0].mxu0
  %v6645 = vpop.f32.mrb[0].mxu0
  %v6646 = vadd.f32 %v6589, %v6645
  %v6647 = vpop.f32.mrb[0].mxu0
  %6648 = vdwg.mxu0
  %6649 = vmatprep.subr.bf16.mxu0 0
  %6650 = vmatpush1.bf16.msra.mxu0 %v4641
  %6651 = vmatprep.subr.bf16.mxu0 0
  %6652 = vmatpush1.bf16.msra.mxu0 %v4642
  %6653 = vmatprep.subr.bf16.mxu0 0
  %6654 = vmatpush1.bf16.msra.mxu0 %v4643
  %6655 = vmatprep.subr.bf16.mxu0 0
  %6656 = vmatpush1.bf16.msra.mxu0 %v4644
  %6657 = vmatprep.subr.bf16.mxu0 0
  %6658 = vmatpush1.bf16.msra.mxu0 %v4645
  %6659 = vmatprep.subr.bf16.mxu0 0
  %6660 = vmatpush1.bf16.msra.mxu0 %v4646
  %6661 = vmatprep.subr.bf16.mxu0 0
  %6662 = vmatpush1.bf16.msra.mxu0 %v4647
  %6663 = vmatprep.subr.bf16.mxu0 0
  %6664 = vmatpush1.bf16.msra.mxu0 %v4648
  %6665 = vmatprep.subr.bf16.mxu0 0
  %6666 = vmatpush1.bf16.msra.mxu0 %v4649
  %6667 = vmatprep.subr.bf16.mxu0 0
  %6668 = vmatpush1.bf16.msra.mxu0 %v4650
  %6669 = vmatprep.subr.bf16.mxu0 0
  %6670 = vmatpush1.bf16.msra.mxu0 %v4651
  %6671 = vmatprep.subr.bf16.mxu0 0
  %6672 = vmatpush1.bf16.msra.mxu0 %v4652
  %6673 = vmatprep.subr.bf16.mxu0 0
  %6674 = vmatpush1.bf16.msra.mxu0 %v4653
  %6675 = vmatprep.subr.bf16.mxu0 0
  %6676 = vmatpush1.bf16.msra.mxu0 %v4654
  %6677 = vmatprep.subr.bf16.mxu0 0
  %6678 = vmatpush1.bf16.msra.mxu0 %v4655
  %6679 = vmatprep.subr.bf16.mxu0 0
  %6680 = vmatpush1.bf16.msra.mxu0 %v4656
  %6681 = vmatprep.mubr.bf16.mxu0 %v1874
  %6682 = vmatmul.mubr.bf16.gmra.mrb[0].mxu0 %v1873
  %v6683 = vpop.f32.mrb[0].mxu0
  %v6684 = vadd.f32 %v6627, %v6683
  %v6685 = vpop.f32.mrb[0].mxu0
  %v6686 = vpop.f32.mrb[0].mxu0
  %v6687 = vadd.f32 %v6630, %v6686
  %v6688 = vpop.f32.mrb[0].mxu0
  %6689 = vmatprep.mubr.bf16.mxu0 %v1938
  %6690 = vmatmul.mubr.bf16.gmra.mrb[0].mxu0 %v1937
  %v6691 = vpop.f32.mrb[0].mxu0
  %v6692 = vadd.f32 %v6635, %v6691
  %v6693 = vpop.f32.mrb[0].mxu0
  %v6694 = vpop.f32.mrb[0].mxu0
  %v6695 = vadd.f32 %v6638, %v6694
  %v6696 = vpop.f32.mrb[0].mxu0
  %6697 = vmatprep.mubr.bf16.mxu0 %v2002
  %6698 = vmatmul.mubr.bf16.gmra.mrb[0].mxu0 %v2001
  %v6699 = vpop.f32.mrb[0].mxu0
  %v6700 = vadd.f32 %v6643, %v6699
  %v6701 = vpop.f32.mrb[0].mxu0
  %v6702 = vpop.f32.mrb[0].mxu0
  %v6703 = vadd.f32 %v6646, %v6702
  %v6704 = vpop.f32.mrb[0].mxu0
  %6705 = vdwg.mxu0
  %6706 = vmatprep.subr.bf16.mxu0 0
  %6707 = vmatpush1.bf16.msra.mxu0 %v4657
  %6708 = vmatprep.subr.bf16.mxu0 0
  %6709 = vmatpush1.bf16.msra.mxu0 %v4658
  %6710 = vmatprep.subr.bf16.mxu0 0
  %6711 = vmatpush1.bf16.msra.mxu0 %v4659
  %6712 = vmatprep.subr.bf16.mxu0 0
  %6713 = vmatpush1.bf16.msra.mxu0 %v4660
  %6714 = vmatprep.subr.bf16.mxu0 0
  %6715 = vmatpush1.bf16.msra.mxu0 %v4661
  %6716 = vmatprep.subr.bf16.mxu0 0
  %6717 = vmatpush1.bf16.msra.mxu0 %v4662
  %6718 = vmatprep.subr.bf16.mxu0 0
  %6719 = vmatpush1.bf16.msra.mxu0 %v4663
  %6720 = vmatprep.subr.bf16.mxu0 0
  %6721 = vmatpush1.bf16.msra.mxu0 %v4664
  %6722 = vmatprep.subr.bf16.mxu0 0
  %6723 = vmatpush1.bf16.msra.mxu0 %v4665
  %6724 = vmatprep.subr.bf16.mxu0 0
  %6725 = vmatpush1.bf16.msra.mxu0 %v4666
  %6726 = vmatprep.subr.bf16.mxu0 0
  %6727 = vmatpush1.bf16.msra.mxu0 %v4667
  %6728 = vmatprep.subr.bf16.mxu0 0
  %6729 = vmatpush1.bf16.msra.mxu0 %v4668
  %6730 = vmatprep.subr.bf16.mxu0 0
  %6731 = vmatpush1.bf16.msra.mxu0 %v4669
  %6732 = vmatprep.subr.bf16.mxu0 0
  %6733 = vmatpush1.bf16.msra.mxu0 %v4670
  %6734 = vmatprep.subr.bf16.mxu0 0
  %6735 = vmatpush1.bf16.msra.mxu0 %v4671
  %6736 = vmatprep.subr.bf16.mxu0 0
  %6737 = vmatpush1.bf16.msra.mxu0 %v4672
  %6738 = vmatprep.mubr.bf16.mxu0 %v1876
  %6739 = vmatmul.mubr.bf16.gmra.mrb[0].mxu0 %v1875
  %v6740 = vpop.f32.mrb[0].mxu0
  %v6741 = vadd.f32 %v6684, %v6740
  %v6742 = vpop.f32.mrb[0].mxu0
  %v6743 = vpop.f32.mrb[0].mxu0
  %v6744 = vadd.f32 %v6687, %v6743
  %v6745 = vpop.f32.mrb[0].mxu0
  %6746 = vmatprep.mubr.bf16.mxu0 %v1940
  %6747 = vmatmul.mubr.bf16.gmra.mrb[0].mxu0 %v1939
  %v6748 = vpop.f32.mrb[0].mxu0
  %v6749 = vadd.f32 %v6692, %v6748
  %v6750 = vpop.f32.mrb[0].mxu0
  %v6751 = vpop.f32.mrb[0].mxu0
  %v6752 = vadd.f32 %v6695, %v6751
  %v6753 = vpop.f32.mrb[0].mxu0
  %6754 = vmatprep.mubr.bf16.mxu0 %v2004
  %6755 = vmatmul.mubr.bf16.gmra.mrb[0].mxu0 %v2003
  %v6756 = vpop.f32.mrb[0].mxu0
  %v6757 = vadd.f32 %v6700, %v6756
  %v6758 = vpop.f32.mrb[0].mxu0
  %v6759 = vpop.f32.mrb[0].mxu0
  %v6760 = vadd.f32 %v6703, %v6759
  %v6761 = vpop.f32.mrb[0].mxu0
  %6762 = vdwg.mxu0
  %6763 = vmatprep.subr.bf16.mxu0 0
  %6764 = vmatpush1.bf16.msra.mxu0 %v4673
  %6765 = vmatprep.subr.bf16.mxu0 0
  %6766 = vmatpush1.bf16.msra.mxu0 %v4674
  %6767 = vmatprep.subr.bf16.mxu0 0
  %6768 = vmatpush1.bf16.msra.mxu0 %v4675
  %6769 = vmatprep.subr.bf16.mxu0 0
  %6770 = vmatpush1.bf16.msra.mxu0 %v4676
  %6771 = vmatprep.subr.bf16.mxu0 0
  %6772 = vmatpush1.bf16.msra.mxu0 %v4677
  %6773 = vmatprep.subr.bf16.mxu0 0
  %6774 = vmatpush1.bf16.msra.mxu0 %v4678
  %6775 = vmatprep.subr.bf16.mxu0 0
  %6776 = vmatpush1.bf16.msra.mxu0 %v4679
  %6777 = vmatprep.subr.bf16.mxu0 0
  %6778 = vmatpush1.bf16.msra.mxu0 %v4680
  %6779 = vmatprep.subr.bf16.mxu0 0
  %6780 = vmatpush1.bf16.msra.mxu0 %v4681
  %6781 = vmatprep.subr.bf16.mxu0 0
  %6782 = vmatpush1.bf16.msra.mxu0 %v4682
  %6783 = vmatprep.subr.bf16.mxu0 0
  %6784 = vmatpush1.bf16.msra.mxu0 %v4683
  %6785 = vmatprep.subr.bf16.mxu0 0
  %6786 = vmatpush1.bf16.msra.mxu0 %v4684
  %6787 = vmatprep.subr.bf16.mxu0 0
  %6788 = vmatpush1.bf16.msra.mxu0 %v4685
  %6789 = vmatprep.subr.bf16.mxu0 0
  %6790 = vmatpush1.bf16.msra.mxu0 %v4686
  %6791 = vmatprep.subr.bf16.mxu0 0
  %6792 = vmatpush1.bf16.msra.mxu0 %v4687
  %6793 = vmatprep.subr.bf16.mxu0 0
  %6794 = vmatpush1.bf16.msra.mxu0 %v4688
  %6795 = vmatprep.mubr.bf16.mxu0 %v1878
  %6796 = vmatmul.mubr.bf16.gmra.mrb[0].mxu0 %v1877
  %v6797 = vpop.f32.mrb[0].mxu0
  %v6798 = vadd.f32 %v6741, %v6797
  %v6799 = vpop.f32.mrb[0].mxu0
  %v6800 = vpop.f32.mrb[0].mxu0
  %v6801 = vadd.f32 %v6744, %v6800
  %v6802 = vpop.f32.mrb[0].mxu0
  %6803 = vmatprep.mubr.bf16.mxu0 %v1942
  %6804 = vmatmul.mubr.bf16.gmra.mrb[0].mxu0 %v1941
  %v6805 = vpop.f32.mrb[0].mxu0
  %v6806 = vadd.f32 %v6749, %v6805
  %v6807 = vpop.f32.mrb[0].mxu0
  %v6808 = vpop.f32.mrb[0].mxu0
  %v6809 = vadd.f32 %v6752, %v6808
  %v6810 = vpop.f32.mrb[0].mxu0
  %6811 = vmatprep.mubr.bf16.mxu0 %v2006
  %6812 = vmatmul.mubr.bf16.gmra.mrb[0].mxu0 %v2005
  %v6813 = vpop.f32.mrb[0].mxu0
  %v6814 = vadd.f32 %v6757, %v6813
  %v6815 = vpop.f32.mrb[0].mxu0
  %v6816 = vpop.f32.mrb[0].mxu0
  %v6817 = vadd.f32 %v6760, %v6816
  %v6818 = vpop.f32.mrb[0].mxu0
  %6819 = vdwg.mxu0
  %6820 = vmatprep.subr.bf16.mxu0 0
  %6821 = vmatpush1.bf16.msra.mxu0 %v4689
  %6822 = vmatprep.subr.bf16.mxu0 0
  %6823 = vmatpush1.bf16.msra.mxu0 %v4690
  %6824 = vmatprep.subr.bf16.mxu0 0
  %6825 = vmatpush1.bf16.msra.mxu0 %v4691
  %6826 = vmatprep.subr.bf16.mxu0 0
  %6827 = vmatpush1.bf16.msra.mxu0 %v4692
  %6828 = vmatprep.subr.bf16.mxu0 0
  %6829 = vmatpush1.bf16.msra.mxu0 %v4693
  %6830 = vmatprep.subr.bf16.mxu0 0
  %6831 = vmatpush1.bf16.msra.mxu0 %v4694
  %6832 = vmatprep.subr.bf16.mxu0 0
  %6833 = vmatpush1.bf16.msra.mxu0 %v4695
  %6834 = vmatprep.subr.bf16.mxu0 0
  %6835 = vmatpush1.bf16.msra.mxu0 %v4696
  %6836 = vmatprep.subr.bf16.mxu0 0
  %6837 = vmatpush1.bf16.msra.mxu0 %v4697
  %6838 = vmatprep.subr.bf16.mxu0 0
  %6839 = vmatpush1.bf16.msra.mxu0 %v4698
  %6840 = vmatprep.subr.bf16.mxu0 0
  %6841 = vmatpush1.bf16.msra.mxu0 %v4699
  %6842 = vmatprep.subr.bf16.mxu0 0
  %6843 = vmatpush1.bf16.msra.mxu0 %v4700
  %6844 = vmatprep.subr.bf16.mxu0 0
  %6845 = vmatpush1.bf16.msra.mxu0 %v4701
  %6846 = vmatprep.subr.bf16.mxu0 0
  %6847 = vmatpush1.bf16.msra.mxu0 %v4702
  %6848 = vmatprep.subr.bf16.mxu0 0
  %6849 = vmatpush1.bf16.msra.mxu0 %v4703
  %6850 = vmatprep.subr.bf16.mxu0 0
  %6851 = vmatpush1.bf16.msra.mxu0 %v4704
  %6852 = vmatprep.mubr.bf16.mxu0 %v1880
  %6853 = vmatmul.mubr.bf16.gmra.mrb[0].mxu0 %v1879
  %v6854 = vpop.f32.mrb[0].mxu0
  %v6855 = vadd.f32 %v6798, %v6854
  %v6856 = vpop.f32.mrb[0].mxu0
  %v6857 = vpop.f32.mrb[0].mxu0
  %v6858 = vadd.f32 %v6801, %v6857
  %v6859 = vpop.f32.mrb[0].mxu0
  %6860 = vmatprep.mubr.bf16.mxu0 %v1944
  %6861 = vmatmul.mubr.bf16.gmra.mrb[0].mxu0 %v1943
  %v6862 = vpop.f32.mrb[0].mxu0
  %v6863 = vadd.f32 %v6806, %v6862
  %v6864 = vpop.f32.mrb[0].mxu0
  %v6865 = vpop.f32.mrb[0].mxu0
  %v6866 = vadd.f32 %v6809, %v6865
  %v6867 = vpop.f32.mrb[0].mxu0
  %6868 = vmatprep.mubr.bf16.mxu0 %v2008
  %6869 = vmatmul.mubr.bf16.gmra.mrb[0].mxu0 %v2007
  %v6870 = vpop.f32.mrb[0].mxu0
  %v6871 = vadd.f32 %v6814, %v6870
  %v6872 = vpop.f32.mrb[0].mxu0
  %v6873 = vpop.f32.mrb[0].mxu0
  %v6874 = vadd.f32 %v6817, %v6873
  %v6875 = vpop.f32.mrb[0].mxu0
  %6876 = vdwg.mxu0
  %6877 = vmatprep.subr.bf16.mxu0 0
  %6878 = vmatpush1.bf16.msra.mxu0 %v4705
  %6879 = vmatprep.subr.bf16.mxu0 0
  %6880 = vmatpush1.bf16.msra.mxu0 %v4706
  %6881 = vmatprep.subr.bf16.mxu0 0
  %6882 = vmatpush1.bf16.msra.mxu0 %v4707
  %6883 = vmatprep.subr.bf16.mxu0 0
  %6884 = vmatpush1.bf16.msra.mxu0 %v4708
  %6885 = vmatprep.subr.bf16.mxu0 0
  %6886 = vmatpush1.bf16.msra.mxu0 %v4709
  %6887 = vmatprep.subr.bf16.mxu0 0
  %6888 = vmatpush1.bf16.msra.mxu0 %v4710
  %6889 = vmatprep.subr.bf16.mxu0 0
  %6890 = vmatpush1.bf16.msra.mxu0 %v4711
  %6891 = vmatprep.subr.bf16.mxu0 0
  %6892 = vmatpush1.bf16.msra.mxu0 %v4712
  %6893 = vmatprep.subr.bf16.mxu0 0
  %6894 = vmatpush1.bf16.msra.mxu0 %v4713
  %6895 = vmatprep.subr.bf16.mxu0 0
  %6896 = vmatpush1.bf16.msra.mxu0 %v4714
  %6897 = vmatprep.subr.bf16.mxu0 0
  %6898 = vmatpush1.bf16.msra.mxu0 %v4715
  %6899 = vmatprep.subr.bf16.mxu0 0
  %6900 = vmatpush1.bf16.msra.mxu0 %v4716
  %6901 = vmatprep.subr.bf16.mxu0 0
  %6902 = vmatpush1.bf16.msra.mxu0 %v4717
  %6903 = vmatprep.subr.bf16.mxu0 0
  %6904 = vmatpush1.bf16.msra.mxu0 %v4718
  %6905 = vmatprep.subr.bf16.mxu0 0
  %6906 = vmatpush1.bf16.msra.mxu0 %v4719
  %6907 = vmatprep.subr.bf16.mxu0 0
  %6908 = vmatpush1.bf16.msra.mxu0 %v4720
  %6909 = vmatprep.mubr.bf16.mxu0 %v1882
  %6910 = vmatmul.mubr.bf16.gmra.mrb[0].mxu0 %v1881
  %v6911 = vpop.f32.mrb[0].mxu0
  %v6912 = vadd.f32 %v6855, %v6911
  %v6913 = vpop.f32.mrb[0].mxu0
  %v6914 = vpop.f32.mrb[0].mxu0
  %v6915 = vadd.f32 %v6858, %v6914
  %v6916 = vpop.f32.mrb[0].mxu0
  %6917 = vmatprep.mubr.bf16.mxu0 %v1946
  %6918 = vmatmul.mubr.bf16.gmra.mrb[0].mxu0 %v1945
  %v6919 = vpop.f32.mrb[0].mxu0
  %v6920 = vadd.f32 %v6863, %v6919
  %v6921 = vpop.f32.mrb[0].mxu0
  %v6922 = vpop.f32.mrb[0].mxu0
  %v6923 = vadd.f32 %v6866, %v6922
  %v6924 = vpop.f32.mrb[0].mxu0
  %6925 = vmatprep.mubr.bf16.mxu0 %v2010
  %6926 = vmatmul.mubr.bf16.gmra.mrb[0].mxu0 %v2009
  %v6927 = vpop.f32.mrb[0].mxu0
  %v6928 = vadd.f32 %v6871, %v6927
  %v6929 = vpop.f32.mrb[0].mxu0
  %v6930 = vpop.f32.mrb[0].mxu0
  %v6931 = vadd.f32 %v6874, %v6930
  %v6932 = vpop.f32.mrb[0].mxu0
  %6933 = vdwg.mxu0
  %6934 = vmatprep.subr.bf16.mxu0 0
  %6935 = vmatpush1.bf16.msra.mxu0 %v4721
  %6936 = vmatprep.subr.bf16.mxu0 0
  %6937 = vmatpush1.bf16.msra.mxu0 %v4722
  %6938 = vmatprep.subr.bf16.mxu0 0
  %6939 = vmatpush1.bf16.msra.mxu0 %v4723
  %6940 = vmatprep.subr.bf16.mxu0 0
  %6941 = vmatpush1.bf16.msra.mxu0 %v4724
  %6942 = vmatprep.subr.bf16.mxu0 0
  %6943 = vmatpush1.bf16.msra.mxu0 %v4725
  %6944 = vmatprep.subr.bf16.mxu0 0
  %6945 = vmatpush1.bf16.msra.mxu0 %v4726
  %6946 = vmatprep.subr.bf16.mxu0 0
  %6947 = vmatpush1.bf16.msra.mxu0 %v4727
  %6948 = vmatprep.subr.bf16.mxu0 0
  %6949 = vmatpush1.bf16.msra.mxu0 %v4728
  %6950 = vmatprep.subr.bf16.mxu0 0
  %6951 = vmatpush1.bf16.msra.mxu0 %v4729
  %6952 = vmatprep.subr.bf16.mxu0 0
  %6953 = vmatpush1.bf16.msra.mxu0 %v4730
  %6954 = vmatprep.subr.bf16.mxu0 0
  %6955 = vmatpush1.bf16.msra.mxu0 %v4731
  %6956 = vmatprep.subr.bf16.mxu0 0
  %6957 = vmatpush1.bf16.msra.mxu0 %v4732
  %6958 = vmatprep.subr.bf16.mxu0 0
  %6959 = vmatpush1.bf16.msra.mxu0 %v4733
  %6960 = vmatprep.subr.bf16.mxu0 0
  %6961 = vmatpush1.bf16.msra.mxu0 %v4734
  %6962 = vmatprep.subr.bf16.mxu0 0
  %6963 = vmatpush1.bf16.msra.mxu0 %v4735
  %6964 = vmatprep.subr.bf16.mxu0 0
  %6965 = vmatpush1.bf16.msra.mxu0 %v4736
  %6966 = vmatprep.mubr.bf16.mxu0 %v1884
  %6967 = vmatmul.mubr.bf16.gmra.mrb[0].mxu0 %v1883
  %v6968 = vpop.f32.mrb[0].mxu0
  %v6969 = vadd.f32 %v6912, %v6968
  %v6970 = vpop.f32.mrb[0].mxu0
  %v6971 = vpop.f32.mrb[0].mxu0
  %v6972 = vadd.f32 %v6915, %v6971
  %v6973 = vpop.f32.mrb[0].mxu0
  %6974 = vmatprep.mubr.bf16.mxu0 %v1948
  %6975 = vmatmul.mubr.bf16.gmra.mrb[0].mxu0 %v1947
  %v6976 = vpop.f32.mrb[0].mxu0
  %v6977 = vadd.f32 %v6920, %v6976
  %v6978 = vpop.f32.mrb[0].mxu0
  %v6979 = vpop.f32.mrb[0].mxu0
  %v6980 = vadd.f32 %v6923, %v6979
  %v6981 = vpop.f32.mrb[0].mxu0
  %6982 = vmatprep.mubr.bf16.mxu0 %v2012
  %6983 = vmatmul.mubr.bf16.gmra.mrb[0].mxu0 %v2011
  %v6984 = vpop.f32.mrb[0].mxu0
  %v6985 = vadd.f32 %v6928, %v6984
  %v6986 = vpop.f32.mrb[0].mxu0
  %v6987 = vpop.f32.mrb[0].mxu0
  %v6988 = vadd.f32 %v6931, %v6987
  %v6989 = vpop.f32.mrb[0].mxu0
  %6990 = vdwg.mxu0
  %6991 = vmatprep.subr.bf16.mxu0 0
  %6992 = vmatpush1.bf16.msra.mxu0 %v4737
  %6993 = vmatprep.subr.bf16.mxu0 0
  %6994 = vmatpush1.bf16.msra.mxu0 %v4738
  %6995 = vmatprep.subr.bf16.mxu0 0
  %6996 = vmatpush1.bf16.msra.mxu0 %v4739
  %6997 = vmatprep.subr.bf16.mxu0 0
  %6998 = vmatpush1.bf16.msra.mxu0 %v4740
  %6999 = vmatprep.subr.bf16.mxu0 0
  %7000 = vmatpush1.bf16.msra.mxu0 %v4741
  %7001 = vmatprep.subr.bf16.mxu0 0
  %7002 = vmatpush1.bf16.msra.mxu0 %v4742
  %7003 = vmatprep.subr.bf16.mxu0 0
  %7004 = vmatpush1.bf16.msra.mxu0 %v4743
  %7005 = vmatprep.subr.bf16.mxu0 0
  %7006 = vmatpush1.bf16.msra.mxu0 %v4744
  %7007 = vmatprep.subr.bf16.mxu0 0
  %7008 = vmatpush1.bf16.msra.mxu0 %v4745
  %7009 = vmatprep.subr.bf16.mxu0 0
  %7010 = vmatpush1.bf16.msra.mxu0 %v4746
  %7011 = vmatprep.subr.bf16.mxu0 0
  %7012 = vmatpush1.bf16.msra.mxu0 %v4747
  %7013 = vmatprep.subr.bf16.mxu0 0
  %7014 = vmatpush1.bf16.msra.mxu0 %v4748
  %7015 = vmatprep.subr.bf16.mxu0 0
  %7016 = vmatpush1.bf16.msra.mxu0 %v4749
  %7017 = vmatprep.subr.bf16.mxu0 0
  %7018 = vmatpush1.bf16.msra.mxu0 %v4750
  %7019 = vmatprep.subr.bf16.mxu0 0
  %7020 = vmatpush1.bf16.msra.mxu0 %v4751
  %7021 = vmatprep.subr.bf16.mxu0 0
  %7022 = vmatpush1.bf16.msra.mxu0 %v4752
  %7023 = vmatprep.mubr.bf16.mxu0 %v1886
  %7024 = vmatmul.mubr.bf16.gmra.mrb[0].mxu0 %v1885
  %v7025 = vpop.f32.mrb[0].mxu0
  %v7026 = vadd.f32 %v6969, %v7025
  %v7027 = vpop.f32.mrb[0].mxu0
  %v7028 = vpop.f32.mrb[0].mxu0
  %v7029 = vadd.f32 %v6972, %v7028
  %v7030 = vpop.f32.mrb[0].mxu0
  %7031 = vmatprep.mubr.bf16.mxu0 %v1950
  %7032 = vmatmul.mubr.bf16.gmra.mrb[0].mxu0 %v1949
  %v7033 = vpop.f32.mrb[0].mxu0
  %v7034 = vadd.f32 %v6977, %v7033
  %v7035 = vpop.f32.mrb[0].mxu0
  %v7036 = vpop.f32.mrb[0].mxu0
  %v7037 = vadd.f32 %v6980, %v7036
  %v7038 = vpop.f32.mrb[0].mxu0
  %7039 = vmatprep.mubr.bf16.mxu0 %v2014
  %7040 = vmatmul.mubr.bf16.gmra.mrb[0].mxu0 %v2013
  %v7041 = vpop.f32.mrb[0].mxu0
  %v7042 = vadd.f32 %v6985, %v7041
  %v7043 = vpop.f32.mrb[0].mxu0
  %v7044 = vpop.f32.mrb[0].mxu0
  %v7045 = vadd.f32 %v6988, %v7044
  %v7046 = vpop.f32.mrb[0].mxu0
  %7047 = vdwg.mxu0
  %7048 = vmatprep.subr.bf16.mxu0 0
  %7049 = vmatpush1.bf16.msra.mxu0 %v4753
  %7050 = vmatprep.subr.bf16.mxu0 0
  %7051 = vmatpush1.bf16.msra.mxu0 %v4754
  %7052 = vmatprep.subr.bf16.mxu0 0
  %7053 = vmatpush1.bf16.msra.mxu0 %v4755
  %7054 = vmatprep.subr.bf16.mxu0 0
  %7055 = vmatpush1.bf16.msra.mxu0 %v4756
  %7056 = vmatprep.subr.bf16.mxu0 0
  %7057 = vmatpush1.bf16.msra.mxu0 %v4757
  %7058 = vmatprep.subr.bf16.mxu0 0
  %7059 = vmatpush1.bf16.msra.mxu0 %v4758
  %7060 = vmatprep.subr.bf16.mxu0 0
  %7061 = vmatpush1.bf16.msra.mxu0 %v4759
  %7062 = vmatprep.subr.bf16.mxu0 0
  %7063 = vmatpush1.bf16.msra.mxu0 %v4760
  %7064 = vmatprep.subr.bf16.mxu0 0
  %7065 = vmatpush1.bf16.msra.mxu0 %v4761
  %7066 = vmatprep.subr.bf16.mxu0 0
  %7067 = vmatpush1.bf16.msra.mxu0 %v4762
  %7068 = vmatprep.subr.bf16.mxu0 0
  %7069 = vmatpush1.bf16.msra.mxu0 %v4763
  %7070 = vmatprep.subr.bf16.mxu0 0
  %7071 = vmatpush1.bf16.msra.mxu0 %v4764
  %7072 = vmatprep.subr.bf16.mxu0 0
  %7073 = vmatpush1.bf16.msra.mxu0 %v4765
  %7074 = vmatprep.subr.bf16.mxu0 0
  %7075 = vmatpush1.bf16.msra.mxu0 %v4766
  %7076 = vmatprep.subr.bf16.mxu0 0
  %7077 = vmatpush1.bf16.msra.mxu0 %v4767
  %7078 = vmatprep.subr.bf16.mxu0 0
  %7079 = vmatpush1.bf16.msra.mxu0 %v4768
  %7080 = vmatprep.mubr.bf16.mxu0 %v1888
  %7081 = vmatmul.mubr.bf16.gmra.mrb[0].mxu0 %v1887
  %v7082 = vpop.f32.mrb[0].mxu0
  %v7083 = vadd.f32 %v7026, %v7082
  %v7084 = vpop.f32.mrb[0].mxu0
  %v7085 = vpop.f32.mrb[0].mxu0
  %v7086 = vadd.f32 %v7029, %v7085
  %v7087 = vpop.f32.mrb[0].mxu0
  %7088 = vmatprep.mubr.bf16.mxu0 %v1952
  %7089 = vmatmul.mubr.bf16.gmra.mrb[0].mxu0 %v1951
  %v7090 = vpop.f32.mrb[0].mxu0
  %v7091 = vadd.f32 %v7034, %v7090
  %v7092 = vpop.f32.mrb[0].mxu0
  %v7093 = vpop.f32.mrb[0].mxu0
  %v7094 = vadd.f32 %v7037, %v7093
  %v7095 = vpop.f32.mrb[0].mxu0
  %7096 = vmatprep.mubr.bf16.mxu0 %v2016
  %7097 = vmatmul.mubr.bf16.gmra.mrb[0].mxu0 %v2015
  %v7098 = vpop.f32.mrb[0].mxu0
  %v7099 = vadd.f32 %v7042, %v7098
  %v7100 = vpop.f32.mrb[0].mxu0
  %v7101 = vpop.f32.mrb[0].mxu0
  %v7102 = vadd.f32 %v7045, %v7101
  %v7103 = vpop.f32.mrb[0].mxu0
  %7104 = vdwg.mxu0
  %v7105 = vxor.u32 %v7083, 2147483648
  %v7106 = vxor.u32 %v7086, 2147483648
  %v7107 = vxor.u32 %v7091, 2147483648
  %v7108 = vxor.u32 %v7094, 2147483648
  %v7109 = vxor.u32 %v7099, 2147483648
  %v7110 = vxor.u32 %v7102, 2147483648
  %v7111 = vmul.f32 %v7105, 1.442695
  %v7112 = vpow.pop %v7111
  %v7113 = vmul.f32 %v7106, 1.442695
  %v7114 = vpow.pop %v7113
  %v7115 = vmul.f32 %v7107, 1.442695
  %v7116 = vpow.pop %v7115
  %v7117 = vmul.f32 %v7108, 1.442695
  %v7118 = vpow.pop %v7117
  %v7119 = vmul.f32 %v7109, 1.442695
  %v7120 = vpow.pop %v7119
  %v7121 = vmul.f32 %v7110, 1.442695
  %v7122 = vpow.pop %v7121
  %v7123 = vadd.f32 %v7112, 1.0
  %v7124 = vadd.f32 %v7114, 1.0
  %v7125 = vadd.f32 %v7116, 1.0
  %v7126 = vadd.f32 %v7118, 1.0
  %v7127 = vadd.f32 %v7120, 1.0
  %v7128 = vadd.f32 %v7122, 1.0
  %v7129 = vrcp.pop %v7123
  %v7130 = vmul.f32 1.0, %v7129
  %v7131 = vrcp.pop %v7124
  %v7132 = vmul.f32 1.0, %v7131
  %v7133 = vrcp.pop %v7125
  %v7134 = vmul.f32 1.0, %v7133
  %v7135 = vrcp.pop %v7126
  %v7136 = vmul.f32 1.0, %v7135
  %v7137 = vrcp.pop %v7127
  %v7138 = vmul.f32 1.0, %v7137
  %v7139 = vrcp.pop %v7128
  %v7140 = vmul.f32 1.0, %v7139
  %v7141 = vpack.c.bf16 %v7132, %v7130
  %v7142 = vpack.c.bf16 %v7136, %v7134
  %v7143 = vpack.c.bf16 %v7140, %v7138
  %v7144 = vld [vmem:[%s3] sm:$0xf]
  %v7145 = vld [vmem:[%s3 + $0x4] sm:$0xf]
  %v7148 = vunpack.c.l.b16 %v7144
  %v7149 = vunpack.c.l.b16 %v7145
  %v7150 = vpack.c.b16 %v7149, %v7148
  %vm7152 = vcmask 130048
  %v7154 = vsel %vm7152, %v7141, 0
  %v7157 = vsel %vm7152, %v7142, 0
  %v7160 = vsel %vm7152, %v7143, 0
  %7162 = vmatprep.subr.bf16.mxu0 0
  %7163 = vmatpush1.bf16.msra.mxu0 %v7150
  %7164 = vmatprep.subr.bf16.mxu0 0
  %7165 = vmatpush1.bf16.msra.mxu0 0
  %7166 = vmatprep.subr.bf16.mxu0 0
  %7167 = vmatpush1.bf16.msra.mxu0 0
  %7168 = vmatprep.subr.bf16.mxu0 0
  %7169 = vmatpush1.bf16.msra.mxu0 0
  %7170 = vmatprep.subr.bf16.mxu0 0
  %7171 = vmatpush1.bf16.msra.mxu0 0
  %7172 = vmatprep.subr.bf16.mxu0 0
  %7173 = vmatpush1.bf16.msra.mxu0 0
  %7174 = vmatprep.subr.bf16.mxu0 0
  %7175 = vmatpush1.bf16.msra.mxu0 0
  %7176 = vmatprep.subr.bf16.mxu0 0
  %7177 = vmatpush1.bf16.msra.mxu0 0
  %7178 = vmatprep.subr.bf16.mxu0 0
  %7179 = vmatpush1.bf16.msra.mxu0 0
  %7180 = vmatprep.subr.bf16.mxu0 0
  %7181 = vmatpush1.bf16.msra.mxu0 0
  %7182 = vmatprep.subr.bf16.mxu0 0
  %7183 = vmatpush1.bf16.msra.mxu0 0
  %7184 = vmatprep.subr.bf16.mxu0 0
  %7185 = vmatpush1.bf16.msra.mxu0 0
  %7186 = vmatprep.subr.bf16.mxu0 0
  %7187 = vmatpush1.bf16.msra.mxu0 0
  %7188 = vmatprep.subr.bf16.mxu0 0
  %7189 = vmatpush1.bf16.msra.mxu0 0
  %7190 = vmatprep.subr.bf16.mxu0 0
  %7191 = vmatpush1.bf16.msra.mxu0 0
  %7192 = vmatprep.subr.bf16.mxu0 0
  %7193 = vmatpush1.bf16.msra.mxu0 0
  %7194 = vmatprep.mubr.bf16.mxu0 0
  %7195 = vmatmul.mubr.bf16.gmra.mrb[0].mxu0 %v7154
  %v7196 = vpop.f32.mrb[0].mxu0
  %v7197 = vadd.f32 0.0, %v7196
  %v7198 = vpop.f32.mrb[0].mxu0
  %v7199 = vpop.f32.mrb[0].mxu0
  %v7200 = vadd.f32 0.0, %v7199
  %v7201 = vpop.f32.mrb[0].mxu0
  %7202 = vmatprep.mubr.bf16.mxu0 0
  %7203 = vmatmul.mubr.bf16.gmra.mrb[0].mxu0 %v7157
  %v7204 = vpop.f32.mrb[0].mxu0
  %v7205 = vadd.f32 0.0, %v7204
  %v7206 = vpop.f32.mrb[0].mxu0
  %v7207 = vpop.f32.mrb[0].mxu0
  %v7208 = vadd.f32 0.0, %v7207
  %v7209 = vpop.f32.mrb[0].mxu0
  %7210 = vmatprep.mubr.bf16.mxu0 0
  %7211 = vmatmul.mubr.bf16.gmra.mrb[0].mxu0 %v7160
  %v7212 = vpop.f32.mrb[0].mxu0
  %v7213 = vadd.f32 0.0, %v7212
  %v7214 = vpop.f32.mrb[0].mxu0
  %v7215 = vpop.f32.mrb[0].mxu0
  %v7216 = vadd.f32 0.0, %v7215
  %v7217 = vpop.f32.mrb[0].mxu0
  %7218 = vdwg.mxu0
  %v7219 = vpack.c.bf16 %v7200, %v7197
  %v7220 = vpack.c.bf16 %v7208, %v7205
  %v7221 = vpack.c.bf16 %v7216, %v7213
  %v7225 = vunpack.c.l.b16 %v7219
  %v7226 = vunpack.c.h.b16 %v7219
  %v7227 = vunpack.c.l.b16 %v7220
  %v7228 = vunpack.c.h.b16 %v7220
  %v7229 = vunpack.c.l.b16 %v7221
  %v7230 = vunpack.c.h.b16 %v7221
  %v7231 = vld [vmem:[%s4] sm:$0xf]
  %v7232 = vld [vmem:[%s4 + $0x4] sm:$0xf]
  %v7233 = vld [vmem:[%s4 + $0x8] sm:$0xf]
  %v7234 = vld [vmem:[%s4 + $0xc] sm:$0x3]
  %v7239 = vunpack.c.l.b16 %v7231
  %v7240 = vunpack.c.l.b16 %v7232
  %v7241 = vunpack.c.l.b16 %v7233
  %v7242 = vunpack.c.l.b16 %v7234
  %v7243 = vpack.c.b16 %v7240, %v7239
  %v7244 = vpack.c.b16 %v7242, %v7241
  %v7245 = vpack.c.b16 %v7226, %v7225
  %v7246 = vpack.c.b16 %v7227, %v7227
  %vm7248 = vcmask 195584
  %v7250 = vsel %vm7248, %v7243, 0
  %v7253 = vsel %vm7248, %v7244, 0
  %vm7255 = vcmask 1043456
  %v7257 = vsel %vm7255, %v7246, 0
  %7259 = vmatprep.subr.bf16.mxu0 0
  %7260 = vmatpush1.bf16.msra.mxu0 %v7245
  %7261 = vmatprep.subr.bf16.mxu0 0
  %7262 = vmatpush1.bf16.msra.mxu0 %v7257
  %7263 = vmatprep.subr.bf16.mxu0 0
  %7264 = vmatpush1.bf16.msra.mxu0 0
  %7265 = vmatprep.subr.bf16.mxu0 0
  %7266 = vmatpush1.bf16.msra.mxu0 0
  %7267 = vmatprep.subr.bf16.mxu0 0
  %7268 = vmatpush1.bf16.msra.mxu0 0
  %7269 = vmatprep.subr.bf16.mxu0 0
  %7270 = vmatpush1.bf16.msra.mxu0 0
  %7271 = vmatprep.subr.bf16.mxu0 0
  %7272 = vmatpush1.bf16.msra.mxu0 0
  %7273 = vmatprep.subr.bf16.mxu0 0
  %7274 = vmatpush1.bf16.msra.mxu0 0
  %7275 = vmatprep.subr.bf16.mxu0 0
  %7276 = vmatpush1.bf16.msra.mxu0 0
  %7277 = vmatprep.subr.bf16.mxu0 0
  %7278 = vmatpush1.bf16.msra.mxu0 0
  %7279 = vmatprep.subr.bf16.mxu0 0
  %7280 = vmatpush1.bf16.msra.mxu0 0
  %7281 = vmatprep.subr.bf16.mxu0 0
  %7282 = vmatpush1.bf16.msra.mxu0 0
  %7283 = vmatprep.subr.bf16.mxu0 0
  %7284 = vmatpush1.bf16.msra.mxu0 0
  %7285 = vmatprep.subr.bf16.mxu0 0
  %7286 = vmatpush1.bf16.msra.mxu0 0
  %7287 = vmatprep.subr.bf16.mxu0 0
  %7288 = vmatpush1.bf16.msra.mxu0 0
  %7289 = vmatprep.subr.bf16.mxu0 0
  %7290 = vmatpush1.bf16.msra.mxu0 0
  %7291 = vmatprep.mubr.bf16.mxu0 0
  %7292 = vmatmul.mubr.bf16.gmra.mrb[0].mxu0 %v7250
  %v7293 = vpop.f32.mrb[0].mxu0
  %v7294 = vadd.f32 0.0, %v7293
  %v7295 = vpop.f32.mrb[0].mxu0
  %v7296 = vpop.f32.mrb[0].mxu0
  %v7297 = vadd.f32 0.0, %v7296
  %v7298 = vpop.f32.mrb[0].mxu0
  %7299 = vmatprep.mubr.bf16.mxu0 0
  %7300 = vmatmul.mubr.bf16.gmra.mrb[0].mxu0 %v7253
  %v7301 = vpop.f32.mrb[0].mxu0
  %v7302 = vadd.f32 0.0, %v7301
  %v7303 = vpop.f32.mrb[0].mxu0
  %v7304 = vpop.f32.mrb[0].mxu0
  %v7305 = vadd.f32 0.0, %v7304
  %v7306 = vpop.f32.mrb[0].mxu0
  %7307 = vdwg.mxu0
  %v7308 = vpack.c.b16 %v7229, %v7228
  %v7309 = vpack.c.b16 %v7230, %v7230
  %v7312 = vsel %vm7255, %v7309, 0
  %7314 = vmatprep.subr.bf16.mxu0 0
  %7315 = vmatpush1.bf16.msra.mxu0 %v7308
  %7316 = vmatprep.subr.bf16.mxu0 0
  %7317 = vmatpush1.bf16.msra.mxu0 %v7312
  %7318 = vmatprep.subr.bf16.mxu0 0
  %7319 = vmatpush1.bf16.msra.mxu0 0
  %7320 = vmatprep.subr.bf16.mxu0 0
  %7321 = vmatpush1.bf16.msra.mxu0 0
  %7322 = vmatprep.subr.bf16.mxu0 0
  %7323 = vmatpush1.bf16.msra.mxu0 0
  %7324 = vmatprep.subr.bf16.mxu0 0
  %7325 = vmatpush1.bf16.msra.mxu0 0
  %7326 = vmatprep.subr.bf16.mxu0 0
  %7327 = vmatpush1.bf16.msra.mxu0 0
  %7328 = vmatprep.subr.bf16.mxu0 0
  %7329 = vmatpush1.bf16.msra.mxu0 0
  %7330 = vmatprep.subr.bf16.mxu0 0
  %7331 = vmatpush1.bf16.msra.mxu0 0
  %7332 = vmatprep.subr.bf16.mxu0 0
  %7333 = vmatpush1.bf16.msra.mxu0 0
  %7334 = vmatprep.subr.bf16.mxu0 0
  %7335 = vmatpush1.bf16.msra.mxu0 0
  %7336 = vmatprep.subr.bf16.mxu0 0
  %7337 = vmatpush1.bf16.msra.mxu0 0
  %7338 = vmatprep.subr.bf16.mxu0 0
  %7339 = vmatpush1.bf16.msra.mxu0 0
  %7340 = vmatprep.subr.bf16.mxu0 0
  %7341 = vmatpush1.bf16.msra.mxu0 0
  %7342 = vmatprep.subr.bf16.mxu0 0
  %7343 = vmatpush1.bf16.msra.mxu0 0
  %7344 = vmatprep.subr.bf16.mxu0 0
  %7345 = vmatpush1.bf16.msra.mxu0 0
  %7346 = vmatprep.mubr.bf16.mxu0 0
  %7347 = vmatmul.mubr.bf16.gmra.mrb[0].mxu0 %v7250
  %v7348 = vpop.f32.mrb[0].mxu0
  %v7349 = vadd.f32 0.0, %v7348
  %v7350 = vpop.f32.mrb[0].mxu0
  %v7351 = vpop.f32.mrb[0].mxu0
  %v7352 = vadd.f32 0.0, %v7351
  %v7353 = vpop.f32.mrb[0].mxu0
  %7354 = vmatprep.mubr.bf16.mxu0 0
  %7355 = vmatmul.mubr.bf16.gmra.mrb[0].mxu0 %v7253
  %v7356 = vpop.f32.mrb[0].mxu0
  %v7357 = vadd.f32 0.0, %v7356
  %v7358 = vpop.f32.mrb[0].mxu0
  %v7359 = vpop.f32.mrb[0].mxu0
  %v7360 = vadd.f32 0.0, %v7359
  %v7361 = vpop.f32.mrb[0].mxu0
  %7362 = vdwg.mxu0
  %vm7363 = vcmask 162816
  %7364 = vst.msk [vmem:[%s5] sm:$0xff] %vm7363, %v7294
  %7365 = vst.msk [vmem:[%s5 + $0x8] sm:$0xff] %vm7363, %v7297
  %7366 = vst.msk [vmem:[%s5 + $0x10] sm:$0xff] %vm7363, %v7302
  %vm7367 = vcmask 158720
  %7368 = vst.msk [vmem:[%s5 + $0x18] sm:$0xf] %vm7367, %v7305
  %7369 = vst.msk [vmem:[%s5 + $0x20] sm:$0xff] %vm7363, %v7349
  %7370 = vst.msk [vmem:[%s5 + $0x28] sm:$0xff] %vm7363, %v7352
  %7371 = vst.msk [vmem:[%s5 + $0x30] sm:$0xff] %vm7363, %v7357
  %7372 = vst.msk [vmem:[%s5 + $0x38] sm:$0xf] %vm7367, %v7360
  // Predicated region
  $region22: #{vae_forward.13} parent=0 // pred_check
    _
  $region23: #{vae_forward.13} parent=0 // pred_check_branch
    %7374 = sbr.rel (0) target = $region25
  $region24: #{vae_forward.13} parent=0 // pred_region
    _
  $region25: #{vae_forward.13} parent=0 // pred_fallthru
    _
  // Predicated region
  $region26: #{vae_forward.13} parent=0 // pred_check
    _
  $region27: #{vae_forward.13} parent=0 // pred_check_branch
    %7376 = sbr.rel (0) target = $region29
  $region28: #{vae_forward.13} parent=0 // pred_region
    _
  $region29: #{vae_forward.13} parent=0 // pred_fallthru
    _

</llo_original>
